<compile_context>
chip_gen: v7x
topology: tpu7x:2x2x1
jax: 0.10.0
libtpu: 0.0.40
codegen_flags: <defaults>
</compile_context>

<pallas_src>
import functools

import numpy as np
import jax
import jax.numpy as jnp
from jax import lax
from jax.experimental import pallas as pl
from jax.experimental.pallas import tpu as pltpu

NEG_SLOPE = 0.2  # LeakyReLU(0.2)


# ----------------------------------------------------------------------------
# One-hot gather matrices: pad(1) + stride-2 + 3x3 window as plain matmuls
# ----------------------------------------------------------------------------
def _tap_gather_matrices(s):
    """g[k, i*t+j, r*s+c] == 1 iff (r, c) == (2i+ky-1, 2j+kx-1) is inside the
    s x s image, with k = 3*ky + kx and t = s // 2.  Rows that fall in the
    zero-padding region are all-zero, so `g[k] @ x_flat` IS the (ky, kx) tap of
    a 3x3 / stride-2 / pad-1 convolution — no strided or unaligned VMEM access
    is needed inside the kernel."""
    t = s // 2
    g = np.zeros((9, t * t, s * s), np.float32)
    for ky in range(3):
        for kx in range(3):
            k = 3 * ky + kx
            for i in range(t):
                r = 2 * i + ky - 1
                if not 0 <= r < s:
                    continue
                for j in range(t):
                    c = 2 * j + kx - 1
                    if 0 <= c < s:
                        g[k, i * t + j, r * s + c] = 1.0
    return jnp.asarray(g, jnp.bfloat16)


# ----------------------------------------------------------------------------
# Fused whole-network kernel: 4 conv blocks + adv head, one image per grid step
# ----------------------------------------------------------------------------
def _discriminator_kernel(*refs, has_shift):
    """refs = [x, (g, w, b[, shift]) x 4, adv_w, adv_b, out]

    x     : (1, S0^2, cin0) bf16  spatially-flattened NHWC image
    g     : (9, T^2, S^2)   bf16  one-hot tap-gather matrices (per layer)
    w     : (9, cin, cout)  bf16  per-tap conv weight (eval-BN scale folded)
    b     : (1, cout)       f32   conv bias * BN scale
    shift : (1, cout)       f32   beta - mean*scale   (BN layers only)
    adv_w : (ds^2, 128)     f32   head weight in (h*w, c) order
    adv_b : (1, 1)          f32
    out   : (1, 1, 128)     f32   validity broadcast across lanes (lane-dense store)
    """
    x_ref, out_ref = refs[0], refs[-1]
    idx = 1
    a = x_ref[0]                                             # (S^2, cin) bf16

    for hs in has_shift:                                     # 4 conv blocks
        g_ref, w_ref, b_ref = refs[idx], refs[idx + 1], refs[idx + 2]
        idx += 3
        s_ref = None
        if hs:
            s_ref = refs[idx]
            idx += 1

        acc = None
        for k in range(9):                                   # 9 taps, unrolled
            # one-hot gather (pad + stride-2 + shift), exact in bf16
            tap = jnp.dot(g_ref[k], a, preferred_element_type=jnp.float32)
            # true-K (= cin, no 128-padding) weight matmul, f32 accumulation
            d = jnp.dot(tap.astype(jnp.bfloat16), w_ref[k],
                        preferred_element_type=jnp.float32)
            acc = d if acc is None else acc + d

        y = acc + b_ref[...]                                 # bias (BN scale folded)
        y = jnp.where(y > 0, y, NEG_SLOPE * y)               # LeakyReLU(0.2); Dropout2d(eval)=id
        if hs:
            y = y + s_ref[...]                               # eval BatchNorm shift
        a = y.astype(jnp.bfloat16)                           # (T^2, cout) -> next layer

    # Adversarial head: Linear(128*ds^2 -> 1) + Sigmoid, fused in-kernel.
    aw_ref, ab_ref = refs[idx], refs[idx + 1]
    feat = a.astype(jnp.float32)                             # (ds^2, 128)
    logit = jnp.sum(feat * aw_ref[...], axis=1, keepdims=True)   # lane reduce
    logit = jnp.sum(logit, axis=0, keepdims=True) + ab_ref[...]  # (1, 1)
    validity = 0.5 * (jnp.tanh(0.5 * logit) + 1.0)           # stable sigmoid (EUP tanh)
    out_ref[0] = jnp.broadcast_to(validity, (1, 128)).astype(out_ref.dtype)


def _const_spec(shape):
    """Full-array block with a grid-invariant index map (fetched once)."""
    nd = len(shape)
    return pl.BlockSpec(shape, lambda b, _nd=nd: (0,) * _nd)


def discriminator_forward(img_nchw, params):
    """Mirrors Discriminator.forward (eval mode) with a single fused Pallas call."""
    n, c, h, w = img_nchw.shape
    # Only remaining host-side prep: NCHW -> flattened NHWC, bf16 (raw input only).
    x = jnp.transpose(img_nchw, (0, 2, 3, 1)).reshape(n, h * w, c).astype(jnp.bfloat16)

    operands = [x]
    in_specs = [pl.BlockSpec((1, h * w, c), lambda b: (b, 0, 0))]
    has_shift = []
    for blk in params["blocks"]:
        hs = "shift" in blk
        has_shift.append(hs)
        for name in ("g", "w", "b") + (("shift",) if hs else ()):
            operands.append(blk[name])
            in_specs.append(_const_spec(blk[name].shape))
    operands += [params["adv_w"], params["adv_b"]]
    in_specs += [_const_spec(params["adv_w"].shape),
                 _const_spec(params["adv_b"].shape)]

    out = pl.pallas_call(
        functools.partial(_discriminator_kernel, has_shift=tuple(has_shift)),
        grid=(n,),
        in_specs=in_specs,
        out_specs=pl.BlockSpec((1, 1, 128), lambda b: (b, 0, 0)),
        out_shape=jax.ShapeDtypeStruct((n, 1, 128), jnp.float32),
        compiler_params=pltpu.CompilerParams(dimension_semantics=("parallel",)),
    )(*operands)
    return out[:, 0, :1]                                     # validity lives in lane 0


# ----------------------------------------------------------------------------
# Parameter construction (deterministic, synthetic) — fold / pack / cast at init
# ----------------------------------------------------------------------------
def init_discriminator_params(key, img_size, channels):
    """Returns (packed params for the kernel, raw params for the f32 reference).

    Eval-mode BatchNorm2d(cout, 0.8) (eps=0.8, mean=0, var=1, gamma=1, beta=0)
    is folded as W' = W*scale, b' = b*scale, shift = beta - mean*scale (valid
    because scale > 0 and LeakyReLU is positively homogeneous)."""
    assert img_size % 16 == 0, "needs four stride-2 halvings"
    cfg = [(channels, 16, False), (16, 32, True), (32, 64, True), (64, 128, True)]
    blocks, ref_blocks = [], []
    s = img_size
    for cin, cout, bn in cfg:
        key, kw, kb = jax.random.split(key, 3)
        w = jax.random.normal(kw, (3, 3, cin, cout), jnp.float32) * 0.05   # HWIO
        b = jax.random.normal(kb, (cout,), jnp.float32) * 0.05
        ref = dict(w=w, b=b, bn=bn)
        if bn:
            eps = 0.8                              # nn.BatchNorm2d(cout, 0.8): eps = 0.8
            gamma = jnp.ones((cout,), jnp.float32)
            beta = jnp.zeros((cout,), jnp.float32)
            mean = jnp.zeros((cout,), jnp.float32)
            var = jnp.ones((cout,), jnp.float32)
            ref.update(eps=eps, gamma=gamma, beta=beta, mean=mean, var=var)
            scale = gamma / jnp.sqrt(var + eps)    # > 0 -> safe to fold through LeakyReLU
            shift = beta - mean * scale
        else:
            scale = jnp.ones((cout,), jnp.float32)
            shift = None
        blk = dict(
            g=_tap_gather_matrices(s),                                   # (9, T^2, S^2) bf16
            w=(w * scale).reshape(9, cin, cout).astype(jnp.bfloat16),    # per-tap, BN folded
            b=(b * scale).reshape(1, cout),                              # f32
        )
        if bn:
            blk["shift"] = shift.reshape(1, cout)
        blocks.append(blk)
        ref_blocks.append(ref)
        s //= 2

    ds = img_size // 16
    key, kw, kb = jax.random.split(key, 3)
    # Head weight generated directly in NHWC-flatten order (h*w, c); a PyTorch
    # checkpoint's (1, 128*ds^2) weight (flattened (c,h,w)) would be permuted once here.
    adv_w = jax.random.normal(kw, (ds * ds, 128), jnp.float32) * 0.05
    adv_b = jax.random.normal(kb, (), jnp.float32) * 0.05
    params = dict(blocks=blocks, adv_w=adv_w, adv_b=adv_b.reshape(1, 1))
    ref_params = dict(blocks=ref_blocks, adv_w=adv_w, adv_b=adv_b)
    return params, ref_params


# ----------------------------------------------------------------------------
# Pure-JAX f32 reference (un-fused, un-folded) for correctness checking
# ----------------------------------------------------------------------------
def reference_forward(img_nchw, ref_params):
    x = jnp.transpose(img_nchw, (0, 2, 3, 1))
    for blk in ref_params["blocks"]:
        x = lax.conv_general_dilated(x, blk["w"], (2, 2), [(1, 1), (1, 1)],
                                     dimension_numbers=("NHWC", "HWIO", "NHWC"))
        x = x + blk["b"]
        x = jnp.where(x > 0, x, NEG_SLOPE * x)     # LeakyReLU; Dropout2d(eval) = identity
        if blk["bn"]:
            x = ((x - blk["mean"]) / jnp.sqrt(blk["var"] + blk["eps"])
                 * blk["gamma"] + blk["beta"])
    n = x.shape[0]
    feat = x.reshape(n, -1, x.shape[-1])           # (n, ds^2, 128) in (h*w, c) order
    logit = jnp.einsum("npc,pc->n", feat, ref_params["adv_w"]) + ref_params["adv_b"]
    return jax.nn.sigmoid(logit)[:, None]


if __name__ == "__main__":
    img_size = 16
    channels = 4
    num_classes = 10  # unused in forward (matches the PyTorch module)
    batch = 2

    key = jax.random.PRNGKey(0)
    k_params, k_img = jax.random.split(key)
    params, ref_params = init_discriminator_params(k_params, img_size, channels)
    img = jax.random.normal(k_img, (batch, channels, img_size, img_size), jnp.float32)

    fwd = jax.jit(discriminator_forward)
    validity = jax.block_until_ready(fwd(img, params))
    assert validity.shape == (batch, 1)
    assert bool(jnp.all((validity >= 0.0) & (validity <= 1.0)))

    # f32 reference check; kernel feature path is bf16 -> loose tolerance.
    expected = reference_forward(img, ref_params)
    err = float(jnp.max(jnp.abs(validity - expected)))
    assert err < 3e-2, f"mismatch vs f32 reference: {err}"
    print("KERNEL_OK")
</pallas_src>

<mosaic_0001>
module attributes {stable_mosaic.version = 11 : i64} {
  func.func @_discriminator_kernel(%arg0: i32, %arg1: memref<1x256x4xbf16, #tpu.memory_space<vmem>>, %arg2: memref<9x64x256xbf16, #tpu.memory_space<vmem>>, %arg3: memref<9x4x16xbf16, #tpu.memory_space<vmem>>, %arg4: memref<1x16xf32, #tpu.memory_space<vmem>>, %arg5: memref<9x16x64xbf16, #tpu.memory_space<vmem>>, %arg6: memref<9x16x32xbf16, #tpu.memory_space<vmem>>, %arg7: memref<1x32xf32, #tpu.memory_space<vmem>>, %arg8: memref<1x32xf32, #tpu.memory_space<vmem>>, %arg9: memref<9x4x16xbf16, #tpu.memory_space<vmem>>, %arg10: memref<9x32x64xbf16, #tpu.memory_space<vmem>>, %arg11: memref<1x64xf32, #tpu.memory_space<vmem>>, %arg12: memref<1x64xf32, #tpu.memory_space<vmem>>, %arg13: memref<9x1x4xbf16, #tpu.memory_space<vmem>>, %arg14: memref<9x64x128xbf16, #tpu.memory_space<vmem>>, %arg15: memref<1x128xf32, #tpu.memory_space<vmem>>, %arg16: memref<1x128xf32, #tpu.memory_space<vmem>>, %arg17: memref<1x128xf32, #tpu.memory_space<vmem>>, %arg18: memref<1x1xf32, #tpu.memory_space<vmem>>, %arg19: memref<1x1x128xf32, #tpu.memory_space<vmem>>) attributes {dimension_semantics = [#tpu.dimension_semantics<parallel>], iteration_bounds = array<i64: 2>, scalar_prefetch = 0 : i64, scratch_operands = 0 : i64, tpu.core_type = #tpu.core_type<tc>, window_params = [{transform_indices = @transform_0, window_bounds = array<i64: 1, 256, 4>}, {pipeline_mode = #tpu.pipeline_mode<synchronous>, transform_indices = @transform_1, window_bounds = array<i64: 9, 64, 256>}, {pipeline_mode = #tpu.pipeline_mode<synchronous>, transform_indices = @transform_2, window_bounds = array<i64: 9, 4, 16>}, {pipeline_mode = #tpu.pipeline_mode<synchronous>, transform_indices = @transform_3, window_bounds = array<i64: 1, 16>}, {pipeline_mode = #tpu.pipeline_mode<synchronous>, transform_indices = @transform_4, window_bounds = array<i64: 9, 16, 64>}, {pipeline_mode = #tpu.pipeline_mode<synchronous>, transform_indices = @transform_5, window_bounds = array<i64: 9, 16, 32>}, {pipeline_mode = #tpu.pipeline_mode<synchronous>, transform_indices = @transform_6, window_bounds = array<i64: 1, 32>}, {pipeline_mode = #tpu.pipeline_mode<synchronous>, transform_indices = @transform_7, window_bounds = array<i64: 1, 32>}, {pipeline_mode = #tpu.pipeline_mode<synchronous>, transform_indices = @transform_8, window_bounds = array<i64: 9, 4, 16>}, {pipeline_mode = #tpu.pipeline_mode<synchronous>, transform_indices = @transform_9, window_bounds = array<i64: 9, 32, 64>}, {pipeline_mode = #tpu.pipeline_mode<synchronous>, transform_indices = @transform_10, window_bounds = array<i64: 1, 64>}, {pipeline_mode = #tpu.pipeline_mode<synchronous>, transform_indices = @transform_11, window_bounds = array<i64: 1, 64>}, {pipeline_mode = #tpu.pipeline_mode<synchronous>, transform_indices = @transform_12, window_bounds = array<i64: 9, 1, 4>}, {pipeline_mode = #tpu.pipeline_mode<synchronous>, transform_indices = @transform_13, window_bounds = array<i64: 9, 64, 128>}, {pipeline_mode = #tpu.pipeline_mode<synchronous>, transform_indices = @transform_14, window_bounds = array<i64: 1, 128>}, {pipeline_mode = #tpu.pipeline_mode<synchronous>, transform_indices = @transform_15, window_bounds = array<i64: 1, 128>}, {pipeline_mode = #tpu.pipeline_mode<synchronous>, transform_indices = @transform_16, window_bounds = array<i64: 1, 128>}, {pipeline_mode = #tpu.pipeline_mode<synchronous>, transform_indices = @transform_17, window_bounds = array<i64: 1, 1>}, {transform_indices = @transform_18, window_bounds = array<i64: 1, 1, 128>}]} {
    %c0 = arith.constant 0 : index
    %c0_0 = arith.constant 0 : index
    %c0_1 = arith.constant 0 : index
    %0 = vector.load %arg1[%c0, %c0_0, %c0_1] : memref<1x256x4xbf16, #tpu.memory_space<vmem>>, vector<1x256x4xbf16>
    %1 = vector.shape_cast %0 : vector<1x256x4xbf16> to vector<256x4xbf16>
    %c0_2 = arith.constant 0 : index
    %c0_3 = arith.constant 0 : index
    %c0_4 = arith.constant 0 : index
    %2 = vector.load %arg2[%c0_2, %c0_3, %c0_4] : memref<9x64x256xbf16, #tpu.memory_space<vmem>>, vector<1x64x256xbf16>
    %3 = vector.shape_cast %2 : vector<1x64x256xbf16> to vector<64x256xbf16>
    %cst = arith.constant dense<0.000000e+00> : vector<64x4xf32>
    %4 = tpu.matmul %3, %1, %cst {dimension_numbers = #tpu.dot_dimension_numbers<[1], [0], [0], [1], [0, 0, 1, 1], [], []>} : vector<64x256xbf16>, vector<256x4xbf16>, vector<64x4xf32> -> vector<64x4xf32>
    %5 = arith.truncf %4 : vector<64x4xf32> to vector<64x4xbf16>
    %c0_5 = arith.constant 0 : index
    %c0_6 = arith.constant 0 : index
    %c0_7 = arith.constant 0 : index
    %6 = vector.load %arg3[%c0_5, %c0_6, %c0_7] : memref<9x4x16xbf16, #tpu.memory_space<vmem>>, vector<1x4x16xbf16>
    %7 = vector.shape_cast %6 : vector<1x4x16xbf16> to vector<4x16xbf16>
    %cst_8 = arith.constant dense<0.000000e+00> : vector<64x16xf32>
    %8 = tpu.matmul %5, %7, %cst_8 {dimension_numbers = #tpu.dot_dimension_numbers<[1], [0], [0], [1], [0, 0, 1, 1], [], []>} : vector<64x4xbf16>, vector<4x16xbf16>, vector<64x16xf32> -> vector<64x16xf32>
    %c1 = arith.constant 1 : index
    %c0_9 = arith.constant 0 : index
    %c0_10 = arith.constant 0 : index
    %9 = vector.load %arg2[%c1, %c0_9, %c0_10] : memref<9x64x256xbf16, #tpu.memory_space<vmem>>, vector<1x64x256xbf16>
    %10 = vector.shape_cast %9 : vector<1x64x256xbf16> to vector<64x256xbf16>
    %cst_11 = arith.constant dense<0.000000e+00> : vector<64x4xf32>
    %11 = tpu.matmul %10, %1, %cst_11 {dimension_numbers = #tpu.dot_dimension_numbers<[1], [0], [0], [1], [0, 0, 1, 1], [], []>} : vector<64x256xbf16>, vector<256x4xbf16>, vector<64x4xf32> -> vector<64x4xf32>
    %12 = arith.truncf %11 : vector<64x4xf32> to vector<64x4xbf16>
    %c1_12 = arith.constant 1 : index
    %c0_13 = arith.constant 0 : index
    %c0_14 = arith.constant 0 : index
    %13 = vector.load %arg3[%c1_12, %c0_13, %c0_14] : memref<9x4x16xbf16, #tpu.memory_space<vmem>>, vector<1x4x16xbf16>
    %14 = vector.shape_cast %13 : vector<1x4x16xbf16> to vector<4x16xbf16>
    %cst_15 = arith.constant dense<0.000000e+00> : vector<64x16xf32>
    %15 = tpu.matmul %12, %14, %cst_15 {dimension_numbers = #tpu.dot_dimension_numbers<[1], [0], [0], [1], [0, 0, 1, 1], [], []>} : vector<64x4xbf16>, vector<4x16xbf16>, vector<64x16xf32> -> vector<64x16xf32>
    %16 = arith.addf %8, %15 : vector<64x16xf32>
    %c2 = arith.constant 2 : index
    %c0_16 = arith.constant 0 : index
    %c0_17 = arith.constant 0 : index
    %17 = vector.load %arg2[%c2, %c0_16, %c0_17] : memref<9x64x256xbf16, #tpu.memory_space<vmem>>, vector<1x64x256xbf16>
    %18 = vector.shape_cast %17 : vector<1x64x256xbf16> to vector<64x256xbf16>
    %cst_18 = arith.constant dense<0.000000e+00> : vector<64x4xf32>
    %19 = tpu.matmul %18, %1, %cst_18 {dimension_numbers = #tpu.dot_dimension_numbers<[1], [0], [0], [1], [0, 0, 1, 1], [], []>} : vector<64x256xbf16>, vector<256x4xbf16>, vector<64x4xf32> -> vector<64x4xf32>
    %20 = arith.truncf %19 : vector<64x4xf32> to vector<64x4xbf16>
    %c2_19 = arith.constant 2 : index
    %c0_20 = arith.constant 0 : index
    %c0_21 = arith.constant 0 : index
    %21 = vector.load %arg3[%c2_19, %c0_20, %c0_21] : memref<9x4x16xbf16, #tpu.memory_space<vmem>>, vector<1x4x16xbf16>
    %22 = vector.shape_cast %21 : vector<1x4x16xbf16> to vector<4x16xbf16>
    %cst_22 = arith.constant dense<0.000000e+00> : vector<64x16xf32>
    %23 = tpu.matmul %20, %22, %cst_22 {dimension_numbers = #tpu.dot_dimension_numbers<[1], [0], [0], [1], [0, 0, 1, 1], [], []>} : vector<64x4xbf16>, vector<4x16xbf16>, vector<64x16xf32> -> vector<64x16xf32>
    %24 = arith.addf %16, %23 : vector<64x16xf32>
    %c3 = arith.constant 3 : index
    %c0_23 = arith.constant 0 : index
    %c0_24 = arith.constant 0 : index
    %25 = vector.load %arg2[%c3, %c0_23, %c0_24] : memref<9x64x256xbf16, #tpu.memory_space<vmem>>, vector<1x64x256xbf16>
    %26 = vector.shape_cast %25 : vector<1x64x256xbf16> to vector<64x256xbf16>
    %cst_25 = arith.constant dense<0.000000e+00> : vector<64x4xf32>
    %27 = tpu.matmul %26, %1, %cst_25 {dimension_numbers = #tpu.dot_dimension_numbers<[1], [0], [0], [1], [0, 0, 1, 1], [], []>} : vector<64x256xbf16>, vector<256x4xbf16>, vector<64x4xf32> -> vector<64x4xf32>
    %28 = arith.truncf %27 : vector<64x4xf32> to vector<64x4xbf16>
    %c3_26 = arith.constant 3 : index
    %c0_27 = arith.constant 0 : index
    %c0_28 = arith.constant 0 : index
    %29 = vector.load %arg3[%c3_26, %c0_27, %c0_28] : memref<9x4x16xbf16, #tpu.memory_space<vmem>>, vector<1x4x16xbf16>
    %30 = vector.shape_cast %29 : vector<1x4x16xbf16> to vector<4x16xbf16>
    %cst_29 = arith.constant dense<0.000000e+00> : vector<64x16xf32>
    %31 = tpu.matmul %28, %30, %cst_29 {dimension_numbers = #tpu.dot_dimension_numbers<[1], [0], [0], [1], [0, 0, 1, 1], [], []>} : vector<64x4xbf16>, vector<4x16xbf16>, vector<64x16xf32> -> vector<64x16xf32>
    %32 = arith.addf %24, %31 : vector<64x16xf32>
    %c4 = arith.constant 4 : index
    %c0_30 = arith.constant 0 : index
    %c0_31 = arith.constant 0 : index
    %33 = vector.load %arg2[%c4, %c0_30, %c0_31] : memref<9x64x256xbf16, #tpu.memory_space<vmem>>, vector<1x64x256xbf16>
    %34 = vector.shape_cast %33 : vector<1x64x256xbf16> to vector<64x256xbf16>
    %cst_32 = arith.constant dense<0.000000e+00> : vector<64x4xf32>
    %35 = tpu.matmul %34, %1, %cst_32 {dimension_numbers = #tpu.dot_dimension_numbers<[1], [0], [0], [1], [0, 0, 1, 1], [], []>} : vector<64x256xbf16>, vector<256x4xbf16>, vector<64x4xf32> -> vector<64x4xf32>
    %36 = arith.truncf %35 : vector<64x4xf32> to vector<64x4xbf16>
    %c4_33 = arith.constant 4 : index
    %c0_34 = arith.constant 0 : index
    %c0_35 = arith.constant 0 : index
    %37 = vector.load %arg3[%c4_33, %c0_34, %c0_35] : memref<9x4x16xbf16, #tpu.memory_space<vmem>>, vector<1x4x16xbf16>
    %38 = vector.shape_cast %37 : vector<1x4x16xbf16> to vector<4x16xbf16>
    %cst_36 = arith.constant dense<0.000000e+00> : vector<64x16xf32>
    %39 = tpu.matmul %36, %38, %cst_36 {dimension_numbers = #tpu.dot_dimension_numbers<[1], [0], [0], [1], [0, 0, 1, 1], [], []>} : vector<64x4xbf16>, vector<4x16xbf16>, vector<64x16xf32> -> vector<64x16xf32>
    %40 = arith.addf %32, %39 : vector<64x16xf32>
    %c5 = arith.constant 5 : index
    %c0_37 = arith.constant 0 : index
    %c0_38 = arith.constant 0 : index
    %41 = vector.load %arg2[%c5, %c0_37, %c0_38] : memref<9x64x256xbf16, #tpu.memory_space<vmem>>, vector<1x64x256xbf16>
    %42 = vector.shape_cast %41 : vector<1x64x256xbf16> to vector<64x256xbf16>
    %cst_39 = arith.constant dense<0.000000e+00> : vector<64x4xf32>
    %43 = tpu.matmul %42, %1, %cst_39 {dimension_numbers = #tpu.dot_dimension_numbers<[1], [0], [0], [1], [0, 0, 1, 1], [], []>} : vector<64x256xbf16>, vector<256x4xbf16>, vector<64x4xf32> -> vector<64x4xf32>
    %44 = arith.truncf %43 : vector<64x4xf32> to vector<64x4xbf16>
    %c5_40 = arith.constant 5 : index
    %c0_41 = arith.constant 0 : index
    %c0_42 = arith.constant 0 : index
    %45 = vector.load %arg3[%c5_40, %c0_41, %c0_42] : memref<9x4x16xbf16, #tpu.memory_space<vmem>>, vector<1x4x16xbf16>
    %46 = vector.shape_cast %45 : vector<1x4x16xbf16> to vector<4x16xbf16>
    %cst_43 = arith.constant dense<0.000000e+00> : vector<64x16xf32>
    %47 = tpu.matmul %44, %46, %cst_43 {dimension_numbers = #tpu.dot_dimension_numbers<[1], [0], [0], [1], [0, 0, 1, 1], [], []>} : vector<64x4xbf16>, vector<4x16xbf16>, vector<64x16xf32> -> vector<64x16xf32>
    %48 = arith.addf %40, %47 : vector<64x16xf32>
    %c6 = arith.constant 6 : index
    %c0_44 = arith.constant 0 : index
    %c0_45 = arith.constant 0 : index
    %49 = vector.load %arg2[%c6, %c0_44, %c0_45] : memref<9x64x256xbf16, #tpu.memory_space<vmem>>, vector<1x64x256xbf16>
    %50 = vector.shape_cast %49 : vector<1x64x256xbf16> to vector<64x256xbf16>
    %cst_46 = arith.constant dense<0.000000e+00> : vector<64x4xf32>
    %51 = tpu.matmul %50, %1, %cst_46 {dimension_numbers = #tpu.dot_dimension_numbers<[1], [0], [0], [1], [0, 0, 1, 1], [], []>} : vector<64x256xbf16>, vector<256x4xbf16>, vector<64x4xf32> -> vector<64x4xf32>
    %52 = arith.truncf %51 : vector<64x4xf32> to vector<64x4xbf16>
    %c6_47 = arith.constant 6 : index
    %c0_48 = arith.constant 0 : index
    %c0_49 = arith.constant 0 : index
    %53 = vector.load %arg3[%c6_47, %c0_48, %c0_49] : memref<9x4x16xbf16, #tpu.memory_space<vmem>>, vector<1x4x16xbf16>
    %54 = vector.shape_cast %53 : vector<1x4x16xbf16> to vector<4x16xbf16>
    %cst_50 = arith.constant dense<0.000000e+00> : vector<64x16xf32>
    %55 = tpu.matmul %52, %54, %cst_50 {dimension_numbers = #tpu.dot_dimension_numbers<[1], [0], [0], [1], [0, 0, 1, 1], [], []>} : vector<64x4xbf16>, vector<4x16xbf16>, vector<64x16xf32> -> vector<64x16xf32>
    %56 = arith.addf %48, %55 : vector<64x16xf32>
    %c7 = arith.constant 7 : index
    %c0_51 = arith.constant 0 : index
    %c0_52 = arith.constant 0 : index
    %57 = vector.load %arg2[%c7, %c0_51, %c0_52] : memref<9x64x256xbf16, #tpu.memory_space<vmem>>, vector<1x64x256xbf16>
    %58 = vector.shape_cast %57 : vector<1x64x256xbf16> to vector<64x256xbf16>
    %cst_53 = arith.constant dense<0.000000e+00> : vector<64x4xf32>
    %59 = tpu.matmul %58, %1, %cst_53 {dimension_numbers = #tpu.dot_dimension_numbers<[1], [0], [0], [1], [0, 0, 1, 1], [], []>} : vector<64x256xbf16>, vector<256x4xbf16>, vector<64x4xf32> -> vector<64x4xf32>
    %60 = arith.truncf %59 : vector<64x4xf32> to vector<64x4xbf16>
    %c7_54 = arith.constant 7 : index
    %c0_55 = arith.constant 0 : index
    %c0_56 = arith.constant 0 : index
    %61 = vector.load %arg3[%c7_54, %c0_55, %c0_56] : memref<9x4x16xbf16, #tpu.memory_space<vmem>>, vector<1x4x16xbf16>
    %62 = vector.shape_cast %61 : vector<1x4x16xbf16> to vector<4x16xbf16>
    %cst_57 = arith.constant dense<0.000000e+00> : vector<64x16xf32>
    %63 = tpu.matmul %60, %62, %cst_57 {dimension_numbers = #tpu.dot_dimension_numbers<[1], [0], [0], [1], [0, 0, 1, 1], [], []>} : vector<64x4xbf16>, vector<4x16xbf16>, vector<64x16xf32> -> vector<64x16xf32>
    %64 = arith.addf %56, %63 : vector<64x16xf32>
    %c8 = arith.constant 8 : index
    %c0_58 = arith.constant 0 : index
    %c0_59 = arith.constant 0 : index
    %65 = vector.load %arg2[%c8, %c0_58, %c0_59] : memref<9x64x256xbf16, #tpu.memory_space<vmem>>, vector<1x64x256xbf16>
    %66 = vector.shape_cast %65 : vector<1x64x256xbf16> to vector<64x256xbf16>
    %cst_60 = arith.constant dense<0.000000e+00> : vector<64x4xf32>
    %67 = tpu.matmul %66, %1, %cst_60 {dimension_numbers = #tpu.dot_dimension_numbers<[1], [0], [0], [1], [0, 0, 1, 1], [], []>} : vector<64x256xbf16>, vector<256x4xbf16>, vector<64x4xf32> -> vector<64x4xf32>
    %68 = arith.truncf %67 : vector<64x4xf32> to vector<64x4xbf16>
    %c8_61 = arith.constant 8 : index
    %c0_62 = arith.constant 0 : index
    %c0_63 = arith.constant 0 : index
    %69 = vector.load %arg3[%c8_61, %c0_62, %c0_63] : memref<9x4x16xbf16, #tpu.memory_space<vmem>>, vector<1x4x16xbf16>
    %70 = vector.shape_cast %69 : vector<1x4x16xbf16> to vector<4x16xbf16>
    %cst_64 = arith.constant dense<0.000000e+00> : vector<64x16xf32>
    %71 = tpu.matmul %68, %70, %cst_64 {dimension_numbers = #tpu.dot_dimension_numbers<[1], [0], [0], [1], [0, 0, 1, 1], [], []>} : vector<64x4xbf16>, vector<4x16xbf16>, vector<64x16xf32> -> vector<64x16xf32>
    %72 = arith.addf %64, %71 : vector<64x16xf32>
    %c0_65 = arith.constant 0 : index
    %c0_66 = arith.constant 0 : index
    %73 = vector.load %arg4[%c0_65, %c0_66] : memref<1x16xf32, #tpu.memory_space<vmem>>, vector<1x16xf32>
    %74 = vector.broadcast %73 : vector<1x16xf32> to vector<64x16xf32>
    %75 = arith.addf %72, %74 : vector<64x16xf32>
    %cst_67 = arith.constant 0.000000e+00 : f32
    %76 = vector.broadcast %cst_67 : f32 to vector<64x16xf32>
    %77 = arith.cmpf ogt, %75, %76 : vector<64x16xf32>
    %cst_68 = arith.constant 2.000000e-01 : f32
    %78 = vector.broadcast %cst_68 : f32 to vector<64x16xf32>
    %79 = arith.mulf %78, %75 : vector<64x16xf32>
    %80 = arith.select %77, %75, %79 : vector<64x16xi1>, vector<64x16xf32>
    %81 = arith.truncf %80 : vector<64x16xf32> to vector<64x16xbf16>
    %c0_69 = arith.constant 0 : index
    %c0_70 = arith.constant 0 : index
    %c0_71 = arith.constant 0 : index
    %82 = vector.load %arg5[%c0_69, %c0_70, %c0_71] : memref<9x16x64xbf16, #tpu.memory_space<vmem>>, vector<1x16x64xbf16>
    %83 = vector.shape_cast %82 : vector<1x16x64xbf16> to vector<16x64xbf16>
    %cst_72 = arith.constant dense<0.000000e+00> : vector<16x16xf32>
    %84 = tpu.matmul %83, %81, %cst_72 {dimension_numbers = #tpu.dot_dimension_numbers<[1], [0], [0], [1], [0, 0, 1, 1], [], []>} : vector<16x64xbf16>, vector<64x16xbf16>, vector<16x16xf32> -> vector<16x16xf32>
    %85 = arith.truncf %84 : vector<16x16xf32> to vector<16x16xbf16>
    %c0_73 = arith.constant 0 : index
    %c0_74 = arith.constant 0 : index
    %c0_75 = arith.constant 0 : index
    %86 = vector.load %arg6[%c0_73, %c0_74, %c0_75] : memref<9x16x32xbf16, #tpu.memory_space<vmem>>, vector<1x16x32xbf16>
    %87 = vector.shape_cast %86 : vector<1x16x32xbf16> to vector<16x32xbf16>
    %cst_76 = arith.constant dense<0.000000e+00> : vector<16x32xf32>
    %88 = tpu.matmul %85, %87, %cst_76 {dimension_numbers = #tpu.dot_dimension_numbers<[1], [0], [0], [1], [0, 0, 1, 1], [], []>} : vector<16x16xbf16>, vector<16x32xbf16>, vector<16x32xf32> -> vector<16x32xf32>
    %c1_77 = arith.constant 1 : index
    %c0_78 = arith.constant 0 : index
    %c0_79 = arith.constant 0 : index
    %89 = vector.load %arg5[%c1_77, %c0_78, %c0_79] : memref<9x16x64xbf16, #tpu.memory_space<vmem>>, vector<1x16x64xbf16>
    %90 = vector.shape_cast %89 : vector<1x16x64xbf16> to vector<16x64xbf16>
    %cst_80 = arith.constant dense<0.000000e+00> : vector<16x16xf32>
    %91 = tpu.matmul %90, %81, %cst_80 {dimension_numbers = #tpu.dot_dimension_numbers<[1], [0], [0], [1], [0, 0, 1, 1], [], []>} : vector<16x64xbf16>, vector<64x16xbf16>, vector<16x16xf32> -> vector<16x16xf32>
    %92 = arith.truncf %91 : vector<16x16xf32> to vector<16x16xbf16>
    %c1_81 = arith.constant 1 : index
    %c0_82 = arith.constant 0 : index
    %c0_83 = arith.constant 0 : index
    %93 = vector.load %arg6[%c1_81, %c0_82, %c0_83] : memref<9x16x32xbf16, #tpu.memory_space<vmem>>, vector<1x16x32xbf16>
    %94 = vector.shape_cast %93 : vector<1x16x32xbf16> to vector<16x32xbf16>
    %cst_84 = arith.constant dense<0.000000e+00> : vector<16x32xf32>
    %95 = tpu.matmul %92, %94, %cst_84 {dimension_numbers = #tpu.dot_dimension_numbers<[1], [0], [0], [1], [0, 0, 1, 1], [], []>} : vector<16x16xbf16>, vector<16x32xbf16>, vector<16x32xf32> -> vector<16x32xf32>
    %96 = arith.addf %88, %95 : vector<16x32xf32>
    %c2_85 = arith.constant 2 : index
    %c0_86 = arith.constant 0 : index
    %c0_87 = arith.constant 0 : index
    %97 = vector.load %arg5[%c2_85, %c0_86, %c0_87] : memref<9x16x64xbf16, #tpu.memory_space<vmem>>, vector<1x16x64xbf16>
    %98 = vector.shape_cast %97 : vector<1x16x64xbf16> to vector<16x64xbf16>
    %cst_88 = arith.constant dense<0.000000e+00> : vector<16x16xf32>
    %99 = tpu.matmul %98, %81, %cst_88 {dimension_numbers = #tpu.dot_dimension_numbers<[1], [0], [0], [1], [0, 0, 1, 1], [], []>} : vector<16x64xbf16>, vector<64x16xbf16>, vector<16x16xf32> -> vector<16x16xf32>
    %100 = arith.truncf %99 : vector<16x16xf32> to vector<16x16xbf16>
    %c2_89 = arith.constant 2 : index
    %c0_90 = arith.constant 0 : index
    %c0_91 = arith.constant 0 : index
    %101 = vector.load %arg6[%c2_89, %c0_90, %c0_91] : memref<9x16x32xbf16, #tpu.memory_space<vmem>>, vector<1x16x32xbf16>
    %102 = vector.shape_cast %101 : vector<1x16x32xbf16> to vector<16x32xbf16>
    %cst_92 = arith.constant dense<0.000000e+00> : vector<16x32xf32>
    %103 = tpu.matmul %100, %102, %cst_92 {dimension_numbers = #tpu.dot_dimension_numbers<[1], [0], [0], [1], [0, 0, 1, 1], [], []>} : vector<16x16xbf16>, vector<16x32xbf16>, vector<16x32xf32> -> vector<16x32xf32>
    %104 = arith.addf %96, %103 : vector<16x32xf32>
    %c3_93 = arith.constant 3 : index
    %c0_94 = arith.constant 0 : index
    %c0_95 = arith.constant 0 : index
    %105 = vector.load %arg5[%c3_93, %c0_94, %c0_95] : memref<9x16x64xbf16, #tpu.memory_space<vmem>>, vector<1x16x64xbf16>
    %106 = vector.shape_cast %105 : vector<1x16x64xbf16> to vector<16x64xbf16>
    %cst_96 = arith.constant dense<0.000000e+00> : vector<16x16xf32>
    %107 = tpu.matmul %106, %81, %cst_96 {dimension_numbers = #tpu.dot_dimension_numbers<[1], [0], [0], [1], [0, 0, 1, 1], [], []>} : vector<16x64xbf16>, vector<64x16xbf16>, vector<16x16xf32> -> vector<16x16xf32>
    %108 = arith.truncf %107 : vector<16x16xf32> to vector<16x16xbf16>
    %c3_97 = arith.constant 3 : index
    %c0_98 = arith.constant 0 : index
    %c0_99 = arith.constant 0 : index
    %109 = vector.load %arg6[%c3_97, %c0_98, %c0_99] : memref<9x16x32xbf16, #tpu.memory_space<vmem>>, vector<1x16x32xbf16>
    %110 = vector.shape_cast %109 : vector<1x16x32xbf16> to vector<16x32xbf16>
    %cst_100 = arith.constant dense<0.000000e+00> : vector<16x32xf32>
    %111 = tpu.matmul %108, %110, %cst_100 {dimension_numbers = #tpu.dot_dimension_numbers<[1], [0], [0], [1], [0, 0, 1, 1], [], []>} : vector<16x16xbf16>, vector<16x32xbf16>, vector<16x32xf32> -> vector<16x32xf32>
    %112 = arith.addf %104, %111 : vector<16x32xf32>
    %c4_101 = arith.constant 4 : index
    %c0_102 = arith.constant 0 : index
    %c0_103 = arith.constant 0 : index
    %113 = vector.load %arg5[%c4_101, %c0_102, %c0_103] : memref<9x16x64xbf16, #tpu.memory_space<vmem>>, vector<1x16x64xbf16>
    %114 = vector.shape_cast %113 : vector<1x16x64xbf16> to vector<16x64xbf16>
    %cst_104 = arith.constant dense<0.000000e+00> : vector<16x16xf32>
    %115 = tpu.matmul %114, %81, %cst_104 {dimension_numbers = #tpu.dot_dimension_numbers<[1], [0], [0], [1], [0, 0, 1, 1], [], []>} : vector<16x64xbf16>, vector<64x16xbf16>, vector<16x16xf32> -> vector<16x16xf32>
    %116 = arith.truncf %115 : vector<16x16xf32> to vector<16x16xbf16>
    %c4_105 = arith.constant 4 : index
    %c0_106 = arith.constant 0 : index
    %c0_107 = arith.constant 0 : index
    %117 = vector.load %arg6[%c4_105, %c0_106, %c0_107] : memref<9x16x32xbf16, #tpu.memory_space<vmem>>, vector<1x16x32xbf16>
    %118 = vector.shape_cast %117 : vector<1x16x32xbf16> to vector<16x32xbf16>
    %cst_108 = arith.constant dense<0.000000e+00> : vector<16x32xf32>
    %119 = tpu.matmul %116, %118, %cst_108 {dimension_numbers = #tpu.dot_dimension_numbers<[1], [0], [0], [1], [0, 0, 1, 1], [], []>} : vector<16x16xbf16>, vector<16x32xbf16>, vector<16x32xf32> -> vector<16x32xf32>
    %120 = arith.addf %112, %119 : vector<16x32xf32>
    %c5_109 = arith.constant 5 : index
    %c0_110 = arith.constant 0 : index
    %c0_111 = arith.constant 0 : index
    %121 = vector.load %arg5[%c5_109, %c0_110, %c0_111] : memref<9x16x64xbf16, #tpu.memory_space<vmem>>, vector<1x16x64xbf16>
    %122 = vector.shape_cast %121 : vector<1x16x64xbf16> to vector<16x64xbf16>
    %cst_112 = arith.constant dense<0.000000e+00> : vector<16x16xf32>
    %123 = tpu.matmul %122, %81, %cst_112 {dimension_numbers = #tpu.dot_dimension_numbers<[1], [0], [0], [1], [0, 0, 1, 1], [], []>} : vector<16x64xbf16>, vector<64x16xbf16>, vector<16x16xf32> -> vector<16x16xf32>
    %124 = arith.truncf %123 : vector<16x16xf32> to vector<16x16xbf16>
    %c5_113 = arith.constant 5 : index
    %c0_114 = arith.constant 0 : index
    %c0_115 = arith.constant 0 : index
    %125 = vector.load %arg6[%c5_113, %c0_114, %c0_115] : memref<9x16x32xbf16, #tpu.memory_space<vmem>>, vector<1x16x32xbf16>
    %126 = vector.shape_cast %125 : vector<1x16x32xbf16> to vector<16x32xbf16>
    %cst_116 = arith.constant dense<0.000000e+00> : vector<16x32xf32>
    %127 = tpu.matmul %124, %126, %cst_116 {dimension_numbers = #tpu.dot_dimension_numbers<[1], [0], [0], [1], [0, 0, 1, 1], [], []>} : vector<16x16xbf16>, vector<16x32xbf16>, vector<16x32xf32> -> vector<16x32xf32>
    %128 = arith.addf %120, %127 : vector<16x32xf32>
    %c6_117 = arith.constant 6 : index
    %c0_118 = arith.constant 0 : index
    %c0_119 = arith.constant 0 : index
    %129 = vector.load %arg5[%c6_117, %c0_118, %c0_119] : memref<9x16x64xbf16, #tpu.memory_space<vmem>>, vector<1x16x64xbf16>
    %130 = vector.shape_cast %129 : vector<1x16x64xbf16> to vector<16x64xbf16>
    %cst_120 = arith.constant dense<0.000000e+00> : vector<16x16xf32>
    %131 = tpu.matmul %130, %81, %cst_120 {dimension_numbers = #tpu.dot_dimension_numbers<[1], [0], [0], [1], [0, 0, 1, 1], [], []>} : vector<16x64xbf16>, vector<64x16xbf16>, vector<16x16xf32> -> vector<16x16xf32>
    %132 = arith.truncf %131 : vector<16x16xf32> to vector<16x16xbf16>
    %c6_121 = arith.constant 6 : index
    %c0_122 = arith.constant 0 : index
    %c0_123 = arith.constant 0 : index
    %133 = vector.load %arg6[%c6_121, %c0_122, %c0_123] : memref<9x16x32xbf16, #tpu.memory_space<vmem>>, vector<1x16x32xbf16>
    %134 = vector.shape_cast %133 : vector<1x16x32xbf16> to vector<16x32xbf16>
    %cst_124 = arith.constant dense<0.000000e+00> : vector<16x32xf32>
    %135 = tpu.matmul %132, %134, %cst_124 {dimension_numbers = #tpu.dot_dimension_numbers<[1], [0], [0], [1], [0, 0, 1, 1], [], []>} : vector<16x16xbf16>, vector<16x32xbf16>, vector<16x32xf32> -> vector<16x32xf32>
    %136 = arith.addf %128, %135 : vector<16x32xf32>
    %c7_125 = arith.constant 7 : index
    %c0_126 = arith.constant 0 : index
    %c0_127 = arith.constant 0 : index
    %137 = vector.load %arg5[%c7_125, %c0_126, %c0_127] : memref<9x16x64xbf16, #tpu.memory_space<vmem>>, vector<1x16x64xbf16>
    %138 = vector.shape_cast %137 : vector<1x16x64xbf16> to vector<16x64xbf16>
    %cst_128 = arith.constant dense<0.000000e+00> : vector<16x16xf32>
    %139 = tpu.matmul %138, %81, %cst_128 {dimension_numbers = #tpu.dot_dimension_numbers<[1], [0], [0], [1], [0, 0, 1, 1], [], []>} : vector<16x64xbf16>, vector<64x16xbf16>, vector<16x16xf32> -> vector<16x16xf32>
    %140 = arith.truncf %139 : vector<16x16xf32> to vector<16x16xbf16>
    %c7_129 = arith.constant 7 : index
    %c0_130 = arith.constant 0 : index
    %c0_131 = arith.constant 0 : index
    %141 = vector.load %arg6[%c7_129, %c0_130, %c0_131] : memref<9x16x32xbf16, #tpu.memory_space<vmem>>, vector<1x16x32xbf16>
    %142 = vector.shape_cast %141 : vector<1x16x32xbf16> to vector<16x32xbf16>
    %cst_132 = arith.constant dense<0.000000e+00> : vector<16x32xf32>
    %143 = tpu.matmul %140, %142, %cst_132 {dimension_numbers = #tpu.dot_dimension_numbers<[1], [0], [0], [1], [0, 0, 1, 1], [], []>} : vector<16x16xbf16>, vector<16x32xbf16>, vector<16x32xf32> -> vector<16x32xf32>
    %144 = arith.addf %136, %143 : vector<16x32xf32>
    %c8_133 = arith.constant 8 : index
    %c0_134 = arith.constant 0 : index
    %c0_135 = arith.constant 0 : index
    %145 = vector.load %arg5[%c8_133, %c0_134, %c0_135] : memref<9x16x64xbf16, #tpu.memory_space<vmem>>, vector<1x16x64xbf16>
    %146 = vector.shape_cast %145 : vector<1x16x64xbf16> to vector<16x64xbf16>
    %cst_136 = arith.constant dense<0.000000e+00> : vector<16x16xf32>
    %147 = tpu.matmul %146, %81, %cst_136 {dimension_numbers = #tpu.dot_dimension_numbers<[1], [0], [0], [1], [0, 0, 1, 1], [], []>} : vector<16x64xbf16>, vector<64x16xbf16>, vector<16x16xf32> -> vector<16x16xf32>
    %148 = arith.truncf %147 : vector<16x16xf32> to vector<16x16xbf16>
    %c8_137 = arith.constant 8 : index
    %c0_138 = arith.constant 0 : index
    %c0_139 = arith.constant 0 : index
    %149 = vector.load %arg6[%c8_137, %c0_138, %c0_139] : memref<9x16x32xbf16, #tpu.memory_space<vmem>>, vector<1x16x32xbf16>
    %150 = vector.shape_cast %149 : vector<1x16x32xbf16> to vector<16x32xbf16>
    %cst_140 = arith.constant dense<0.000000e+00> : vector<16x32xf32>
    %151 = tpu.matmul %148, %150, %cst_140 {dimension_numbers = #tpu.dot_dimension_numbers<[1], [0], [0], [1], [0, 0, 1, 1], [], []>} : vector<16x16xbf16>, vector<16x32xbf16>, vector<16x32xf32> -> vector<16x32xf32>
    %152 = arith.addf %144, %151 : vector<16x32xf32>
    %c0_141 = arith.constant 0 : index
    %c0_142 = arith.constant 0 : index
    %153 = vector.load %arg7[%c0_141, %c0_142] : memref<1x32xf32, #tpu.memory_space<vmem>>, vector<1x32xf32>
    %154 = vector.broadcast %153 : vector<1x32xf32> to vector<16x32xf32>
    %155 = arith.addf %152, %154 : vector<16x32xf32>
    %cst_143 = arith.constant 0.000000e+00 : f32
    %156 = vector.broadcast %cst_143 : f32 to vector<16x32xf32>
    %157 = arith.cmpf ogt, %155, %156 : vector<16x32xf32>
    %cst_144 = arith.constant 2.000000e-01 : f32
    %158 = vector.broadcast %cst_144 : f32 to vector<16x32xf32>
    %159 = arith.mulf %158, %155 : vector<16x32xf32>
    %160 = arith.select %157, %155, %159 : vector<16x32xi1>, vector<16x32xf32>
    %c0_145 = arith.constant 0 : index
    %c0_146 = arith.constant 0 : index
    %161 = vector.load %arg8[%c0_145, %c0_146] : memref<1x32xf32, #tpu.memory_space<vmem>>, vector<1x32xf32>
    %162 = vector.broadcast %161 : vector<1x32xf32> to vector<16x32xf32>
    %163 = arith.addf %160, %162 : vector<16x32xf32>
    %164 = arith.truncf %163 : vector<16x32xf32> to vector<16x32xbf16>
    %c0_147 = arith.constant 0 : index
    %c0_148 = arith.constant 0 : index
    %c0_149 = arith.constant 0 : index
    %165 = vector.load %arg9[%c0_147, %c0_148, %c0_149] : memref<9x4x16xbf16, #tpu.memory_space<vmem>>, vector<1x4x16xbf16>
    %166 = vector.shape_cast %165 : vector<1x4x16xbf16> to vector<4x16xbf16>
    %cst_150 = arith.constant dense<0.000000e+00> : vector<4x32xf32>
    %167 = tpu.matmul %166, %164, %cst_150 {dimension_numbers = #tpu.dot_dimension_numbers<[1], [0], [0], [1], [0, 0, 1, 1], [], []>} : vector<4x16xbf16>, vector<16x32xbf16>, vector<4x32xf32> -> vector<4x32xf32>
    %168 = arith.truncf %167 : vector<4x32xf32> to vector<4x32xbf16>
    %c0_151 = arith.constant 0 : index
    %c0_152 = arith.constant 0 : index
    %c0_153 = arith.constant 0 : index
    %169 = vector.load %arg10[%c0_151, %c0_152, %c0_153] : memref<9x32x64xbf16, #tpu.memory_space<vmem>>, vector<1x32x64xbf16>
    %170 = vector.shape_cast %169 : vector<1x32x64xbf16> to vector<32x64xbf16>
    %cst_154 = arith.constant dense<0.000000e+00> : vector<4x64xf32>
    %171 = tpu.matmul %168, %170, %cst_154 {dimension_numbers = #tpu.dot_dimension_numbers<[1], [0], [0], [1], [0, 0, 1, 1], [], []>} : vector<4x32xbf16>, vector<32x64xbf16>, vector<4x64xf32> -> vector<4x64xf32>
    %c1_155 = arith.constant 1 : index
    %c0_156 = arith.constant 0 : index
    %c0_157 = arith.constant 0 : index
    %172 = vector.load %arg9[%c1_155, %c0_156, %c0_157] : memref<9x4x16xbf16, #tpu.memory_space<vmem>>, vector<1x4x16xbf16>
    %173 = vector.shape_cast %172 : vector<1x4x16xbf16> to vector<4x16xbf16>
    %cst_158 = arith.constant dense<0.000000e+00> : vector<4x32xf32>
    %174 = tpu.matmul %173, %164, %cst_158 {dimension_numbers = #tpu.dot_dimension_numbers<[1], [0], [0], [1], [0, 0, 1, 1], [], []>} : vector<4x16xbf16>, vector<16x32xbf16>, vector<4x32xf32> -> vector<4x32xf32>
    %175 = arith.truncf %174 : vector<4x32xf32> to vector<4x32xbf16>
    %c1_159 = arith.constant 1 : index
    %c0_160 = arith.constant 0 : index
    %c0_161 = arith.constant 0 : index
    %176 = vector.load %arg10[%c1_159, %c0_160, %c0_161] : memref<9x32x64xbf16, #tpu.memory_space<vmem>>, vector<1x32x64xbf16>
    %177 = vector.shape_cast %176 : vector<1x32x64xbf16> to vector<32x64xbf16>
    %cst_162 = arith.constant dense<0.000000e+00> : vector<4x64xf32>
    %178 = tpu.matmul %175, %177, %cst_162 {dimension_numbers = #tpu.dot_dimension_numbers<[1], [0], [0], [1], [0, 0, 1, 1], [], []>} : vector<4x32xbf16>, vector<32x64xbf16>, vector<4x64xf32> -> vector<4x64xf32>
    %179 = arith.addf %171, %178 : vector<4x64xf32>
    %c2_163 = arith.constant 2 : index
    %c0_164 = arith.constant 0 : index
    %c0_165 = arith.constant 0 : index
    %180 = vector.load %arg9[%c2_163, %c0_164, %c0_165] : memref<9x4x16xbf16, #tpu.memory_space<vmem>>, vector<1x4x16xbf16>
    %181 = vector.shape_cast %180 : vector<1x4x16xbf16> to vector<4x16xbf16>
    %cst_166 = arith.constant dense<0.000000e+00> : vector<4x32xf32>
    %182 = tpu.matmul %181, %164, %cst_166 {dimension_numbers = #tpu.dot_dimension_numbers<[1], [0], [0], [1], [0, 0, 1, 1], [], []>} : vector<4x16xbf16>, vector<16x32xbf16>, vector<4x32xf32> -> vector<4x32xf32>
    %183 = arith.truncf %182 : vector<4x32xf32> to vector<4x32xbf16>
    %c2_167 = arith.constant 2 : index
    %c0_168 = arith.constant 0 : index
    %c0_169 = arith.constant 0 : index
    %184 = vector.load %arg10[%c2_167, %c0_168, %c0_169] : memref<9x32x64xbf16, #tpu.memory_space<vmem>>, vector<1x32x64xbf16>
    %185 = vector.shape_cast %184 : vector<1x32x64xbf16> to vector<32x64xbf16>
    %cst_170 = arith.constant dense<0.000000e+00> : vector<4x64xf32>
    %186 = tpu.matmul %183, %185, %cst_170 {dimension_numbers = #tpu.dot_dimension_numbers<[1], [0], [0], [1], [0, 0, 1, 1], [], []>} : vector<4x32xbf16>, vector<32x64xbf16>, vector<4x64xf32> -> vector<4x64xf32>
    %187 = arith.addf %179, %186 : vector<4x64xf32>
    %c3_171 = arith.constant 3 : index
    %c0_172 = arith.constant 0 : index
    %c0_173 = arith.constant 0 : index
    %188 = vector.load %arg9[%c3_171, %c0_172, %c0_173] : memref<9x4x16xbf16, #tpu.memory_space<vmem>>, vector<1x4x16xbf16>
    %189 = vector.shape_cast %188 : vector<1x4x16xbf16> to vector<4x16xbf16>
    %cst_174 = arith.constant dense<0.000000e+00> : vector<4x32xf32>
    %190 = tpu.matmul %189, %164, %cst_174 {dimension_numbers = #tpu.dot_dimension_numbers<[1], [0], [0], [1], [0, 0, 1, 1], [], []>} : vector<4x16xbf16>, vector<16x32xbf16>, vector<4x32xf32> -> vector<4x32xf32>
    %191 = arith.truncf %190 : vector<4x32xf32> to vector<4x32xbf16>
    %c3_175 = arith.constant 3 : index
    %c0_176 = arith.constant 0 : index
    %c0_177 = arith.constant 0 : index
    %192 = vector.load %arg10[%c3_175, %c0_176, %c0_177] : memref<9x32x64xbf16, #tpu.memory_space<vmem>>, vector<1x32x64xbf16>
    %193 = vector.shape_cast %192 : vector<1x32x64xbf16> to vector<32x64xbf16>
    %cst_178 = arith.constant dense<0.000000e+00> : vector<4x64xf32>
    %194 = tpu.matmul %191, %193, %cst_178 {dimension_numbers = #tpu.dot_dimension_numbers<[1], [0], [0], [1], [0, 0, 1, 1], [], []>} : vector<4x32xbf16>, vector<32x64xbf16>, vector<4x64xf32> -> vector<4x64xf32>
    %195 = arith.addf %187, %194 : vector<4x64xf32>
    %c4_179 = arith.constant 4 : index
    %c0_180 = arith.constant 0 : index
    %c0_181 = arith.constant 0 : index
    %196 = vector.load %arg9[%c4_179, %c0_180, %c0_181] : memref<9x4x16xbf16, #tpu.memory_space<vmem>>, vector<1x4x16xbf16>
    %197 = vector.shape_cast %196 : vector<1x4x16xbf16> to vector<4x16xbf16>
    %cst_182 = arith.constant dense<0.000000e+00> : vector<4x32xf32>
    %198 = tpu.matmul %197, %164, %cst_182 {dimension_numbers = #tpu.dot_dimension_numbers<[1], [0], [0], [1], [0, 0, 1, 1], [], []>} : vector<4x16xbf16>, vector<16x32xbf16>, vector<4x32xf32> -> vector<4x32xf32>
    %199 = arith.truncf %198 : vector<4x32xf32> to vector<4x32xbf16>
    %c4_183 = arith.constant 4 : index
    %c0_184 = arith.constant 0 : index
    %c0_185 = arith.constant 0 : index
    %200 = vector.load %arg10[%c4_183, %c0_184, %c0_185] : memref<9x32x64xbf16, #tpu.memory_space<vmem>>, vector<1x32x64xbf16>
    %201 = vector.shape_cast %200 : vector<1x32x64xbf16> to vector<32x64xbf16>
    %cst_186 = arith.constant dense<0.000000e+00> : vector<4x64xf32>
    %202 = tpu.matmul %199, %201, %cst_186 {dimension_numbers = #tpu.dot_dimension_numbers<[1], [0], [0], [1], [0, 0, 1, 1], [], []>} : vector<4x32xbf16>, vector<32x64xbf16>, vector<4x64xf32> -> vector<4x64xf32>
    %203 = arith.addf %195, %202 : vector<4x64xf32>
    %c5_187 = arith.constant 5 : index
    %c0_188 = arith.constant 0 : index
    %c0_189 = arith.constant 0 : index
    %204 = vector.load %arg9[%c5_187, %c0_188, %c0_189] : memref<9x4x16xbf16, #tpu.memory_space<vmem>>, vector<1x4x16xbf16>
    %205 = vector.shape_cast %204 : vector<1x4x16xbf16> to vector<4x16xbf16>
    %cst_190 = arith.constant dense<0.000000e+00> : vector<4x32xf32>
    %206 = tpu.matmul %205, %164, %cst_190 {dimension_numbers = #tpu.dot_dimension_numbers<[1], [0], [0], [1], [0, 0, 1, 1], [], []>} : vector<4x16xbf16>, vector<16x32xbf16>, vector<4x32xf32> -> vector<4x32xf32>
    %207 = arith.truncf %206 : vector<4x32xf32> to vector<4x32xbf16>
    %c5_191 = arith.constant 5 : index
    %c0_192 = arith.constant 0 : index
    %c0_193 = arith.constant 0 : index
    %208 = vector.load %arg10[%c5_191, %c0_192, %c0_193] : memref<9x32x64xbf16, #tpu.memory_space<vmem>>, vector<1x32x64xbf16>
    %209 = vector.shape_cast %208 : vector<1x32x64xbf16> to vector<32x64xbf16>
    %cst_194 = arith.constant dense<0.000000e+00> : vector<4x64xf32>
    %210 = tpu.matmul %207, %209, %cst_194 {dimension_numbers = #tpu.dot_dimension_numbers<[1], [0], [0], [1], [0, 0, 1, 1], [], []>} : vector<4x32xbf16>, vector<32x64xbf16>, vector<4x64xf32> -> vector<4x64xf32>
    %211 = arith.addf %203, %210 : vector<4x64xf32>
    %c6_195 = arith.constant 6 : index
    %c0_196 = arith.constant 0 : index
    %c0_197 = arith.constant 0 : index
    %212 = vector.load %arg9[%c6_195, %c0_196, %c0_197] : memref<9x4x16xbf16, #tpu.memory_space<vmem>>, vector<1x4x16xbf16>
    %213 = vector.shape_cast %212 : vector<1x4x16xbf16> to vector<4x16xbf16>
    %cst_198 = arith.constant dense<0.000000e+00> : vector<4x32xf32>
    %214 = tpu.matmul %213, %164, %cst_198 {dimension_numbers = #tpu.dot_dimension_numbers<[1], [0], [0], [1], [0, 0, 1, 1], [], []>} : vector<4x16xbf16>, vector<16x32xbf16>, vector<4x32xf32> -> vector<4x32xf32>
    %215 = arith.truncf %214 : vector<4x32xf32> to vector<4x32xbf16>
    %c6_199 = arith.constant 6 : index
    %c0_200 = arith.constant 0 : index
    %c0_201 = arith.constant 0 : index
    %216 = vector.load %arg10[%c6_199, %c0_200, %c0_201] : memref<9x32x64xbf16, #tpu.memory_space<vmem>>, vector<1x32x64xbf16>
    %217 = vector.shape_cast %216 : vector<1x32x64xbf16> to vector<32x64xbf16>
    %cst_202 = arith.constant dense<0.000000e+00> : vector<4x64xf32>
    %218 = tpu.matmul %215, %217, %cst_202 {dimension_numbers = #tpu.dot_dimension_numbers<[1], [0], [0], [1], [0, 0, 1, 1], [], []>} : vector<4x32xbf16>, vector<32x64xbf16>, vector<4x64xf32> -> vector<4x64xf32>
    %219 = arith.addf %211, %218 : vector<4x64xf32>
    %c7_203 = arith.constant 7 : index
    %c0_204 = arith.constant 0 : index
    %c0_205 = arith.constant 0 : index
    %220 = vector.load %arg9[%c7_203, %c0_204, %c0_205] : memref<9x4x16xbf16, #tpu.memory_space<vmem>>, vector<1x4x16xbf16>
    %221 = vector.shape_cast %220 : vector<1x4x16xbf16> to vector<4x16xbf16>
    %cst_206 = arith.constant dense<0.000000e+00> : vector<4x32xf32>
    %222 = tpu.matmul %221, %164, %cst_206 {dimension_numbers = #tpu.dot_dimension_numbers<[1], [0], [0], [1], [0, 0, 1, 1], [], []>} : vector<4x16xbf16>, vector<16x32xbf16>, vector<4x32xf32> -> vector<4x32xf32>
    %223 = arith.truncf %222 : vector<4x32xf32> to vector<4x32xbf16>
    %c7_207 = arith.constant 7 : index
    %c0_208 = arith.constant 0 : index
    %c0_209 = arith.constant 0 : index
    %224 = vector.load %arg10[%c7_207, %c0_208, %c0_209] : memref<9x32x64xbf16, #tpu.memory_space<vmem>>, vector<1x32x64xbf16>
    %225 = vector.shape_cast %224 : vector<1x32x64xbf16> to vector<32x64xbf16>
    %cst_210 = arith.constant dense<0.000000e+00> : vector<4x64xf32>
    %226 = tpu.matmul %223, %225, %cst_210 {dimension_numbers = #tpu.dot_dimension_numbers<[1], [0], [0], [1], [0, 0, 1, 1], [], []>} : vector<4x32xbf16>, vector<32x64xbf16>, vector<4x64xf32> -> vector<4x64xf32>
    %227 = arith.addf %219, %226 : vector<4x64xf32>
    %c8_211 = arith.constant 8 : index
    %c0_212 = arith.constant 0 : index
    %c0_213 = arith.constant 0 : index
    %228 = vector.load %arg9[%c8_211, %c0_212, %c0_213] : memref<9x4x16xbf16, #tpu.memory_space<vmem>>, vector<1x4x16xbf16>
    %229 = vector.shape_cast %228 : vector<1x4x16xbf16> to vector<4x16xbf16>
    %cst_214 = arith.constant dense<0.000000e+00> : vector<4x32xf32>
    %230 = tpu.matmul %229, %164, %cst_214 {dimension_numbers = #tpu.dot_dimension_numbers<[1], [0], [0], [1], [0, 0, 1, 1], [], []>} : vector<4x16xbf16>, vector<16x32xbf16>, vector<4x32xf32> -> vector<4x32xf32>
    %231 = arith.truncf %230 : vector<4x32xf32> to vector<4x32xbf16>
    %c8_215 = arith.constant 8 : index
    %c0_216 = arith.constant 0 : index
    %c0_217 = arith.constant 0 : index
    %232 = vector.load %arg10[%c8_215, %c0_216, %c0_217] : memref<9x32x64xbf16, #tpu.memory_space<vmem>>, vector<1x32x64xbf16>
    %233 = vector.shape_cast %232 : vector<1x32x64xbf16> to vector<32x64xbf16>
    %cst_218 = arith.constant dense<0.000000e+00> : vector<4x64xf32>
    %234 = tpu.matmul %231, %233, %cst_218 {dimension_numbers = #tpu.dot_dimension_numbers<[1], [0], [0], [1], [0, 0, 1, 1], [], []>} : vector<4x32xbf16>, vector<32x64xbf16>, vector<4x64xf32> -> vector<4x64xf32>
    %235 = arith.addf %227, %234 : vector<4x64xf32>
    %c0_219 = arith.constant 0 : index
    %c0_220 = arith.constant 0 : index
    %236 = vector.load %arg11[%c0_219, %c0_220] : memref<1x64xf32, #tpu.memory_space<vmem>>, vector<1x64xf32>
    %237 = vector.broadcast %236 : vector<1x64xf32> to vector<4x64xf32>
    %238 = arith.addf %235, %237 : vector<4x64xf32>
    %cst_221 = arith.constant 0.000000e+00 : f32
    %239 = vector.broadcast %cst_221 : f32 to vector<4x64xf32>
    %240 = arith.cmpf ogt, %238, %239 : vector<4x64xf32>
    %cst_222 = arith.constant 2.000000e-01 : f32
    %241 = vector.broadcast %cst_222 : f32 to vector<4x64xf32>
    %242 = arith.mulf %241, %238 : vector<4x64xf32>
    %243 = arith.select %240, %238, %242 : vector<4x64xi1>, vector<4x64xf32>
    %c0_223 = arith.constant 0 : index
    %c0_224 = arith.constant 0 : index
    %244 = vector.load %arg12[%c0_223, %c0_224] : memref<1x64xf32, #tpu.memory_space<vmem>>, vector<1x64xf32>
    %245 = vector.broadcast %244 : vector<1x64xf32> to vector<4x64xf32>
    %246 = arith.addf %243, %245 : vector<4x64xf32>
    %247 = arith.truncf %246 : vector<4x64xf32> to vector<4x64xbf16>
    %c0_225 = arith.constant 0 : index
    %c0_226 = arith.constant 0 : index
    %c0_227 = arith.constant 0 : index
    %248 = vector.load %arg13[%c0_225, %c0_226, %c0_227] : memref<9x1x4xbf16, #tpu.memory_space<vmem>>, vector<1x1x4xbf16>
    %249 = vector.shape_cast %248 : vector<1x1x4xbf16> to vector<1x4xbf16>
    %cst_228 = arith.constant dense<0.000000e+00> : vector<1x64xf32>
    %250 = tpu.matmul %249, %247, %cst_228 {dimension_numbers = #tpu.dot_dimension_numbers<[1], [0], [0], [1], [0, 0, 1, 1], [], []>} : vector<1x4xbf16>, vector<4x64xbf16>, vector<1x64xf32> -> vector<1x64xf32>
    %251 = arith.truncf %250 : vector<1x64xf32> to vector<1x64xbf16>
    %c0_229 = arith.constant 0 : index
    %c0_230 = arith.constant 0 : index
    %c0_231 = arith.constant 0 : index
    %252 = vector.load %arg14[%c0_229, %c0_230, %c0_231] : memref<9x64x128xbf16, #tpu.memory_space<vmem>>, vector<1x64x128xbf16>
    %253 = vector.shape_cast %252 : vector<1x64x128xbf16> to vector<64x128xbf16>
    %cst_232 = arith.constant dense<0.000000e+00> : vector<1x128xf32>
    %254 = tpu.matmul %251, %253, %cst_232 {dimension_numbers = #tpu.dot_dimension_numbers<[1], [0], [0], [1], [0, 0, 1, 1], [], []>} : vector<1x64xbf16>, vector<64x128xbf16>, vector<1x128xf32> -> vector<1x128xf32>
    %c1_233 = arith.constant 1 : index
    %c0_234 = arith.constant 0 : index
    %c0_235 = arith.constant 0 : index
    %255 = vector.load %arg13[%c1_233, %c0_234, %c0_235] : memref<9x1x4xbf16, #tpu.memory_space<vmem>>, vector<1x1x4xbf16>
    %256 = vector.shape_cast %255 : vector<1x1x4xbf16> to vector<1x4xbf16>
    %cst_236 = arith.constant dense<0.000000e+00> : vector<1x64xf32>
    %257 = tpu.matmul %256, %247, %cst_236 {dimension_numbers = #tpu.dot_dimension_numbers<[1], [0], [0], [1], [0, 0, 1, 1], [], []>} : vector<1x4xbf16>, vector<4x64xbf16>, vector<1x64xf32> -> vector<1x64xf32>
    %258 = arith.truncf %257 : vector<1x64xf32> to vector<1x64xbf16>
    %c1_237 = arith.constant 1 : index
    %c0_238 = arith.constant 0 : index
    %c0_239 = arith.constant 0 : index
    %259 = vector.load %arg14[%c1_237, %c0_238, %c0_239] : memref<9x64x128xbf16, #tpu.memory_space<vmem>>, vector<1x64x128xbf16>
    %260 = vector.shape_cast %259 : vector<1x64x128xbf16> to vector<64x128xbf16>
    %cst_240 = arith.constant dense<0.000000e+00> : vector<1x128xf32>
    %261 = tpu.matmul %258, %260, %cst_240 {dimension_numbers = #tpu.dot_dimension_numbers<[1], [0], [0], [1], [0, 0, 1, 1], [], []>} : vector<1x64xbf16>, vector<64x128xbf16>, vector<1x128xf32> -> vector<1x128xf32>
    %262 = arith.addf %254, %261 : vector<1x128xf32>
    %c2_241 = arith.constant 2 : index
    %c0_242 = arith.constant 0 : index
    %c0_243 = arith.constant 0 : index
    %263 = vector.load %arg13[%c2_241, %c0_242, %c0_243] : memref<9x1x4xbf16, #tpu.memory_space<vmem>>, vector<1x1x4xbf16>
    %264 = vector.shape_cast %263 : vector<1x1x4xbf16> to vector<1x4xbf16>
    %cst_244 = arith.constant dense<0.000000e+00> : vector<1x64xf32>
    %265 = tpu.matmul %264, %247, %cst_244 {dimension_numbers = #tpu.dot_dimension_numbers<[1], [0], [0], [1], [0, 0, 1, 1], [], []>} : vector<1x4xbf16>, vector<4x64xbf16>, vector<1x64xf32> -> vector<1x64xf32>
    %266 = arith.truncf %265 : vector<1x64xf32> to vector<1x64xbf16>
    %c2_245 = arith.constant 2 : index
    %c0_246 = arith.constant 0 : index
    %c0_247 = arith.constant 0 : index
    %267 = vector.load %arg14[%c2_245, %c0_246, %c0_247] : memref<9x64x128xbf16, #tpu.memory_space<vmem>>, vector<1x64x128xbf16>
    %268 = vector.shape_cast %267 : vector<1x64x128xbf16> to vector<64x128xbf16>
    %cst_248 = arith.constant dense<0.000000e+00> : vector<1x128xf32>
    %269 = tpu.matmul %266, %268, %cst_248 {dimension_numbers = #tpu.dot_dimension_numbers<[1], [0], [0], [1], [0, 0, 1, 1], [], []>} : vector<1x64xbf16>, vector<64x128xbf16>, vector<1x128xf32> -> vector<1x128xf32>
    %270 = arith.addf %262, %269 : vector<1x128xf32>
    %c3_249 = arith.constant 3 : index
    %c0_250 = arith.constant 0 : index
    %c0_251 = arith.constant 0 : index
    %271 = vector.load %arg13[%c3_249, %c0_250, %c0_251] : memref<9x1x4xbf16, #tpu.memory_space<vmem>>, vector<1x1x4xbf16>
    %272 = vector.shape_cast %271 : vector<1x1x4xbf16> to vector<1x4xbf16>
    %cst_252 = arith.constant dense<0.000000e+00> : vector<1x64xf32>
    %273 = tpu.matmul %272, %247, %cst_252 {dimension_numbers = #tpu.dot_dimension_numbers<[1], [0], [0], [1], [0, 0, 1, 1], [], []>} : vector<1x4xbf16>, vector<4x64xbf16>, vector<1x64xf32> -> vector<1x64xf32>
    %274 = arith.truncf %273 : vector<1x64xf32> to vector<1x64xbf16>
    %c3_253 = arith.constant 3 : index
    %c0_254 = arith.constant 0 : index
    %c0_255 = arith.constant 0 : index
    %275 = vector.load %arg14[%c3_253, %c0_254, %c0_255] : memref<9x64x128xbf16, #tpu.memory_space<vmem>>, vector<1x64x128xbf16>
    %276 = vector.shape_cast %275 : vector<1x64x128xbf16> to vector<64x128xbf16>
    %cst_256 = arith.constant dense<0.000000e+00> : vector<1x128xf32>
    %277 = tpu.matmul %274, %276, %cst_256 {dimension_numbers = #tpu.dot_dimension_numbers<[1], [0], [0], [1], [0, 0, 1, 1], [], []>} : vector<1x64xbf16>, vector<64x128xbf16>, vector<1x128xf32> -> vector<1x128xf32>
    %278 = arith.addf %270, %277 : vector<1x128xf32>
    %c4_257 = arith.constant 4 : index
    %c0_258 = arith.constant 0 : index
    %c0_259 = arith.constant 0 : index
    %279 = vector.load %arg13[%c4_257, %c0_258, %c0_259] : memref<9x1x4xbf16, #tpu.memory_space<vmem>>, vector<1x1x4xbf16>
    %280 = vector.shape_cast %279 : vector<1x1x4xbf16> to vector<1x4xbf16>
    %cst_260 = arith.constant dense<0.000000e+00> : vector<1x64xf32>
    %281 = tpu.matmul %280, %247, %cst_260 {dimension_numbers = #tpu.dot_dimension_numbers<[1], [0], [0], [1], [0, 0, 1, 1], [], []>} : vector<1x4xbf16>, vector<4x64xbf16>, vector<1x64xf32> -> vector<1x64xf32>
    %282 = arith.truncf %281 : vector<1x64xf32> to vector<1x64xbf16>
    %c4_261 = arith.constant 4 : index
    %c0_262 = arith.constant 0 : index
    %c0_263 = arith.constant 0 : index
    %283 = vector.load %arg14[%c4_261, %c0_262, %c0_263] : memref<9x64x128xbf16, #tpu.memory_space<vmem>>, vector<1x64x128xbf16>
    %284 = vector.shape_cast %283 : vector<1x64x128xbf16> to vector<64x128xbf16>
    %cst_264 = arith.constant dense<0.000000e+00> : vector<1x128xf32>
    %285 = tpu.matmul %282, %284, %cst_264 {dimension_numbers = #tpu.dot_dimension_numbers<[1], [0], [0], [1], [0, 0, 1, 1], [], []>} : vector<1x64xbf16>, vector<64x128xbf16>, vector<1x128xf32> -> vector<1x128xf32>
    %286 = arith.addf %278, %285 : vector<1x128xf32>
    %c5_265 = arith.constant 5 : index
    %c0_266 = arith.constant 0 : index
    %c0_267 = arith.constant 0 : index
    %287 = vector.load %arg13[%c5_265, %c0_266, %c0_267] : memref<9x1x4xbf16, #tpu.memory_space<vmem>>, vector<1x1x4xbf16>
    %288 = vector.shape_cast %287 : vector<1x1x4xbf16> to vector<1x4xbf16>
    %cst_268 = arith.constant dense<0.000000e+00> : vector<1x64xf32>
    %289 = tpu.matmul %288, %247, %cst_268 {dimension_numbers = #tpu.dot_dimension_numbers<[1], [0], [0], [1], [0, 0, 1, 1], [], []>} : vector<1x4xbf16>, vector<4x64xbf16>, vector<1x64xf32> -> vector<1x64xf32>
    %290 = arith.truncf %289 : vector<1x64xf32> to vector<1x64xbf16>
    %c5_269 = arith.constant 5 : index
    %c0_270 = arith.constant 0 : index
    %c0_271 = arith.constant 0 : index
    %291 = vector.load %arg14[%c5_269, %c0_270, %c0_271] : memref<9x64x128xbf16, #tpu.memory_space<vmem>>, vector<1x64x128xbf16>
    %292 = vector.shape_cast %291 : vector<1x64x128xbf16> to vector<64x128xbf16>
    %cst_272 = arith.constant dense<0.000000e+00> : vector<1x128xf32>
    %293 = tpu.matmul %290, %292, %cst_272 {dimension_numbers = #tpu.dot_dimension_numbers<[1], [0], [0], [1], [0, 0, 1, 1], [], []>} : vector<1x64xbf16>, vector<64x128xbf16>, vector<1x128xf32> -> vector<1x128xf32>
    %294 = arith.addf %286, %293 : vector<1x128xf32>
    %c6_273 = arith.constant 6 : index
    %c0_274 = arith.constant 0 : index
    %c0_275 = arith.constant 0 : index
    %295 = vector.load %arg13[%c6_273, %c0_274, %c0_275] : memref<9x1x4xbf16, #tpu.memory_space<vmem>>, vector<1x1x4xbf16>
    %296 = vector.shape_cast %295 : vector<1x1x4xbf16> to vector<1x4xbf16>
    %cst_276 = arith.constant dense<0.000000e+00> : vector<1x64xf32>
    %297 = tpu.matmul %296, %247, %cst_276 {dimension_numbers = #tpu.dot_dimension_numbers<[1], [0], [0], [1], [0, 0, 1, 1], [], []>} : vector<1x4xbf16>, vector<4x64xbf16>, vector<1x64xf32> -> vector<1x64xf32>
    %298 = arith.truncf %297 : vector<1x64xf32> to vector<1x64xbf16>
    %c6_277 = arith.constant 6 : index
    %c0_278 = arith.constant 0 : index
    %c0_279 = arith.constant 0 : index
    %299 = vector.load %arg14[%c6_277, %c0_278, %c0_279] : memref<9x64x128xbf16, #tpu.memory_space<vmem>>, vector<1x64x128xbf16>
    %300 = vector.shape_cast %299 : vector<1x64x128xbf16> to vector<64x128xbf16>
    %cst_280 = arith.constant dense<0.000000e+00> : vector<1x128xf32>
    %301 = tpu.matmul %298, %300, %cst_280 {dimension_numbers = #tpu.dot_dimension_numbers<[1], [0], [0], [1], [0, 0, 1, 1], [], []>} : vector<1x64xbf16>, vector<64x128xbf16>, vector<1x128xf32> -> vector<1x128xf32>
    %302 = arith.addf %294, %301 : vector<1x128xf32>
    %c7_281 = arith.constant 7 : index
    %c0_282 = arith.constant 0 : index
    %c0_283 = arith.constant 0 : index
    %303 = vector.load %arg13[%c7_281, %c0_282, %c0_283] : memref<9x1x4xbf16, #tpu.memory_space<vmem>>, vector<1x1x4xbf16>
    %304 = vector.shape_cast %303 : vector<1x1x4xbf16> to vector<1x4xbf16>
    %cst_284 = arith.constant dense<0.000000e+00> : vector<1x64xf32>
    %305 = tpu.matmul %304, %247, %cst_284 {dimension_numbers = #tpu.dot_dimension_numbers<[1], [0], [0], [1], [0, 0, 1, 1], [], []>} : vector<1x4xbf16>, vector<4x64xbf16>, vector<1x64xf32> -> vector<1x64xf32>
    %306 = arith.truncf %305 : vector<1x64xf32> to vector<1x64xbf16>
    %c7_285 = arith.constant 7 : index
    %c0_286 = arith.constant 0 : index
    %c0_287 = arith.constant 0 : index
    %307 = vector.load %arg14[%c7_285, %c0_286, %c0_287] : memref<9x64x128xbf16, #tpu.memory_space<vmem>>, vector<1x64x128xbf16>
    %308 = vector.shape_cast %307 : vector<1x64x128xbf16> to vector<64x128xbf16>
    %cst_288 = arith.constant dense<0.000000e+00> : vector<1x128xf32>
    %309 = tpu.matmul %306, %308, %cst_288 {dimension_numbers = #tpu.dot_dimension_numbers<[1], [0], [0], [1], [0, 0, 1, 1], [], []>} : vector<1x64xbf16>, vector<64x128xbf16>, vector<1x128xf32> -> vector<1x128xf32>
    %310 = arith.addf %302, %309 : vector<1x128xf32>
    %c8_289 = arith.constant 8 : index
    %c0_290 = arith.constant 0 : index
    %c0_291 = arith.constant 0 : index
    %311 = vector.load %arg13[%c8_289, %c0_290, %c0_291] : memref<9x1x4xbf16, #tpu.memory_space<vmem>>, vector<1x1x4xbf16>
    %312 = vector.shape_cast %311 : vector<1x1x4xbf16> to vector<1x4xbf16>
    %cst_292 = arith.constant dense<0.000000e+00> : vector<1x64xf32>
    %313 = tpu.matmul %312, %247, %cst_292 {dimension_numbers = #tpu.dot_dimension_numbers<[1], [0], [0], [1], [0, 0, 1, 1], [], []>} : vector<1x4xbf16>, vector<4x64xbf16>, vector<1x64xf32> -> vector<1x64xf32>
    %314 = arith.truncf %313 : vector<1x64xf32> to vector<1x64xbf16>
    %c8_293 = arith.constant 8 : index
    %c0_294 = arith.constant 0 : index
    %c0_295 = arith.constant 0 : index
    %315 = vector.load %arg14[%c8_293, %c0_294, %c0_295] : memref<9x64x128xbf16, #tpu.memory_space<vmem>>, vector<1x64x128xbf16>
    %316 = vector.shape_cast %315 : vector<1x64x128xbf16> to vector<64x128xbf16>
    %cst_296 = arith.constant dense<0.000000e+00> : vector<1x128xf32>
    %317 = tpu.matmul %314, %316, %cst_296 {dimension_numbers = #tpu.dot_dimension_numbers<[1], [0], [0], [1], [0, 0, 1, 1], [], []>} : vector<1x64xbf16>, vector<64x128xbf16>, vector<1x128xf32> -> vector<1x128xf32>
    %318 = arith.addf %310, %317 : vector<1x128xf32>
    %c0_297 = arith.constant 0 : index
    %c0_298 = arith.constant 0 : index
    %319 = vector.load %arg15[%c0_297, %c0_298] : memref<1x128xf32, #tpu.memory_space<vmem>>, vector<1x128xf32>
    %320 = arith.addf %318, %319 : vector<1x128xf32>
    %cst_299 = arith.constant 0.000000e+00 : f32
    %321 = vector.broadcast %cst_299 : f32 to vector<1x128xf32>
    %322 = arith.cmpf ogt, %320, %321 : vector<1x128xf32>
    %cst_300 = arith.constant 2.000000e-01 : f32
    %323 = vector.broadcast %cst_300 : f32 to vector<1x128xf32>
    %324 = arith.mulf %323, %320 : vector<1x128xf32>
    %325 = arith.select %322, %320, %324 : vector<1x128xi1>, vector<1x128xf32>
    %c0_301 = arith.constant 0 : index
    %c0_302 = arith.constant 0 : index
    %326 = vector.load %arg16[%c0_301, %c0_302] : memref<1x128xf32, #tpu.memory_space<vmem>>, vector<1x128xf32>
    %327 = arith.addf %325, %326 : vector<1x128xf32>
    %328 = arith.truncf %327 : vector<1x128xf32> to vector<1x128xbf16>
    %329 = arith.extf %328 : vector<1x128xbf16> to vector<1x128xf32>
    %c0_303 = arith.constant 0 : index
    %c0_304 = arith.constant 0 : index
    %330 = vector.load %arg17[%c0_303, %c0_304] : memref<1x128xf32, #tpu.memory_space<vmem>>, vector<1x128xf32>
    %331 = arith.mulf %329, %330 : vector<1x128xf32>
    %cst_305 = arith.constant dense<0.000000e+00> : vector<1xf32>
    %332 = vector.multi_reduction <add>, %331, %cst_305 [1] : vector<1x128xf32> to vector<1xf32>
    %333 = vector.shape_cast %332 : vector<1xf32> to vector<1x1xf32>
    %cst_306 = arith.constant dense<0.000000e+00> : vector<1xf32>
    %334 = vector.multi_reduction <add>, %333, %cst_306 [0] : vector<1x1xf32> to vector<1xf32>
    %335 = vector.shape_cast %334 : vector<1xf32> to vector<1x1xf32>
    %c0_307 = arith.constant 0 : index
    %c0_308 = arith.constant 0 : index
    %336 = vector.load %arg18[%c0_307, %c0_308] : memref<1x1xf32, #tpu.memory_space<vmem>>, vector<1x1xf32>
    %337 = arith.addf %335, %336 : vector<1x1xf32>
    %cst_309 = arith.constant 5.000000e-01 : f32
    %338 = vector.broadcast %cst_309 : f32 to vector<1x1xf32>
    %339 = arith.mulf %338, %337 : vector<1x1xf32>
    %340 = math.tanh %339 : vector<1x1xf32>
    %cst_310 = arith.constant 1.000000e+00 : f32
    %341 = vector.broadcast %cst_310 : f32 to vector<1x1xf32>
    %342 = arith.addf %340, %341 : vector<1x1xf32>
    %cst_311 = arith.constant 5.000000e-01 : f32
    %343 = vector.broadcast %cst_311 : f32 to vector<1x1xf32>
    %344 = arith.mulf %343, %342 : vector<1x1xf32>
    %345 = vector.shape_cast %344 : vector<1x1xf32> to vector<1x1xf32>
    %346 = vector.broadcast %345 : vector<1x1xf32> to vector<1x128xf32>
    %c0_312 = arith.constant 0 : index
    %c0_313 = arith.constant 0 : index
    %c0_314 = arith.constant 0 : index
    %347 = vector.load %arg19[%c0_312, %c0_313, %c0_314] : memref<1x1x128xf32, #tpu.memory_space<vmem>>, vector<1x1x128xf32>
    %348 = vector.shape_cast %347 : vector<1x1x128xf32> to vector<1x128xf32>
    %349 = vector.shape_cast %346 : vector<1x128xf32> to vector<1x1x128xf32>
    tpu.vector_store %arg19[%c0_312, %c0_313, %c0_314], %349 {strides = array<i32>} : memref<1x1x128xf32, #tpu.memory_space<vmem>>, vector<1x1x128xf32>,
    return
  }
  func.func @transform_0(%arg0: i32) -> (i32, i32, i32) {
    %c0_i32 = arith.constant 0 : i32
    %c0_i32_0 = arith.constant 0 : i32
    %c0_i32_1 = arith.constant 0 : i32
    return %arg0, %c0_i32, %c0_i32_0 : i32, i32, i32
  }
  func.func @transform_1(%arg0: i32) -> (i32, i32, i32) {
    %c0_i32 = arith.constant 0 : i32
    %c0_i32_0 = arith.constant 0 : i32
    %c0_i32_1 = arith.constant 0 : i32
    %c0_i32_2 = arith.constant 0 : i32
    return %c0_i32, %c0_i32_0, %c0_i32_1 : i32, i32, i32
  }
  func.func @transform_2(%arg0: i32) -> (i32, i32, i32) {
    %c0_i32 = arith.constant 0 : i32
    %c0_i32_0 = arith.constant 0 : i32
    %c0_i32_1 = arith.constant 0 : i32
    %c0_i32_2 = arith.constant 0 : i32
    return %c0_i32, %c0_i32_0, %c0_i32_1 : i32, i32, i32
  }
  func.func @transform_3(%arg0: i32) -> (i32, i32) {
    %c0_i32 = arith.constant 0 : i32
    %c0_i32_0 = arith.constant 0 : i32
    %c0_i32_1 = arith.constant 0 : i32
    return %c0_i32, %c0_i32_0 : i32, i32
  }
  func.func @transform_4(%arg0: i32) -> (i32, i32, i32) {
    %c0_i32 = arith.constant 0 : i32
    %c0_i32_0 = arith.constant 0 : i32
    %c0_i32_1 = arith.constant 0 : i32
    %c0_i32_2 = arith.constant 0 : i32
    return %c0_i32, %c0_i32_0, %c0_i32_1 : i32, i32, i32
  }
  func.func @transform_5(%arg0: i32) -> (i32, i32, i32) {
    %c0_i32 = arith.constant 0 : i32
    %c0_i32_0 = arith.constant 0 : i32
    %c0_i32_1 = arith.constant 0 : i32
    %c0_i32_2 = arith.constant 0 : i32
    return %c0_i32, %c0_i32_0, %c0_i32_1 : i32, i32, i32
  }
  func.func @transform_6(%arg0: i32) -> (i32, i32) {
    %c0_i32 = arith.constant 0 : i32
    %c0_i32_0 = arith.constant 0 : i32
    %c0_i32_1 = arith.constant 0 : i32
    return %c0_i32, %c0_i32_0 : i32, i32
  }
  func.func @transform_7(%arg0: i32) -> (i32, i32) {
    %c0_i32 = arith.constant 0 : i32
    %c0_i32_0 = arith.constant 0 : i32
    %c0_i32_1 = arith.constant 0 : i32
    return %c0_i32, %c0_i32_0 : i32, i32
  }
  func.func @transform_8(%arg0: i32) -> (i32, i32, i32) {
    %c0_i32 = arith.constant 0 : i32
    %c0_i32_0 = arith.constant 0 : i32
    %c0_i32_1 = arith.constant 0 : i32
    %c0_i32_2 = arith.constant 0 : i32
    return %c0_i32, %c0_i32_0, %c0_i32_1 : i32, i32, i32
  }
  func.func @transform_9(%arg0: i32) -> (i32, i32, i32) {
    %c0_i32 = arith.constant 0 : i32
    %c0_i32_0 = arith.constant 0 : i32
    %c0_i32_1 = arith.constant 0 : i32
    %c0_i32_2 = arith.constant 0 : i32
    return %c0_i32, %c0_i32_0, %c0_i32_1 : i32, i32, i32
  }
  func.func @transform_10(%arg0: i32) -> (i32, i32) {
    %c0_i32 = arith.constant 0 : i32
    %c0_i32_0 = arith.constant 0 : i32
    %c0_i32_1 = arith.constant 0 : i32
    return %c0_i32, %c0_i32_0 : i32, i32
  }
  func.func @transform_11(%arg0: i32) -> (i32, i32) {
    %c0_i32 = arith.constant 0 : i32
    %c0_i32_0 = arith.constant 0 : i32
    %c0_i32_1 = arith.constant 0 : i32
    return %c0_i32, %c0_i32_0 : i32, i32
  }
  func.func @transform_12(%arg0: i32) -> (i32, i32, i32) {
    %c0_i32 = arith.constant 0 : i32
    %c0_i32_0 = arith.constant 0 : i32
    %c0_i32_1 = arith.constant 0 : i32
    %c0_i32_2 = arith.constant 0 : i32
    return %c0_i32, %c0_i32_0, %c0_i32_1 : i32, i32, i32
  }
  func.func @transform_13(%arg0: i32) -> (i32, i32, i32) {
    %c0_i32 = arith.constant 0 : i32
    %c0_i32_0 = arith.constant 0 : i32
    %c0_i32_1 = arith.constant 0 : i32
    %c0_i32_2 = arith.constant 0 : i32
    return %c0_i32, %c0_i32_0, %c0_i32_1 : i32, i32, i32
  }
  func.func @transform_14(%arg0: i32) -> (i32, i32) {
    %c0_i32 = arith.constant 0 : i32
    %c0_i32_0 = arith.constant 0 : i32
    %c0_i32_1 = arith.constant 0 : i32
    return %c0_i32, %c0_i32_0 : i32, i32
  }
  func.func @transform_15(%arg0: i32) -> (i32, i32) {
    %c0_i32 = arith.constant 0 : i32
    %c0_i32_0 = arith.constant 0 : i32
    %c0_i32_1 = arith.constant 0 : i32
    return %c0_i32, %c0_i32_0 : i32, i32
  }
  func.func @transform_16(%arg0: i32) -> (i32, i32) {
    %c0_i32 = arith.constant 0 : i32
    %c0_i32_0 = arith.constant 0 : i32
    %c0_i32_1 = arith.constant 0 : i32
    return %c0_i32, %c0_i32_0 : i32, i32
  }
  func.func @transform_17(%arg0: i32) -> (i32, i32) {
    %c0_i32 = arith.constant 0 : i32
    %c0_i32_0 = arith.constant 0 : i32
    %c0_i32_1 = arith.constant 0 : i32
    return %c0_i32, %c0_i32_0 : i32, i32
  }
  func.func @transform_18(%arg0: i32) -> (i32, i32, i32) {
    %c0_i32 = arith.constant 0 : i32
    %c0_i32_0 = arith.constant 0 : i32
    %c0_i32_1 = arith.constant 0 : i32
    return %arg0, %c0_i32, %c0_i32_0 : i32, i32, i32
  }
}

</mosaic_0001>

<llo_original>
// kernel: discriminator_forward.1
$region0: #{discriminator_forward.1}
  #allocation0 [shape = 'u32[]', space=smem, size = 0x4, offset = 0x4, fixed_abs, tag = 'smem constant byte address 0x4 - core index']
  #allocation1 [shape = 'u32[144,128]{1,0:T(1,128)}', space=vmem, size = 0x12000, scoped, tag = 'internal scratch']
  #allocation2 [shape = 'f32[1,1]{1,0:T(1,128)S(1)}', space=vmem, size = 0x200, scoped, tag = 'scoped memory for discriminator_forward.1']
  %s0 = inlined_call_operand.vmem [shape: bf16[2,256,4], index: 0, kind: input, shape index: {}]
  %s1 = inlined_call_operand.hbm [shape: bf16[9,64,256], index: 1, kind: input, shape index: {}]
  %s2 = inlined_call_operand.vmem [shape: bf16[9,4,16], index: 2, kind: input, shape index: {}]
  %s3 = inlined_call_operand.vmem [shape: f32[1,16], index: 3, kind: input, shape index: {}]
  %s4 = inlined_call_operand.vmem [shape: bf16[9,16,64], index: 4, kind: input, shape index: {}]
  %s5 = inlined_call_operand.hbm [shape: bf16[9,16,32], index: 5, kind: input, shape index: {}]
  %s6 = inlined_call_operand.vmem [shape: f32[1,32], index: 6, kind: input, shape index: {}]
  %s7 = inlined_call_operand.vmem [shape: f32[1,32], index: 7, kind: input, shape index: {}]
  %s8 = inlined_call_operand.vmem [shape: bf16[9,4,16], index: 8, kind: input, shape index: {}]
  %s9 = inlined_call_operand.vmem [shape: bf16[9,32,64], index: 9, kind: input, shape index: {}]
  %s10 = inlined_call_operand.vmem [shape: f32[1,64], index: 10, kind: input, shape index: {}]
  %s11 = inlined_call_operand.hbm [shape: f32[1,64], index: 11, kind: input, shape index: {}]
  %s12 = inlined_call_operand.vmem [shape: bf16[9,1,4], index: 12, kind: input, shape index: {}]
  %s13 = inlined_call_operand.vmem [shape: bf16[9,64,128], index: 13, kind: input, shape index: {}]
  %s14 = inlined_call_operand.hbm [shape: f32[1,128], index: 14, kind: input, shape index: {}]
  %s15 = inlined_call_operand.hbm [shape: f32[1,128], index: 15, kind: input, shape index: {}]
  %s16 = inlined_call_operand.vmem [shape: f32[1,128], index: 16, kind: input, shape index: {}]
  %s17 = inlined_call_operand.<no memory space> [shape: f32[1,1], index: 17, kind: input, shape index: {}]
  %s18 = inlined_call_operand.vmem [shape: f32[2,1,128], index: 18, kind: output, shape index: {}]
  %s19 = sld [smem:[#allocation0]]
  $region125: #{discriminator_forward.1} parent=0
    _
  %s21 = ssub.s32 1, %s19
  %s22 = scalar_select 0, %s21, %s19
  %v23 = vstv %s17
  %24 = vst [vmem:[#allocation2] sm:$0x1] %v23
  $region1: #{discriminator_forward.1} parent=0
    #allocation3 [shape = 'u8[294912]{0}', space=vmem, size = 0x48000, scoped, tag = 'input window, operand 1, single buffered']
    #allocation4 [shape = 's32[2]{0}', space=sflag, size = 0x8, scoped, tag = 'scoped memory for discriminator_forward.1']
    #allocation5 [shape = 'u8[36864]{0}', space=vmem, size = 0x9000, scoped, tag = 'input window, operand 5, single buffered']
    #allocation6 [shape = 's32[1]{0}', space=sflag, size = 0x4, scoped, tag = 'scoped memory for discriminator_forward.1']
    #allocation7 [shape = 'u8[512]{0}', space=vmem, size = 0x400, scoped, tag = 'input window, operand 11, single buffered']
    #allocation8 [shape = 'u8[512]{0}', space=vmem, size = 0x400, scoped, tag = 'input window, operand 14, single buffered']
    #allocation9 [shape = 's32[1]{0}', space=sflag, size = 0x4, scoped, tag = 'scoped memory for discriminator_forward.1']
    #allocation10 [shape = 'u8[512]{0}', space=vmem, size = 0x400, scoped, tag = 'input window, operand 15, single buffered']
    %25 = vsyncpa [#allocation4], 0
    %26 = vsyncpa [#allocation6], 0
    %27 = vsyncpa [#allocation9], 0
    loop: start=0, step=1, limit=4
    $region2: #{discriminator_forward.1} parent=1 // loop_pre_header
      _
    $region3: #{discriminator_forward.1} parent=1 // loop_header
      %s29 = sphi 0, %s33
      %p30 = scmp.ge.s32.totalorder %s29, 4
      %s39 = sphi 0, %s41
      %s42 = sphi 0, %s39
      %s43 = sphi 0, %s42
      %s59 = sphi 0, %s43
      %s63 = sphi 0, %s63
      %s65 = sphi 0, %s63
      %s66 = sphi 0, %s65
      %s80 = sphi 0, %s66
      %s84 = sphi 0, %s84
      %s86 = sphi 0, %s84
      %s87 = sphi 0, %s86
      %s101 = sphi 0, %s87
      %s105 = sphi 0, %s105
      %s107 = sphi 0, %s105
      %s108 = sphi 0, %s107
      %s122 = sphi 0, %s108
      %s126 = sphi 0, %s126
      %s128 = sphi 0, %s126
      %s129 = sphi 0, %s128
      %s143 = sphi 0, %s129
      %s147 = sphi 0, %s147
      %s149 = sphi 0, %s147
      %s150 = sphi 0, %s149
      %s164 = sphi 0, %s150
      %s168 = sphi 0, %s168
      %s170 = sphi 0, %s168
      %s171 = sphi 0, %s170
      %s185 = sphi 0, %s171
      %s189 = sphi 0, %s189
      %s191 = sphi 0, %s189
      %s192 = sphi 0, %s191
      %s206 = sphi 0, %s192
      %s210 = sphi 0, %s210
      %s212 = sphi 0, %s210
      %s213 = sphi 0, %s212
      %s227 = sphi 0, %s213
      %s231 = sphi 0, %s231
      %s233 = sphi 0, %s231
      %s234 = sphi 0, %s233
      %s248 = sphi 0, %s234
      %s252 = sphi 0, %s252
      %s254 = sphi 0, %s252
      %s255 = sphi 0, %s254
      %s269 = sphi 0, %s255
      %s273 = sphi 0, %s273
      %s275 = sphi 0, %s273
      %s276 = sphi 0, %s275
      %s290 = sphi 0, %s276
      %s294 = sphi 0, %s294
      %s296 = sphi 0, %s294
      %s297 = sphi 0, %s296
      %s311 = sphi 0, %s297
      %s315 = sphi 0, %s315
      %s317 = sphi 0, %s315
      %s318 = sphi 0, %s317
      %s332 = sphi 0, %s318
      %s336 = sphi 0, %s336
      %s338 = sphi 0, %s336
      %s339 = sphi 0, %s338
      %s353 = sphi 0, %s339
      %s357 = sphi 0, %s357
      %s359 = sphi 0, %s357
      %s360 = sphi 0, %s359
      %s374 = sphi 0, %s360
      %s378 = sphi 0, %s378
      %s380 = sphi 0, %s378
      %s381 = sphi 0, %s380
      %s395 = sphi 0, %s381
      %s399 = sphi 0, %s399
      %s401 = sphi 0, %s399
      %s402 = sphi 0, %s401
      %s416 = sphi 0, %s402
      %s422 = sphi 0, %s424
      %s425 = sphi 0, %s422
      %s426 = sphi 0, %s425
      %s442 = sphi 0, %s426
    $region4: #{discriminator_forward.1} parent=1 // loop_header_branch
      %32 = sbr.rel (%p30) target = $region8
    $region5: #{discriminator_forward.1} parent=1 // loop_body
      %s34 = ssub.s32 %s29, 1
      %s35 = ssub.s32 %s29, 2
      %s36 = sadd.s32 %s29, 1
      %s37 = ssub.s32 %s29, %s36
      %p38 = scmp.eq.s32.totalorder %s37, 0
      %s40 = sadd.s32 %s39, 1
      %s41 = scalar_select %p38, %s39, %s40
      %p44 = pneg %p38
      %p45 = scmp.eq.s32.totalorder %s29, 1
      %p46 = por %p44, %p45
      %p47 = scmp.ne.s32.totalorder %s39, %s42
      %p48 = scmp.eq.s32.totalorder %s29, 0
      %p49 = por %p47, %p48
      %p50 = scmp.ne.s32.totalorder %s39, %s42
      %p51 = scmp.eq.s32.totalorder %s34, 1
      %p52 = por %p50, %p51
      %p53 = scmp.ne.s32.totalorder %s42, %s43
      %p54 = scmp.eq.s32.totalorder %s34, 0
      %p55 = por %p53, %p54
      %p56 = scmp.ne.s32.totalorder %s42, %s43
      %p57 = scmp.eq.s32.totalorder %s35, 1
      %p58 = por %p56, %p57
      %p60 = scmp.ne.s32.totalorder %s43, %s59
      %p61 = scmp.eq.s32.totalorder %s35, 0
      %p62 = por %p60, %p61
      %s64 = sadd.s32 %s63, 1
      %p67 = scmp.eq.s32.totalorder %s29, 1
      %p68 = scmp.ne.s32.totalorder %s63, %s65
      %p69 = scmp.eq.s32.totalorder %s29, 0
      %p70 = por %p68, %p69
      %p71 = scmp.ne.s32.totalorder %s63, %s65
      %p72 = scmp.eq.s32.totalorder %s34, 1
      %p73 = por %p71, %p72
      %p74 = scmp.ne.s32.totalorder %s65, %s66
      %p75 = scmp.eq.s32.totalorder %s34, 0
      %p76 = por %p74, %p75
      %p77 = scmp.ne.s32.totalorder %s65, %s66
      %p78 = scmp.eq.s32.totalorder %s35, 1
      %p79 = por %p77, %p78
      %p81 = scmp.ne.s32.totalorder %s66, %s80
      %p82 = scmp.eq.s32.totalorder %s35, 0
      %p83 = por %p81, %p82
      %s85 = sadd.s32 %s84, 1
      %p88 = scmp.eq.s32.totalorder %s29, 1
      %p89 = scmp.ne.s32.totalorder %s84, %s86
      %p90 = scmp.eq.s32.totalorder %s29, 0
      %p91 = por %p89, %p90
      %p92 = scmp.ne.s32.totalorder %s84, %s86
      %p93 = scmp.eq.s32.totalorder %s34, 1
      %p94 = por %p92, %p93
      %p95 = scmp.ne.s32.totalorder %s86, %s87
      %p96 = scmp.eq.s32.totalorder %s34, 0
      %p97 = por %p95, %p96
      %p98 = scmp.ne.s32.totalorder %s86, %s87
      %p99 = scmp.eq.s32.totalorder %s35, 1
      %p100 = por %p98, %p99
      %p102 = scmp.ne.s32.totalorder %s87, %s101
      %p103 = scmp.eq.s32.totalorder %s35, 0
      %p104 = por %p102, %p103
      %s106 = sadd.s32 %s105, 1
      %p109 = scmp.eq.s32.totalorder %s29, 1
      %p110 = scmp.ne.s32.totalorder %s105, %s107
      %p111 = scmp.eq.s32.totalorder %s29, 0
      %p112 = por %p110, %p111
      %p113 = scmp.ne.s32.totalorder %s105, %s107
      %p114 = scmp.eq.s32.totalorder %s34, 1
      %p115 = por %p113, %p114
      %p116 = scmp.ne.s32.totalorder %s107, %s108
      %p117 = scmp.eq.s32.totalorder %s34, 0
      %p118 = por %p116, %p117
      %p119 = scmp.ne.s32.totalorder %s107, %s108
      %p120 = scmp.eq.s32.totalorder %s35, 1
      %p121 = por %p119, %p120
      %p123 = scmp.ne.s32.totalorder %s108, %s122
      %p124 = scmp.eq.s32.totalorder %s35, 0
      %p125 = por %p123, %p124
      %s127 = sadd.s32 %s126, 1
      %p130 = scmp.eq.s32.totalorder %s29, 1
      %p131 = scmp.ne.s32.totalorder %s126, %s128
      %p132 = scmp.eq.s32.totalorder %s29, 0
      %p133 = por %p131, %p132
      %p134 = scmp.ne.s32.totalorder %s126, %s128
      %p135 = scmp.eq.s32.totalorder %s34, 1
      %p136 = por %p134, %p135
      %p137 = scmp.ne.s32.totalorder %s128, %s129
      %p138 = scmp.eq.s32.totalorder %s34, 0
      %p139 = por %p137, %p138
      %p140 = scmp.ne.s32.totalorder %s128, %s129
      %p141 = scmp.eq.s32.totalorder %s35, 1
      %p142 = por %p140, %p141
      %p144 = scmp.ne.s32.totalorder %s129, %s143
      %p145 = scmp.eq.s32.totalorder %s35, 0
      %p146 = por %p144, %p145
      %s148 = sadd.s32 %s147, 1
      %p151 = scmp.eq.s32.totalorder %s29, 1
      %p152 = scmp.ne.s32.totalorder %s147, %s149
      %p153 = scmp.eq.s32.totalorder %s29, 0
      %p154 = por %p152, %p153
      %p155 = scmp.ne.s32.totalorder %s147, %s149
      %p156 = scmp.eq.s32.totalorder %s34, 1
      %p157 = por %p155, %p156
      %p158 = scmp.ne.s32.totalorder %s149, %s150
      %p159 = scmp.eq.s32.totalorder %s34, 0
      %p160 = por %p158, %p159
      %p161 = scmp.ne.s32.totalorder %s149, %s150
      %p162 = scmp.eq.s32.totalorder %s35, 1
      %p163 = por %p161, %p162
      %p165 = scmp.ne.s32.totalorder %s150, %s164
      %p166 = scmp.eq.s32.totalorder %s35, 0
      %p167 = por %p165, %p166
      %s169 = sadd.s32 %s168, 1
      %p172 = scmp.eq.s32.totalorder %s29, 1
      %p173 = scmp.ne.s32.totalorder %s168, %s170
      %p174 = scmp.eq.s32.totalorder %s29, 0
      %p175 = por %p173, %p174
      %p176 = scmp.ne.s32.totalorder %s168, %s170
      %p177 = scmp.eq.s32.totalorder %s34, 1
      %p178 = por %p176, %p177
      %p179 = scmp.ne.s32.totalorder %s170, %s171
      %p180 = scmp.eq.s32.totalorder %s34, 0
      %p181 = por %p179, %p180
      %p182 = scmp.ne.s32.totalorder %s170, %s171
      %p183 = scmp.eq.s32.totalorder %s35, 1
      %p184 = por %p182, %p183
      %p186 = scmp.ne.s32.totalorder %s171, %s185
      %p187 = scmp.eq.s32.totalorder %s35, 0
      %p188 = por %p186, %p187
      %s190 = sadd.s32 %s189, 1
      %p193 = scmp.eq.s32.totalorder %s29, 1
      %p194 = scmp.ne.s32.totalorder %s189, %s191
      %p195 = scmp.eq.s32.totalorder %s29, 0
      %p196 = por %p194, %p195
      %p197 = scmp.ne.s32.totalorder %s189, %s191
      %p198 = scmp.eq.s32.totalorder %s34, 1
      %p199 = por %p197, %p198
      %p200 = scmp.ne.s32.totalorder %s191, %s192
      %p201 = scmp.eq.s32.totalorder %s34, 0
      %p202 = por %p200, %p201
      %p203 = scmp.ne.s32.totalorder %s191, %s192
      %p204 = scmp.eq.s32.totalorder %s35, 1
      %p205 = por %p203, %p204
      %p207 = scmp.ne.s32.totalorder %s192, %s206
      %p208 = scmp.eq.s32.totalorder %s35, 0
      %p209 = por %p207, %p208
      %s211 = sadd.s32 %s210, 1
      %p214 = scmp.eq.s32.totalorder %s29, 1
      %p215 = scmp.ne.s32.totalorder %s210, %s212
      %p216 = scmp.eq.s32.totalorder %s29, 0
      %p217 = por %p215, %p216
      %p218 = scmp.ne.s32.totalorder %s210, %s212
      %p219 = scmp.eq.s32.totalorder %s34, 1
      %p220 = por %p218, %p219
      %p221 = scmp.ne.s32.totalorder %s212, %s213
      %p222 = scmp.eq.s32.totalorder %s34, 0
      %p223 = por %p221, %p222
      %p224 = scmp.ne.s32.totalorder %s212, %s213
      %p225 = scmp.eq.s32.totalorder %s35, 1
      %p226 = por %p224, %p225
      %p228 = scmp.ne.s32.totalorder %s213, %s227
      %p229 = scmp.eq.s32.totalorder %s35, 0
      %p230 = por %p228, %p229
      %s232 = sadd.s32 %s231, 1
      %p235 = scmp.eq.s32.totalorder %s29, 1
      %p236 = scmp.ne.s32.totalorder %s231, %s233
      %p237 = scmp.eq.s32.totalorder %s29, 0
      %p238 = por %p236, %p237
      %p239 = scmp.ne.s32.totalorder %s231, %s233
      %p240 = scmp.eq.s32.totalorder %s34, 1
      %p241 = por %p239, %p240
      %p242 = scmp.ne.s32.totalorder %s233, %s234
      %p243 = scmp.eq.s32.totalorder %s34, 0
      %p244 = por %p242, %p243
      %p245 = scmp.ne.s32.totalorder %s233, %s234
      %p246 = scmp.eq.s32.totalorder %s35, 1
      %p247 = por %p245, %p246
      %p249 = scmp.ne.s32.totalorder %s234, %s248
      %p250 = scmp.eq.s32.totalorder %s35, 0
      %p251 = por %p249, %p250
      %s253 = sadd.s32 %s252, 1
      %p256 = scmp.eq.s32.totalorder %s29, 1
      %p257 = scmp.ne.s32.totalorder %s252, %s254
      %p258 = scmp.eq.s32.totalorder %s29, 0
      %p259 = por %p257, %p258
      %p260 = scmp.ne.s32.totalorder %s252, %s254
      %p261 = scmp.eq.s32.totalorder %s34, 1
      %p262 = por %p260, %p261
      %p263 = scmp.ne.s32.totalorder %s254, %s255
      %p264 = scmp.eq.s32.totalorder %s34, 0
      %p265 = por %p263, %p264
      %p266 = scmp.ne.s32.totalorder %s254, %s255
      %p267 = scmp.eq.s32.totalorder %s35, 1
      %p268 = por %p266, %p267
      %p270 = scmp.ne.s32.totalorder %s255, %s269
      %p271 = scmp.eq.s32.totalorder %s35, 0
      %p272 = por %p270, %p271
      %s274 = sadd.s32 %s273, 1
      %p277 = scmp.eq.s32.totalorder %s29, 1
      %p278 = scmp.ne.s32.totalorder %s273, %s275
      %p279 = scmp.eq.s32.totalorder %s29, 0
      %p280 = por %p278, %p279
      %p281 = scmp.ne.s32.totalorder %s273, %s275
      %p282 = scmp.eq.s32.totalorder %s34, 1
      %p283 = por %p281, %p282
      %p284 = scmp.ne.s32.totalorder %s275, %s276
      %p285 = scmp.eq.s32.totalorder %s34, 0
      %p286 = por %p284, %p285
      %p287 = scmp.ne.s32.totalorder %s275, %s276
      %p288 = scmp.eq.s32.totalorder %s35, 1
      %p289 = por %p287, %p288
      %p291 = scmp.ne.s32.totalorder %s276, %s290
      %p292 = scmp.eq.s32.totalorder %s35, 0
      %p293 = por %p291, %p292
      %s295 = sadd.s32 %s294, 1
      %p298 = scmp.eq.s32.totalorder %s29, 1
      %p299 = scmp.ne.s32.totalorder %s294, %s296
      %p300 = scmp.eq.s32.totalorder %s29, 0
      %p301 = por %p299, %p300
      %p302 = scmp.ne.s32.totalorder %s294, %s296
      %p303 = scmp.eq.s32.totalorder %s34, 1
      %p304 = por %p302, %p303
      %p305 = scmp.ne.s32.totalorder %s296, %s297
      %p306 = scmp.eq.s32.totalorder %s34, 0
      %p307 = por %p305, %p306
      %p308 = scmp.ne.s32.totalorder %s296, %s297
      %p309 = scmp.eq.s32.totalorder %s35, 1
      %p310 = por %p308, %p309
      %p312 = scmp.ne.s32.totalorder %s297, %s311
      %p313 = scmp.eq.s32.totalorder %s35, 0
      %p314 = por %p312, %p313
      %s316 = sadd.s32 %s315, 1
      %p319 = scmp.eq.s32.totalorder %s29, 1
      %p320 = scmp.ne.s32.totalorder %s315, %s317
      %p321 = scmp.eq.s32.totalorder %s29, 0
      %p322 = por %p320, %p321
      %p323 = scmp.ne.s32.totalorder %s315, %s317
      %p324 = scmp.eq.s32.totalorder %s34, 1
      %p325 = por %p323, %p324
      %p326 = scmp.ne.s32.totalorder %s317, %s318
      %p327 = scmp.eq.s32.totalorder %s34, 0
      %p328 = por %p326, %p327
      %p329 = scmp.ne.s32.totalorder %s317, %s318
      %p330 = scmp.eq.s32.totalorder %s35, 1
      %p331 = por %p329, %p330
      %p333 = scmp.ne.s32.totalorder %s318, %s332
      %p334 = scmp.eq.s32.totalorder %s35, 0
      %p335 = por %p333, %p334
      %s337 = sadd.s32 %s336, 1
      %p340 = scmp.eq.s32.totalorder %s29, 1
      %p341 = scmp.ne.s32.totalorder %s336, %s338
      %p342 = scmp.eq.s32.totalorder %s29, 0
      %p343 = por %p341, %p342
      %p344 = scmp.ne.s32.totalorder %s336, %s338
      %p345 = scmp.eq.s32.totalorder %s34, 1
      %p346 = por %p344, %p345
      %p347 = scmp.ne.s32.totalorder %s338, %s339
      %p348 = scmp.eq.s32.totalorder %s34, 0
      %p349 = por %p347, %p348
      %p350 = scmp.ne.s32.totalorder %s338, %s339
      %p351 = scmp.eq.s32.totalorder %s35, 1
      %p352 = por %p350, %p351
      %p354 = scmp.ne.s32.totalorder %s339, %s353
      %p355 = scmp.eq.s32.totalorder %s35, 0
      %p356 = por %p354, %p355
      %s358 = sadd.s32 %s357, 1
      %p361 = scmp.eq.s32.totalorder %s29, 1
      %p362 = scmp.ne.s32.totalorder %s357, %s359
      %p363 = scmp.eq.s32.totalorder %s29, 0
      %p364 = por %p362, %p363
      %p365 = scmp.ne.s32.totalorder %s357, %s359
      %p366 = scmp.eq.s32.totalorder %s34, 1
      %p367 = por %p365, %p366
      %p368 = scmp.ne.s32.totalorder %s359, %s360
      %p369 = scmp.eq.s32.totalorder %s34, 0
      %p370 = por %p368, %p369
      %p371 = scmp.ne.s32.totalorder %s359, %s360
      %p372 = scmp.eq.s32.totalorder %s35, 1
      %p373 = por %p371, %p372
      %p375 = scmp.ne.s32.totalorder %s360, %s374
      %p376 = scmp.eq.s32.totalorder %s35, 0
      %p377 = por %p375, %p376
      %s379 = sadd.s32 %s378, 1
      %p382 = scmp.eq.s32.totalorder %s29, 1
      %p383 = scmp.ne.s32.totalorder %s378, %s380
      %p384 = scmp.eq.s32.totalorder %s29, 0
      %p385 = por %p383, %p384
      %p386 = scmp.ne.s32.totalorder %s378, %s380
      %p387 = scmp.eq.s32.totalorder %s34, 1
      %p388 = por %p386, %p387
      %p389 = scmp.ne.s32.totalorder %s380, %s381
      %p390 = scmp.eq.s32.totalorder %s34, 0
      %p391 = por %p389, %p390
      %p392 = scmp.ne.s32.totalorder %s380, %s381
      %p393 = scmp.eq.s32.totalorder %s35, 1
      %p394 = por %p392, %p393
      %p396 = scmp.ne.s32.totalorder %s381, %s395
      %p397 = scmp.eq.s32.totalorder %s35, 0
      %p398 = por %p396, %p397
      %s400 = sadd.s32 %s399, 1
      %p403 = scmp.eq.s32.totalorder %s29, 1
      %p404 = scmp.ne.s32.totalorder %s399, %s401
      %p405 = scmp.eq.s32.totalorder %s29, 0
      %p406 = por %p404, %p405
      %p407 = scmp.ne.s32.totalorder %s399, %s401
      %p408 = scmp.eq.s32.totalorder %s34, 1
      %p409 = por %p407, %p408
      %p410 = scmp.ne.s32.totalorder %s401, %s402
      %p411 = scmp.eq.s32.totalorder %s34, 0
      %p412 = por %p410, %p411
      %p413 = scmp.ne.s32.totalorder %s401, %s402
      %p414 = scmp.eq.s32.totalorder %s35, 1
      %p415 = por %p413, %p414
      %p417 = scmp.ne.s32.totalorder %s402, %s416
      %p418 = scmp.eq.s32.totalorder %s35, 0
      %p419 = por %p417, %p418
      %s420 = ssub.s32 %s29, %s36
      %p421 = scmp.eq.s32.totalorder %s420, 0
      %s423 = sadd.s32 %s422, 1
      %s424 = scalar_select %p421, %s422, %s423
      %p427 = pneg %p421
      %p428 = scmp.eq.s32.totalorder %s29, 1
      %p429 = por %p427, %p428
      %p430 = scmp.ne.s32.totalorder %s422, %s425
      %p431 = scmp.eq.s32.totalorder %s29, 0
      %p432 = por %p430, %p431
      %p433 = scmp.ne.s32.totalorder %s422, %s425
      %p434 = scmp.eq.s32.totalorder %s34, 1
      %p435 = por %p433, %p434
      %p436 = scmp.ne.s32.totalorder %s425, %s426
      %p437 = scmp.eq.s32.totalorder %s34, 0
      %p438 = por %p436, %p437
      %p439 = scmp.ne.s32.totalorder %s425, %s426
      %p440 = scmp.eq.s32.totalorder %s35, 1
      %p441 = por %p439, %p440
      %p443 = scmp.ne.s32.totalorder %s426, %s442
      %p444 = scmp.eq.s32.totalorder %s35, 0
      %p445 = por %p443, %p444
      %p446 = scmp.le.s32.totalorder 1, %s29
      %p447 = scmp.lt.s32.totalorder %s29, 3
      %p448 = pnand %p446, %p447
      %p449 = pneg %p448
      // Predicated region
      $region9: #{discriminator_forward.1} parent=5 // pred_check
        _
      $region10: #{discriminator_forward.1} parent=5 // pred_check_branch
        %451 = sbr.rel (%p448) target = $region12
      $region11: #{discriminator_forward.1} parent=5 // pred_region
        %s452 = ssub.s32 %s29, 1
        // Predicated region
        $region13: #{discriminator_forward.1} parent=11 // pred_check
          %p453 = pneg %p76
        $region14: #{discriminator_forward.1} parent=11 // pred_check_branch
          %455 = sbr.rel (%p453) target = $region16
        $region15: #{discriminator_forward.1} parent=11 // pred_region
          %s457 = ssub.s32 9216, 9216
          %458 = vsyncadd [#allocation4], %s457
          %s459 = sshll.u32 [#allocation3], 4
          %s460 = int_to_ptr.vmem [resolvable:$true] %s459
          %465 = dma.hbm_to_vmem [thread:$0]  %s1, 9216, %s460, [#allocation4], 128, 128, 8
        $region16: #{discriminator_forward.1} parent=11 // pred_fallthru
          _
        // Predicated region
        $region17: #{discriminator_forward.1} parent=11 // pred_check
          %p466 = pneg %p97
        $region18: #{discriminator_forward.1} parent=11 // pred_check_branch
          %468 = sbr.rel (%p466) target = $region20
        $region19: #{discriminator_forward.1} parent=11 // pred_region
          _
        $region20: #{discriminator_forward.1} parent=11 // pred_fallthru
          _
        // Predicated region
        $region21: #{discriminator_forward.1} parent=11 // pred_check
          %p469 = pneg %p118
        $region22: #{discriminator_forward.1} parent=11 // pred_check_branch
          %471 = sbr.rel (%p469) target = $region24
        $region23: #{discriminator_forward.1} parent=11 // pred_region
          _
        $region24: #{discriminator_forward.1} parent=11 // pred_fallthru
          _
        // Predicated region
        $region25: #{discriminator_forward.1} parent=11 // pred_check
          %p472 = pneg %p139
        $region26: #{discriminator_forward.1} parent=11 // pred_check_branch
          %474 = sbr.rel (%p472) target = $region28
        $region27: #{discriminator_forward.1} parent=11 // pred_region
          _
        $region28: #{discriminator_forward.1} parent=11 // pred_fallthru
          _
        // Predicated region
        $region29: #{discriminator_forward.1} parent=11 // pred_check
          %p475 = pneg %p160
        $region30: #{discriminator_forward.1} parent=11 // pred_check_branch
          %477 = sbr.rel (%p475) target = $region32
        $region31: #{discriminator_forward.1} parent=11 // pred_region
          %s479 = ssub.s32 1152, 1152
          %480 = vsyncadd [#allocation6], %s479
          %s481 = sshll.u32 [#allocation5], 4
          %s482 = int_to_ptr.vmem [resolvable:$true] %s481
          %487 = dma.hbm_to_vmem [thread:$0]  %s5, 1152, %s482, [#allocation6], 64, 64, 4
        $region32: #{discriminator_forward.1} parent=11 // pred_fallthru
          _
        // Predicated region
        $region33: #{discriminator_forward.1} parent=11 // pred_check
          %p488 = pneg %p181
        $region34: #{discriminator_forward.1} parent=11 // pred_check_branch
          %490 = sbr.rel (%p488) target = $region36
        $region35: #{discriminator_forward.1} parent=11 // pred_region
          _
        $region36: #{discriminator_forward.1} parent=11 // pred_fallthru
          _
        // Predicated region
        $region37: #{discriminator_forward.1} parent=11 // pred_check
          %p491 = pneg %p202
        $region38: #{discriminator_forward.1} parent=11 // pred_check_branch
          %493 = sbr.rel (%p491) target = $region40
        $region39: #{discriminator_forward.1} parent=11 // pred_region
          _
        $region40: #{discriminator_forward.1} parent=11 // pred_fallthru
          _
        // Predicated region
        $region41: #{discriminator_forward.1} parent=11 // pred_check
          %p494 = pneg %p223
        $region42: #{discriminator_forward.1} parent=11 // pred_check_branch
          %496 = sbr.rel (%p494) target = $region44
        $region43: #{discriminator_forward.1} parent=11 // pred_region
          _
        $region44: #{discriminator_forward.1} parent=11 // pred_fallthru
          _
        // Predicated region
        $region45: #{discriminator_forward.1} parent=11 // pred_check
          %p497 = pneg %p244
        $region46: #{discriminator_forward.1} parent=11 // pred_check_branch
          %499 = sbr.rel (%p497) target = $region48
        $region47: #{discriminator_forward.1} parent=11 // pred_region
          _
        $region48: #{discriminator_forward.1} parent=11 // pred_fallthru
          _
        // Predicated region
        $region49: #{discriminator_forward.1} parent=11 // pred_check
          %p500 = pneg %p265
        $region50: #{discriminator_forward.1} parent=11 // pred_check_branch
          %502 = sbr.rel (%p500) target = $region52
        $region51: #{discriminator_forward.1} parent=11 // pred_region
          _
        $region52: #{discriminator_forward.1} parent=11 // pred_fallthru
          _
        // Predicated region
        $region53: #{discriminator_forward.1} parent=11 // pred_check
          %p503 = pneg %p286
        $region54: #{discriminator_forward.1} parent=11 // pred_check_branch
          %505 = sbr.rel (%p503) target = $region56
        $region55: #{discriminator_forward.1} parent=11 // pred_region
          %s507 = ssub.s32 16, 16
          %508 = vsyncadd [#allocation6], %s507
          %s510 = sshll.u32 [#allocation7], 4
          %s511 = int_to_ptr.vmem [resolvable:$true] %s510
          %513 = dma.hbm_to_vmem [thread:$0]  %s11, 16, %s511, [#allocation6]
        $region56: #{discriminator_forward.1} parent=11 // pred_fallthru
          _
        // Predicated region
        $region57: #{discriminator_forward.1} parent=11 // pred_check
          %p514 = pneg %p307
        $region58: #{discriminator_forward.1} parent=11 // pred_check_branch
          %516 = sbr.rel (%p514) target = $region60
        $region59: #{discriminator_forward.1} parent=11 // pred_region
          _
        $region60: #{discriminator_forward.1} parent=11 // pred_fallthru
          _
        // Predicated region
        $region61: #{discriminator_forward.1} parent=11 // pred_check
          %p517 = pneg %p328
        $region62: #{discriminator_forward.1} parent=11 // pred_check_branch
          %519 = sbr.rel (%p517) target = $region64
        $region63: #{discriminator_forward.1} parent=11 // pred_region
          _
        $region64: #{discriminator_forward.1} parent=11 // pred_fallthru
          _
        // Predicated region
        $region65: #{discriminator_forward.1} parent=11 // pred_check
          %p520 = pneg %p349
        $region66: #{discriminator_forward.1} parent=11 // pred_check_branch
          %522 = sbr.rel (%p520) target = $region68
        $region67: #{discriminator_forward.1} parent=11 // pred_region
          %s524 = ssub.s32 16, 16
          %525 = vsyncadd [#allocation9], %s524
          %s527 = sshll.u32 [#allocation8], 4
          %s528 = int_to_ptr.vmem [resolvable:$true] %s527
          %530 = dma.hbm_to_vmem [thread:$0]  %s14, 16, %s528, [#allocation9]
        $region68: #{discriminator_forward.1} parent=11 // pred_fallthru
          _
        // Predicated region
        $region69: #{discriminator_forward.1} parent=11 // pred_check
          %p531 = pneg %p370
        $region70: #{discriminator_forward.1} parent=11 // pred_check_branch
          %533 = sbr.rel (%p531) target = $region72
        $region71: #{discriminator_forward.1} parent=11 // pred_region
          %s535 = ssub.s32 16, 16
          %536 = vsyncadd [#allocation9], %s535
          %s538 = sshll.u32 [#allocation10], 4
          %s539 = int_to_ptr.vmem [resolvable:$true] %s538
          %541 = dma.hbm_to_vmem [thread:$0]  %s15, 16, %s539, [#allocation9]
        $region72: #{discriminator_forward.1} parent=11 // pred_fallthru
          _
        // Predicated region
        $region73: #{discriminator_forward.1} parent=11 // pred_check
          %p542 = pneg %p391
        $region74: #{discriminator_forward.1} parent=11 // pred_check_branch
          %544 = sbr.rel (%p542) target = $region76
        $region75: #{discriminator_forward.1} parent=11 // pred_region
          _
        $region76: #{discriminator_forward.1} parent=11 // pred_fallthru
          _
        // Predicated region
        $region77: #{discriminator_forward.1} parent=11 // pred_check
          %p545 = pneg %p412
        $region78: #{discriminator_forward.1} parent=11 // pred_check_branch
          %547 = sbr.rel (%p545) target = $region80
        $region79: #{discriminator_forward.1} parent=11 // pred_region
          _
        $region80: #{discriminator_forward.1} parent=11 // pred_fallthru
          _
      $region12: #{discriminator_forward.1} parent=5 // pred_fallthru
        _
      %p548 = scmp.lt.s32.totalorder %s29, 2
      // Predicated region
      $region81: #{discriminator_forward.1} parent=5 // pred_check
        %p549 = pneg %p548
      $region82: #{discriminator_forward.1} parent=5 // pred_check_branch
        %551 = sbr.rel (%p549) target = $region84
      $region83: #{discriminator_forward.1} parent=5 // pred_region
        // Predicated region
        $region85: #{discriminator_forward.1} parent=83 // pred_check
          %p552 = pneg %p49
        $region86: #{discriminator_forward.1} parent=83 // pred_check_branch
          %554 = sbr.rel (%p552) target = $region88
        $region87: #{discriminator_forward.1} parent=83 // pred_region
          %p555 = scmp.lt.s32.totalorder %s29, 1
          %s556 = scalar_select %p555, %s29, 1
          %s557 = smul.addr %s556, 32
          %s558 = smul.addr %s557, 4
          %s559 = scalar_lea.vmem %s0, %s558
        $region88: #{discriminator_forward.1} parent=83 // pred_fallthru
          _
      $region84: #{discriminator_forward.1} parent=5 // pred_fallthru
        _
      %p560 = scmp.le.s32.totalorder 1, %s29
      %p561 = scmp.lt.s32.totalorder %s29, 3
      %p562 = pnand %p560, %p561
      %p563 = pneg %p562
      // Predicated region
      $region89: #{discriminator_forward.1} parent=5 // pred_check
        _
      $region90: #{discriminator_forward.1} parent=5 // pred_check_branch
        %565 = sbr.rel (%p562) target = $region92
      $region91: #{discriminator_forward.1} parent=5 // pred_region
        %s566 = ssub.s32 %s29, 1
        // Predicated region
        $region93: #{discriminator_forward.1} parent=91 // pred_check
          %p567 = pneg %p76
        $region94: #{discriminator_forward.1} parent=91 // pred_check_branch
          %569 = sbr.rel (%p567) target = $region96
        $region95: #{discriminator_forward.1} parent=91 // pred_region
          %570 = dma.done [#allocation4], 9216
        $region96: #{discriminator_forward.1} parent=91 // pred_fallthru
          _
        // Predicated region
        $region97: #{discriminator_forward.1} parent=91 // pred_check
          %p571 = pneg %p160
        $region98: #{discriminator_forward.1} parent=91 // pred_check_branch
          %573 = sbr.rel (%p571) target = $region100
        $region99: #{discriminator_forward.1} parent=91 // pred_region
          %574 = dma.done [#allocation6], 1152
        $region100: #{discriminator_forward.1} parent=91 // pred_fallthru
          _
        // Predicated region
        $region101: #{discriminator_forward.1} parent=91 // pred_check
          %p575 = pneg %p286
        $region102: #{discriminator_forward.1} parent=91 // pred_check_branch
          %577 = sbr.rel (%p575) target = $region104
        $region103: #{discriminator_forward.1} parent=91 // pred_region
          %578 = dma.done [#allocation6], 16
        $region104: #{discriminator_forward.1} parent=91 // pred_fallthru
          _
        // Predicated region
        $region105: #{discriminator_forward.1} parent=91 // pred_check
          %p579 = pneg %p349
        $region106: #{discriminator_forward.1} parent=91 // pred_check_branch
          %581 = sbr.rel (%p579) target = $region108
        $region107: #{discriminator_forward.1} parent=91 // pred_region
          %582 = dma.done [#allocation9], 16
        $region108: #{discriminator_forward.1} parent=91 // pred_fallthru
          _
        // Predicated region
        $region109: #{discriminator_forward.1} parent=91 // pred_check
          %p583 = pneg %p370
        $region110: #{discriminator_forward.1} parent=91 // pred_check_branch
          %585 = sbr.rel (%p583) target = $region112
        $region111: #{discriminator_forward.1} parent=91 // pred_region
          %586 = dma.done [#allocation9], 16
        $region112: #{discriminator_forward.1} parent=91 // pred_fallthru
          _
        %p587 = scmp.lt.s32.totalorder %s34, 1
        %s588 = scalar_select %p587, %s34, 1
        %s589 = smul.addr %s588, 32
        %s590 = smul.addr %s589, 4
        %s591 = scalar_lea.vmem %s0, %s590
        %p592 = pneg %p55
        %p593 = pneg %p52
        %p594 = pneg %p76
        %p595 = pneg %p73
        %p596 = pneg %p97
        %p597 = pneg %p94
        %p598 = pneg %p118
        %p599 = pneg %p115
        %p600 = pneg %p139
        %p601 = pneg %p136
        %p602 = pneg %p160
        %p603 = pneg %p157
        %p604 = pneg %p181
        %p605 = pneg %p178
        %p606 = pneg %p202
        %p607 = pneg %p199
        %p608 = pneg %p223
        %p609 = pneg %p220
        %p610 = pneg %p244
        %p611 = pneg %p241
        %p612 = pneg %p265
        %p613 = pneg %p262
        %p614 = pneg %p286
        %p615 = pneg %p283
        %p616 = pneg %p307
        %p617 = pneg %p304
        %p618 = pneg %p328
        %p619 = pneg %p325
        %p620 = pneg %p349
        %p621 = pneg %p346
        %p622 = pneg %p370
        %p623 = pneg %p367
        %p624 = pneg %p391
        %p625 = pneg %p388
        %p626 = pneg %p412
        %p627 = pneg %p409
        %p628 = pneg %p438
        %p629 = pneg %p435
        %p630 = scmp.lt.s32.totalorder %s34, 1
        %s631 = scalar_select %p630, %s34, 1
        %s632 = scalar_lea.vmem %s18, %s631
        %p633 = scmp.lt.s32.totalorder %s34, 1
        %s634 = scalar_select %p633, %s34, 1
        %s635 = smul.addr %s634, 32
        %s636 = smul.addr %s635, 4
        %s637 = scalar_lea.vmem %s0, %s636
        %p638 = scmp.lt.s32.totalorder %s34, 1
        %s639 = scalar_select %p638, %s34, 1
        %s640 = scalar_lea.vmem %s18, %s639
        %v642 = vld [vmem:[%s637] sm:$0xf]
        %v643 = vld [vmem:[%s637 + $0x4] sm:$0xf]
        %v644 = vld [vmem:[%s637 + $0x8] sm:$0xf]
        %v645 = vld [vmem:[%s637 + $0xc] sm:$0xf]
        %v646 = vld [vmem:[%s637 + $0x10] sm:$0xf]
        %v647 = vld [vmem:[%s637 + $0x14] sm:$0xf]
        %v648 = vld [vmem:[%s637 + $0x18] sm:$0xf]
        %v649 = vld [vmem:[%s637 + $0x1c] sm:$0xf]
        %v650 = vld [vmem:[%s637 + $0x20] sm:$0xf]
        %v651 = vld [vmem:[%s637 + $0x24] sm:$0xf]
        %v652 = vld [vmem:[%s637 + $0x28] sm:$0xf]
        %v653 = vld [vmem:[%s637 + $0x2c] sm:$0xf]
        %v654 = vld [vmem:[%s637 + $0x30] sm:$0xf]
        %v655 = vld [vmem:[%s637 + $0x34] sm:$0xf]
        %v656 = vld [vmem:[%s637 + $0x38] sm:$0xf]
        %v657 = vld [vmem:[%s637 + $0x3c] sm:$0xf]
        %v658 = vld [vmem:[%s637 + $0x40] sm:$0xf]
        %v659 = vld [vmem:[%s637 + $0x44] sm:$0xf]
        %v660 = vld [vmem:[%s637 + $0x48] sm:$0xf]
        %v661 = vld [vmem:[%s637 + $0x4c] sm:$0xf]
        %v662 = vld [vmem:[%s637 + $0x50] sm:$0xf]
        %v663 = vld [vmem:[%s637 + $0x54] sm:$0xf]
        %v664 = vld [vmem:[%s637 + $0x58] sm:$0xf]
        %v665 = vld [vmem:[%s637 + $0x5c] sm:$0xf]
        %v666 = vld [vmem:[%s637 + $0x60] sm:$0xf]
        %v667 = vld [vmem:[%s637 + $0x64] sm:$0xf]
        %v668 = vld [vmem:[%s637 + $0x68] sm:$0xf]
        %v669 = vld [vmem:[%s637 + $0x6c] sm:$0xf]
        %v670 = vld [vmem:[%s637 + $0x70] sm:$0xf]
        %v671 = vld [vmem:[%s637 + $0x74] sm:$0xf]
        %v672 = vld [vmem:[%s637 + $0x78] sm:$0xf]
        %v673 = vld [vmem:[%s637 + $0x7c] sm:$0xf]
        %v674 = vld [vmem:[#allocation3] sm:$0xff]
        %v675 = vld [vmem:[#allocation3 + $0x8] sm:$0xff]
        %v676 = vld [vmem:[#allocation3 + $0x10] sm:$0xff]
        %v677 = vld [vmem:[#allocation3 + $0x18] sm:$0xff]
        %v678 = vld [vmem:[#allocation3 + $0x20] sm:$0xff]
        %v679 = vld [vmem:[#allocation3 + $0x28] sm:$0xff]
        %v680 = vld [vmem:[#allocation3 + $0x30] sm:$0xff]
        %v681 = vld [vmem:[#allocation3 + $0x38] sm:$0xff]
        %v690 = vunpack.c.l.b16 %v674
        %v691 = vunpack.c.h.b16 %v674
        %v692 = vunpack.c.l.b16 %v675
        %v693 = vunpack.c.h.b16 %v675
        %v694 = vunpack.c.l.b16 %v676
        %v695 = vunpack.c.h.b16 %v676
        %v696 = vunpack.c.l.b16 %v677
        %v697 = vunpack.c.h.b16 %v677
        %v698 = vunpack.c.l.b16 %v678
        %v699 = vunpack.c.h.b16 %v678
        %v700 = vunpack.c.l.b16 %v679
        %v701 = vunpack.c.h.b16 %v679
        %v702 = vunpack.c.l.b16 %v680
        %v703 = vunpack.c.h.b16 %v680
        %v704 = vunpack.c.l.b16 %v681
        %v705 = vunpack.c.h.b16 %v681
        %v706 = vpack.c.b16 %v692, %v690
        %v707 = vpack.c.b16 %v693, %v691
        %v708 = vpack.c.b16 %v696, %v694
        %v709 = vpack.c.b16 %v697, %v695
        %v710 = vpack.c.b16 %v700, %v698
        %v711 = vpack.c.b16 %v701, %v699
        %v712 = vpack.c.b16 %v704, %v702
        %v713 = vpack.c.b16 %v705, %v703
        %v754 = vunpack.c.l.b16 %v642
        %v755 = vunpack.c.l.b16 %v643
        %v756 = vunpack.c.l.b16 %v644
        %v757 = vunpack.c.l.b16 %v645
        %v758 = vunpack.c.l.b16 %v646
        %v759 = vunpack.c.l.b16 %v647
        %v760 = vunpack.c.l.b16 %v648
        %v761 = vunpack.c.l.b16 %v649
        %v762 = vunpack.c.l.b16 %v650
        %v763 = vunpack.c.l.b16 %v651
        %v764 = vunpack.c.l.b16 %v652
        %v765 = vunpack.c.l.b16 %v653
        %v766 = vunpack.c.l.b16 %v654
        %v767 = vunpack.c.l.b16 %v655
        %v768 = vunpack.c.l.b16 %v656
        %v769 = vunpack.c.l.b16 %v657
        %v770 = vunpack.c.l.b16 %v658
        %v771 = vunpack.c.l.b16 %v659
        %v772 = vunpack.c.l.b16 %v660
        %v773 = vunpack.c.l.b16 %v661
        %v774 = vunpack.c.l.b16 %v662
        %v775 = vunpack.c.l.b16 %v663
        %v776 = vunpack.c.l.b16 %v664
        %v777 = vunpack.c.l.b16 %v665
        %v778 = vunpack.c.l.b16 %v666
        %v779 = vunpack.c.l.b16 %v667
        %v780 = vunpack.c.l.b16 %v668
        %v781 = vunpack.c.l.b16 %v669
        %v782 = vunpack.c.l.b16 %v670
        %v783 = vunpack.c.l.b16 %v671
        %v784 = vunpack.c.l.b16 %v672
        %v785 = vunpack.c.l.b16 %v673
        %v786 = vpack.c.b16 %v755, %v754
        %v787 = vpack.c.b16 %v757, %v756
        %v788 = vpack.c.b16 %v759, %v758
        %v789 = vpack.c.b16 %v761, %v760
        %v790 = vpack.c.b16 %v763, %v762
        %v791 = vpack.c.b16 %v765, %v764
        %v792 = vpack.c.b16 %v767, %v766
        %v793 = vpack.c.b16 %v769, %v768
        %v794 = vpack.c.b16 %v771, %v770
        %v795 = vpack.c.b16 %v773, %v772
        %v796 = vpack.c.b16 %v775, %v774
        %v797 = vpack.c.b16 %v777, %v776
        %v798 = vpack.c.b16 %v779, %v778
        %v799 = vpack.c.b16 %v781, %v780
        %v800 = vpack.c.b16 %v783, %v782
        %v801 = vpack.c.b16 %v785, %v784
        %818 = vmatprep.subr.bf16.mxu0 0
        %819 = vmatpush1.bf16.msra.mxu0 %v786
        %820 = vmatprep.subr.bf16.mxu0 0
        %821 = vmatpush1.bf16.msra.mxu0 %v787
        %822 = vmatprep.subr.bf16.mxu0 0
        %823 = vmatpush1.bf16.msra.mxu0 %v788
        %824 = vmatprep.subr.bf16.mxu0 0
        %825 = vmatpush1.bf16.msra.mxu0 %v789
        %826 = vmatprep.subr.bf16.mxu0 0
        %827 = vmatpush1.bf16.msra.mxu0 %v790
        %828 = vmatprep.subr.bf16.mxu0 0
        %829 = vmatpush1.bf16.msra.mxu0 %v791
        %830 = vmatprep.subr.bf16.mxu0 0
        %831 = vmatpush1.bf16.msra.mxu0 %v792
        %832 = vmatprep.subr.bf16.mxu0 0
        %833 = vmatpush1.bf16.msra.mxu0 %v793
        %834 = vmatprep.subr.bf16.mxu0 0
        %835 = vmatpush1.bf16.msra.mxu0 %v794
        %836 = vmatprep.subr.bf16.mxu0 0
        %837 = vmatpush1.bf16.msra.mxu0 %v795
        %838 = vmatprep.subr.bf16.mxu0 0
        %839 = vmatpush1.bf16.msra.mxu0 %v796
        %840 = vmatprep.subr.bf16.mxu0 0
        %841 = vmatpush1.bf16.msra.mxu0 %v797
        %842 = vmatprep.subr.bf16.mxu0 0
        %843 = vmatpush1.bf16.msra.mxu0 %v798
        %844 = vmatprep.subr.bf16.mxu0 0
        %845 = vmatpush1.bf16.msra.mxu0 %v799
        %846 = vmatprep.subr.bf16.mxu0 0
        %847 = vmatpush1.bf16.msra.mxu0 %v800
        %848 = vmatprep.subr.bf16.mxu0 0
        %849 = vmatpush1.bf16.msra.mxu0 %v801
        %850 = vmatprep.mubr.bf16.mxu0 %v707
        %851 = vmatmul.mubr.bf16.gmra.mrb[0].mxu0 %v706
        %v852 = vpop.f32.mrb[0].mxu0
        %v853 = vadd.f32 0.0, %v852
        %v854 = vpop.f32.mrb[0].mxu0
        %v855 = vpop.f32.mrb[0].mxu0
        %v856 = vadd.f32 0.0, %v855
        %v857 = vpop.f32.mrb[0].mxu0
        %858 = vmatprep.mubr.bf16.mxu0 %v709
        %859 = vmatmul.mubr.bf16.gmra.mrb[0].mxu0 %v708
        %v860 = vpop.f32.mrb[0].mxu0
        %v861 = vadd.f32 0.0, %v860
        %v862 = vpop.f32.mrb[0].mxu0
        %v863 = vpop.f32.mrb[0].mxu0
        %v864 = vadd.f32 0.0, %v863
        %v865 = vpop.f32.mrb[0].mxu0
        %866 = vmatprep.mubr.bf16.mxu0 %v711
        %867 = vmatmul.mubr.bf16.gmra.mrb[0].mxu0 %v710
        %v868 = vpop.f32.mrb[0].mxu0
        %v869 = vadd.f32 0.0, %v868
        %v870 = vpop.f32.mrb[0].mxu0
        %v871 = vpop.f32.mrb[0].mxu0
        %v872 = vadd.f32 0.0, %v871
        %v873 = vpop.f32.mrb[0].mxu0
        %874 = vmatprep.mubr.bf16.mxu0 %v713
        %875 = vmatmul.mubr.bf16.gmra.mrb[0].mxu0 %v712
        %v876 = vpop.f32.mrb[0].mxu0
        %v877 = vadd.f32 0.0, %v876
        %v878 = vpop.f32.mrb[0].mxu0
        %v879 = vpop.f32.mrb[0].mxu0
        %v880 = vadd.f32 0.0, %v879
        %v881 = vpop.f32.mrb[0].mxu0
        %882 = vdwg.mxu0
        %v883 = vpack.c.bf16 %v856, %v853
        %v884 = vpack.c.bf16 %v864, %v861
        %v885 = vpack.c.bf16 %v872, %v869
        %v886 = vpack.c.bf16 %v880, %v877
        %v887 = vld [vmem:[%s2] sm:$0x3]
        %s888 = scalar_lea.vmem [#allocation3], 64
        %v889 = vld [vmem:[%s888] sm:$0xff]
        %v890 = vld [vmem:[%s888 + $0x8] sm:$0xff]
        %v891 = vld [vmem:[%s888 + $0x10] sm:$0xff]
        %v892 = vld [vmem:[%s888 + $0x18] sm:$0xff]
        %v893 = vld [vmem:[%s888 + $0x20] sm:$0xff]
        %v894 = vld [vmem:[%s888 + $0x28] sm:$0xff]
        %v895 = vld [vmem:[%s888 + $0x30] sm:$0xff]
        %v896 = vld [vmem:[%s888 + $0x38] sm:$0xff]
        %v905 = vunpack.c.l.b16 %v889
        %v906 = vunpack.c.h.b16 %v889
        %v907 = vunpack.c.l.b16 %v890
        %v908 = vunpack.c.h.b16 %v890
        %v909 = vunpack.c.l.b16 %v891
        %v910 = vunpack.c.h.b16 %v891
        %v911 = vunpack.c.l.b16 %v892
        %v912 = vunpack.c.h.b16 %v892
        %v913 = vunpack.c.l.b16 %v893
        %v914 = vunpack.c.h.b16 %v893
        %v915 = vunpack.c.l.b16 %v894
        %v916 = vunpack.c.h.b16 %v894
        %v917 = vunpack.c.l.b16 %v895
        %v918 = vunpack.c.h.b16 %v895
        %v919 = vunpack.c.l.b16 %v896
        %v920 = vunpack.c.h.b16 %v896
        %v921 = vpack.c.b16 %v907, %v905
        %v922 = vpack.c.b16 %v908, %v906
        %v923 = vpack.c.b16 %v911, %v909
        %v924 = vpack.c.b16 %v912, %v910
        %v925 = vpack.c.b16 %v915, %v913
        %v926 = vpack.c.b16 %v916, %v914
        %v927 = vpack.c.b16 %v919, %v917
        %v928 = vpack.c.b16 %v920, %v918
        %937 = vmatprep.subr.bf16.mxu0 0
        %938 = vmatpush1.bf16.msra.mxu0 %v786
        %939 = vmatprep.subr.bf16.mxu0 0
        %940 = vmatpush1.bf16.msra.mxu0 %v787
        %941 = vmatprep.subr.bf16.mxu0 0
        %942 = vmatpush1.bf16.msra.mxu0 %v788
        %943 = vmatprep.subr.bf16.mxu0 0
        %944 = vmatpush1.bf16.msra.mxu0 %v789
        %945 = vmatprep.subr.bf16.mxu0 0
        %946 = vmatpush1.bf16.msra.mxu0 %v790
        %947 = vmatprep.subr.bf16.mxu0 0
        %948 = vmatpush1.bf16.msra.mxu0 %v791
        %949 = vmatprep.subr.bf16.mxu0 0
        %950 = vmatpush1.bf16.msra.mxu0 %v792
        %951 = vmatprep.subr.bf16.mxu0 0
        %952 = vmatpush1.bf16.msra.mxu0 %v793
        %953 = vmatprep.subr.bf16.mxu0 0
        %954 = vmatpush1.bf16.msra.mxu0 %v794
        %955 = vmatprep.subr.bf16.mxu0 0
        %956 = vmatpush1.bf16.msra.mxu0 %v795
        %957 = vmatprep.subr.bf16.mxu0 0
        %958 = vmatpush1.bf16.msra.mxu0 %v796
        %959 = vmatprep.subr.bf16.mxu0 0
        %960 = vmatpush1.bf16.msra.mxu0 %v797
        %961 = vmatprep.subr.bf16.mxu0 0
        %962 = vmatpush1.bf16.msra.mxu0 %v798
        %963 = vmatprep.subr.bf16.mxu0 0
        %964 = vmatpush1.bf16.msra.mxu0 %v799
        %965 = vmatprep.subr.bf16.mxu0 0
        %966 = vmatpush1.bf16.msra.mxu0 %v800
        %967 = vmatprep.subr.bf16.mxu0 0
        %968 = vmatpush1.bf16.msra.mxu0 %v801
        %969 = vmatprep.mubr.bf16.mxu0 %v922
        %970 = vmatmul.mubr.bf16.gmra.mrb[0].mxu0 %v921
        %v971 = vpop.f32.mrb[0].mxu0
        %v972 = vadd.f32 0.0, %v971
        %v973 = vpop.f32.mrb[0].mxu0
        %v974 = vpop.f32.mrb[0].mxu0
        %v975 = vadd.f32 0.0, %v974
        %v976 = vpop.f32.mrb[0].mxu0
        %977 = vmatprep.mubr.bf16.mxu0 %v924
        %978 = vmatmul.mubr.bf16.gmra.mrb[0].mxu0 %v923
        %v979 = vpop.f32.mrb[0].mxu0
        %v980 = vadd.f32 0.0, %v979
        %v981 = vpop.f32.mrb[0].mxu0
        %v982 = vpop.f32.mrb[0].mxu0
        %v983 = vadd.f32 0.0, %v982
        %v984 = vpop.f32.mrb[0].mxu0
        %985 = vmatprep.mubr.bf16.mxu0 %v926
        %986 = vmatmul.mubr.bf16.gmra.mrb[0].mxu0 %v925
        %v987 = vpop.f32.mrb[0].mxu0
        %v988 = vadd.f32 0.0, %v987
        %v989 = vpop.f32.mrb[0].mxu0
        %v990 = vpop.f32.mrb[0].mxu0
        %v991 = vadd.f32 0.0, %v990
        %v992 = vpop.f32.mrb[0].mxu0
        %993 = vmatprep.mubr.bf16.mxu0 %v928
        %994 = vmatmul.mubr.bf16.gmra.mrb[0].mxu0 %v927
        %v995 = vpop.f32.mrb[0].mxu0
        %v996 = vadd.f32 0.0, %v995
        %v997 = vpop.f32.mrb[0].mxu0
        %v998 = vpop.f32.mrb[0].mxu0
        %v999 = vadd.f32 0.0, %v998
        %v1000 = vpop.f32.mrb[0].mxu0
        %1001 = vdwg.mxu0
        %v1002 = vpack.c.bf16 %v975, %v972
        %v1003 = vpack.c.bf16 %v983, %v980
        %v1004 = vpack.c.bf16 %v991, %v988
        %v1005 = vpack.c.bf16 %v999, %v996
        %s1006 = scalar_lea.vmem %s2, 2
        %v1007 = vld [vmem:[%s1006] sm:$0x3]
        %vm1008 = vcmask 31744
        %v1010 = vsel %vm1008, %v1002, 0
        %v1013 = vsel %vm1008, %v1003, 0
        %v1016 = vsel %vm1008, %v1004, 0
        %v1019 = vsel %vm1008, %v1005, 0
        %vm1021 = vcmask 1041408
        %v1023 = vsel %vm1021, %v1007, 0
        %1025 = vmatprep.subr.bf16.mxu0 0
        %1026 = vmatpush1.bf16.msra.mxu0 %v1023
        %1027 = vmatprep.subr.bf16.mxu0 0
        %1028 = vmatpush1.bf16.msra.mxu0 0
        %1029 = vmatprep.subr.bf16.mxu0 0
        %1030 = vmatpush1.bf16.msra.mxu0 0
        %1031 = vmatprep.subr.bf16.mxu0 0
        %1032 = vmatpush1.bf16.msra.mxu0 0
        %1033 = vmatprep.subr.bf16.mxu0 0
        %1034 = vmatpush1.bf16.msra.mxu0 0
        %1035 = vmatprep.subr.bf16.mxu0 0
        %1036 = vmatpush1.bf16.msra.mxu0 0
        %1037 = vmatprep.subr.bf16.mxu0 0
        %1038 = vmatpush1.bf16.msra.mxu0 0
        %1039 = vmatprep.subr.bf16.mxu0 0
        %1040 = vmatpush1.bf16.msra.mxu0 0
        %1041 = vmatprep.subr.bf16.mxu0 0
        %1042 = vmatpush1.bf16.msra.mxu0 0
        %1043 = vmatprep.subr.bf16.mxu0 0
        %1044 = vmatpush1.bf16.msra.mxu0 0
        %1045 = vmatprep.subr.bf16.mxu0 0
        %1046 = vmatpush1.bf16.msra.mxu0 0
        %1047 = vmatprep.subr.bf16.mxu0 0
        %1048 = vmatpush1.bf16.msra.mxu0 0
        %1049 = vmatprep.subr.bf16.mxu0 0
        %1050 = vmatpush1.bf16.msra.mxu0 0
        %1051 = vmatprep.subr.bf16.mxu0 0
        %1052 = vmatpush1.bf16.msra.mxu0 0
        %1053 = vmatprep.subr.bf16.mxu0 0
        %1054 = vmatpush1.bf16.msra.mxu0 0
        %1055 = vmatprep.subr.bf16.mxu0 0
        %1056 = vmatpush1.bf16.msra.mxu0 0
        %1057 = vmatprep.mubr.bf16.mxu0 0
        %1058 = vmatmul.mubr.bf16.gmra.mrb[0].mxu0 %v1010
        %v1059 = vpop.f32.mrb[0].mxu0
        %v1060 = vadd.f32 0.0, %v1059
        %v1061 = vpop.f32.mrb[0].mxu0
        %v1062 = vpop.f32.mrb[0].mxu0
        %v1063 = vadd.f32 0.0, %v1062
        %v1064 = vpop.f32.mrb[0].mxu0
        %1065 = vmatprep.mubr.bf16.mxu0 0
        %1066 = vmatmul.mubr.bf16.gmra.mrb[0].mxu0 %v1013
        %v1067 = vpop.f32.mrb[0].mxu0
        %v1068 = vadd.f32 0.0, %v1067
        %v1069 = vpop.f32.mrb[0].mxu0
        %v1070 = vpop.f32.mrb[0].mxu0
        %v1071 = vadd.f32 0.0, %v1070
        %v1072 = vpop.f32.mrb[0].mxu0
        %1073 = vmatprep.mubr.bf16.mxu0 0
        %1074 = vmatmul.mubr.bf16.gmra.mrb[0].mxu0 %v1016
        %v1075 = vpop.f32.mrb[0].mxu0
        %v1076 = vadd.f32 0.0, %v1075
        %v1077 = vpop.f32.mrb[0].mxu0
        %v1078 = vpop.f32.mrb[0].mxu0
        %v1079 = vadd.f32 0.0, %v1078
        %v1080 = vpop.f32.mrb[0].mxu0
        %1081 = vmatprep.mubr.bf16.mxu0 0
        %1082 = vmatmul.mubr.bf16.gmra.mrb[0].mxu0 %v1019
        %v1083 = vpop.f32.mrb[0].mxu0
        %v1084 = vadd.f32 0.0, %v1083
        %v1085 = vpop.f32.mrb[0].mxu0
        %v1086 = vpop.f32.mrb[0].mxu0
        %v1087 = vadd.f32 0.0, %v1086
        %v1088 = vpop.f32.mrb[0].mxu0
        %1089 = vdwg.mxu0
        %v1091 = vsel %vm1008, %v883, 0
        %v1094 = vsel %vm1008, %v884, 0
        %v1097 = vsel %vm1008, %v885, 0
        %v1100 = vsel %vm1008, %v886, 0
        %v1103 = vsel %vm1021, %v887, 0
        %1105 = vmatprep.subr.bf16.mxu0 0
        %1106 = vmatpush1.bf16.msra.mxu0 %v1103
        %1107 = vmatprep.subr.bf16.mxu0 0
        %1108 = vmatpush1.bf16.msra.mxu0 0
        %1109 = vmatprep.subr.bf16.mxu0 0
        %1110 = vmatpush1.bf16.msra.mxu0 0
        %1111 = vmatprep.subr.bf16.mxu0 0
        %1112 = vmatpush1.bf16.msra.mxu0 0
        %1113 = vmatprep.subr.bf16.mxu0 0
        %1114 = vmatpush1.bf16.msra.mxu0 0
        %1115 = vmatprep.subr.bf16.mxu0 0
        %1116 = vmatpush1.bf16.msra.mxu0 0
        %1117 = vmatprep.subr.bf16.mxu0 0
        %1118 = vmatpush1.bf16.msra.mxu0 0
        %1119 = vmatprep.subr.bf16.mxu0 0
        %1120 = vmatpush1.bf16.msra.mxu0 0
        %1121 = vmatprep.subr.bf16.mxu0 0
        %1122 = vmatpush1.bf16.msra.mxu0 0
        %1123 = vmatprep.subr.bf16.mxu0 0
        %1124 = vmatpush1.bf16.msra.mxu0 0
        %1125 = vmatprep.subr.bf16.mxu0 0
        %1126 = vmatpush1.bf16.msra.mxu0 0
        %1127 = vmatprep.subr.bf16.mxu0 0
        %1128 = vmatpush1.bf16.msra.mxu0 0
        %1129 = vmatprep.subr.bf16.mxu0 0
        %1130 = vmatpush1.bf16.msra.mxu0 0
        %1131 = vmatprep.subr.bf16.mxu0 0
        %1132 = vmatpush1.bf16.msra.mxu0 0
        %1133 = vmatprep.subr.bf16.mxu0 0
        %1134 = vmatpush1.bf16.msra.mxu0 0
        %1135 = vmatprep.subr.bf16.mxu0 0
        %1136 = vmatpush1.bf16.msra.mxu0 0
        %1137 = vmatprep.mubr.bf16.mxu0 0
        %1138 = vmatmul.mubr.bf16.gmra.mrb[0].mxu0 %v1091
        %v1139 = vpop.f32.mrb[0].mxu0
        %v1140 = vadd.f32 %v1060, %v1139
        %v1141 = vpop.f32.mrb[0].mxu0
        %v1142 = vpop.f32.mrb[0].mxu0
        %v1143 = vadd.f32 %v1063, %v1142
        %v1144 = vpop.f32.mrb[0].mxu0
        %1145 = vmatprep.mubr.bf16.mxu0 0
        %1146 = vmatmul.mubr.bf16.gmra.mrb[0].mxu0 %v1094
        %v1147 = vpop.f32.mrb[0].mxu0
        %v1148 = vadd.f32 %v1068, %v1147
        %v1149 = vpop.f32.mrb[0].mxu0
        %v1150 = vpop.f32.mrb[0].mxu0
        %v1151 = vadd.f32 %v1071, %v1150
        %v1152 = vpop.f32.mrb[0].mxu0
        %1153 = vmatprep.mubr.bf16.mxu0 0
        %1154 = vmatmul.mubr.bf16.gmra.mrb[0].mxu0 %v1097
        %v1155 = vpop.f32.mrb[0].mxu0
        %v1156 = vadd.f32 %v1076, %v1155
        %v1157 = vpop.f32.mrb[0].mxu0
        %v1158 = vpop.f32.mrb[0].mxu0
        %v1159 = vadd.f32 %v1079, %v1158
        %v1160 = vpop.f32.mrb[0].mxu0
        %1161 = vmatprep.mubr.bf16.mxu0 0
        %1162 = vmatmul.mubr.bf16.gmra.mrb[0].mxu0 %v1100
        %v1163 = vpop.f32.mrb[0].mxu0
        %v1164 = vadd.f32 %v1084, %v1163
        %v1165 = vpop.f32.mrb[0].mxu0
        %v1166 = vpop.f32.mrb[0].mxu0
        %v1167 = vadd.f32 %v1087, %v1166
        %v1168 = vpop.f32.mrb[0].mxu0
        %1169 = vdwg.mxu0
        %s1170 = scalar_lea.vmem [#allocation3], 128
        %v1171 = vld [vmem:[%s1170] sm:$0xff]
        %v1172 = vld [vmem:[%s1170 + $0x8] sm:$0xff]
        %v1173 = vld [vmem:[%s1170 + $0x10] sm:$0xff]
        %v1174 = vld [vmem:[%s1170 + $0x18] sm:$0xff]
        %v1175 = vld [vmem:[%s1170 + $0x20] sm:$0xff]
        %v1176 = vld [vmem:[%s1170 + $0x28] sm:$0xff]
        %v1177 = vld [vmem:[%s1170 + $0x30] sm:$0xff]
        %v1178 = vld [vmem:[%s1170 + $0x38] sm:$0xff]
        %v1187 = vunpack.c.l.b16 %v1171
        %v1188 = vunpack.c.h.b16 %v1171
        %v1189 = vunpack.c.l.b16 %v1172
        %v1190 = vunpack.c.h.b16 %v1172
        %v1191 = vunpack.c.l.b16 %v1173
        %v1192 = vunpack.c.h.b16 %v1173
        %v1193 = vunpack.c.l.b16 %v1174
        %v1194 = vunpack.c.h.b16 %v1174
        %v1195 = vunpack.c.l.b16 %v1175
        %v1196 = vunpack.c.h.b16 %v1175
        %v1197 = vunpack.c.l.b16 %v1176
        %v1198 = vunpack.c.h.b16 %v1176
        %v1199 = vunpack.c.l.b16 %v1177
        %v1200 = vunpack.c.h.b16 %v1177
        %v1201 = vunpack.c.l.b16 %v1178
        %v1202 = vunpack.c.h.b16 %v1178
        %v1203 = vpack.c.b16 %v1189, %v1187
        %v1204 = vpack.c.b16 %v1190, %v1188
        %v1205 = vpack.c.b16 %v1193, %v1191
        %v1206 = vpack.c.b16 %v1194, %v1192
        %v1207 = vpack.c.b16 %v1197, %v1195
        %v1208 = vpack.c.b16 %v1198, %v1196
        %v1209 = vpack.c.b16 %v1201, %v1199
        %v1210 = vpack.c.b16 %v1202, %v1200
        %1219 = vmatprep.subr.bf16.mxu0 0
        %1220 = vmatpush1.bf16.msra.mxu0 %v786
        %1221 = vmatprep.subr.bf16.mxu0 0
        %1222 = vmatpush1.bf16.msra.mxu0 %v787
        %1223 = vmatprep.subr.bf16.mxu0 0
        %1224 = vmatpush1.bf16.msra.mxu0 %v788
        %1225 = vmatprep.subr.bf16.mxu0 0
        %1226 = vmatpush1.bf16.msra.mxu0 %v789
        %1227 = vmatprep.subr.bf16.mxu0 0
        %1228 = vmatpush1.bf16.msra.mxu0 %v790
        %1229 = vmatprep.subr.bf16.mxu0 0
        %1230 = vmatpush1.bf16.msra.mxu0 %v791
        %1231 = vmatprep.subr.bf16.mxu0 0
        %1232 = vmatpush1.bf16.msra.mxu0 %v792
        %1233 = vmatprep.subr.bf16.mxu0 0
        %1234 = vmatpush1.bf16.msra.mxu0 %v793
        %1235 = vmatprep.subr.bf16.mxu0 0
        %1236 = vmatpush1.bf16.msra.mxu0 %v794
        %1237 = vmatprep.subr.bf16.mxu0 0
        %1238 = vmatpush1.bf16.msra.mxu0 %v795
        %1239 = vmatprep.subr.bf16.mxu0 0
        %1240 = vmatpush1.bf16.msra.mxu0 %v796
        %1241 = vmatprep.subr.bf16.mxu0 0
        %1242 = vmatpush1.bf16.msra.mxu0 %v797
        %1243 = vmatprep.subr.bf16.mxu0 0
        %1244 = vmatpush1.bf16.msra.mxu0 %v798
        %1245 = vmatprep.subr.bf16.mxu0 0
        %1246 = vmatpush1.bf16.msra.mxu0 %v799
        %1247 = vmatprep.subr.bf16.mxu0 0
        %1248 = vmatpush1.bf16.msra.mxu0 %v800
        %1249 = vmatprep.subr.bf16.mxu0 0
        %1250 = vmatpush1.bf16.msra.mxu0 %v801
        %1251 = vmatprep.mubr.bf16.mxu0 %v1204
        %1252 = vmatmul.mubr.bf16.gmra.mrb[0].mxu0 %v1203
        %v1253 = vpop.f32.mrb[0].mxu0
        %v1254 = vadd.f32 0.0, %v1253
        %v1255 = vpop.f32.mrb[0].mxu0
        %v1256 = vpop.f32.mrb[0].mxu0
        %v1257 = vadd.f32 0.0, %v1256
        %v1258 = vpop.f32.mrb[0].mxu0
        %1259 = vmatprep.mubr.bf16.mxu0 %v1206
        %1260 = vmatmul.mubr.bf16.gmra.mrb[0].mxu0 %v1205
        %v1261 = vpop.f32.mrb[0].mxu0
        %v1262 = vadd.f32 0.0, %v1261
        %v1263 = vpop.f32.mrb[0].mxu0
        %v1264 = vpop.f32.mrb[0].mxu0
        %v1265 = vadd.f32 0.0, %v1264
        %v1266 = vpop.f32.mrb[0].mxu0
        %1267 = vmatprep.mubr.bf16.mxu0 %v1208
        %1268 = vmatmul.mubr.bf16.gmra.mrb[0].mxu0 %v1207
        %v1269 = vpop.f32.mrb[0].mxu0
        %v1270 = vadd.f32 0.0, %v1269
        %v1271 = vpop.f32.mrb[0].mxu0
        %v1272 = vpop.f32.mrb[0].mxu0
        %v1273 = vadd.f32 0.0, %v1272
        %v1274 = vpop.f32.mrb[0].mxu0
        %1275 = vmatprep.mubr.bf16.mxu0 %v1210
        %1276 = vmatmul.mubr.bf16.gmra.mrb[0].mxu0 %v1209
        %v1277 = vpop.f32.mrb[0].mxu0
        %v1278 = vadd.f32 0.0, %v1277
        %v1279 = vpop.f32.mrb[0].mxu0
        %v1280 = vpop.f32.mrb[0].mxu0
        %v1281 = vadd.f32 0.0, %v1280
        %v1282 = vpop.f32.mrb[0].mxu0
        %1283 = vdwg.mxu0
        %v1284 = vpack.c.bf16 %v1257, %v1254
        %v1285 = vpack.c.bf16 %v1265, %v1262
        %v1286 = vpack.c.bf16 %v1273, %v1270
        %v1287 = vpack.c.bf16 %v1281, %v1278
        %s1288 = scalar_lea.vmem %s2, 4
        %v1289 = vld [vmem:[%s1288] sm:$0x3]
        %v1291 = vsel %vm1008, %v1284, 0
        %v1294 = vsel %vm1008, %v1285, 0
        %v1297 = vsel %vm1008, %v1286, 0
        %v1300 = vsel %vm1008, %v1287, 0
        %v1303 = vsel %vm1021, %v1289, 0
        %1305 = vmatprep.subr.bf16.mxu0 0
        %1306 = vmatpush1.bf16.msra.mxu0 %v1303
        %1307 = vmatprep.subr.bf16.mxu0 0
        %1308 = vmatpush1.bf16.msra.mxu0 0
        %1309 = vmatprep.subr.bf16.mxu0 0
        %1310 = vmatpush1.bf16.msra.mxu0 0
        %1311 = vmatprep.subr.bf16.mxu0 0
        %1312 = vmatpush1.bf16.msra.mxu0 0
        %1313 = vmatprep.subr.bf16.mxu0 0
        %1314 = vmatpush1.bf16.msra.mxu0 0
        %1315 = vmatprep.subr.bf16.mxu0 0
        %1316 = vmatpush1.bf16.msra.mxu0 0
        %1317 = vmatprep.subr.bf16.mxu0 0
        %1318 = vmatpush1.bf16.msra.mxu0 0
        %1319 = vmatprep.subr.bf16.mxu0 0
        %1320 = vmatpush1.bf16.msra.mxu0 0
        %1321 = vmatprep.subr.bf16.mxu0 0
        %1322 = vmatpush1.bf16.msra.mxu0 0
        %1323 = vmatprep.subr.bf16.mxu0 0
        %1324 = vmatpush1.bf16.msra.mxu0 0
        %1325 = vmatprep.subr.bf16.mxu0 0
        %1326 = vmatpush1.bf16.msra.mxu0 0
        %1327 = vmatprep.subr.bf16.mxu0 0
        %1328 = vmatpush1.bf16.msra.mxu0 0
        %1329 = vmatprep.subr.bf16.mxu0 0
        %1330 = vmatpush1.bf16.msra.mxu0 0
        %1331 = vmatprep.subr.bf16.mxu0 0
        %1332 = vmatpush1.bf16.msra.mxu0 0
        %1333 = vmatprep.subr.bf16.mxu0 0
        %1334 = vmatpush1.bf16.msra.mxu0 0
        %1335 = vmatprep.subr.bf16.mxu0 0
        %1336 = vmatpush1.bf16.msra.mxu0 0
        %1337 = vmatprep.mubr.bf16.mxu0 0
        %1338 = vmatmul.mubr.bf16.gmra.mrb[0].mxu0 %v1291
        %v1339 = vpop.f32.mrb[0].mxu0
        %v1340 = vadd.f32 0.0, %v1339
        %v1341 = vpop.f32.mrb[0].mxu0
        %v1342 = vpop.f32.mrb[0].mxu0
        %v1343 = vadd.f32 0.0, %v1342
        %v1344 = vpop.f32.mrb[0].mxu0
        %1345 = vmatprep.mubr.bf16.mxu0 0
        %1346 = vmatmul.mubr.bf16.gmra.mrb[0].mxu0 %v1294
        %v1347 = vpop.f32.mrb[0].mxu0
        %v1348 = vadd.f32 0.0, %v1347
        %v1349 = vpop.f32.mrb[0].mxu0
        %v1350 = vpop.f32.mrb[0].mxu0
        %v1351 = vadd.f32 0.0, %v1350
        %v1352 = vpop.f32.mrb[0].mxu0
        %1353 = vmatprep.mubr.bf16.mxu0 0
        %1354 = vmatmul.mubr.bf16.gmra.mrb[0].mxu0 %v1297
        %v1355 = vpop.f32.mrb[0].mxu0
        %v1356 = vadd.f32 0.0, %v1355
        %v1357 = vpop.f32.mrb[0].mxu0
        %v1358 = vpop.f32.mrb[0].mxu0
        %v1359 = vadd.f32 0.0, %v1358
        %v1360 = vpop.f32.mrb[0].mxu0
        %1361 = vmatprep.mubr.bf16.mxu0 0
        %1362 = vmatmul.mubr.bf16.gmra.mrb[0].mxu0 %v1300
        %v1363 = vpop.f32.mrb[0].mxu0
        %v1364 = vadd.f32 0.0, %v1363
        %v1365 = vpop.f32.mrb[0].mxu0
        %v1366 = vpop.f32.mrb[0].mxu0
        %v1367 = vadd.f32 0.0, %v1366
        %v1368 = vpop.f32.mrb[0].mxu0
        %1369 = vdwg.mxu0
        %v1370 = vadd.f32 %v1140, %v1340
        %v1371 = vadd.f32 %v1143, %v1343
        %v1372 = vadd.f32 %v1148, %v1348
        %v1373 = vadd.f32 %v1151, %v1351
        %v1374 = vadd.f32 %v1156, %v1356
        %v1375 = vadd.f32 %v1159, %v1359
        %v1376 = vadd.f32 %v1164, %v1364
        %v1377 = vadd.f32 %v1167, %v1367
        %s1378 = scalar_lea.vmem [#allocation3], 192
        %v1379 = vld [vmem:[%s1378] sm:$0xff]
        %v1380 = vld [vmem:[%s1378 + $0x8] sm:$0xff]
        %v1381 = vld [vmem:[%s1378 + $0x10] sm:$0xff]
        %v1382 = vld [vmem:[%s1378 + $0x18] sm:$0xff]
        %v1383 = vld [vmem:[%s1378 + $0x20] sm:$0xff]
        %v1384 = vld [vmem:[%s1378 + $0x28] sm:$0xff]
        %v1385 = vld [vmem:[%s1378 + $0x30] sm:$0xff]
        %v1386 = vld [vmem:[%s1378 + $0x38] sm:$0xff]
        %v1395 = vunpack.c.l.b16 %v1379
        %v1396 = vunpack.c.h.b16 %v1379
        %v1397 = vunpack.c.l.b16 %v1380
        %v1398 = vunpack.c.h.b16 %v1380
        %v1399 = vunpack.c.l.b16 %v1381
        %v1400 = vunpack.c.h.b16 %v1381
        %v1401 = vunpack.c.l.b16 %v1382
        %v1402 = vunpack.c.h.b16 %v1382
        %v1403 = vunpack.c.l.b16 %v1383
        %v1404 = vunpack.c.h.b16 %v1383
        %v1405 = vunpack.c.l.b16 %v1384
        %v1406 = vunpack.c.h.b16 %v1384
        %v1407 = vunpack.c.l.b16 %v1385
        %v1408 = vunpack.c.h.b16 %v1385
        %v1409 = vunpack.c.l.b16 %v1386
        %v1410 = vunpack.c.h.b16 %v1386
        %v1411 = vpack.c.b16 %v1397, %v1395
        %v1412 = vpack.c.b16 %v1398, %v1396
        %v1413 = vpack.c.b16 %v1401, %v1399
        %v1414 = vpack.c.b16 %v1402, %v1400
        %v1415 = vpack.c.b16 %v1405, %v1403
        %v1416 = vpack.c.b16 %v1406, %v1404
        %v1417 = vpack.c.b16 %v1409, %v1407
        %v1418 = vpack.c.b16 %v1410, %v1408
        %1427 = vmatprep.subr.bf16.mxu0 0
        %1428 = vmatpush1.bf16.msra.mxu0 %v786
        %1429 = vmatprep.subr.bf16.mxu0 0
        %1430 = vmatpush1.bf16.msra.mxu0 %v787
        %1431 = vmatprep.subr.bf16.mxu0 0
        %1432 = vmatpush1.bf16.msra.mxu0 %v788
        %1433 = vmatprep.subr.bf16.mxu0 0
        %1434 = vmatpush1.bf16.msra.mxu0 %v789
        %1435 = vmatprep.subr.bf16.mxu0 0
        %1436 = vmatpush1.bf16.msra.mxu0 %v790
        %1437 = vmatprep.subr.bf16.mxu0 0
        %1438 = vmatpush1.bf16.msra.mxu0 %v791
        %1439 = vmatprep.subr.bf16.mxu0 0
        %1440 = vmatpush1.bf16.msra.mxu0 %v792
        %1441 = vmatprep.subr.bf16.mxu0 0
        %1442 = vmatpush1.bf16.msra.mxu0 %v793
        %1443 = vmatprep.subr.bf16.mxu0 0
        %1444 = vmatpush1.bf16.msra.mxu0 %v794
        %1445 = vmatprep.subr.bf16.mxu0 0
        %1446 = vmatpush1.bf16.msra.mxu0 %v795
        %1447 = vmatprep.subr.bf16.mxu0 0
        %1448 = vmatpush1.bf16.msra.mxu0 %v796
        %1449 = vmatprep.subr.bf16.mxu0 0
        %1450 = vmatpush1.bf16.msra.mxu0 %v797
        %1451 = vmatprep.subr.bf16.mxu0 0
        %1452 = vmatpush1.bf16.msra.mxu0 %v798
        %1453 = vmatprep.subr.bf16.mxu0 0
        %1454 = vmatpush1.bf16.msra.mxu0 %v799
        %1455 = vmatprep.subr.bf16.mxu0 0
        %1456 = vmatpush1.bf16.msra.mxu0 %v800
        %1457 = vmatprep.subr.bf16.mxu0 0
        %1458 = vmatpush1.bf16.msra.mxu0 %v801
        %1459 = vmatprep.mubr.bf16.mxu0 %v1412
        %1460 = vmatmul.mubr.bf16.gmra.mrb[0].mxu0 %v1411
        %v1461 = vpop.f32.mrb[0].mxu0
        %v1462 = vadd.f32 0.0, %v1461
        %v1463 = vpop.f32.mrb[0].mxu0
        %v1464 = vpop.f32.mrb[0].mxu0
        %v1465 = vadd.f32 0.0, %v1464
        %v1466 = vpop.f32.mrb[0].mxu0
        %1467 = vmatprep.mubr.bf16.mxu0 %v1414
        %1468 = vmatmul.mubr.bf16.gmra.mrb[0].mxu0 %v1413
        %v1469 = vpop.f32.mrb[0].mxu0
        %v1470 = vadd.f32 0.0, %v1469
        %v1471 = vpop.f32.mrb[0].mxu0
        %v1472 = vpop.f32.mrb[0].mxu0
        %v1473 = vadd.f32 0.0, %v1472
        %v1474 = vpop.f32.mrb[0].mxu0
        %1475 = vmatprep.mubr.bf16.mxu0 %v1416
        %1476 = vmatmul.mubr.bf16.gmra.mrb[0].mxu0 %v1415
        %v1477 = vpop.f32.mrb[0].mxu0
        %v1478 = vadd.f32 0.0, %v1477
        %v1479 = vpop.f32.mrb[0].mxu0
        %v1480 = vpop.f32.mrb[0].mxu0
        %v1481 = vadd.f32 0.0, %v1480
        %v1482 = vpop.f32.mrb[0].mxu0
        %1483 = vmatprep.mubr.bf16.mxu0 %v1418
        %1484 = vmatmul.mubr.bf16.gmra.mrb[0].mxu0 %v1417
        %v1485 = vpop.f32.mrb[0].mxu0
        %v1486 = vadd.f32 0.0, %v1485
        %v1487 = vpop.f32.mrb[0].mxu0
        %v1488 = vpop.f32.mrb[0].mxu0
        %v1489 = vadd.f32 0.0, %v1488
        %v1490 = vpop.f32.mrb[0].mxu0
        %1491 = vdwg.mxu0
        %v1492 = vpack.c.bf16 %v1465, %v1462
        %v1493 = vpack.c.bf16 %v1473, %v1470
        %v1494 = vpack.c.bf16 %v1481, %v1478
        %v1495 = vpack.c.bf16 %v1489, %v1486
        %s1496 = scalar_lea.vmem %s2, 6
        %v1497 = vld [vmem:[%s1496] sm:$0x3]
        %v1499 = vsel %vm1008, %v1492, 0
        %v1502 = vsel %vm1008, %v1493, 0
        %v1505 = vsel %vm1008, %v1494, 0
        %v1508 = vsel %vm1008, %v1495, 0
        %v1511 = vsel %vm1021, %v1497, 0
        %1513 = vmatprep.subr.bf16.mxu0 0
        %1514 = vmatpush1.bf16.msra.mxu0 %v1511
        %1515 = vmatprep.subr.bf16.mxu0 0
        %1516 = vmatpush1.bf16.msra.mxu0 0
        %1517 = vmatprep.subr.bf16.mxu0 0
        %1518 = vmatpush1.bf16.msra.mxu0 0
        %1519 = vmatprep.subr.bf16.mxu0 0
        %1520 = vmatpush1.bf16.msra.mxu0 0
        %1521 = vmatprep.subr.bf16.mxu0 0
        %1522 = vmatpush1.bf16.msra.mxu0 0
        %1523 = vmatprep.subr.bf16.mxu0 0
        %1524 = vmatpush1.bf16.msra.mxu0 0
        %1525 = vmatprep.subr.bf16.mxu0 0
        %1526 = vmatpush1.bf16.msra.mxu0 0
        %1527 = vmatprep.subr.bf16.mxu0 0
        %1528 = vmatpush1.bf16.msra.mxu0 0
        %1529 = vmatprep.subr.bf16.mxu0 0
        %1530 = vmatpush1.bf16.msra.mxu0 0
        %1531 = vmatprep.subr.bf16.mxu0 0
        %1532 = vmatpush1.bf16.msra.mxu0 0
        %1533 = vmatprep.subr.bf16.mxu0 0
        %1534 = vmatpush1.bf16.msra.mxu0 0
        %1535 = vmatprep.subr.bf16.mxu0 0
        %1536 = vmatpush1.bf16.msra.mxu0 0
        %1537 = vmatprep.subr.bf16.mxu0 0
        %1538 = vmatpush1.bf16.msra.mxu0 0
        %1539 = vmatprep.subr.bf16.mxu0 0
        %1540 = vmatpush1.bf16.msra.mxu0 0
        %1541 = vmatprep.subr.bf16.mxu0 0
        %1542 = vmatpush1.bf16.msra.mxu0 0
        %1543 = vmatprep.subr.bf16.mxu0 0
        %1544 = vmatpush1.bf16.msra.mxu0 0
        %1545 = vmatprep.mubr.bf16.mxu0 0
        %1546 = vmatmul.mubr.bf16.gmra.mrb[0].mxu0 %v1499
        %v1547 = vpop.f32.mrb[0].mxu0
        %v1548 = vadd.f32 0.0, %v1547
        %v1549 = vpop.f32.mrb[0].mxu0
        %v1550 = vpop.f32.mrb[0].mxu0
        %v1551 = vadd.f32 0.0, %v1550
        %v1552 = vpop.f32.mrb[0].mxu0
        %1553 = vmatprep.mubr.bf16.mxu0 0
        %1554 = vmatmul.mubr.bf16.gmra.mrb[0].mxu0 %v1502
        %v1555 = vpop.f32.mrb[0].mxu0
        %v1556 = vadd.f32 0.0, %v1555
        %v1557 = vpop.f32.mrb[0].mxu0
        %v1558 = vpop.f32.mrb[0].mxu0
        %v1559 = vadd.f32 0.0, %v1558
        %v1560 = vpop.f32.mrb[0].mxu0
        %1561 = vmatprep.mubr.bf16.mxu0 0
        %1562 = vmatmul.mubr.bf16.gmra.mrb[0].mxu0 %v1505
        %v1563 = vpop.f32.mrb[0].mxu0
        %v1564 = vadd.f32 0.0, %v1563
        %v1565 = vpop.f32.mrb[0].mxu0
        %v1566 = vpop.f32.mrb[0].mxu0
        %v1567 = vadd.f32 0.0, %v1566
        %v1568 = vpop.f32.mrb[0].mxu0
        %1569 = vmatprep.mubr.bf16.mxu0 0
        %1570 = vmatmul.mubr.bf16.gmra.mrb[0].mxu0 %v1508
        %v1571 = vpop.f32.mrb[0].mxu0
        %v1572 = vadd.f32 0.0, %v1571
        %v1573 = vpop.f32.mrb[0].mxu0
        %v1574 = vpop.f32.mrb[0].mxu0
        %v1575 = vadd.f32 0.0, %v1574
        %v1576 = vpop.f32.mrb[0].mxu0
        %1577 = vdwg.mxu0
        %v1578 = vadd.f32 %v1370, %v1548
        %v1579 = vadd.f32 %v1371, %v1551
        %v1580 = vadd.f32 %v1372, %v1556
        %v1581 = vadd.f32 %v1373, %v1559
        %v1582 = vadd.f32 %v1374, %v1564
        %v1583 = vadd.f32 %v1375, %v1567
        %v1584 = vadd.f32 %v1376, %v1572
        %v1585 = vadd.f32 %v1377, %v1575
        %s1586 = scalar_lea.vmem [#allocation3], 256
        %v1587 = vld [vmem:[%s1586] sm:$0xff]
        %v1588 = vld [vmem:[%s1586 + $0x8] sm:$0xff]
        %v1589 = vld [vmem:[%s1586 + $0x10] sm:$0xff]
        %v1590 = vld [vmem:[%s1586 + $0x18] sm:$0xff]
        %v1591 = vld [vmem:[%s1586 + $0x20] sm:$0xff]
        %v1592 = vld [vmem:[%s1586 + $0x28] sm:$0xff]
        %v1593 = vld [vmem:[%s1586 + $0x30] sm:$0xff]
        %v1594 = vld [vmem:[%s1586 + $0x38] sm:$0xff]
        %v1603 = vunpack.c.l.b16 %v1587
        %v1604 = vunpack.c.h.b16 %v1587
        %v1605 = vunpack.c.l.b16 %v1588
        %v1606 = vunpack.c.h.b16 %v1588
        %v1607 = vunpack.c.l.b16 %v1589
        %v1608 = vunpack.c.h.b16 %v1589
        %v1609 = vunpack.c.l.b16 %v1590
        %v1610 = vunpack.c.h.b16 %v1590
        %v1611 = vunpack.c.l.b16 %v1591
        %v1612 = vunpack.c.h.b16 %v1591
        %v1613 = vunpack.c.l.b16 %v1592
        %v1614 = vunpack.c.h.b16 %v1592
        %v1615 = vunpack.c.l.b16 %v1593
        %v1616 = vunpack.c.h.b16 %v1593
        %v1617 = vunpack.c.l.b16 %v1594
        %v1618 = vunpack.c.h.b16 %v1594
        %v1619 = vpack.c.b16 %v1605, %v1603
        %v1620 = vpack.c.b16 %v1606, %v1604
        %v1621 = vpack.c.b16 %v1609, %v1607
        %v1622 = vpack.c.b16 %v1610, %v1608
        %v1623 = vpack.c.b16 %v1613, %v1611
        %v1624 = vpack.c.b16 %v1614, %v1612
        %v1625 = vpack.c.b16 %v1617, %v1615
        %v1626 = vpack.c.b16 %v1618, %v1616
        %1635 = vmatprep.subr.bf16.mxu0 0
        %1636 = vmatpush1.bf16.msra.mxu0 %v786
        %1637 = vmatprep.subr.bf16.mxu0 0
        %1638 = vmatpush1.bf16.msra.mxu0 %v787
        %1639 = vmatprep.subr.bf16.mxu0 0
        %1640 = vmatpush1.bf16.msra.mxu0 %v788
        %1641 = vmatprep.subr.bf16.mxu0 0
        %1642 = vmatpush1.bf16.msra.mxu0 %v789
        %1643 = vmatprep.subr.bf16.mxu0 0
        %1644 = vmatpush1.bf16.msra.mxu0 %v790
        %1645 = vmatprep.subr.bf16.mxu0 0
        %1646 = vmatpush1.bf16.msra.mxu0 %v791
        %1647 = vmatprep.subr.bf16.mxu0 0
        %1648 = vmatpush1.bf16.msra.mxu0 %v792
        %1649 = vmatprep.subr.bf16.mxu0 0
        %1650 = vmatpush1.bf16.msra.mxu0 %v793
        %1651 = vmatprep.subr.bf16.mxu0 0
        %1652 = vmatpush1.bf16.msra.mxu0 %v794
        %1653 = vmatprep.subr.bf16.mxu0 0
        %1654 = vmatpush1.bf16.msra.mxu0 %v795
        %1655 = vmatprep.subr.bf16.mxu0 0
        %1656 = vmatpush1.bf16.msra.mxu0 %v796
        %1657 = vmatprep.subr.bf16.mxu0 0
        %1658 = vmatpush1.bf16.msra.mxu0 %v797
        %1659 = vmatprep.subr.bf16.mxu0 0
        %1660 = vmatpush1.bf16.msra.mxu0 %v798
        %1661 = vmatprep.subr.bf16.mxu0 0
        %1662 = vmatpush1.bf16.msra.mxu0 %v799
        %1663 = vmatprep.subr.bf16.mxu0 0
        %1664 = vmatpush1.bf16.msra.mxu0 %v800
        %1665 = vmatprep.subr.bf16.mxu0 0
        %1666 = vmatpush1.bf16.msra.mxu0 %v801
        %1667 = vmatprep.mubr.bf16.mxu0 %v1620
        %1668 = vmatmul.mubr.bf16.gmra.mrb[0].mxu0 %v1619
        %v1669 = vpop.f32.mrb[0].mxu0
        %v1670 = vadd.f32 0.0, %v1669
        %v1671 = vpop.f32.mrb[0].mxu0
        %v1672 = vpop.f32.mrb[0].mxu0
        %v1673 = vadd.f32 0.0, %v1672
        %v1674 = vpop.f32.mrb[0].mxu0
        %1675 = vmatprep.mubr.bf16.mxu0 %v1622
        %1676 = vmatmul.mubr.bf16.gmra.mrb[0].mxu0 %v1621
        %v1677 = vpop.f32.mrb[0].mxu0
        %v1678 = vadd.f32 0.0, %v1677
        %v1679 = vpop.f32.mrb[0].mxu0
        %v1680 = vpop.f32.mrb[0].mxu0
        %v1681 = vadd.f32 0.0, %v1680
        %v1682 = vpop.f32.mrb[0].mxu0
        %1683 = vmatprep.mubr.bf16.mxu0 %v1624
        %1684 = vmatmul.mubr.bf16.gmra.mrb[0].mxu0 %v1623
        %v1685 = vpop.f32.mrb[0].mxu0
        %v1686 = vadd.f32 0.0, %v1685
        %v1687 = vpop.f32.mrb[0].mxu0
        %v1688 = vpop.f32.mrb[0].mxu0
        %v1689 = vadd.f32 0.0, %v1688
        %v1690 = vpop.f32.mrb[0].mxu0
        %1691 = vmatprep.mubr.bf16.mxu0 %v1626
        %1692 = vmatmul.mubr.bf16.gmra.mrb[0].mxu0 %v1625
        %v1693 = vpop.f32.mrb[0].mxu0
        %v1694 = vadd.f32 0.0, %v1693
        %v1695 = vpop.f32.mrb[0].mxu0
        %v1696 = vpop.f32.mrb[0].mxu0
        %v1697 = vadd.f32 0.0, %v1696
        %v1698 = vpop.f32.mrb[0].mxu0
        %1699 = vdwg.mxu0
        %v1700 = vpack.c.bf16 %v1673, %v1670
        %v1701 = vpack.c.bf16 %v1681, %v1678
        %v1702 = vpack.c.bf16 %v1689, %v1686
        %v1703 = vpack.c.bf16 %v1697, %v1694
        %s1704 = scalar_lea.vmem %s2, 8
        %v1705 = vld [vmem:[%s1704] sm:$0x3]
        %v1707 = vsel %vm1008, %v1700, 0
        %v1710 = vsel %vm1008, %v1701, 0
        %v1713 = vsel %vm1008, %v1702, 0
        %v1716 = vsel %vm1008, %v1703, 0
        %v1719 = vsel %vm1021, %v1705, 0
        %1721 = vmatprep.subr.bf16.mxu0 0
        %1722 = vmatpush1.bf16.msra.mxu0 %v1719
        %1723 = vmatprep.subr.bf16.mxu0 0
        %1724 = vmatpush1.bf16.msra.mxu0 0
        %1725 = vmatprep.subr.bf16.mxu0 0
        %1726 = vmatpush1.bf16.msra.mxu0 0
        %1727 = vmatprep.subr.bf16.mxu0 0
        %1728 = vmatpush1.bf16.msra.mxu0 0
        %1729 = vmatprep.subr.bf16.mxu0 0
        %1730 = vmatpush1.bf16.msra.mxu0 0
        %1731 = vmatprep.subr.bf16.mxu0 0
        %1732 = vmatpush1.bf16.msra.mxu0 0
        %1733 = vmatprep.subr.bf16.mxu0 0
        %1734 = vmatpush1.bf16.msra.mxu0 0
        %1735 = vmatprep.subr.bf16.mxu0 0
        %1736 = vmatpush1.bf16.msra.mxu0 0
        %1737 = vmatprep.subr.bf16.mxu0 0
        %1738 = vmatpush1.bf16.msra.mxu0 0
        %1739 = vmatprep.subr.bf16.mxu0 0
        %1740 = vmatpush1.bf16.msra.mxu0 0
        %1741 = vmatprep.subr.bf16.mxu0 0
        %1742 = vmatpush1.bf16.msra.mxu0 0
        %1743 = vmatprep.subr.bf16.mxu0 0
        %1744 = vmatpush1.bf16.msra.mxu0 0
        %1745 = vmatprep.subr.bf16.mxu0 0
        %1746 = vmatpush1.bf16.msra.mxu0 0
        %1747 = vmatprep.subr.bf16.mxu0 0
        %1748 = vmatpush1.bf16.msra.mxu0 0
        %1749 = vmatprep.subr.bf16.mxu0 0
        %1750 = vmatpush1.bf16.msra.mxu0 0
        %1751 = vmatprep.subr.bf16.mxu0 0
        %1752 = vmatpush1.bf16.msra.mxu0 0
        %1753 = vmatprep.mubr.bf16.mxu0 0
        %1754 = vmatmul.mubr.bf16.gmra.mrb[0].mxu0 %v1707
        %v1755 = vpop.f32.mrb[0].mxu0
        %v1756 = vadd.f32 0.0, %v1755
        %v1757 = vpop.f32.mrb[0].mxu0
        %v1758 = vpop.f32.mrb[0].mxu0
        %v1759 = vadd.f32 0.0, %v1758
        %v1760 = vpop.f32.mrb[0].mxu0
        %1761 = vmatprep.mubr.bf16.mxu0 0
        %1762 = vmatmul.mubr.bf16.gmra.mrb[0].mxu0 %v1710
        %v1763 = vpop.f32.mrb[0].mxu0
        %v1764 = vadd.f32 0.0, %v1763
        %v1765 = vpop.f32.mrb[0].mxu0
        %v1766 = vpop.f32.mrb[0].mxu0
        %v1767 = vadd.f32 0.0, %v1766
        %v1768 = vpop.f32.mrb[0].mxu0
        %1769 = vmatprep.mubr.bf16.mxu0 0
        %1770 = vmatmul.mubr.bf16.gmra.mrb[0].mxu0 %v1713
        %v1771 = vpop.f32.mrb[0].mxu0
        %v1772 = vadd.f32 0.0, %v1771
        %v1773 = vpop.f32.mrb[0].mxu0
        %v1774 = vpop.f32.mrb[0].mxu0
        %v1775 = vadd.f32 0.0, %v1774
        %v1776 = vpop.f32.mrb[0].mxu0
        %1777 = vmatprep.mubr.bf16.mxu0 0
        %1778 = vmatmul.mubr.bf16.gmra.mrb[0].mxu0 %v1716
        %v1779 = vpop.f32.mrb[0].mxu0
        %v1780 = vadd.f32 0.0, %v1779
        %v1781 = vpop.f32.mrb[0].mxu0
        %v1782 = vpop.f32.mrb[0].mxu0
        %v1783 = vadd.f32 0.0, %v1782
        %v1784 = vpop.f32.mrb[0].mxu0
        %1785 = vdwg.mxu0
        %v1786 = vadd.f32 %v1578, %v1756
        %v1787 = vadd.f32 %v1579, %v1759
        %v1788 = vadd.f32 %v1580, %v1764
        %v1789 = vadd.f32 %v1581, %v1767
        %v1790 = vadd.f32 %v1582, %v1772
        %v1791 = vadd.f32 %v1583, %v1775
        %v1792 = vadd.f32 %v1584, %v1780
        %v1793 = vadd.f32 %v1585, %v1783
        %s1794 = scalar_lea.vmem [#allocation3], 320
        %v1795 = vld [vmem:[%s1794] sm:$0xff]
        %v1796 = vld [vmem:[%s1794 + $0x8] sm:$0xff]
        %v1797 = vld [vmem:[%s1794 + $0x10] sm:$0xff]
        %v1798 = vld [vmem:[%s1794 + $0x18] sm:$0xff]
        %v1799 = vld [vmem:[%s1794 + $0x20] sm:$0xff]
        %v1800 = vld [vmem:[%s1794 + $0x28] sm:$0xff]
        %v1801 = vld [vmem:[%s1794 + $0x30] sm:$0xff]
        %v1802 = vld [vmem:[%s1794 + $0x38] sm:$0xff]
        %v1811 = vunpack.c.l.b16 %v1795
        %v1812 = vunpack.c.h.b16 %v1795
        %v1813 = vunpack.c.l.b16 %v1796
        %v1814 = vunpack.c.h.b16 %v1796
        %v1815 = vunpack.c.l.b16 %v1797
        %v1816 = vunpack.c.h.b16 %v1797
        %v1817 = vunpack.c.l.b16 %v1798
        %v1818 = vunpack.c.h.b16 %v1798
        %v1819 = vunpack.c.l.b16 %v1799
        %v1820 = vunpack.c.h.b16 %v1799
        %v1821 = vunpack.c.l.b16 %v1800
        %v1822 = vunpack.c.h.b16 %v1800
        %v1823 = vunpack.c.l.b16 %v1801
        %v1824 = vunpack.c.h.b16 %v1801
        %v1825 = vunpack.c.l.b16 %v1802
        %v1826 = vunpack.c.h.b16 %v1802
        %v1827 = vpack.c.b16 %v1813, %v1811
        %v1828 = vpack.c.b16 %v1814, %v1812
        %v1829 = vpack.c.b16 %v1817, %v1815
        %v1830 = vpack.c.b16 %v1818, %v1816
        %v1831 = vpack.c.b16 %v1821, %v1819
        %v1832 = vpack.c.b16 %v1822, %v1820
        %v1833 = vpack.c.b16 %v1825, %v1823
        %v1834 = vpack.c.b16 %v1826, %v1824
        %1843 = vmatprep.subr.bf16.mxu0 0
        %1844 = vmatpush1.bf16.msra.mxu0 %v786
        %1845 = vmatprep.subr.bf16.mxu0 0
        %1846 = vmatpush1.bf16.msra.mxu0 %v787
        %1847 = vmatprep.subr.bf16.mxu0 0
        %1848 = vmatpush1.bf16.msra.mxu0 %v788
        %1849 = vmatprep.subr.bf16.mxu0 0
        %1850 = vmatpush1.bf16.msra.mxu0 %v789
        %1851 = vmatprep.subr.bf16.mxu0 0
        %1852 = vmatpush1.bf16.msra.mxu0 %v790
        %1853 = vmatprep.subr.bf16.mxu0 0
        %1854 = vmatpush1.bf16.msra.mxu0 %v791
        %1855 = vmatprep.subr.bf16.mxu0 0
        %1856 = vmatpush1.bf16.msra.mxu0 %v792
        %1857 = vmatprep.subr.bf16.mxu0 0
        %1858 = vmatpush1.bf16.msra.mxu0 %v793
        %1859 = vmatprep.subr.bf16.mxu0 0
        %1860 = vmatpush1.bf16.msra.mxu0 %v794
        %1861 = vmatprep.subr.bf16.mxu0 0
        %1862 = vmatpush1.bf16.msra.mxu0 %v795
        %1863 = vmatprep.subr.bf16.mxu0 0
        %1864 = vmatpush1.bf16.msra.mxu0 %v796
        %1865 = vmatprep.subr.bf16.mxu0 0
        %1866 = vmatpush1.bf16.msra.mxu0 %v797
        %1867 = vmatprep.subr.bf16.mxu0 0
        %1868 = vmatpush1.bf16.msra.mxu0 %v798
        %1869 = vmatprep.subr.bf16.mxu0 0
        %1870 = vmatpush1.bf16.msra.mxu0 %v799
        %1871 = vmatprep.subr.bf16.mxu0 0
        %1872 = vmatpush1.bf16.msra.mxu0 %v800
        %1873 = vmatprep.subr.bf16.mxu0 0
        %1874 = vmatpush1.bf16.msra.mxu0 %v801
        %1875 = vmatprep.mubr.bf16.mxu0 %v1828
        %1876 = vmatmul.mubr.bf16.gmra.mrb[0].mxu0 %v1827
        %v1877 = vpop.f32.mrb[0].mxu0
        %v1878 = vadd.f32 0.0, %v1877
        %v1879 = vpop.f32.mrb[0].mxu0
        %v1880 = vpop.f32.mrb[0].mxu0
        %v1881 = vadd.f32 0.0, %v1880
        %v1882 = vpop.f32.mrb[0].mxu0
        %1883 = vmatprep.mubr.bf16.mxu0 %v1830
        %1884 = vmatmul.mubr.bf16.gmra.mrb[0].mxu0 %v1829
        %v1885 = vpop.f32.mrb[0].mxu0
        %v1886 = vadd.f32 0.0, %v1885
        %v1887 = vpop.f32.mrb[0].mxu0
        %v1888 = vpop.f32.mrb[0].mxu0
        %v1889 = vadd.f32 0.0, %v1888
        %v1890 = vpop.f32.mrb[0].mxu0
        %1891 = vmatprep.mubr.bf16.mxu0 %v1832
        %1892 = vmatmul.mubr.bf16.gmra.mrb[0].mxu0 %v1831
        %v1893 = vpop.f32.mrb[0].mxu0
        %v1894 = vadd.f32 0.0, %v1893
        %v1895 = vpop.f32.mrb[0].mxu0
        %v1896 = vpop.f32.mrb[0].mxu0
        %v1897 = vadd.f32 0.0, %v1896
        %v1898 = vpop.f32.mrb[0].mxu0
        %1899 = vmatprep.mubr.bf16.mxu0 %v1834
        %1900 = vmatmul.mubr.bf16.gmra.mrb[0].mxu0 %v1833
        %v1901 = vpop.f32.mrb[0].mxu0
        %v1902 = vadd.f32 0.0, %v1901
        %v1903 = vpop.f32.mrb[0].mxu0
        %v1904 = vpop.f32.mrb[0].mxu0
        %v1905 = vadd.f32 0.0, %v1904
        %v1906 = vpop.f32.mrb[0].mxu0
        %1907 = vdwg.mxu0
        %v1908 = vpack.c.bf16 %v1881, %v1878
        %v1909 = vpack.c.bf16 %v1889, %v1886
        %v1910 = vpack.c.bf16 %v1897, %v1894
        %v1911 = vpack.c.bf16 %v1905, %v1902
        %s1912 = scalar_lea.vmem %s2, 10
        %v1913 = vld [vmem:[%s1912] sm:$0x3]
        %v1915 = vsel %vm1008, %v1908, 0
        %v1918 = vsel %vm1008, %v1909, 0
        %v1921 = vsel %vm1008, %v1910, 0
        %v1924 = vsel %vm1008, %v1911, 0
        %v1927 = vsel %vm1021, %v1913, 0
        %1929 = vmatprep.subr.bf16.mxu0 0
        %1930 = vmatpush1.bf16.msra.mxu0 %v1927
        %1931 = vmatprep.subr.bf16.mxu0 0
        %1932 = vmatpush1.bf16.msra.mxu0 0
        %1933 = vmatprep.subr.bf16.mxu0 0
        %1934 = vmatpush1.bf16.msra.mxu0 0
        %1935 = vmatprep.subr.bf16.mxu0 0
        %1936 = vmatpush1.bf16.msra.mxu0 0
        %1937 = vmatprep.subr.bf16.mxu0 0
        %1938 = vmatpush1.bf16.msra.mxu0 0
        %1939 = vmatprep.subr.bf16.mxu0 0
        %1940 = vmatpush1.bf16.msra.mxu0 0
        %1941 = vmatprep.subr.bf16.mxu0 0
        %1942 = vmatpush1.bf16.msra.mxu0 0
        %1943 = vmatprep.subr.bf16.mxu0 0
        %1944 = vmatpush1.bf16.msra.mxu0 0
        %1945 = vmatprep.subr.bf16.mxu0 0
        %1946 = vmatpush1.bf16.msra.mxu0 0
        %1947 = vmatprep.subr.bf16.mxu0 0
        %1948 = vmatpush1.bf16.msra.mxu0 0
        %1949 = vmatprep.subr.bf16.mxu0 0
        %1950 = vmatpush1.bf16.msra.mxu0 0
        %1951 = vmatprep.subr.bf16.mxu0 0
        %1952 = vmatpush1.bf16.msra.mxu0 0
        %1953 = vmatprep.subr.bf16.mxu0 0
        %1954 = vmatpush1.bf16.msra.mxu0 0
        %1955 = vmatprep.subr.bf16.mxu0 0
        %1956 = vmatpush1.bf16.msra.mxu0 0
        %1957 = vmatprep.subr.bf16.mxu0 0
        %1958 = vmatpush1.bf16.msra.mxu0 0
        %1959 = vmatprep.subr.bf16.mxu0 0
        %1960 = vmatpush1.bf16.msra.mxu0 0
        %1961 = vmatprep.mubr.bf16.mxu0 0
        %1962 = vmatmul.mubr.bf16.gmra.mrb[0].mxu0 %v1915
        %v1963 = vpop.f32.mrb[0].mxu0
        %v1964 = vadd.f32 0.0, %v1963
        %v1965 = vpop.f32.mrb[0].mxu0
        %v1966 = vpop.f32.mrb[0].mxu0
        %v1967 = vadd.f32 0.0, %v1966
        %v1968 = vpop.f32.mrb[0].mxu0
        %1969 = vmatprep.mubr.bf16.mxu0 0
        %1970 = vmatmul.mubr.bf16.gmra.mrb[0].mxu0 %v1918
        %v1971 = vpop.f32.mrb[0].mxu0
        %v1972 = vadd.f32 0.0, %v1971
        %v1973 = vpop.f32.mrb[0].mxu0
        %v1974 = vpop.f32.mrb[0].mxu0
        %v1975 = vadd.f32 0.0, %v1974
        %v1976 = vpop.f32.mrb[0].mxu0
        %1977 = vmatprep.mubr.bf16.mxu0 0
        %1978 = vmatmul.mubr.bf16.gmra.mrb[0].mxu0 %v1921
        %v1979 = vpop.f32.mrb[0].mxu0
        %v1980 = vadd.f32 0.0, %v1979
        %v1981 = vpop.f32.mrb[0].mxu0
        %v1982 = vpop.f32.mrb[0].mxu0
        %v1983 = vadd.f32 0.0, %v1982
        %v1984 = vpop.f32.mrb[0].mxu0
        %1985 = vmatprep.mubr.bf16.mxu0 0
        %1986 = vmatmul.mubr.bf16.gmra.mrb[0].mxu0 %v1924
        %v1987 = vpop.f32.mrb[0].mxu0
        %v1988 = vadd.f32 0.0, %v1987
        %v1989 = vpop.f32.mrb[0].mxu0
        %v1990 = vpop.f32.mrb[0].mxu0
        %v1991 = vadd.f32 0.0, %v1990
        %v1992 = vpop.f32.mrb[0].mxu0
        %1993 = vdwg.mxu0
        %v1994 = vadd.f32 %v1786, %v1964
        %v1995 = vadd.f32 %v1787, %v1967
        %v1996 = vadd.f32 %v1788, %v1972
        %v1997 = vadd.f32 %v1789, %v1975
        %v1998 = vadd.f32 %v1790, %v1980
        %v1999 = vadd.f32 %v1791, %v1983
        %v2000 = vadd.f32 %v1792, %v1988
        %v2001 = vadd.f32 %v1793, %v1991
        %s2002 = scalar_lea.vmem [#allocation3], 384
        %v2003 = vld [vmem:[%s2002] sm:$0xff]
        %v2004 = vld [vmem:[%s2002 + $0x8] sm:$0xff]
        %v2005 = vld [vmem:[%s2002 + $0x10] sm:$0xff]
        %v2006 = vld [vmem:[%s2002 + $0x18] sm:$0xff]
        %v2007 = vld [vmem:[%s2002 + $0x20] sm:$0xff]
        %v2008 = vld [vmem:[%s2002 + $0x28] sm:$0xff]
        %v2009 = vld [vmem:[%s2002 + $0x30] sm:$0xff]
        %v2010 = vld [vmem:[%s2002 + $0x38] sm:$0xff]
        %v2019 = vunpack.c.l.b16 %v2003
        %v2020 = vunpack.c.h.b16 %v2003
        %v2021 = vunpack.c.l.b16 %v2004
        %v2022 = vunpack.c.h.b16 %v2004
        %v2023 = vunpack.c.l.b16 %v2005
        %v2024 = vunpack.c.h.b16 %v2005
        %v2025 = vunpack.c.l.b16 %v2006
        %v2026 = vunpack.c.h.b16 %v2006
        %v2027 = vunpack.c.l.b16 %v2007
        %v2028 = vunpack.c.h.b16 %v2007
        %v2029 = vunpack.c.l.b16 %v2008
        %v2030 = vunpack.c.h.b16 %v2008
        %v2031 = vunpack.c.l.b16 %v2009
        %v2032 = vunpack.c.h.b16 %v2009
        %v2033 = vunpack.c.l.b16 %v2010
        %v2034 = vunpack.c.h.b16 %v2010
        %v2035 = vpack.c.b16 %v2021, %v2019
        %v2036 = vpack.c.b16 %v2022, %v2020
        %v2037 = vpack.c.b16 %v2025, %v2023
        %v2038 = vpack.c.b16 %v2026, %v2024
        %v2039 = vpack.c.b16 %v2029, %v2027
        %v2040 = vpack.c.b16 %v2030, %v2028
        %v2041 = vpack.c.b16 %v2033, %v2031
        %v2042 = vpack.c.b16 %v2034, %v2032
        %2051 = vmatprep.subr.bf16.mxu0 0
        %2052 = vmatpush1.bf16.msra.mxu0 %v786
        %2053 = vmatprep.subr.bf16.mxu0 0
        %2054 = vmatpush1.bf16.msra.mxu0 %v787
        %2055 = vmatprep.subr.bf16.mxu0 0
        %2056 = vmatpush1.bf16.msra.mxu0 %v788
        %2057 = vmatprep.subr.bf16.mxu0 0
        %2058 = vmatpush1.bf16.msra.mxu0 %v789
        %2059 = vmatprep.subr.bf16.mxu0 0
        %2060 = vmatpush1.bf16.msra.mxu0 %v790
        %2061 = vmatprep.subr.bf16.mxu0 0
        %2062 = vmatpush1.bf16.msra.mxu0 %v791
        %2063 = vmatprep.subr.bf16.mxu0 0
        %2064 = vmatpush1.bf16.msra.mxu0 %v792
        %2065 = vmatprep.subr.bf16.mxu0 0
        %2066 = vmatpush1.bf16.msra.mxu0 %v793
        %2067 = vmatprep.subr.bf16.mxu0 0
        %2068 = vmatpush1.bf16.msra.mxu0 %v794
        %2069 = vmatprep.subr.bf16.mxu0 0
        %2070 = vmatpush1.bf16.msra.mxu0 %v795
        %2071 = vmatprep.subr.bf16.mxu0 0
        %2072 = vmatpush1.bf16.msra.mxu0 %v796
        %2073 = vmatprep.subr.bf16.mxu0 0
        %2074 = vmatpush1.bf16.msra.mxu0 %v797
        %2075 = vmatprep.subr.bf16.mxu0 0
        %2076 = vmatpush1.bf16.msra.mxu0 %v798
        %2077 = vmatprep.subr.bf16.mxu0 0
        %2078 = vmatpush1.bf16.msra.mxu0 %v799
        %2079 = vmatprep.subr.bf16.mxu0 0
        %2080 = vmatpush1.bf16.msra.mxu0 %v800
        %2081 = vmatprep.subr.bf16.mxu0 0
        %2082 = vmatpush1.bf16.msra.mxu0 %v801
        %2083 = vmatprep.mubr.bf16.mxu0 %v2036
        %2084 = vmatmul.mubr.bf16.gmra.mrb[0].mxu0 %v2035
        %v2085 = vpop.f32.mrb[0].mxu0
        %v2086 = vadd.f32 0.0, %v2085
        %v2087 = vpop.f32.mrb[0].mxu0
        %v2088 = vpop.f32.mrb[0].mxu0
        %v2089 = vadd.f32 0.0, %v2088
        %v2090 = vpop.f32.mrb[0].mxu0
        %2091 = vmatprep.mubr.bf16.mxu0 %v2038
        %2092 = vmatmul.mubr.bf16.gmra.mrb[0].mxu0 %v2037
        %v2093 = vpop.f32.mrb[0].mxu0
        %v2094 = vadd.f32 0.0, %v2093
        %v2095 = vpop.f32.mrb[0].mxu0
        %v2096 = vpop.f32.mrb[0].mxu0
        %v2097 = vadd.f32 0.0, %v2096
        %v2098 = vpop.f32.mrb[0].mxu0
        %2099 = vmatprep.mubr.bf16.mxu0 %v2040
        %2100 = vmatmul.mubr.bf16.gmra.mrb[0].mxu0 %v2039
        %v2101 = vpop.f32.mrb[0].mxu0
        %v2102 = vadd.f32 0.0, %v2101
        %v2103 = vpop.f32.mrb[0].mxu0
        %v2104 = vpop.f32.mrb[0].mxu0
        %v2105 = vadd.f32 0.0, %v2104
        %v2106 = vpop.f32.mrb[0].mxu0
        %2107 = vmatprep.mubr.bf16.mxu0 %v2042
        %2108 = vmatmul.mubr.bf16.gmra.mrb[0].mxu0 %v2041
        %v2109 = vpop.f32.mrb[0].mxu0
        %v2110 = vadd.f32 0.0, %v2109
        %v2111 = vpop.f32.mrb[0].mxu0
        %v2112 = vpop.f32.mrb[0].mxu0
        %v2113 = vadd.f32 0.0, %v2112
        %v2114 = vpop.f32.mrb[0].mxu0
        %2115 = vdwg.mxu0
        %v2116 = vpack.c.bf16 %v2089, %v2086
        %v2117 = vpack.c.bf16 %v2097, %v2094
        %v2118 = vpack.c.bf16 %v2105, %v2102
        %v2119 = vpack.c.bf16 %v2113, %v2110
        %s2120 = scalar_lea.vmem %s2, 12
        %v2121 = vld [vmem:[%s2120] sm:$0x3]
        %v2123 = vsel %vm1008, %v2116, 0
        %v2126 = vsel %vm1008, %v2117, 0
        %v2129 = vsel %vm1008, %v2118, 0
        %v2132 = vsel %vm1008, %v2119, 0
        %v2135 = vsel %vm1021, %v2121, 0
        %2137 = vmatprep.subr.bf16.mxu0 0
        %2138 = vmatpush1.bf16.msra.mxu0 %v2135
        %2139 = vmatprep.subr.bf16.mxu0 0
        %2140 = vmatpush1.bf16.msra.mxu0 0
        %2141 = vmatprep.subr.bf16.mxu0 0
        %2142 = vmatpush1.bf16.msra.mxu0 0
        %2143 = vmatprep.subr.bf16.mxu0 0
        %2144 = vmatpush1.bf16.msra.mxu0 0
        %2145 = vmatprep.subr.bf16.mxu0 0
        %2146 = vmatpush1.bf16.msra.mxu0 0
        %2147 = vmatprep.subr.bf16.mxu0 0
        %2148 = vmatpush1.bf16.msra.mxu0 0
        %2149 = vmatprep.subr.bf16.mxu0 0
        %2150 = vmatpush1.bf16.msra.mxu0 0
        %2151 = vmatprep.subr.bf16.mxu0 0
        %2152 = vmatpush1.bf16.msra.mxu0 0
        %2153 = vmatprep.subr.bf16.mxu0 0
        %2154 = vmatpush1.bf16.msra.mxu0 0
        %2155 = vmatprep.subr.bf16.mxu0 0
        %2156 = vmatpush1.bf16.msra.mxu0 0
        %2157 = vmatprep.subr.bf16.mxu0 0
        %2158 = vmatpush1.bf16.msra.mxu0 0
        %2159 = vmatprep.subr.bf16.mxu0 0
        %2160 = vmatpush1.bf16.msra.mxu0 0
        %2161 = vmatprep.subr.bf16.mxu0 0
        %2162 = vmatpush1.bf16.msra.mxu0 0
        %2163 = vmatprep.subr.bf16.mxu0 0
        %2164 = vmatpush1.bf16.msra.mxu0 0
        %2165 = vmatprep.subr.bf16.mxu0 0
        %2166 = vmatpush1.bf16.msra.mxu0 0
        %2167 = vmatprep.subr.bf16.mxu0 0
        %2168 = vmatpush1.bf16.msra.mxu0 0
        %2169 = vmatprep.mubr.bf16.mxu0 0
        %2170 = vmatmul.mubr.bf16.gmra.mrb[0].mxu0 %v2123
        %v2171 = vpop.f32.mrb[0].mxu0
        %v2172 = vadd.f32 0.0, %v2171
        %v2173 = vpop.f32.mrb[0].mxu0
        %v2174 = vpop.f32.mrb[0].mxu0
        %v2175 = vadd.f32 0.0, %v2174
        %v2176 = vpop.f32.mrb[0].mxu0
        %2177 = vmatprep.mubr.bf16.mxu0 0
        %2178 = vmatmul.mubr.bf16.gmra.mrb[0].mxu0 %v2126
        %v2179 = vpop.f32.mrb[0].mxu0
        %v2180 = vadd.f32 0.0, %v2179
        %v2181 = vpop.f32.mrb[0].mxu0
        %v2182 = vpop.f32.mrb[0].mxu0
        %v2183 = vadd.f32 0.0, %v2182
        %v2184 = vpop.f32.mrb[0].mxu0
        %2185 = vmatprep.mubr.bf16.mxu0 0
        %2186 = vmatmul.mubr.bf16.gmra.mrb[0].mxu0 %v2129
        %v2187 = vpop.f32.mrb[0].mxu0
        %v2188 = vadd.f32 0.0, %v2187
        %v2189 = vpop.f32.mrb[0].mxu0
        %v2190 = vpop.f32.mrb[0].mxu0
        %v2191 = vadd.f32 0.0, %v2190
        %v2192 = vpop.f32.mrb[0].mxu0
        %2193 = vmatprep.mubr.bf16.mxu0 0
        %2194 = vmatmul.mubr.bf16.gmra.mrb[0].mxu0 %v2132
        %v2195 = vpop.f32.mrb[0].mxu0
        %v2196 = vadd.f32 0.0, %v2195
        %v2197 = vpop.f32.mrb[0].mxu0
        %v2198 = vpop.f32.mrb[0].mxu0
        %v2199 = vadd.f32 0.0, %v2198
        %v2200 = vpop.f32.mrb[0].mxu0
        %2201 = vdwg.mxu0
        %v2202 = vadd.f32 %v1994, %v2172
        %v2203 = vadd.f32 %v1995, %v2175
        %v2204 = vadd.f32 %v1996, %v2180
        %v2205 = vadd.f32 %v1997, %v2183
        %v2206 = vadd.f32 %v1998, %v2188
        %v2207 = vadd.f32 %v1999, %v2191
        %v2208 = vadd.f32 %v2000, %v2196
        %v2209 = vadd.f32 %v2001, %v2199
        %s2210 = scalar_lea.vmem [#allocation3], 448
        %v2211 = vld [vmem:[%s2210] sm:$0xff]
        %v2212 = vld [vmem:[%s2210 + $0x8] sm:$0xff]
        %v2213 = vld [vmem:[%s2210 + $0x10] sm:$0xff]
        %v2214 = vld [vmem:[%s2210 + $0x18] sm:$0xff]
        %v2215 = vld [vmem:[%s2210 + $0x20] sm:$0xff]
        %v2216 = vld [vmem:[%s2210 + $0x28] sm:$0xff]
        %v2217 = vld [vmem:[%s2210 + $0x30] sm:$0xff]
        %v2218 = vld [vmem:[%s2210 + $0x38] sm:$0xff]
        %v2227 = vunpack.c.l.b16 %v2211
        %v2228 = vunpack.c.h.b16 %v2211
        %v2229 = vunpack.c.l.b16 %v2212
        %v2230 = vunpack.c.h.b16 %v2212
        %v2231 = vunpack.c.l.b16 %v2213
        %v2232 = vunpack.c.h.b16 %v2213
        %v2233 = vunpack.c.l.b16 %v2214
        %v2234 = vunpack.c.h.b16 %v2214
        %v2235 = vunpack.c.l.b16 %v2215
        %v2236 = vunpack.c.h.b16 %v2215
        %v2237 = vunpack.c.l.b16 %v2216
        %v2238 = vunpack.c.h.b16 %v2216
        %v2239 = vunpack.c.l.b16 %v2217
        %v2240 = vunpack.c.h.b16 %v2217
        %v2241 = vunpack.c.l.b16 %v2218
        %v2242 = vunpack.c.h.b16 %v2218
        %v2243 = vpack.c.b16 %v2229, %v2227
        %v2244 = vpack.c.b16 %v2230, %v2228
        %v2245 = vpack.c.b16 %v2233, %v2231
        %v2246 = vpack.c.b16 %v2234, %v2232
        %v2247 = vpack.c.b16 %v2237, %v2235
        %v2248 = vpack.c.b16 %v2238, %v2236
        %v2249 = vpack.c.b16 %v2241, %v2239
        %v2250 = vpack.c.b16 %v2242, %v2240
        %2259 = vmatprep.subr.bf16.mxu0 0
        %2260 = vmatpush1.bf16.msra.mxu0 %v786
        %2261 = vmatprep.subr.bf16.mxu0 0
        %2262 = vmatpush1.bf16.msra.mxu0 %v787
        %2263 = vmatprep.subr.bf16.mxu0 0
        %2264 = vmatpush1.bf16.msra.mxu0 %v788
        %2265 = vmatprep.subr.bf16.mxu0 0
        %2266 = vmatpush1.bf16.msra.mxu0 %v789
        %2267 = vmatprep.subr.bf16.mxu0 0
        %2268 = vmatpush1.bf16.msra.mxu0 %v790
        %2269 = vmatprep.subr.bf16.mxu0 0
        %2270 = vmatpush1.bf16.msra.mxu0 %v791
        %2271 = vmatprep.subr.bf16.mxu0 0
        %2272 = vmatpush1.bf16.msra.mxu0 %v792
        %2273 = vmatprep.subr.bf16.mxu0 0
        %2274 = vmatpush1.bf16.msra.mxu0 %v793
        %2275 = vmatprep.subr.bf16.mxu0 0
        %2276 = vmatpush1.bf16.msra.mxu0 %v794
        %2277 = vmatprep.subr.bf16.mxu0 0
        %2278 = vmatpush1.bf16.msra.mxu0 %v795
        %2279 = vmatprep.subr.bf16.mxu0 0
        %2280 = vmatpush1.bf16.msra.mxu0 %v796
        %2281 = vmatprep.subr.bf16.mxu0 0
        %2282 = vmatpush1.bf16.msra.mxu0 %v797
        %2283 = vmatprep.subr.bf16.mxu0 0
        %2284 = vmatpush1.bf16.msra.mxu0 %v798
        %2285 = vmatprep.subr.bf16.mxu0 0
        %2286 = vmatpush1.bf16.msra.mxu0 %v799
        %2287 = vmatprep.subr.bf16.mxu0 0
        %2288 = vmatpush1.bf16.msra.mxu0 %v800
        %2289 = vmatprep.subr.bf16.mxu0 0
        %2290 = vmatpush1.bf16.msra.mxu0 %v801
        %2291 = vmatprep.mubr.bf16.mxu0 %v2244
        %2292 = vmatmul.mubr.bf16.gmra.mrb[0].mxu0 %v2243
        %v2293 = vpop.f32.mrb[0].mxu0
        %v2294 = vadd.f32 0.0, %v2293
        %v2295 = vpop.f32.mrb[0].mxu0
        %v2296 = vpop.f32.mrb[0].mxu0
        %v2297 = vadd.f32 0.0, %v2296
        %v2298 = vpop.f32.mrb[0].mxu0
        %2299 = vmatprep.mubr.bf16.mxu0 %v2246
        %2300 = vmatmul.mubr.bf16.gmra.mrb[0].mxu0 %v2245
        %v2301 = vpop.f32.mrb[0].mxu0
        %v2302 = vadd.f32 0.0, %v2301
        %v2303 = vpop.f32.mrb[0].mxu0
        %v2304 = vpop.f32.mrb[0].mxu0
        %v2305 = vadd.f32 0.0, %v2304
        %v2306 = vpop.f32.mrb[0].mxu0
        %2307 = vmatprep.mubr.bf16.mxu0 %v2248
        %2308 = vmatmul.mubr.bf16.gmra.mrb[0].mxu0 %v2247
        %v2309 = vpop.f32.mrb[0].mxu0
        %v2310 = vadd.f32 0.0, %v2309
        %v2311 = vpop.f32.mrb[0].mxu0
        %v2312 = vpop.f32.mrb[0].mxu0
        %v2313 = vadd.f32 0.0, %v2312
        %v2314 = vpop.f32.mrb[0].mxu0
        %2315 = vmatprep.mubr.bf16.mxu0 %v2250
        %2316 = vmatmul.mubr.bf16.gmra.mrb[0].mxu0 %v2249
        %v2317 = vpop.f32.mrb[0].mxu0
        %v2318 = vadd.f32 0.0, %v2317
        %v2319 = vpop.f32.mrb[0].mxu0
        %v2320 = vpop.f32.mrb[0].mxu0
        %v2321 = vadd.f32 0.0, %v2320
        %v2322 = vpop.f32.mrb[0].mxu0
        %2323 = vdwg.mxu0
        %v2324 = vpack.c.bf16 %v2297, %v2294
        %v2325 = vpack.c.bf16 %v2305, %v2302
        %v2326 = vpack.c.bf16 %v2313, %v2310
        %v2327 = vpack.c.bf16 %v2321, %v2318
        %s2328 = scalar_lea.vmem %s2, 14
        %v2329 = vld [vmem:[%s2328] sm:$0x3]
        %v2331 = vsel %vm1008, %v2324, 0
        %v2334 = vsel %vm1008, %v2325, 0
        %v2337 = vsel %vm1008, %v2326, 0
        %v2340 = vsel %vm1008, %v2327, 0
        %v2343 = vsel %vm1021, %v2329, 0
        %2345 = vmatprep.subr.bf16.mxu0 0
        %2346 = vmatpush1.bf16.msra.mxu0 %v2343
        %2347 = vmatprep.subr.bf16.mxu0 0
        %2348 = vmatpush1.bf16.msra.mxu0 0
        %2349 = vmatprep.subr.bf16.mxu0 0
        %2350 = vmatpush1.bf16.msra.mxu0 0
        %2351 = vmatprep.subr.bf16.mxu0 0
        %2352 = vmatpush1.bf16.msra.mxu0 0
        %2353 = vmatprep.subr.bf16.mxu0 0
        %2354 = vmatpush1.bf16.msra.mxu0 0
        %2355 = vmatprep.subr.bf16.mxu0 0
        %2356 = vmatpush1.bf16.msra.mxu0 0
        %2357 = vmatprep.subr.bf16.mxu0 0
        %2358 = vmatpush1.bf16.msra.mxu0 0
        %2359 = vmatprep.subr.bf16.mxu0 0
        %2360 = vmatpush1.bf16.msra.mxu0 0
        %2361 = vmatprep.subr.bf16.mxu0 0
        %2362 = vmatpush1.bf16.msra.mxu0 0
        %2363 = vmatprep.subr.bf16.mxu0 0
        %2364 = vmatpush1.bf16.msra.mxu0 0
        %2365 = vmatprep.subr.bf16.mxu0 0
        %2366 = vmatpush1.bf16.msra.mxu0 0
        %2367 = vmatprep.subr.bf16.mxu0 0
        %2368 = vmatpush1.bf16.msra.mxu0 0
        %2369 = vmatprep.subr.bf16.mxu0 0
        %2370 = vmatpush1.bf16.msra.mxu0 0
        %2371 = vmatprep.subr.bf16.mxu0 0
        %2372 = vmatpush1.bf16.msra.mxu0 0
        %2373 = vmatprep.subr.bf16.mxu0 0
        %2374 = vmatpush1.bf16.msra.mxu0 0
        %2375 = vmatprep.subr.bf16.mxu0 0
        %2376 = vmatpush1.bf16.msra.mxu0 0
        %2377 = vmatprep.mubr.bf16.mxu0 0
        %2378 = vmatmul.mubr.bf16.gmra.mrb[0].mxu0 %v2331
        %v2379 = vpop.f32.mrb[0].mxu0
        %v2380 = vadd.f32 0.0, %v2379
        %v2381 = vpop.f32.mrb[0].mxu0
        %v2382 = vpop.f32.mrb[0].mxu0
        %v2383 = vadd.f32 0.0, %v2382
        %v2384 = vpop.f32.mrb[0].mxu0
        %2385 = vmatprep.mubr.bf16.mxu0 0
        %2386 = vmatmul.mubr.bf16.gmra.mrb[0].mxu0 %v2334
        %v2387 = vpop.f32.mrb[0].mxu0
        %v2388 = vadd.f32 0.0, %v2387
        %v2389 = vpop.f32.mrb[0].mxu0
        %v2390 = vpop.f32.mrb[0].mxu0
        %v2391 = vadd.f32 0.0, %v2390
        %v2392 = vpop.f32.mrb[0].mxu0
        %2393 = vmatprep.mubr.bf16.mxu0 0
        %2394 = vmatmul.mubr.bf16.gmra.mrb[0].mxu0 %v2337
        %v2395 = vpop.f32.mrb[0].mxu0
        %v2396 = vadd.f32 0.0, %v2395
        %v2397 = vpop.f32.mrb[0].mxu0
        %v2398 = vpop.f32.mrb[0].mxu0
        %v2399 = vadd.f32 0.0, %v2398
        %v2400 = vpop.f32.mrb[0].mxu0
        %2401 = vmatprep.mubr.bf16.mxu0 0
        %2402 = vmatmul.mubr.bf16.gmra.mrb[0].mxu0 %v2340
        %v2403 = vpop.f32.mrb[0].mxu0
        %v2404 = vadd.f32 0.0, %v2403
        %v2405 = vpop.f32.mrb[0].mxu0
        %v2406 = vpop.f32.mrb[0].mxu0
        %v2407 = vadd.f32 0.0, %v2406
        %v2408 = vpop.f32.mrb[0].mxu0
        %2409 = vdwg.mxu0
        %v2410 = vadd.f32 %v2202, %v2380
        %v2411 = vadd.f32 %v2203, %v2383
        %v2412 = vadd.f32 %v2204, %v2388
        %v2413 = vadd.f32 %v2205, %v2391
        %v2414 = vadd.f32 %v2206, %v2396
        %v2415 = vadd.f32 %v2207, %v2399
        %v2416 = vadd.f32 %v2208, %v2404
        %v2417 = vadd.f32 %v2209, %v2407
        %s2418 = scalar_lea.vmem [#allocation3], 512
        %v2419 = vld [vmem:[%s2418] sm:$0xff]
        %v2420 = vld [vmem:[%s2418 + $0x8] sm:$0xff]
        %v2421 = vld [vmem:[%s2418 + $0x10] sm:$0xff]
        %v2422 = vld [vmem:[%s2418 + $0x18] sm:$0xff]
        %v2423 = vld [vmem:[%s2418 + $0x20] sm:$0xff]
        %v2424 = vld [vmem:[%s2418 + $0x28] sm:$0xff]
        %v2425 = vld [vmem:[%s2418 + $0x30] sm:$0xff]
        %v2426 = vld [vmem:[%s2418 + $0x38] sm:$0xff]
        %v2435 = vunpack.c.l.b16 %v2419
        %v2436 = vunpack.c.h.b16 %v2419
        %v2437 = vunpack.c.l.b16 %v2420
        %v2438 = vunpack.c.h.b16 %v2420
        %v2439 = vunpack.c.l.b16 %v2421
        %v2440 = vunpack.c.h.b16 %v2421
        %v2441 = vunpack.c.l.b16 %v2422
        %v2442 = vunpack.c.h.b16 %v2422
        %v2443 = vunpack.c.l.b16 %v2423
        %v2444 = vunpack.c.h.b16 %v2423
        %v2445 = vunpack.c.l.b16 %v2424
        %v2446 = vunpack.c.h.b16 %v2424
        %v2447 = vunpack.c.l.b16 %v2425
        %v2448 = vunpack.c.h.b16 %v2425
        %v2449 = vunpack.c.l.b16 %v2426
        %v2450 = vunpack.c.h.b16 %v2426
        %v2451 = vpack.c.b16 %v2437, %v2435
        %v2452 = vpack.c.b16 %v2438, %v2436
        %v2453 = vpack.c.b16 %v2441, %v2439
        %v2454 = vpack.c.b16 %v2442, %v2440
        %v2455 = vpack.c.b16 %v2445, %v2443
        %v2456 = vpack.c.b16 %v2446, %v2444
        %v2457 = vpack.c.b16 %v2449, %v2447
        %v2458 = vpack.c.b16 %v2450, %v2448
        %2467 = vmatprep.subr.bf16.mxu0 0
        %2468 = vmatpush1.bf16.msra.mxu0 %v786
        %2469 = vmatprep.subr.bf16.mxu0 0
        %2470 = vmatpush1.bf16.msra.mxu0 %v787
        %2471 = vmatprep.subr.bf16.mxu0 0
        %2472 = vmatpush1.bf16.msra.mxu0 %v788
        %2473 = vmatprep.subr.bf16.mxu0 0
        %2474 = vmatpush1.bf16.msra.mxu0 %v789
        %2475 = vmatprep.subr.bf16.mxu0 0
        %2476 = vmatpush1.bf16.msra.mxu0 %v790
        %2477 = vmatprep.subr.bf16.mxu0 0
        %2478 = vmatpush1.bf16.msra.mxu0 %v791
        %2479 = vmatprep.subr.bf16.mxu0 0
        %2480 = vmatpush1.bf16.msra.mxu0 %v792
        %2481 = vmatprep.subr.bf16.mxu0 0
        %2482 = vmatpush1.bf16.msra.mxu0 %v793
        %2483 = vmatprep.subr.bf16.mxu0 0
        %2484 = vmatpush1.bf16.msra.mxu0 %v794
        %2485 = vmatprep.subr.bf16.mxu0 0
        %2486 = vmatpush1.bf16.msra.mxu0 %v795
        %2487 = vmatprep.subr.bf16.mxu0 0
        %2488 = vmatpush1.bf16.msra.mxu0 %v796
        %2489 = vmatprep.subr.bf16.mxu0 0
        %2490 = vmatpush1.bf16.msra.mxu0 %v797
        %2491 = vmatprep.subr.bf16.mxu0 0
        %2492 = vmatpush1.bf16.msra.mxu0 %v798
        %2493 = vmatprep.subr.bf16.mxu0 0
        %2494 = vmatpush1.bf16.msra.mxu0 %v799
        %2495 = vmatprep.subr.bf16.mxu0 0
        %2496 = vmatpush1.bf16.msra.mxu0 %v800
        %2497 = vmatprep.subr.bf16.mxu0 0
        %2498 = vmatpush1.bf16.msra.mxu0 %v801
        %2499 = vmatprep.mubr.bf16.mxu0 %v2452
        %2500 = vmatmul.mubr.bf16.gmra.mrb[0].mxu0 %v2451
        %v2501 = vpop.f32.mrb[0].mxu0
        %v2502 = vadd.f32 0.0, %v2501
        %v2503 = vpop.f32.mrb[0].mxu0
        %v2504 = vpop.f32.mrb[0].mxu0
        %v2505 = vadd.f32 0.0, %v2504
        %v2506 = vpop.f32.mrb[0].mxu0
        %2507 = vmatprep.mubr.bf16.mxu0 %v2454
        %2508 = vmatmul.mubr.bf16.gmra.mrb[0].mxu0 %v2453
        %v2509 = vpop.f32.mrb[0].mxu0
        %v2510 = vadd.f32 0.0, %v2509
        %v2511 = vpop.f32.mrb[0].mxu0
        %v2512 = vpop.f32.mrb[0].mxu0
        %v2513 = vadd.f32 0.0, %v2512
        %v2514 = vpop.f32.mrb[0].mxu0
        %2515 = vmatprep.mubr.bf16.mxu0 %v2456
        %2516 = vmatmul.mubr.bf16.gmra.mrb[0].mxu0 %v2455
        %v2517 = vpop.f32.mrb[0].mxu0
        %v2518 = vadd.f32 0.0, %v2517
        %v2519 = vpop.f32.mrb[0].mxu0
        %v2520 = vpop.f32.mrb[0].mxu0
        %v2521 = vadd.f32 0.0, %v2520
        %v2522 = vpop.f32.mrb[0].mxu0
        %2523 = vmatprep.mubr.bf16.mxu0 %v2458
        %2524 = vmatmul.mubr.bf16.gmra.mrb[0].mxu0 %v2457
        %v2525 = vpop.f32.mrb[0].mxu0
        %v2526 = vadd.f32 0.0, %v2525
        %v2527 = vpop.f32.mrb[0].mxu0
        %v2528 = vpop.f32.mrb[0].mxu0
        %v2529 = vadd.f32 0.0, %v2528
        %v2530 = vpop.f32.mrb[0].mxu0
        %2531 = vdwg.mxu0
        %v2532 = vpack.c.bf16 %v2505, %v2502
        %v2533 = vpack.c.bf16 %v2513, %v2510
        %v2534 = vpack.c.bf16 %v2521, %v2518
        %v2535 = vpack.c.bf16 %v2529, %v2526
        %s2536 = scalar_lea.vmem %s2, 16
        %v2537 = vld [vmem:[%s2536] sm:$0x3]
        %v2539 = vsel %vm1008, %v2532, 0
        %v2542 = vsel %vm1008, %v2533, 0
        %v2545 = vsel %vm1008, %v2534, 0
        %v2548 = vsel %vm1008, %v2535, 0
        %v2551 = vsel %vm1021, %v2537, 0
        %2553 = vmatprep.subr.bf16.mxu0 0
        %2554 = vmatpush1.bf16.msra.mxu0 %v2551
        %2555 = vmatprep.subr.bf16.mxu0 0
        %2556 = vmatpush1.bf16.msra.mxu0 0
        %2557 = vmatprep.subr.bf16.mxu0 0
        %2558 = vmatpush1.bf16.msra.mxu0 0
        %2559 = vmatprep.subr.bf16.mxu0 0
        %2560 = vmatpush1.bf16.msra.mxu0 0
        %2561 = vmatprep.subr.bf16.mxu0 0
        %2562 = vmatpush1.bf16.msra.mxu0 0
        %2563 = vmatprep.subr.bf16.mxu0 0
        %2564 = vmatpush1.bf16.msra.mxu0 0
        %2565 = vmatprep.subr.bf16.mxu0 0
        %2566 = vmatpush1.bf16.msra.mxu0 0
        %2567 = vmatprep.subr.bf16.mxu0 0
        %2568 = vmatpush1.bf16.msra.mxu0 0
        %2569 = vmatprep.subr.bf16.mxu0 0
        %2570 = vmatpush1.bf16.msra.mxu0 0
        %2571 = vmatprep.subr.bf16.mxu0 0
        %2572 = vmatpush1.bf16.msra.mxu0 0
        %2573 = vmatprep.subr.bf16.mxu0 0
        %2574 = vmatpush1.bf16.msra.mxu0 0
        %2575 = vmatprep.subr.bf16.mxu0 0
        %2576 = vmatpush1.bf16.msra.mxu0 0
        %2577 = vmatprep.subr.bf16.mxu0 0
        %2578 = vmatpush1.bf16.msra.mxu0 0
        %2579 = vmatprep.subr.bf16.mxu0 0
        %2580 = vmatpush1.bf16.msra.mxu0 0
        %2581 = vmatprep.subr.bf16.mxu0 0
        %2582 = vmatpush1.bf16.msra.mxu0 0
        %2583 = vmatprep.subr.bf16.mxu0 0
        %2584 = vmatpush1.bf16.msra.mxu0 0
        %2585 = vmatprep.mubr.bf16.mxu0 0
        %2586 = vmatmul.mubr.bf16.gmra.mrb[0].mxu0 %v2539
        %v2587 = vpop.f32.mrb[0].mxu0
        %v2588 = vadd.f32 0.0, %v2587
        %v2589 = vpop.f32.mrb[0].mxu0
        %v2590 = vpop.f32.mrb[0].mxu0
        %v2591 = vadd.f32 0.0, %v2590
        %v2592 = vpop.f32.mrb[0].mxu0
        %2593 = vmatprep.mubr.bf16.mxu0 0
        %2594 = vmatmul.mubr.bf16.gmra.mrb[0].mxu0 %v2542
        %v2595 = vpop.f32.mrb[0].mxu0
        %v2596 = vadd.f32 0.0, %v2595
        %v2597 = vpop.f32.mrb[0].mxu0
        %v2598 = vpop.f32.mrb[0].mxu0
        %v2599 = vadd.f32 0.0, %v2598
        %v2600 = vpop.f32.mrb[0].mxu0
        %2601 = vmatprep.mubr.bf16.mxu0 0
        %2602 = vmatmul.mubr.bf16.gmra.mrb[0].mxu0 %v2545
        %v2603 = vpop.f32.mrb[0].mxu0
        %v2604 = vadd.f32 0.0, %v2603
        %v2605 = vpop.f32.mrb[0].mxu0
        %v2606 = vpop.f32.mrb[0].mxu0
        %v2607 = vadd.f32 0.0, %v2606
        %v2608 = vpop.f32.mrb[0].mxu0
        %2609 = vmatprep.mubr.bf16.mxu0 0
        %2610 = vmatmul.mubr.bf16.gmra.mrb[0].mxu0 %v2548
        %v2611 = vpop.f32.mrb[0].mxu0
        %v2612 = vadd.f32 0.0, %v2611
        %v2613 = vpop.f32.mrb[0].mxu0
        %v2614 = vpop.f32.mrb[0].mxu0
        %v2615 = vadd.f32 0.0, %v2614
        %v2616 = vpop.f32.mrb[0].mxu0
        %2617 = vdwg.mxu0
        %v2618 = vadd.f32 %v2410, %v2588
        %v2619 = vadd.f32 %v2411, %v2591
        %v2620 = vadd.f32 %v2412, %v2596
        %v2621 = vadd.f32 %v2413, %v2599
        %v2622 = vadd.f32 %v2414, %v2604
        %v2623 = vadd.f32 %v2415, %v2607
        %v2624 = vadd.f32 %v2416, %v2612
        %v2625 = vadd.f32 %v2417, %v2615
        %v2626 = vld [vmem:[%s3] sm:$0x1]
        %v2628 = vlaneseq
        %v2629 = vshrl.u32 %v2628, 7
        %v2630 = vsub.s32 0, %v2629
        %v2631 = vrot.slane %v2626, %v2630
        %v2633 = vadd.f32 %v2618, %v2631
        %v2634 = vadd.f32 %v2619, %v2631
        %v2635 = vadd.f32 %v2620, %v2631
        %v2636 = vadd.f32 %v2621, %v2631
        %v2637 = vadd.f32 %v2622, %v2631
        %v2638 = vadd.f32 %v2623, %v2631
        %v2639 = vadd.f32 %v2624, %v2631
        %v2640 = vadd.f32 %v2625, %v2631
        %vm2641 = vcmp.gt.f32.partialorder %v2633, 0.0
        %vm2642 = vcmp.gt.f32.partialorder %v2634, 0.0
        %vm2643 = vcmp.gt.f32.partialorder %v2635, 0.0
        %vm2644 = vcmp.gt.f32.partialorder %v2636, 0.0
        %vm2645 = vcmp.gt.f32.partialorder %v2637, 0.0
        %vm2646 = vcmp.gt.f32.partialorder %v2638, 0.0
        %vm2647 = vcmp.gt.f32.partialorder %v2639, 0.0
        %vm2648 = vcmp.gt.f32.partialorder %v2640, 0.0
        %v2649 = vmul.f32 %v2633, 0.2
        %v2650 = vmul.f32 %v2634, 0.2
        %v2651 = vmul.f32 %v2635, 0.2
        %v2652 = vmul.f32 %v2636, 0.2
        %v2653 = vmul.f32 %v2637, 0.2
        %v2654 = vmul.f32 %v2638, 0.2
        %v2655 = vmul.f32 %v2639, 0.2
        %v2656 = vmul.f32 %v2640, 0.2
        %v2657 = vsel %vm2641, %v2633, %v2649
        %v2658 = vsel %vm2642, %v2634, %v2650
        %v2659 = vsel %vm2643, %v2635, %v2651
        %v2660 = vsel %vm2644, %v2636, %v2652
        %v2661 = vsel %vm2645, %v2637, %v2653
        %v2662 = vsel %vm2646, %v2638, %v2654
        %v2663 = vsel %vm2647, %v2639, %v2655
        %v2664 = vsel %vm2648, %v2640, %v2656
        %v2665 = vpack.c.bf16 %v2658, %v2657
        %v2666 = vpack.c.bf16 %v2660, %v2659
        %v2667 = vpack.c.bf16 %v2662, %v2661
        %v2668 = vpack.c.bf16 %v2664, %v2663
        %v2669 = vld [vmem:[%s4] sm:$0xf]
        %v2670 = vld [vmem:[%s4 + $0x4] sm:$0xf]
        %v2673 = vunpack.c.l.b16 %v2669
        %v2674 = vunpack.c.l.b16 %v2670
        %v2675 = vpack.c.b16 %v2674, %v2673
        %vm2676 = vcmask 523264
        %v2678 = vsel %vm2676, %v2675, 0
        %2680 = vmatprep.subr.bf16.mxu0 0
        %2681 = vmatpush1.bf16.msra.mxu0 %v2665
        %2682 = vmatprep.subr.bf16.mxu0 0
        %2683 = vmatpush1.bf16.msra.mxu0 %v2666
        %2684 = vmatprep.subr.bf16.mxu0 0
        %2685 = vmatpush1.bf16.msra.mxu0 %v2667
        %2686 = vmatprep.subr.bf16.mxu0 0
        %2687 = vmatpush1.bf16.msra.mxu0 %v2668
        %2688 = vmatprep.subr.bf16.mxu0 0
        %2689 = vmatpush1.bf16.msra.mxu0 0
        %2690 = vmatprep.subr.bf16.mxu0 0
        %2691 = vmatpush1.bf16.msra.mxu0 0
        %2692 = vmatprep.subr.bf16.mxu0 0
        %2693 = vmatpush1.bf16.msra.mxu0 0
        %2694 = vmatprep.subr.bf16.mxu0 0
        %2695 = vmatpush1.bf16.msra.mxu0 0
        %2696 = vmatprep.subr.bf16.mxu0 0
        %2697 = vmatpush1.bf16.msra.mxu0 0
        %2698 = vmatprep.subr.bf16.mxu0 0
        %2699 = vmatpush1.bf16.msra.mxu0 0
        %2700 = vmatprep.subr.bf16.mxu0 0
        %2701 = vmatpush1.bf16.msra.mxu0 0
        %2702 = vmatprep.subr.bf16.mxu0 0
        %2703 = vmatpush1.bf16.msra.mxu0 0
        %2704 = vmatprep.subr.bf16.mxu0 0
        %2705 = vmatpush1.bf16.msra.mxu0 0
        %2706 = vmatprep.subr.bf16.mxu0 0
        %2707 = vmatpush1.bf16.msra.mxu0 0
        %2708 = vmatprep.subr.bf16.mxu0 0
        %2709 = vmatpush1.bf16.msra.mxu0 0
        %2710 = vmatprep.subr.bf16.mxu0 0
        %2711 = vmatpush1.bf16.msra.mxu0 0
        %2712 = vmatprep.mubr.bf16.mxu0 0
        %2713 = vmatmul.mubr.bf16.gmra.mrb[0].mxu0 %v2678
        %v2714 = vpop.f32.mrb[0].mxu0
        %v2715 = vadd.f32 0.0, %v2714
        %v2716 = vpop.f32.mrb[0].mxu0
        %v2717 = vpop.f32.mrb[0].mxu0
        %v2718 = vadd.f32 0.0, %v2717
        %v2719 = vpop.f32.mrb[0].mxu0
        %2720 = vdwg.mxu0
        %v2721 = vpack.c.bf16 %v2718, %v2715
        %v2722 = vld [vmem:[#allocation5] sm:$0xf]
        %v2723 = vld [vmem:[#allocation5 + $0x4] sm:$0xf]
        %s2724 = scalar_lea.vmem %s4, 8
        %v2725 = vld [vmem:[%s2724] sm:$0xf]
        %v2726 = vld [vmem:[%s2724 + $0x4] sm:$0xf]
        %v2729 = vunpack.c.l.b16 %v2725
        %v2730 = vunpack.c.l.b16 %v2726
        %v2731 = vpack.c.b16 %v2730, %v2729
        %v2733 = vsel %vm2676, %v2731, 0
        %2735 = vmatprep.subr.bf16.mxu0 0
        %2736 = vmatpush1.bf16.msra.mxu0 %v2665
        %2737 = vmatprep.subr.bf16.mxu0 0
        %2738 = vmatpush1.bf16.msra.mxu0 %v2666
        %2739 = vmatprep.subr.bf16.mxu0 0
        %2740 = vmatpush1.bf16.msra.mxu0 %v2667
        %2741 = vmatprep.subr.bf16.mxu0 0
        %2742 = vmatpush1.bf16.msra.mxu0 %v2668
        %2743 = vmatprep.subr.bf16.mxu0 0
        %2744 = vmatpush1.bf16.msra.mxu0 0
        %2745 = vmatprep.subr.bf16.mxu0 0
        %2746 = vmatpush1.bf16.msra.mxu0 0
        %2747 = vmatprep.subr.bf16.mxu0 0
        %2748 = vmatpush1.bf16.msra.mxu0 0
        %2749 = vmatprep.subr.bf16.mxu0 0
        %2750 = vmatpush1.bf16.msra.mxu0 0
        %2751 = vmatprep.subr.bf16.mxu0 0
        %2752 = vmatpush1.bf16.msra.mxu0 0
        %2753 = vmatprep.subr.bf16.mxu0 0
        %2754 = vmatpush1.bf16.msra.mxu0 0
        %2755 = vmatprep.subr.bf16.mxu0 0
        %2756 = vmatpush1.bf16.msra.mxu0 0
        %2757 = vmatprep.subr.bf16.mxu0 0
        %2758 = vmatpush1.bf16.msra.mxu0 0
        %2759 = vmatprep.subr.bf16.mxu0 0
        %2760 = vmatpush1.bf16.msra.mxu0 0
        %2761 = vmatprep.subr.bf16.mxu0 0
        %2762 = vmatpush1.bf16.msra.mxu0 0
        %2763 = vmatprep.subr.bf16.mxu0 0
        %2764 = vmatpush1.bf16.msra.mxu0 0
        %2765 = vmatprep.subr.bf16.mxu0 0
        %2766 = vmatpush1.bf16.msra.mxu0 0
        %2767 = vmatprep.mubr.bf16.mxu0 0
        %2768 = vmatmul.mubr.bf16.gmra.mrb[0].mxu0 %v2733
        %v2769 = vpop.f32.mrb[0].mxu0
        %v2770 = vadd.f32 0.0, %v2769
        %v2771 = vpop.f32.mrb[0].mxu0
        %v2772 = vpop.f32.mrb[0].mxu0
        %v2773 = vadd.f32 0.0, %v2772
        %v2774 = vpop.f32.mrb[0].mxu0
        %2775 = vdwg.mxu0
        %v2776 = vpack.c.bf16 %v2773, %v2770
        %s2777 = scalar_lea.vmem [#allocation5], 8
        %v2778 = vld [vmem:[%s2777] sm:$0xf]
        %v2779 = vld [vmem:[%s2777 + $0x4] sm:$0xf]
        %v2782 = vunpack.c.l.b16 %v2778
        %v2783 = vunpack.c.l.b16 %v2779
        %v2784 = vpack.c.b16 %v2783, %v2782
        %vm2786 = vcmask 130048
        %v2788 = vsel %vm2786, %v2776, 0
        %2790 = vmatprep.subr.bf16.mxu0 0
        %2791 = vmatpush1.bf16.msra.mxu0 %v2784
        %2792 = vmatprep.subr.bf16.mxu0 0
        %2793 = vmatpush1.bf16.msra.mxu0 0
        %2794 = vmatprep.subr.bf16.mxu0 0
        %2795 = vmatpush1.bf16.msra.mxu0 0
        %2796 = vmatprep.subr.bf16.mxu0 0
        %2797 = vmatpush1.bf16.msra.mxu0 0
        %2798 = vmatprep.subr.bf16.mxu0 0
        %2799 = vmatpush1.bf16.msra.mxu0 0
        %2800 = vmatprep.subr.bf16.mxu0 0
        %2801 = vmatpush1.bf16.msra.mxu0 0
        %2802 = vmatprep.subr.bf16.mxu0 0
        %2803 = vmatpush1.bf16.msra.mxu0 0
        %2804 = vmatprep.subr.bf16.mxu0 0
        %2805 = vmatpush1.bf16.msra.mxu0 0
        %2806 = vmatprep.subr.bf16.mxu0 0
        %2807 = vmatpush1.bf16.msra.mxu0 0
        %2808 = vmatprep.subr.bf16.mxu0 0
        %2809 = vmatpush1.bf16.msra.mxu0 0
        %2810 = vmatprep.subr.bf16.mxu0 0
        %2811 = vmatpush1.bf16.msra.mxu0 0
        %2812 = vmatprep.subr.bf16.mxu0 0
        %2813 = vmatpush1.bf16.msra.mxu0 0
        %2814 = vmatprep.subr.bf16.mxu0 0
        %2815 = vmatpush1.bf16.msra.mxu0 0
        %2816 = vmatprep.subr.bf16.mxu0 0
        %2817 = vmatpush1.bf16.msra.mxu0 0
        %2818 = vmatprep.subr.bf16.mxu0 0
        %2819 = vmatpush1.bf16.msra.mxu0 0
        %2820 = vmatprep.subr.bf16.mxu0 0
        %2821 = vmatpush1.bf16.msra.mxu0 0
        %2822 = vmatprep.mubr.bf16.mxu0 0
        %2823 = vmatmul.mubr.bf16.gmra.mrb[0].mxu0 %v2788
        %v2824 = vpop.f32.mrb[0].mxu0
        %v2825 = vadd.f32 0.0, %v2824
        %v2826 = vpop.f32.mrb[0].mxu0
        %v2827 = vpop.f32.mrb[0].mxu0
        %v2828 = vadd.f32 0.0, %v2827
        %v2829 = vpop.f32.mrb[0].mxu0
        %2830 = vdwg.mxu0
        %v2833 = vunpack.c.l.b16 %v2722
        %v2834 = vunpack.c.l.b16 %v2723
        %v2835 = vpack.c.b16 %v2834, %v2833
        %v2838 = vsel %vm2786, %v2721, 0
        %2840 = vmatprep.subr.bf16.mxu0 0
        %2841 = vmatpush1.bf16.msra.mxu0 %v2835
        %2842 = vmatprep.subr.bf16.mxu0 0
        %2843 = vmatpush1.bf16.msra.mxu0 0
        %2844 = vmatprep.subr.bf16.mxu0 0
        %2845 = vmatpush1.bf16.msra.mxu0 0
        %2846 = vmatprep.subr.bf16.mxu0 0
        %2847 = vmatpush1.bf16.msra.mxu0 0
        %2848 = vmatprep.subr.bf16.mxu0 0
        %2849 = vmatpush1.bf16.msra.mxu0 0
        %2850 = vmatprep.subr.bf16.mxu0 0
        %2851 = vmatpush1.bf16.msra.mxu0 0
        %2852 = vmatprep.subr.bf16.mxu0 0
        %2853 = vmatpush1.bf16.msra.mxu0 0
        %2854 = vmatprep.subr.bf16.mxu0 0
        %2855 = vmatpush1.bf16.msra.mxu0 0
        %2856 = vmatprep.subr.bf16.mxu0 0
        %2857 = vmatpush1.bf16.msra.mxu0 0
        %2858 = vmatprep.subr.bf16.mxu0 0
        %2859 = vmatpush1.bf16.msra.mxu0 0
        %2860 = vmatprep.subr.bf16.mxu0 0
        %2861 = vmatpush1.bf16.msra.mxu0 0
        %2862 = vmatprep.subr.bf16.mxu0 0
        %2863 = vmatpush1.bf16.msra.mxu0 0
        %2864 = vmatprep.subr.bf16.mxu0 0
        %2865 = vmatpush1.bf16.msra.mxu0 0
        %2866 = vmatprep.subr.bf16.mxu0 0
        %2867 = vmatpush1.bf16.msra.mxu0 0
        %2868 = vmatprep.subr.bf16.mxu0 0
        %2869 = vmatpush1.bf16.msra.mxu0 0
        %2870 = vmatprep.subr.bf16.mxu0 0
        %2871 = vmatpush1.bf16.msra.mxu0 0
        %2872 = vmatprep.mubr.bf16.mxu0 0
        %2873 = vmatmul.mubr.bf16.gmra.mrb[0].mxu0 %v2838
        %v2874 = vpop.f32.mrb[0].mxu0
        %v2875 = vadd.f32 %v2825, %v2874
        %v2876 = vpop.f32.mrb[0].mxu0
        %v2877 = vpop.f32.mrb[0].mxu0
        %v2878 = vadd.f32 %v2828, %v2877
        %v2879 = vpop.f32.mrb[0].mxu0
        %2880 = vdwg.mxu0
        %s2881 = scalar_lea.vmem %s4, 16
        %v2882 = vld [vmem:[%s2881] sm:$0xf]
        %v2883 = vld [vmem:[%s2881 + $0x4] sm:$0xf]
        %v2886 = vunpack.c.l.b16 %v2882
        %v2887 = vunpack.c.l.b16 %v2883
        %v2888 = vpack.c.b16 %v2887, %v2886
        %v2890 = vsel %vm2676, %v2888, 0
        %2892 = vmatprep.subr.bf16.mxu0 0
        %2893 = vmatpush1.bf16.msra.mxu0 %v2665
        %2894 = vmatprep.subr.bf16.mxu0 0
        %2895 = vmatpush1.bf16.msra.mxu0 %v2666
        %2896 = vmatprep.subr.bf16.mxu0 0
        %2897 = vmatpush1.bf16.msra.mxu0 %v2667
        %2898 = vmatprep.subr.bf16.mxu0 0
        %2899 = vmatpush1.bf16.msra.mxu0 %v2668
        %2900 = vmatprep.subr.bf16.mxu0 0
        %2901 = vmatpush1.bf16.msra.mxu0 0
        %2902 = vmatprep.subr.bf16.mxu0 0
        %2903 = vmatpush1.bf16.msra.mxu0 0
        %2904 = vmatprep.subr.bf16.mxu0 0
        %2905 = vmatpush1.bf16.msra.mxu0 0
        %2906 = vmatprep.subr.bf16.mxu0 0
        %2907 = vmatpush1.bf16.msra.mxu0 0
        %2908 = vmatprep.subr.bf16.mxu0 0
        %2909 = vmatpush1.bf16.msra.mxu0 0
        %2910 = vmatprep.subr.bf16.mxu0 0
        %2911 = vmatpush1.bf16.msra.mxu0 0
        %2912 = vmatprep.subr.bf16.mxu0 0
        %2913 = vmatpush1.bf16.msra.mxu0 0
        %2914 = vmatprep.subr.bf16.mxu0 0
        %2915 = vmatpush1.bf16.msra.mxu0 0
        %2916 = vmatprep.subr.bf16.mxu0 0
        %2917 = vmatpush1.bf16.msra.mxu0 0
        %2918 = vmatprep.subr.bf16.mxu0 0
        %2919 = vmatpush1.bf16.msra.mxu0 0
        %2920 = vmatprep.subr.bf16.mxu0 0
        %2921 = vmatpush1.bf16.msra.mxu0 0
        %2922 = vmatprep.subr.bf16.mxu0 0
        %2923 = vmatpush1.bf16.msra.mxu0 0
        %2924 = vmatprep.mubr.bf16.mxu0 0
        %2925 = vmatmul.mubr.bf16.gmra.mrb[0].mxu0 %v2890
        %v2926 = vpop.f32.mrb[0].mxu0
        %v2927 = vadd.f32 0.0, %v2926
        %v2928 = vpop.f32.mrb[0].mxu0
        %v2929 = vpop.f32.mrb[0].mxu0
        %v2930 = vadd.f32 0.0, %v2929
        %v2931 = vpop.f32.mrb[0].mxu0
        %2932 = vdwg.mxu0
        %v2933 = vpack.c.bf16 %v2930, %v2927
        %s2934 = scalar_lea.vmem [#allocation5], 16
        %v2935 = vld [vmem:[%s2934] sm:$0xf]
        %v2936 = vld [vmem:[%s2934 + $0x4] sm:$0xf]
        %v2939 = vunpack.c.l.b16 %v2935
        %v2940 = vunpack.c.l.b16 %v2936
        %v2941 = vpack.c.b16 %v2940, %v2939
        %v2944 = vsel %vm2786, %v2933, 0
        %2946 = vmatprep.subr.bf16.mxu0 0
        %2947 = vmatpush1.bf16.msra.mxu0 %v2941
        %2948 = vmatprep.subr.bf16.mxu0 0
        %2949 = vmatpush1.bf16.msra.mxu0 0
        %2950 = vmatprep.subr.bf16.mxu0 0
        %2951 = vmatpush1.bf16.msra.mxu0 0
        %2952 = vmatprep.subr.bf16.mxu0 0
        %2953 = vmatpush1.bf16.msra.mxu0 0
        %2954 = vmatprep.subr.bf16.mxu0 0
        %2955 = vmatpush1.bf16.msra.mxu0 0
        %2956 = vmatprep.subr.bf16.mxu0 0
        %2957 = vmatpush1.bf16.msra.mxu0 0
        %2958 = vmatprep.subr.bf16.mxu0 0
        %2959 = vmatpush1.bf16.msra.mxu0 0
        %2960 = vmatprep.subr.bf16.mxu0 0
        %2961 = vmatpush1.bf16.msra.mxu0 0
        %2962 = vmatprep.subr.bf16.mxu0 0
        %2963 = vmatpush1.bf16.msra.mxu0 0
        %2964 = vmatprep.subr.bf16.mxu0 0
        %2965 = vmatpush1.bf16.msra.mxu0 0
        %2966 = vmatprep.subr.bf16.mxu0 0
        %2967 = vmatpush1.bf16.msra.mxu0 0
        %2968 = vmatprep.subr.bf16.mxu0 0
        %2969 = vmatpush1.bf16.msra.mxu0 0
        %2970 = vmatprep.subr.bf16.mxu0 0
        %2971 = vmatpush1.bf16.msra.mxu0 0
        %2972 = vmatprep.subr.bf16.mxu0 0
        %2973 = vmatpush1.bf16.msra.mxu0 0
        %2974 = vmatprep.subr.bf16.mxu0 0
        %2975 = vmatpush1.bf16.msra.mxu0 0
        %2976 = vmatprep.subr.bf16.mxu0 0
        %2977 = vmatpush1.bf16.msra.mxu0 0
        %2978 = vmatprep.mubr.bf16.mxu0 0
        %2979 = vmatmul.mubr.bf16.gmra.mrb[0].mxu0 %v2944
        %v2980 = vpop.f32.mrb[0].mxu0
        %v2981 = vadd.f32 0.0, %v2980
        %v2982 = vpop.f32.mrb[0].mxu0
        %v2983 = vpop.f32.mrb[0].mxu0
        %v2984 = vadd.f32 0.0, %v2983
        %v2985 = vpop.f32.mrb[0].mxu0
        %2986 = vdwg.mxu0
        %v2987 = vadd.f32 %v2875, %v2981
        %v2988 = vadd.f32 %v2878, %v2984
        %s2989 = scalar_lea.vmem %s4, 24
        %v2990 = vld [vmem:[%s2989] sm:$0xf]
        %v2991 = vld [vmem:[%s2989 + $0x4] sm:$0xf]
        %v2994 = vunpack.c.l.b16 %v2990
        %v2995 = vunpack.c.l.b16 %v2991
        %v2996 = vpack.c.b16 %v2995, %v2994
        %v2998 = vsel %vm2676, %v2996, 0
        %3000 = vmatprep.subr.bf16.mxu0 0
        %3001 = vmatpush1.bf16.msra.mxu0 %v2665
        %3002 = vmatprep.subr.bf16.mxu0 0
        %3003 = vmatpush1.bf16.msra.mxu0 %v2666
        %3004 = vmatprep.subr.bf16.mxu0 0
        %3005 = vmatpush1.bf16.msra.mxu0 %v2667
        %3006 = vmatprep.subr.bf16.mxu0 0
        %3007 = vmatpush1.bf16.msra.mxu0 %v2668
        %3008 = vmatprep.subr.bf16.mxu0 0
        %3009 = vmatpush1.bf16.msra.mxu0 0
        %3010 = vmatprep.subr.bf16.mxu0 0
        %3011 = vmatpush1.bf16.msra.mxu0 0
        %3012 = vmatprep.subr.bf16.mxu0 0
        %3013 = vmatpush1.bf16.msra.mxu0 0
        %3014 = vmatprep.subr.bf16.mxu0 0
        %3015 = vmatpush1.bf16.msra.mxu0 0
        %3016 = vmatprep.subr.bf16.mxu0 0
        %3017 = vmatpush1.bf16.msra.mxu0 0
        %3018 = vmatprep.subr.bf16.mxu0 0
        %3019 = vmatpush1.bf16.msra.mxu0 0
        %3020 = vmatprep.subr.bf16.mxu0 0
        %3021 = vmatpush1.bf16.msra.mxu0 0
        %3022 = vmatprep.subr.bf16.mxu0 0
        %3023 = vmatpush1.bf16.msra.mxu0 0
        %3024 = vmatprep.subr.bf16.mxu0 0
        %3025 = vmatpush1.bf16.msra.mxu0 0
        %3026 = vmatprep.subr.bf16.mxu0 0
        %3027 = vmatpush1.bf16.msra.mxu0 0
        %3028 = vmatprep.subr.bf16.mxu0 0
        %3029 = vmatpush1.bf16.msra.mxu0 0
        %3030 = vmatprep.subr.bf16.mxu0 0
        %3031 = vmatpush1.bf16.msra.mxu0 0
        %3032 = vmatprep.mubr.bf16.mxu0 0
        %3033 = vmatmul.mubr.bf16.gmra.mrb[0].mxu0 %v2998
        %v3034 = vpop.f32.mrb[0].mxu0
        %v3035 = vadd.f32 0.0, %v3034
        %v3036 = vpop.f32.mrb[0].mxu0
        %v3037 = vpop.f32.mrb[0].mxu0
        %v3038 = vadd.f32 0.0, %v3037
        %v3039 = vpop.f32.mrb[0].mxu0
        %3040 = vdwg.mxu0
        %v3041 = vpack.c.bf16 %v3038, %v3035
        %s3042 = scalar_lea.vmem [#allocation5], 24
        %v3043 = vld [vmem:[%s3042] sm:$0xf]
        %v3044 = vld [vmem:[%s3042 + $0x4] sm:$0xf]
        %v3047 = vunpack.c.l.b16 %v3043
        %v3048 = vunpack.c.l.b16 %v3044
        %v3049 = vpack.c.b16 %v3048, %v3047
        %v3052 = vsel %vm2786, %v3041, 0
        %3054 = vmatprep.subr.bf16.mxu0 0
        %3055 = vmatpush1.bf16.msra.mxu0 %v3049
        %3056 = vmatprep.subr.bf16.mxu0 0
        %3057 = vmatpush1.bf16.msra.mxu0 0
        %3058 = vmatprep.subr.bf16.mxu0 0
        %3059 = vmatpush1.bf16.msra.mxu0 0
        %3060 = vmatprep.subr.bf16.mxu0 0
        %3061 = vmatpush1.bf16.msra.mxu0 0
        %3062 = vmatprep.subr.bf16.mxu0 0
        %3063 = vmatpush1.bf16.msra.mxu0 0
        %3064 = vmatprep.subr.bf16.mxu0 0
        %3065 = vmatpush1.bf16.msra.mxu0 0
        %3066 = vmatprep.subr.bf16.mxu0 0
        %3067 = vmatpush1.bf16.msra.mxu0 0
        %3068 = vmatprep.subr.bf16.mxu0 0
        %3069 = vmatpush1.bf16.msra.mxu0 0
        %3070 = vmatprep.subr.bf16.mxu0 0
        %3071 = vmatpush1.bf16.msra.mxu0 0
        %3072 = vmatprep.subr.bf16.mxu0 0
        %3073 = vmatpush1.bf16.msra.mxu0 0
        %3074 = vmatprep.subr.bf16.mxu0 0
        %3075 = vmatpush1.bf16.msra.mxu0 0
        %3076 = vmatprep.subr.bf16.mxu0 0
        %3077 = vmatpush1.bf16.msra.mxu0 0
        %3078 = vmatprep.subr.bf16.mxu0 0
        %3079 = vmatpush1.bf16.msra.mxu0 0
        %3080 = vmatprep.subr.bf16.mxu0 0
        %3081 = vmatpush1.bf16.msra.mxu0 0
        %3082 = vmatprep.subr.bf16.mxu0 0
        %3083 = vmatpush1.bf16.msra.mxu0 0
        %3084 = vmatprep.subr.bf16.mxu0 0
        %3085 = vmatpush1.bf16.msra.mxu0 0
        %3086 = vmatprep.mubr.bf16.mxu0 0
        %3087 = vmatmul.mubr.bf16.gmra.mrb[0].mxu0 %v3052
        %v3088 = vpop.f32.mrb[0].mxu0
        %v3089 = vadd.f32 0.0, %v3088
        %v3090 = vpop.f32.mrb[0].mxu0
        %v3091 = vpop.f32.mrb[0].mxu0
        %v3092 = vadd.f32 0.0, %v3091
        %v3093 = vpop.f32.mrb[0].mxu0
        %3094 = vdwg.mxu0
        %v3095 = vadd.f32 %v2987, %v3089
        %v3096 = vadd.f32 %v2988, %v3092
        %s3097 = scalar_lea.vmem %s4, 32
        %v3098 = vld [vmem:[%s3097] sm:$0xf]
        %v3099 = vld [vmem:[%s3097 + $0x4] sm:$0xf]
        %v3102 = vunpack.c.l.b16 %v3098
        %v3103 = vunpack.c.l.b16 %v3099
        %v3104 = vpack.c.b16 %v3103, %v3102
        %v3106 = vsel %vm2676, %v3104, 0
        %3108 = vmatprep.subr.bf16.mxu0 0
        %3109 = vmatpush1.bf16.msra.mxu0 %v2665
        %3110 = vmatprep.subr.bf16.mxu0 0
        %3111 = vmatpush1.bf16.msra.mxu0 %v2666
        %3112 = vmatprep.subr.bf16.mxu0 0
        %3113 = vmatpush1.bf16.msra.mxu0 %v2667
        %3114 = vmatprep.subr.bf16.mxu0 0
        %3115 = vmatpush1.bf16.msra.mxu0 %v2668
        %3116 = vmatprep.subr.bf16.mxu0 0
        %3117 = vmatpush1.bf16.msra.mxu0 0
        %3118 = vmatprep.subr.bf16.mxu0 0
        %3119 = vmatpush1.bf16.msra.mxu0 0
        %3120 = vmatprep.subr.bf16.mxu0 0
        %3121 = vmatpush1.bf16.msra.mxu0 0
        %3122 = vmatprep.subr.bf16.mxu0 0
        %3123 = vmatpush1.bf16.msra.mxu0 0
        %3124 = vmatprep.subr.bf16.mxu0 0
        %3125 = vmatpush1.bf16.msra.mxu0 0
        %3126 = vmatprep.subr.bf16.mxu0 0
        %3127 = vmatpush1.bf16.msra.mxu0 0
        %3128 = vmatprep.subr.bf16.mxu0 0
        %3129 = vmatpush1.bf16.msra.mxu0 0
        %3130 = vmatprep.subr.bf16.mxu0 0
        %3131 = vmatpush1.bf16.msra.mxu0 0
        %3132 = vmatprep.subr.bf16.mxu0 0
        %3133 = vmatpush1.bf16.msra.mxu0 0
        %3134 = vmatprep.subr.bf16.mxu0 0
        %3135 = vmatpush1.bf16.msra.mxu0 0
        %3136 = vmatprep.subr.bf16.mxu0 0
        %3137 = vmatpush1.bf16.msra.mxu0 0
        %3138 = vmatprep.subr.bf16.mxu0 0
        %3139 = vmatpush1.bf16.msra.mxu0 0
        %3140 = vmatprep.mubr.bf16.mxu0 0
        %3141 = vmatmul.mubr.bf16.gmra.mrb[0].mxu0 %v3106
        %v3142 = vpop.f32.mrb[0].mxu0
        %v3143 = vadd.f32 0.0, %v3142
        %v3144 = vpop.f32.mrb[0].mxu0
        %v3145 = vpop.f32.mrb[0].mxu0
        %v3146 = vadd.f32 0.0, %v3145
        %v3147 = vpop.f32.mrb[0].mxu0
        %3148 = vdwg.mxu0
        %v3149 = vpack.c.bf16 %v3146, %v3143
        %s3150 = scalar_lea.vmem [#allocation5], 32
        %v3151 = vld [vmem:[%s3150] sm:$0xf]
        %v3152 = vld [vmem:[%s3150 + $0x4] sm:$0xf]
        %v3155 = vunpack.c.l.b16 %v3151
        %v3156 = vunpack.c.l.b16 %v3152
        %v3157 = vpack.c.b16 %v3156, %v3155
        %v3160 = vsel %vm2786, %v3149, 0
        %3162 = vmatprep.subr.bf16.mxu0 0
        %3163 = vmatpush1.bf16.msra.mxu0 %v3157
        %3164 = vmatprep.subr.bf16.mxu0 0
        %3165 = vmatpush1.bf16.msra.mxu0 0
        %3166 = vmatprep.subr.bf16.mxu0 0
        %3167 = vmatpush1.bf16.msra.mxu0 0
        %3168 = vmatprep.subr.bf16.mxu0 0
        %3169 = vmatpush1.bf16.msra.mxu0 0
        %3170 = vmatprep.subr.bf16.mxu0 0
        %3171 = vmatpush1.bf16.msra.mxu0 0
        %3172 = vmatprep.subr.bf16.mxu0 0
        %3173 = vmatpush1.bf16.msra.mxu0 0
        %3174 = vmatprep.subr.bf16.mxu0 0
        %3175 = vmatpush1.bf16.msra.mxu0 0
        %3176 = vmatprep.subr.bf16.mxu0 0
        %3177 = vmatpush1.bf16.msra.mxu0 0
        %3178 = vmatprep.subr.bf16.mxu0 0
        %3179 = vmatpush1.bf16.msra.mxu0 0
        %3180 = vmatprep.subr.bf16.mxu0 0
        %3181 = vmatpush1.bf16.msra.mxu0 0
        %3182 = vmatprep.subr.bf16.mxu0 0
        %3183 = vmatpush1.bf16.msra.mxu0 0
        %3184 = vmatprep.subr.bf16.mxu0 0
        %3185 = vmatpush1.bf16.msra.mxu0 0
        %3186 = vmatprep.subr.bf16.mxu0 0
        %3187 = vmatpush1.bf16.msra.mxu0 0
        %3188 = vmatprep.subr.bf16.mxu0 0
        %3189 = vmatpush1.bf16.msra.mxu0 0
        %3190 = vmatprep.subr.bf16.mxu0 0
        %3191 = vmatpush1.bf16.msra.mxu0 0
        %3192 = vmatprep.subr.bf16.mxu0 0
        %3193 = vmatpush1.bf16.msra.mxu0 0
        %3194 = vmatprep.mubr.bf16.mxu0 0
        %3195 = vmatmul.mubr.bf16.gmra.mrb[0].mxu0 %v3160
        %v3196 = vpop.f32.mrb[0].mxu0
        %v3197 = vadd.f32 0.0, %v3196
        %v3198 = vpop.f32.mrb[0].mxu0
        %v3199 = vpop.f32.mrb[0].mxu0
        %v3200 = vadd.f32 0.0, %v3199
        %v3201 = vpop.f32.mrb[0].mxu0
        %3202 = vdwg.mxu0
        %v3203 = vadd.f32 %v3095, %v3197
        %v3204 = vadd.f32 %v3096, %v3200
        %s3205 = scalar_lea.vmem %s4, 40
        %v3206 = vld [vmem:[%s3205] sm:$0xf]
        %v3207 = vld [vmem:[%s3205 + $0x4] sm:$0xf]
        %v3210 = vunpack.c.l.b16 %v3206
        %v3211 = vunpack.c.l.b16 %v3207
        %v3212 = vpack.c.b16 %v3211, %v3210
        %v3214 = vsel %vm2676, %v3212, 0
        %3216 = vmatprep.subr.bf16.mxu0 0
        %3217 = vmatpush1.bf16.msra.mxu0 %v2665
        %3218 = vmatprep.subr.bf16.mxu0 0
        %3219 = vmatpush1.bf16.msra.mxu0 %v2666
        %3220 = vmatprep.subr.bf16.mxu0 0
        %3221 = vmatpush1.bf16.msra.mxu0 %v2667
        %3222 = vmatprep.subr.bf16.mxu0 0
        %3223 = vmatpush1.bf16.msra.mxu0 %v2668
        %3224 = vmatprep.subr.bf16.mxu0 0
        %3225 = vmatpush1.bf16.msra.mxu0 0
        %3226 = vmatprep.subr.bf16.mxu0 0
        %3227 = vmatpush1.bf16.msra.mxu0 0
        %3228 = vmatprep.subr.bf16.mxu0 0
        %3229 = vmatpush1.bf16.msra.mxu0 0
        %3230 = vmatprep.subr.bf16.mxu0 0
        %3231 = vmatpush1.bf16.msra.mxu0 0
        %3232 = vmatprep.subr.bf16.mxu0 0
        %3233 = vmatpush1.bf16.msra.mxu0 0
        %3234 = vmatprep.subr.bf16.mxu0 0
        %3235 = vmatpush1.bf16.msra.mxu0 0
        %3236 = vmatprep.subr.bf16.mxu0 0
        %3237 = vmatpush1.bf16.msra.mxu0 0
        %3238 = vmatprep.subr.bf16.mxu0 0
        %3239 = vmatpush1.bf16.msra.mxu0 0
        %3240 = vmatprep.subr.bf16.mxu0 0
        %3241 = vmatpush1.bf16.msra.mxu0 0
        %3242 = vmatprep.subr.bf16.mxu0 0
        %3243 = vmatpush1.bf16.msra.mxu0 0
        %3244 = vmatprep.subr.bf16.mxu0 0
        %3245 = vmatpush1.bf16.msra.mxu0 0
        %3246 = vmatprep.subr.bf16.mxu0 0
        %3247 = vmatpush1.bf16.msra.mxu0 0
        %3248 = vmatprep.mubr.bf16.mxu0 0
        %3249 = vmatmul.mubr.bf16.gmra.mrb[0].mxu0 %v3214
        %v3250 = vpop.f32.mrb[0].mxu0
        %v3251 = vadd.f32 0.0, %v3250
        %v3252 = vpop.f32.mrb[0].mxu0
        %v3253 = vpop.f32.mrb[0].mxu0
        %v3254 = vadd.f32 0.0, %v3253
        %v3255 = vpop.f32.mrb[0].mxu0
        %3256 = vdwg.mxu0
        %v3257 = vpack.c.bf16 %v3254, %v3251
        %s3258 = scalar_lea.vmem [#allocation5], 40
        %v3259 = vld [vmem:[%s3258] sm:$0xf]
        %v3260 = vld [vmem:[%s3258 + $0x4] sm:$0xf]
        %v3263 = vunpack.c.l.b16 %v3259
        %v3264 = vunpack.c.l.b16 %v3260
        %v3265 = vpack.c.b16 %v3264, %v3263
        %v3268 = vsel %vm2786, %v3257, 0
        %3270 = vmatprep.subr.bf16.mxu0 0
        %3271 = vmatpush1.bf16.msra.mxu0 %v3265
        %3272 = vmatprep.subr.bf16.mxu0 0
        %3273 = vmatpush1.bf16.msra.mxu0 0
        %3274 = vmatprep.subr.bf16.mxu0 0
        %3275 = vmatpush1.bf16.msra.mxu0 0
        %3276 = vmatprep.subr.bf16.mxu0 0
        %3277 = vmatpush1.bf16.msra.mxu0 0
        %3278 = vmatprep.subr.bf16.mxu0 0
        %3279 = vmatpush1.bf16.msra.mxu0 0
        %3280 = vmatprep.subr.bf16.mxu0 0
        %3281 = vmatpush1.bf16.msra.mxu0 0
        %3282 = vmatprep.subr.bf16.mxu0 0
        %3283 = vmatpush1.bf16.msra.mxu0 0
        %3284 = vmatprep.subr.bf16.mxu0 0
        %3285 = vmatpush1.bf16.msra.mxu0 0
        %3286 = vmatprep.subr.bf16.mxu0 0
        %3287 = vmatpush1.bf16.msra.mxu0 0
        %3288 = vmatprep.subr.bf16.mxu0 0
        %3289 = vmatpush1.bf16.msra.mxu0 0
        %3290 = vmatprep.subr.bf16.mxu0 0
        %3291 = vmatpush1.bf16.msra.mxu0 0
        %3292 = vmatprep.subr.bf16.mxu0 0
        %3293 = vmatpush1.bf16.msra.mxu0 0
        %3294 = vmatprep.subr.bf16.mxu0 0
        %3295 = vmatpush1.bf16.msra.mxu0 0
        %3296 = vmatprep.subr.bf16.mxu0 0
        %3297 = vmatpush1.bf16.msra.mxu0 0
        %3298 = vmatprep.subr.bf16.mxu0 0
        %3299 = vmatpush1.bf16.msra.mxu0 0
        %3300 = vmatprep.subr.bf16.mxu0 0
        %3301 = vmatpush1.bf16.msra.mxu0 0
        %3302 = vmatprep.mubr.bf16.mxu0 0
        %3303 = vmatmul.mubr.bf16.gmra.mrb[0].mxu0 %v3268
        %v3304 = vpop.f32.mrb[0].mxu0
        %v3305 = vadd.f32 0.0, %v3304
        %v3306 = vpop.f32.mrb[0].mxu0
        %v3307 = vpop.f32.mrb[0].mxu0
        %v3308 = vadd.f32 0.0, %v3307
        %v3309 = vpop.f32.mrb[0].mxu0
        %3310 = vdwg.mxu0
        %v3311 = vadd.f32 %v3203, %v3305
        %v3312 = vadd.f32 %v3204, %v3308
        %s3313 = scalar_lea.vmem %s4, 48
        %v3314 = vld [vmem:[%s3313] sm:$0xf]
        %v3315 = vld [vmem:[%s3313 + $0x4] sm:$0xf]
        %v3318 = vunpack.c.l.b16 %v3314
        %v3319 = vunpack.c.l.b16 %v3315
        %v3320 = vpack.c.b16 %v3319, %v3318
        %v3322 = vsel %vm2676, %v3320, 0
        %3324 = vmatprep.subr.bf16.mxu0 0
        %3325 = vmatpush1.bf16.msra.mxu0 %v2665
        %3326 = vmatprep.subr.bf16.mxu0 0
        %3327 = vmatpush1.bf16.msra.mxu0 %v2666
        %3328 = vmatprep.subr.bf16.mxu0 0
        %3329 = vmatpush1.bf16.msra.mxu0 %v2667
        %3330 = vmatprep.subr.bf16.mxu0 0
        %3331 = vmatpush1.bf16.msra.mxu0 %v2668
        %3332 = vmatprep.subr.bf16.mxu0 0
        %3333 = vmatpush1.bf16.msra.mxu0 0
        %3334 = vmatprep.subr.bf16.mxu0 0
        %3335 = vmatpush1.bf16.msra.mxu0 0
        %3336 = vmatprep.subr.bf16.mxu0 0
        %3337 = vmatpush1.bf16.msra.mxu0 0
        %3338 = vmatprep.subr.bf16.mxu0 0
        %3339 = vmatpush1.bf16.msra.mxu0 0
        %3340 = vmatprep.subr.bf16.mxu0 0
        %3341 = vmatpush1.bf16.msra.mxu0 0
        %3342 = vmatprep.subr.bf16.mxu0 0
        %3343 = vmatpush1.bf16.msra.mxu0 0
        %3344 = vmatprep.subr.bf16.mxu0 0
        %3345 = vmatpush1.bf16.msra.mxu0 0
        %3346 = vmatprep.subr.bf16.mxu0 0
        %3347 = vmatpush1.bf16.msra.mxu0 0
        %3348 = vmatprep.subr.bf16.mxu0 0
        %3349 = vmatpush1.bf16.msra.mxu0 0
        %3350 = vmatprep.subr.bf16.mxu0 0
        %3351 = vmatpush1.bf16.msra.mxu0 0
        %3352 = vmatprep.subr.bf16.mxu0 0
        %3353 = vmatpush1.bf16.msra.mxu0 0
        %3354 = vmatprep.subr.bf16.mxu0 0
        %3355 = vmatpush1.bf16.msra.mxu0 0
        %3356 = vmatprep.mubr.bf16.mxu0 0
        %3357 = vmatmul.mubr.bf16.gmra.mrb[0].mxu0 %v3322
        %v3358 = vpop.f32.mrb[0].mxu0
        %v3359 = vadd.f32 0.0, %v3358
        %v3360 = vpop.f32.mrb[0].mxu0
        %v3361 = vpop.f32.mrb[0].mxu0
        %v3362 = vadd.f32 0.0, %v3361
        %v3363 = vpop.f32.mrb[0].mxu0
        %3364 = vdwg.mxu0
        %v3365 = vpack.c.bf16 %v3362, %v3359
        %s3366 = scalar_lea.vmem [#allocation5], 48
        %v3367 = vld [vmem:[%s3366] sm:$0xf]
        %v3368 = vld [vmem:[%s3366 + $0x4] sm:$0xf]
        %v3371 = vunpack.c.l.b16 %v3367
        %v3372 = vunpack.c.l.b16 %v3368
        %v3373 = vpack.c.b16 %v3372, %v3371
        %v3376 = vsel %vm2786, %v3365, 0
        %3378 = vmatprep.subr.bf16.mxu0 0
        %3379 = vmatpush1.bf16.msra.mxu0 %v3373
        %3380 = vmatprep.subr.bf16.mxu0 0
        %3381 = vmatpush1.bf16.msra.mxu0 0
        %3382 = vmatprep.subr.bf16.mxu0 0
        %3383 = vmatpush1.bf16.msra.mxu0 0
        %3384 = vmatprep.subr.bf16.mxu0 0
        %3385 = vmatpush1.bf16.msra.mxu0 0
        %3386 = vmatprep.subr.bf16.mxu0 0
        %3387 = vmatpush1.bf16.msra.mxu0 0
        %3388 = vmatprep.subr.bf16.mxu0 0
        %3389 = vmatpush1.bf16.msra.mxu0 0
        %3390 = vmatprep.subr.bf16.mxu0 0
        %3391 = vmatpush1.bf16.msra.mxu0 0
        %3392 = vmatprep.subr.bf16.mxu0 0
        %3393 = vmatpush1.bf16.msra.mxu0 0
        %3394 = vmatprep.subr.bf16.mxu0 0
        %3395 = vmatpush1.bf16.msra.mxu0 0
        %3396 = vmatprep.subr.bf16.mxu0 0
        %3397 = vmatpush1.bf16.msra.mxu0 0
        %3398 = vmatprep.subr.bf16.mxu0 0
        %3399 = vmatpush1.bf16.msra.mxu0 0
        %3400 = vmatprep.subr.bf16.mxu0 0
        %3401 = vmatpush1.bf16.msra.mxu0 0
        %3402 = vmatprep.subr.bf16.mxu0 0
        %3403 = vmatpush1.bf16.msra.mxu0 0
        %3404 = vmatprep.subr.bf16.mxu0 0
        %3405 = vmatpush1.bf16.msra.mxu0 0
        %3406 = vmatprep.subr.bf16.mxu0 0
        %3407 = vmatpush1.bf16.msra.mxu0 0
        %3408 = vmatprep.subr.bf16.mxu0 0
        %3409 = vmatpush1.bf16.msra.mxu0 0
        %3410 = vmatprep.mubr.bf16.mxu0 0
        %3411 = vmatmul.mubr.bf16.gmra.mrb[0].mxu0 %v3376
        %v3412 = vpop.f32.mrb[0].mxu0
        %v3413 = vadd.f32 0.0, %v3412
        %v3414 = vpop.f32.mrb[0].mxu0
        %v3415 = vpop.f32.mrb[0].mxu0
        %v3416 = vadd.f32 0.0, %v3415
        %v3417 = vpop.f32.mrb[0].mxu0
        %3418 = vdwg.mxu0
        %v3419 = vadd.f32 %v3311, %v3413
        %v3420 = vadd.f32 %v3312, %v3416
        %s3421 = scalar_lea.vmem %s4, 56
        %v3422 = vld [vmem:[%s3421] sm:$0xf]
        %v3423 = vld [vmem:[%s3421 + $0x4] sm:$0xf]
        %v3426 = vunpack.c.l.b16 %v3422
        %v3427 = vunpack.c.l.b16 %v3423
        %v3428 = vpack.c.b16 %v3427, %v3426
        %v3430 = vsel %vm2676, %v3428, 0
        %3432 = vmatprep.subr.bf16.mxu0 0
        %3433 = vmatpush1.bf16.msra.mxu0 %v2665
        %3434 = vmatprep.subr.bf16.mxu0 0
        %3435 = vmatpush1.bf16.msra.mxu0 %v2666
        %3436 = vmatprep.subr.bf16.mxu0 0
        %3437 = vmatpush1.bf16.msra.mxu0 %v2667
        %3438 = vmatprep.subr.bf16.mxu0 0
        %3439 = vmatpush1.bf16.msra.mxu0 %v2668
        %3440 = vmatprep.subr.bf16.mxu0 0
        %3441 = vmatpush1.bf16.msra.mxu0 0
        %3442 = vmatprep.subr.bf16.mxu0 0
        %3443 = vmatpush1.bf16.msra.mxu0 0
        %3444 = vmatprep.subr.bf16.mxu0 0
        %3445 = vmatpush1.bf16.msra.mxu0 0
        %3446 = vmatprep.subr.bf16.mxu0 0
        %3447 = vmatpush1.bf16.msra.mxu0 0
        %3448 = vmatprep.subr.bf16.mxu0 0
        %3449 = vmatpush1.bf16.msra.mxu0 0
        %3450 = vmatprep.subr.bf16.mxu0 0
        %3451 = vmatpush1.bf16.msra.mxu0 0
        %3452 = vmatprep.subr.bf16.mxu0 0
        %3453 = vmatpush1.bf16.msra.mxu0 0
        %3454 = vmatprep.subr.bf16.mxu0 0
        %3455 = vmatpush1.bf16.msra.mxu0 0
        %3456 = vmatprep.subr.bf16.mxu0 0
        %3457 = vmatpush1.bf16.msra.mxu0 0
        %3458 = vmatprep.subr.bf16.mxu0 0
        %3459 = vmatpush1.bf16.msra.mxu0 0
        %3460 = vmatprep.subr.bf16.mxu0 0
        %3461 = vmatpush1.bf16.msra.mxu0 0
        %3462 = vmatprep.subr.bf16.mxu0 0
        %3463 = vmatpush1.bf16.msra.mxu0 0
        %3464 = vmatprep.mubr.bf16.mxu0 0
        %3465 = vmatmul.mubr.bf16.gmra.mrb[0].mxu0 %v3430
        %v3466 = vpop.f32.mrb[0].mxu0
        %v3467 = vadd.f32 0.0, %v3466
        %v3468 = vpop.f32.mrb[0].mxu0
        %v3469 = vpop.f32.mrb[0].mxu0
        %v3470 = vadd.f32 0.0, %v3469
        %v3471 = vpop.f32.mrb[0].mxu0
        %3472 = vdwg.mxu0
        %v3473 = vpack.c.bf16 %v3470, %v3467
        %s3474 = scalar_lea.vmem [#allocation5], 56
        %v3475 = vld [vmem:[%s3474] sm:$0xf]
        %v3476 = vld [vmem:[%s3474 + $0x4] sm:$0xf]
        %v3479 = vunpack.c.l.b16 %v3475
        %v3480 = vunpack.c.l.b16 %v3476
        %v3481 = vpack.c.b16 %v3480, %v3479
        %v3484 = vsel %vm2786, %v3473, 0
        %3486 = vmatprep.subr.bf16.mxu0 0
        %3487 = vmatpush1.bf16.msra.mxu0 %v3481
        %3488 = vmatprep.subr.bf16.mxu0 0
        %3489 = vmatpush1.bf16.msra.mxu0 0
        %3490 = vmatprep.subr.bf16.mxu0 0
        %3491 = vmatpush1.bf16.msra.mxu0 0
        %3492 = vmatprep.subr.bf16.mxu0 0
        %3493 = vmatpush1.bf16.msra.mxu0 0
        %3494 = vmatprep.subr.bf16.mxu0 0
        %3495 = vmatpush1.bf16.msra.mxu0 0
        %3496 = vmatprep.subr.bf16.mxu0 0
        %3497 = vmatpush1.bf16.msra.mxu0 0
        %3498 = vmatprep.subr.bf16.mxu0 0
        %3499 = vmatpush1.bf16.msra.mxu0 0
        %3500 = vmatprep.subr.bf16.mxu0 0
        %3501 = vmatpush1.bf16.msra.mxu0 0
        %3502 = vmatprep.subr.bf16.mxu0 0
        %3503 = vmatpush1.bf16.msra.mxu0 0
        %3504 = vmatprep.subr.bf16.mxu0 0
        %3505 = vmatpush1.bf16.msra.mxu0 0
        %3506 = vmatprep.subr.bf16.mxu0 0
        %3507 = vmatpush1.bf16.msra.mxu0 0
        %3508 = vmatprep.subr.bf16.mxu0 0
        %3509 = vmatpush1.bf16.msra.mxu0 0
        %3510 = vmatprep.subr.bf16.mxu0 0
        %3511 = vmatpush1.bf16.msra.mxu0 0
        %3512 = vmatprep.subr.bf16.mxu0 0
        %3513 = vmatpush1.bf16.msra.mxu0 0
        %3514 = vmatprep.subr.bf16.mxu0 0
        %3515 = vmatpush1.bf16.msra.mxu0 0
        %3516 = vmatprep.subr.bf16.mxu0 0
        %3517 = vmatpush1.bf16.msra.mxu0 0
        %3518 = vmatprep.mubr.bf16.mxu0 0
        %3519 = vmatmul.mubr.bf16.gmra.mrb[0].mxu0 %v3484
        %v3520 = vpop.f32.mrb[0].mxu0
        %v3521 = vadd.f32 0.0, %v3520
        %v3522 = vpop.f32.mrb[0].mxu0
        %v3523 = vpop.f32.mrb[0].mxu0
        %v3524 = vadd.f32 0.0, %v3523
        %v3525 = vpop.f32.mrb[0].mxu0
        %3526 = vdwg.mxu0
        %v3527 = vadd.f32 %v3419, %v3521
        %v3528 = vadd.f32 %v3420, %v3524
        %s3529 = scalar_lea.vmem %s4, 64
        %v3530 = vld [vmem:[%s3529] sm:$0xf]
        %v3531 = vld [vmem:[%s3529 + $0x4] sm:$0xf]
        %v3534 = vunpack.c.l.b16 %v3530
        %v3535 = vunpack.c.l.b16 %v3531
        %v3536 = vpack.c.b16 %v3535, %v3534
        %v3538 = vsel %vm2676, %v3536, 0
        %3540 = vmatprep.subr.bf16.mxu0 0
        %3541 = vmatpush1.bf16.msra.mxu0 %v2665
        %3542 = vmatprep.subr.bf16.mxu0 0
        %3543 = vmatpush1.bf16.msra.mxu0 %v2666
        %3544 = vmatprep.subr.bf16.mxu0 0
        %3545 = vmatpush1.bf16.msra.mxu0 %v2667
        %3546 = vmatprep.subr.bf16.mxu0 0
        %3547 = vmatpush1.bf16.msra.mxu0 %v2668
        %3548 = vmatprep.subr.bf16.mxu0 0
        %3549 = vmatpush1.bf16.msra.mxu0 0
        %3550 = vmatprep.subr.bf16.mxu0 0
        %3551 = vmatpush1.bf16.msra.mxu0 0
        %3552 = vmatprep.subr.bf16.mxu0 0
        %3553 = vmatpush1.bf16.msra.mxu0 0
        %3554 = vmatprep.subr.bf16.mxu0 0
        %3555 = vmatpush1.bf16.msra.mxu0 0
        %3556 = vmatprep.subr.bf16.mxu0 0
        %3557 = vmatpush1.bf16.msra.mxu0 0
        %3558 = vmatprep.subr.bf16.mxu0 0
        %3559 = vmatpush1.bf16.msra.mxu0 0
        %3560 = vmatprep.subr.bf16.mxu0 0
        %3561 = vmatpush1.bf16.msra.mxu0 0
        %3562 = vmatprep.subr.bf16.mxu0 0
        %3563 = vmatpush1.bf16.msra.mxu0 0
        %3564 = vmatprep.subr.bf16.mxu0 0
        %3565 = vmatpush1.bf16.msra.mxu0 0
        %3566 = vmatprep.subr.bf16.mxu0 0
        %3567 = vmatpush1.bf16.msra.mxu0 0
        %3568 = vmatprep.subr.bf16.mxu0 0
        %3569 = vmatpush1.bf16.msra.mxu0 0
        %3570 = vmatprep.subr.bf16.mxu0 0
        %3571 = vmatpush1.bf16.msra.mxu0 0
        %3572 = vmatprep.mubr.bf16.mxu0 0
        %3573 = vmatmul.mubr.bf16.gmra.mrb[0].mxu0 %v3538
        %v3574 = vpop.f32.mrb[0].mxu0
        %v3575 = vadd.f32 0.0, %v3574
        %v3576 = vpop.f32.mrb[0].mxu0
        %v3577 = vpop.f32.mrb[0].mxu0
        %v3578 = vadd.f32 0.0, %v3577
        %v3579 = vpop.f32.mrb[0].mxu0
        %3580 = vdwg.mxu0
        %v3581 = vpack.c.bf16 %v3578, %v3575
        %s3582 = scalar_lea.vmem [#allocation5], 64
        %v3583 = vld [vmem:[%s3582] sm:$0xf]
        %v3584 = vld [vmem:[%s3582 + $0x4] sm:$0xf]
        %v3587 = vunpack.c.l.b16 %v3583
        %v3588 = vunpack.c.l.b16 %v3584
        %v3589 = vpack.c.b16 %v3588, %v3587
        %v3592 = vsel %vm2786, %v3581, 0
        %3594 = vmatprep.subr.bf16.mxu0 0
        %3595 = vmatpush1.bf16.msra.mxu0 %v3589
        %3596 = vmatprep.subr.bf16.mxu0 0
        %3597 = vmatpush1.bf16.msra.mxu0 0
        %3598 = vmatprep.subr.bf16.mxu0 0
        %3599 = vmatpush1.bf16.msra.mxu0 0
        %3600 = vmatprep.subr.bf16.mxu0 0
        %3601 = vmatpush1.bf16.msra.mxu0 0
        %3602 = vmatprep.subr.bf16.mxu0 0
        %3603 = vmatpush1.bf16.msra.mxu0 0
        %3604 = vmatprep.subr.bf16.mxu0 0
        %3605 = vmatpush1.bf16.msra.mxu0 0
        %3606 = vmatprep.subr.bf16.mxu0 0
        %3607 = vmatpush1.bf16.msra.mxu0 0
        %3608 = vmatprep.subr.bf16.mxu0 0
        %3609 = vmatpush1.bf16.msra.mxu0 0
        %3610 = vmatprep.subr.bf16.mxu0 0
        %3611 = vmatpush1.bf16.msra.mxu0 0
        %3612 = vmatprep.subr.bf16.mxu0 0
        %3613 = vmatpush1.bf16.msra.mxu0 0
        %3614 = vmatprep.subr.bf16.mxu0 0
        %3615 = vmatpush1.bf16.msra.mxu0 0
        %3616 = vmatprep.subr.bf16.mxu0 0
        %3617 = vmatpush1.bf16.msra.mxu0 0
        %3618 = vmatprep.subr.bf16.mxu0 0
        %3619 = vmatpush1.bf16.msra.mxu0 0
        %3620 = vmatprep.subr.bf16.mxu0 0
        %3621 = vmatpush1.bf16.msra.mxu0 0
        %3622 = vmatprep.subr.bf16.mxu0 0
        %3623 = vmatpush1.bf16.msra.mxu0 0
        %3624 = vmatprep.subr.bf16.mxu0 0
        %3625 = vmatpush1.bf16.msra.mxu0 0
        %3626 = vmatprep.mubr.bf16.mxu0 0
        %3627 = vmatmul.mubr.bf16.gmra.mrb[0].mxu0 %v3592
        %v3628 = vpop.f32.mrb[0].mxu0
        %v3629 = vadd.f32 0.0, %v3628
        %v3630 = vpop.f32.mrb[0].mxu0
        %v3631 = vpop.f32.mrb[0].mxu0
        %v3632 = vadd.f32 0.0, %v3631
        %v3633 = vpop.f32.mrb[0].mxu0
        %3634 = vdwg.mxu0
        %v3635 = vadd.f32 %v3527, %v3629
        %v3636 = vadd.f32 %v3528, %v3632
        %v3637 = vld [vmem:[%s6] sm:$0x1]
        %v3639 = vlaneseq
        %v3640 = vshrl.u32 %v3639, 7
        %v3641 = vsub.s32 0, %v3640
        %v3642 = vrot.slane %v3637, %v3641
        %v3644 = vadd.f32 %v3635, %v3642
        %v3645 = vadd.f32 %v3636, %v3642
        %vm3646 = vcmp.gt.f32.partialorder %v3644, 0.0
        %vm3647 = vcmp.gt.f32.partialorder %v3645, 0.0
        %v3648 = vmul.f32 %v3644, 0.2
        %v3649 = vmul.f32 %v3645, 0.2
        %v3650 = vsel %vm3646, %v3644, %v3648
        %v3651 = vsel %vm3647, %v3645, %v3649
        %v3652 = vld [vmem:[%s7] sm:$0x1]
        %v3654 = vlaneseq
        %v3655 = vshrl.u32 %v3654, 7
        %v3656 = vsub.s32 0, %v3655
        %v3657 = vrot.slane %v3652, %v3656
        %v3659 = vadd.f32 %v3650, %v3657
        %v3660 = vadd.f32 %v3651, %v3657
        %v3661 = vpack.c.bf16 %v3660, %v3659
        %v3662 = vld [vmem:[%s8] sm:$0x3]
        %v3664 = vsel %vm2786, %v3662, 0
        %3666 = vmatprep.subr.bf16.mxu0 0
        %3667 = vmatpush1.bf16.msra.mxu0 %v3661
        %3668 = vmatprep.subr.bf16.mxu0 0
        %3669 = vmatpush1.bf16.msra.mxu0 0
        %3670 = vmatprep.subr.bf16.mxu0 0
        %3671 = vmatpush1.bf16.msra.mxu0 0
        %3672 = vmatprep.subr.bf16.mxu0 0
        %3673 = vmatpush1.bf16.msra.mxu0 0
        %3674 = vmatprep.subr.bf16.mxu0 0
        %3675 = vmatpush1.bf16.msra.mxu0 0
        %3676 = vmatprep.subr.bf16.mxu0 0
        %3677 = vmatpush1.bf16.msra.mxu0 0
        %3678 = vmatprep.subr.bf16.mxu0 0
        %3679 = vmatpush1.bf16.msra.mxu0 0
        %3680 = vmatprep.subr.bf16.mxu0 0
        %3681 = vmatpush1.bf16.msra.mxu0 0
        %3682 = vmatprep.subr.bf16.mxu0 0
        %3683 = vmatpush1.bf16.msra.mxu0 0
        %3684 = vmatprep.subr.bf16.mxu0 0
        %3685 = vmatpush1.bf16.msra.mxu0 0
        %3686 = vmatprep.subr.bf16.mxu0 0
        %3687 = vmatpush1.bf16.msra.mxu0 0
        %3688 = vmatprep.subr.bf16.mxu0 0
        %3689 = vmatpush1.bf16.msra.mxu0 0
        %3690 = vmatprep.subr.bf16.mxu0 0
        %3691 = vmatpush1.bf16.msra.mxu0 0
        %3692 = vmatprep.subr.bf16.mxu0 0
        %3693 = vmatpush1.bf16.msra.mxu0 0
        %3694 = vmatprep.subr.bf16.mxu0 0
        %3695 = vmatpush1.bf16.msra.mxu0 0
        %3696 = vmatprep.subr.bf16.mxu0 0
        %3697 = vmatpush1.bf16.msra.mxu0 0
        %3698 = vmatprep.mubr.bf16.mxu0 0
        %3699 = vmatmul.mubr.bf16.gmra.mrb[0].mxu0 %v3664
        %v3700 = vpop.f32.mrb[0].mxu0
        %v3701 = vadd.f32 0.0, %v3700
        %v3702 = vpop.f32.mrb[0].mxu0
        %v3703 = vpop.f32.mrb[0].mxu0
        %v3704 = vpop.f32.mrb[0].mxu0
        %3705 = vdwg.mxu0
        %v3706 = vpack.c.bf16 %v3701, %v3701
        %v3707 = vld [vmem:[%s9] sm:$0xf]
        %v3708 = vld [vmem:[%s9 + $0x4] sm:$0xf]
        %v3709 = vld [vmem:[%s9 + $0x8] sm:$0xf]
        %v3710 = vld [vmem:[%s9 + $0xc] sm:$0xf]
        %s3711 = scalar_lea.vmem %s8, 2
        %v3712 = vld [vmem:[%s3711] sm:$0x3]
        %v3714 = vsel %vm2786, %v3712, 0
        %3716 = vmatprep.subr.bf16.mxu0 0
        %3717 = vmatpush1.bf16.msra.mxu0 %v3661
        %3718 = vmatprep.subr.bf16.mxu0 0
        %3719 = vmatpush1.bf16.msra.mxu0 0
        %3720 = vmatprep.subr.bf16.mxu0 0
        %3721 = vmatpush1.bf16.msra.mxu0 0
        %3722 = vmatprep.subr.bf16.mxu0 0
        %3723 = vmatpush1.bf16.msra.mxu0 0
        %3724 = vmatprep.subr.bf16.mxu0 0
        %3725 = vmatpush1.bf16.msra.mxu0 0
        %3726 = vmatprep.subr.bf16.mxu0 0
        %3727 = vmatpush1.bf16.msra.mxu0 0
        %3728 = vmatprep.subr.bf16.mxu0 0
        %3729 = vmatpush1.bf16.msra.mxu0 0
        %3730 = vmatprep.subr.bf16.mxu0 0
        %3731 = vmatpush1.bf16.msra.mxu0 0
        %3732 = vmatprep.subr.bf16.mxu0 0
        %3733 = vmatpush1.bf16.msra.mxu0 0
        %3734 = vmatprep.subr.bf16.mxu0 0
        %3735 = vmatpush1.bf16.msra.mxu0 0
        %3736 = vmatprep.subr.bf16.mxu0 0
        %3737 = vmatpush1.bf16.msra.mxu0 0
        %3738 = vmatprep.subr.bf16.mxu0 0
        %3739 = vmatpush1.bf16.msra.mxu0 0
        %3740 = vmatprep.subr.bf16.mxu0 0
        %3741 = vmatpush1.bf16.msra.mxu0 0
        %3742 = vmatprep.subr.bf16.mxu0 0
        %3743 = vmatpush1.bf16.msra.mxu0 0
        %3744 = vmatprep.subr.bf16.mxu0 0
        %3745 = vmatpush1.bf16.msra.mxu0 0
        %3746 = vmatprep.subr.bf16.mxu0 0
        %3747 = vmatpush1.bf16.msra.mxu0 0
        %3748 = vmatprep.mubr.bf16.mxu0 0
        %3749 = vmatmul.mubr.bf16.gmra.mrb[0].mxu0 %v3714
        %v3750 = vpop.f32.mrb[0].mxu0
        %v3751 = vadd.f32 0.0, %v3750
        %v3752 = vpop.f32.mrb[0].mxu0
        %v3753 = vpop.f32.mrb[0].mxu0
        %v3754 = vpop.f32.mrb[0].mxu0
        %3755 = vdwg.mxu0
        %v3756 = vpack.c.bf16 %v3751, %v3751
        %s3757 = scalar_lea.vmem %s9, 16
        %v3758 = vld [vmem:[%s3757] sm:$0xf]
        %v3759 = vld [vmem:[%s3757 + $0x4] sm:$0xf]
        %v3760 = vld [vmem:[%s3757 + $0x8] sm:$0xf]
        %v3761 = vld [vmem:[%s3757 + $0xc] sm:$0xf]
        %v3766 = vunpack.c.l.b16 %v3758
        %v3767 = vunpack.c.l.b16 %v3759
        %v3768 = vunpack.c.l.b16 %v3760
        %v3769 = vunpack.c.l.b16 %v3761
        %v3770 = vpack.c.b16 %v3767, %v3766
        %v3771 = vpack.c.b16 %v3769, %v3768
        %vm3774 = vcmask 261120
        %v3776 = vsel %vm3774, %v3756, 0
        %3778 = vmatprep.subr.bf16.mxu0 0
        %3779 = vmatpush1.bf16.msra.mxu0 %v3770
        %3780 = vmatprep.subr.bf16.mxu0 0
        %3781 = vmatpush1.bf16.msra.mxu0 %v3771
        %3782 = vmatprep.subr.bf16.mxu0 0
        %3783 = vmatpush1.bf16.msra.mxu0 0
        %3784 = vmatprep.subr.bf16.mxu0 0
        %3785 = vmatpush1.bf16.msra.mxu0 0
        %3786 = vmatprep.subr.bf16.mxu0 0
        %3787 = vmatpush1.bf16.msra.mxu0 0
        %3788 = vmatprep.subr.bf16.mxu0 0
        %3789 = vmatpush1.bf16.msra.mxu0 0
        %3790 = vmatprep.subr.bf16.mxu0 0
        %3791 = vmatpush1.bf16.msra.mxu0 0
        %3792 = vmatprep.subr.bf16.mxu0 0
        %3793 = vmatpush1.bf16.msra.mxu0 0
        %3794 = vmatprep.subr.bf16.mxu0 0
        %3795 = vmatpush1.bf16.msra.mxu0 0
        %3796 = vmatprep.subr.bf16.mxu0 0
        %3797 = vmatpush1.bf16.msra.mxu0 0
        %3798 = vmatprep.subr.bf16.mxu0 0
        %3799 = vmatpush1.bf16.msra.mxu0 0
        %3800 = vmatprep.subr.bf16.mxu0 0
        %3801 = vmatpush1.bf16.msra.mxu0 0
        %3802 = vmatprep.subr.bf16.mxu0 0
        %3803 = vmatpush1.bf16.msra.mxu0 0
        %3804 = vmatprep.subr.bf16.mxu0 0
        %3805 = vmatpush1.bf16.msra.mxu0 0
        %3806 = vmatprep.subr.bf16.mxu0 0
        %3807 = vmatpush1.bf16.msra.mxu0 0
        %3808 = vmatprep.subr.bf16.mxu0 0
        %3809 = vmatpush1.bf16.msra.mxu0 0
        %3810 = vmatprep.mubr.bf16.mxu0 0
        %3811 = vmatmul.mubr.bf16.gmra.mrb[0].mxu0 %v3776
        %v3812 = vpop.f32.mrb[0].mxu0
        %v3813 = vadd.f32 0.0, %v3812
        %v3814 = vpop.f32.mrb[0].mxu0
        %v3815 = vpop.f32.mrb[0].mxu0
        %v3816 = vpop.f32.mrb[0].mxu0
        %3817 = vdwg.mxu0
        %v3822 = vunpack.c.l.b16 %v3707
        %v3823 = vunpack.c.l.b16 %v3708
        %v3824 = vunpack.c.l.b16 %v3709
        %v3825 = vunpack.c.l.b16 %v3710
        %v3826 = vpack.c.b16 %v3823, %v3822
        %v3827 = vpack.c.b16 %v3825, %v3824
        %v3831 = vsel %vm3774, %v3706, 0
        %3833 = vmatprep.subr.bf16.mxu0 0
        %3834 = vmatpush1.bf16.msra.mxu0 %v3826
        %3835 = vmatprep.subr.bf16.mxu0 0
        %3836 = vmatpush1.bf16.msra.mxu0 %v3827
        %3837 = vmatprep.subr.bf16.mxu0 0
        %3838 = vmatpush1.bf16.msra.mxu0 0
        %3839 = vmatprep.subr.bf16.mxu0 0
        %3840 = vmatpush1.bf16.msra.mxu0 0
        %3841 = vmatprep.subr.bf16.mxu0 0
        %3842 = vmatpush1.bf16.msra.mxu0 0
        %3843 = vmatprep.subr.bf16.mxu0 0
        %3844 = vmatpush1.bf16.msra.mxu0 0
        %3845 = vmatprep.subr.bf16.mxu0 0
        %3846 = vmatpush1.bf16.msra.mxu0 0
        %3847 = vmatprep.subr.bf16.mxu0 0
        %3848 = vmatpush1.bf16.msra.mxu0 0
        %3849 = vmatprep.subr.bf16.mxu0 0
        %3850 = vmatpush1.bf16.msra.mxu0 0
        %3851 = vmatprep.subr.bf16.mxu0 0
        %3852 = vmatpush1.bf16.msra.mxu0 0
        %3853 = vmatprep.subr.bf16.mxu0 0
        %3854 = vmatpush1.bf16.msra.mxu0 0
        %3855 = vmatprep.subr.bf16.mxu0 0
        %3856 = vmatpush1.bf16.msra.mxu0 0
        %3857 = vmatprep.subr.bf16.mxu0 0
        %3858 = vmatpush1.bf16.msra.mxu0 0
        %3859 = vmatprep.subr.bf16.mxu0 0
        %3860 = vmatpush1.bf16.msra.mxu0 0
        %3861 = vmatprep.subr.bf16.mxu0 0
        %3862 = vmatpush1.bf16.msra.mxu0 0
        %3863 = vmatprep.subr.bf16.mxu0 0
        %3864 = vmatpush1.bf16.msra.mxu0 0
        %3865 = vmatprep.mubr.bf16.mxu0 0
        %3866 = vmatmul.mubr.bf16.gmra.mrb[0].mxu0 %v3831
        %v3867 = vpop.f32.mrb[0].mxu0
        %v3868 = vadd.f32 %v3813, %v3867
        %v3869 = vpop.f32.mrb[0].mxu0
        %v3870 = vpop.f32.mrb[0].mxu0
        %v3871 = vpop.f32.mrb[0].mxu0
        %3872 = vdwg.mxu0
        %s3873 = scalar_lea.vmem %s8, 4
        %v3874 = vld [vmem:[%s3873] sm:$0x3]
        %v3876 = vsel %vm2786, %v3874, 0
        %3878 = vmatprep.subr.bf16.mxu0 0
        %3879 = vmatpush1.bf16.msra.mxu0 %v3661
        %3880 = vmatprep.subr.bf16.mxu0 0
        %3881 = vmatpush1.bf16.msra.mxu0 0
        %3882 = vmatprep.subr.bf16.mxu0 0
        %3883 = vmatpush1.bf16.msra.mxu0 0
        %3884 = vmatprep.subr.bf16.mxu0 0
        %3885 = vmatpush1.bf16.msra.mxu0 0
        %3886 = vmatprep.subr.bf16.mxu0 0
        %3887 = vmatpush1.bf16.msra.mxu0 0
        %3888 = vmatprep.subr.bf16.mxu0 0
        %3889 = vmatpush1.bf16.msra.mxu0 0
        %3890 = vmatprep.subr.bf16.mxu0 0
        %3891 = vmatpush1.bf16.msra.mxu0 0
        %3892 = vmatprep.subr.bf16.mxu0 0
        %3893 = vmatpush1.bf16.msra.mxu0 0
        %3894 = vmatprep.subr.bf16.mxu0 0
        %3895 = vmatpush1.bf16.msra.mxu0 0
        %3896 = vmatprep.subr.bf16.mxu0 0
        %3897 = vmatpush1.bf16.msra.mxu0 0
        %3898 = vmatprep.subr.bf16.mxu0 0
        %3899 = vmatpush1.bf16.msra.mxu0 0
        %3900 = vmatprep.subr.bf16.mxu0 0
        %3901 = vmatpush1.bf16.msra.mxu0 0
        %3902 = vmatprep.subr.bf16.mxu0 0
        %3903 = vmatpush1.bf16.msra.mxu0 0
        %3904 = vmatprep.subr.bf16.mxu0 0
        %3905 = vmatpush1.bf16.msra.mxu0 0
        %3906 = vmatprep.subr.bf16.mxu0 0
        %3907 = vmatpush1.bf16.msra.mxu0 0
        %3908 = vmatprep.subr.bf16.mxu0 0
        %3909 = vmatpush1.bf16.msra.mxu0 0
        %3910 = vmatprep.mubr.bf16.mxu0 0
        %3911 = vmatmul.mubr.bf16.gmra.mrb[0].mxu0 %v3876
        %v3912 = vpop.f32.mrb[0].mxu0
        %v3913 = vadd.f32 0.0, %v3912
        %v3914 = vpop.f32.mrb[0].mxu0
        %v3915 = vpop.f32.mrb[0].mxu0
        %v3916 = vpop.f32.mrb[0].mxu0
        %3917 = vdwg.mxu0
        %v3918 = vpack.c.bf16 %v3913, %v3913
        %s3919 = scalar_lea.vmem %s9, 32
        %v3920 = vld [vmem:[%s3919] sm:$0xf]
        %v3921 = vld [vmem:[%s3919 + $0x4] sm:$0xf]
        %v3922 = vld [vmem:[%s3919 + $0x8] sm:$0xf]
        %v3923 = vld [vmem:[%s3919 + $0xc] sm:$0xf]
        %v3928 = vunpack.c.l.b16 %v3920
        %v3929 = vunpack.c.l.b16 %v3921
        %v3930 = vunpack.c.l.b16 %v3922
        %v3931 = vunpack.c.l.b16 %v3923
        %v3932 = vpack.c.b16 %v3929, %v3928
        %v3933 = vpack.c.b16 %v3931, %v3930
        %v3937 = vsel %vm3774, %v3918, 0
        %3939 = vmatprep.subr.bf16.mxu0 0
        %3940 = vmatpush1.bf16.msra.mxu0 %v3932
        %3941 = vmatprep.subr.bf16.mxu0 0
        %3942 = vmatpush1.bf16.msra.mxu0 %v3933
        %3943 = vmatprep.subr.bf16.mxu0 0
        %3944 = vmatpush1.bf16.msra.mxu0 0
        %3945 = vmatprep.subr.bf16.mxu0 0
        %3946 = vmatpush1.bf16.msra.mxu0 0
        %3947 = vmatprep.subr.bf16.mxu0 0
        %3948 = vmatpush1.bf16.msra.mxu0 0
        %3949 = vmatprep.subr.bf16.mxu0 0
        %3950 = vmatpush1.bf16.msra.mxu0 0
        %3951 = vmatprep.subr.bf16.mxu0 0
        %3952 = vmatpush1.bf16.msra.mxu0 0
        %3953 = vmatprep.subr.bf16.mxu0 0
        %3954 = vmatpush1.bf16.msra.mxu0 0
        %3955 = vmatprep.subr.bf16.mxu0 0
        %3956 = vmatpush1.bf16.msra.mxu0 0
        %3957 = vmatprep.subr.bf16.mxu0 0
        %3958 = vmatpush1.bf16.msra.mxu0 0
        %3959 = vmatprep.subr.bf16.mxu0 0
        %3960 = vmatpush1.bf16.msra.mxu0 0
        %3961 = vmatprep.subr.bf16.mxu0 0
        %3962 = vmatpush1.bf16.msra.mxu0 0
        %3963 = vmatprep.subr.bf16.mxu0 0
        %3964 = vmatpush1.bf16.msra.mxu0 0
        %3965 = vmatprep.subr.bf16.mxu0 0
        %3966 = vmatpush1.bf16.msra.mxu0 0
        %3967 = vmatprep.subr.bf16.mxu0 0
        %3968 = vmatpush1.bf16.msra.mxu0 0
        %3969 = vmatprep.subr.bf16.mxu0 0
        %3970 = vmatpush1.bf16.msra.mxu0 0
        %3971 = vmatprep.mubr.bf16.mxu0 0
        %3972 = vmatmul.mubr.bf16.gmra.mrb[0].mxu0 %v3937
        %v3973 = vpop.f32.mrb[0].mxu0
        %v3974 = vadd.f32 0.0, %v3973
        %v3975 = vpop.f32.mrb[0].mxu0
        %v3976 = vpop.f32.mrb[0].mxu0
        %v3977 = vpop.f32.mrb[0].mxu0
        %3978 = vdwg.mxu0
        %v3979 = vadd.f32 %v3868, %v3974
        %s3980 = scalar_lea.vmem %s8, 6
        %v3981 = vld [vmem:[%s3980] sm:$0x3]
        %v3983 = vsel %vm2786, %v3981, 0
        %3985 = vmatprep.subr.bf16.mxu0 0
        %3986 = vmatpush1.bf16.msra.mxu0 %v3661
        %3987 = vmatprep.subr.bf16.mxu0 0
        %3988 = vmatpush1.bf16.msra.mxu0 0
        %3989 = vmatprep.subr.bf16.mxu0 0
        %3990 = vmatpush1.bf16.msra.mxu0 0
        %3991 = vmatprep.subr.bf16.mxu0 0
        %3992 = vmatpush1.bf16.msra.mxu0 0
        %3993 = vmatprep.subr.bf16.mxu0 0
        %3994 = vmatpush1.bf16.msra.mxu0 0
        %3995 = vmatprep.subr.bf16.mxu0 0
        %3996 = vmatpush1.bf16.msra.mxu0 0
        %3997 = vmatprep.subr.bf16.mxu0 0
        %3998 = vmatpush1.bf16.msra.mxu0 0
        %3999 = vmatprep.subr.bf16.mxu0 0
        %4000 = vmatpush1.bf16.msra.mxu0 0
        %4001 = vmatprep.subr.bf16.mxu0 0
        %4002 = vmatpush1.bf16.msra.mxu0 0
        %4003 = vmatprep.subr.bf16.mxu0 0
        %4004 = vmatpush1.bf16.msra.mxu0 0
        %4005 = vmatprep.subr.bf16.mxu0 0
        %4006 = vmatpush1.bf16.msra.mxu0 0
        %4007 = vmatprep.subr.bf16.mxu0 0
        %4008 = vmatpush1.bf16.msra.mxu0 0
        %4009 = vmatprep.subr.bf16.mxu0 0
        %4010 = vmatpush1.bf16.msra.mxu0 0
        %4011 = vmatprep.subr.bf16.mxu0 0
        %4012 = vmatpush1.bf16.msra.mxu0 0
        %4013 = vmatprep.subr.bf16.mxu0 0
        %4014 = vmatpush1.bf16.msra.mxu0 0
        %4015 = vmatprep.subr.bf16.mxu0 0
        %4016 = vmatpush1.bf16.msra.mxu0 0
        %4017 = vmatprep.mubr.bf16.mxu0 0
        %4018 = vmatmul.mubr.bf16.gmra.mrb[0].mxu0 %v3983
        %v4019 = vpop.f32.mrb[0].mxu0
        %v4020 = vadd.f32 0.0, %v4019
        %v4021 = vpop.f32.mrb[0].mxu0
        %v4022 = vpop.f32.mrb[0].mxu0
        %v4023 = vpop.f32.mrb[0].mxu0
        %4024 = vdwg.mxu0
        %v4025 = vpack.c.bf16 %v4020, %v4020
        %s4026 = scalar_lea.vmem %s9, 48
        %v4027 = vld [vmem:[%s4026] sm:$0xf]
        %v4028 = vld [vmem:[%s4026 + $0x4] sm:$0xf]
        %v4029 = vld [vmem:[%s4026 + $0x8] sm:$0xf]
        %v4030 = vld [vmem:[%s4026 + $0xc] sm:$0xf]
        %v4035 = vunpack.c.l.b16 %v4027
        %v4036 = vunpack.c.l.b16 %v4028
        %v4037 = vunpack.c.l.b16 %v4029
        %v4038 = vunpack.c.l.b16 %v4030
        %v4039 = vpack.c.b16 %v4036, %v4035
        %v4040 = vpack.c.b16 %v4038, %v4037
        %v4044 = vsel %vm3774, %v4025, 0
        %4046 = vmatprep.subr.bf16.mxu0 0
        %4047 = vmatpush1.bf16.msra.mxu0 %v4039
        %4048 = vmatprep.subr.bf16.mxu0 0
        %4049 = vmatpush1.bf16.msra.mxu0 %v4040
        %4050 = vmatprep.subr.bf16.mxu0 0
        %4051 = vmatpush1.bf16.msra.mxu0 0
        %4052 = vmatprep.subr.bf16.mxu0 0
        %4053 = vmatpush1.bf16.msra.mxu0 0
        %4054 = vmatprep.subr.bf16.mxu0 0
        %4055 = vmatpush1.bf16.msra.mxu0 0
        %4056 = vmatprep.subr.bf16.mxu0 0
        %4057 = vmatpush1.bf16.msra.mxu0 0
        %4058 = vmatprep.subr.bf16.mxu0 0
        %4059 = vmatpush1.bf16.msra.mxu0 0
        %4060 = vmatprep.subr.bf16.mxu0 0
        %4061 = vmatpush1.bf16.msra.mxu0 0
        %4062 = vmatprep.subr.bf16.mxu0 0
        %4063 = vmatpush1.bf16.msra.mxu0 0
        %4064 = vmatprep.subr.bf16.mxu0 0
        %4065 = vmatpush1.bf16.msra.mxu0 0
        %4066 = vmatprep.subr.bf16.mxu0 0
        %4067 = vmatpush1.bf16.msra.mxu0 0
        %4068 = vmatprep.subr.bf16.mxu0 0
        %4069 = vmatpush1.bf16.msra.mxu0 0
        %4070 = vmatprep.subr.bf16.mxu0 0
        %4071 = vmatpush1.bf16.msra.mxu0 0
        %4072 = vmatprep.subr.bf16.mxu0 0
        %4073 = vmatpush1.bf16.msra.mxu0 0
        %4074 = vmatprep.subr.bf16.mxu0 0
        %4075 = vmatpush1.bf16.msra.mxu0 0
        %4076 = vmatprep.subr.bf16.mxu0 0
        %4077 = vmatpush1.bf16.msra.mxu0 0
        %4078 = vmatprep.mubr.bf16.mxu0 0
        %4079 = vmatmul.mubr.bf16.gmra.mrb[0].mxu0 %v4044
        %v4080 = vpop.f32.mrb[0].mxu0
        %v4081 = vadd.f32 0.0, %v4080
        %v4082 = vpop.f32.mrb[0].mxu0
        %v4083 = vpop.f32.mrb[0].mxu0
        %v4084 = vpop.f32.mrb[0].mxu0
        %4085 = vdwg.mxu0
        %v4086 = vadd.f32 %v3979, %v4081
        %s4087 = scalar_lea.vmem %s8, 8
        %v4088 = vld [vmem:[%s4087] sm:$0x3]
        %v4090 = vsel %vm2786, %v4088, 0
        %4092 = vmatprep.subr.bf16.mxu0 0
        %4093 = vmatpush1.bf16.msra.mxu0 %v3661
        %4094 = vmatprep.subr.bf16.mxu0 0
        %4095 = vmatpush1.bf16.msra.mxu0 0
        %4096 = vmatprep.subr.bf16.mxu0 0
        %4097 = vmatpush1.bf16.msra.mxu0 0
        %4098 = vmatprep.subr.bf16.mxu0 0
        %4099 = vmatpush1.bf16.msra.mxu0 0
        %4100 = vmatprep.subr.bf16.mxu0 0
        %4101 = vmatpush1.bf16.msra.mxu0 0
        %4102 = vmatprep.subr.bf16.mxu0 0
        %4103 = vmatpush1.bf16.msra.mxu0 0
        %4104 = vmatprep.subr.bf16.mxu0 0
        %4105 = vmatpush1.bf16.msra.mxu0 0
        %4106 = vmatprep.subr.bf16.mxu0 0
        %4107 = vmatpush1.bf16.msra.mxu0 0
        %4108 = vmatprep.subr.bf16.mxu0 0
        %4109 = vmatpush1.bf16.msra.mxu0 0
        %4110 = vmatprep.subr.bf16.mxu0 0
        %4111 = vmatpush1.bf16.msra.mxu0 0
        %4112 = vmatprep.subr.bf16.mxu0 0
        %4113 = vmatpush1.bf16.msra.mxu0 0
        %4114 = vmatprep.subr.bf16.mxu0 0
        %4115 = vmatpush1.bf16.msra.mxu0 0
        %4116 = vmatprep.subr.bf16.mxu0 0
        %4117 = vmatpush1.bf16.msra.mxu0 0
        %4118 = vmatprep.subr.bf16.mxu0 0
        %4119 = vmatpush1.bf16.msra.mxu0 0
        %4120 = vmatprep.subr.bf16.mxu0 0
        %4121 = vmatpush1.bf16.msra.mxu0 0
        %4122 = vmatprep.subr.bf16.mxu0 0
        %4123 = vmatpush1.bf16.msra.mxu0 0
        %4124 = vmatprep.mubr.bf16.mxu0 0
        %4125 = vmatmul.mubr.bf16.gmra.mrb[0].mxu0 %v4090
        %v4126 = vpop.f32.mrb[0].mxu0
        %v4127 = vadd.f32 0.0, %v4126
        %v4128 = vpop.f32.mrb[0].mxu0
        %v4129 = vpop.f32.mrb[0].mxu0
        %v4130 = vpop.f32.mrb[0].mxu0
        %4131 = vdwg.mxu0
        %v4132 = vpack.c.bf16 %v4127, %v4127
        %s4133 = scalar_lea.vmem %s9, 64
        %v4134 = vld [vmem:[%s4133] sm:$0xf]
        %v4135 = vld [vmem:[%s4133 + $0x4] sm:$0xf]
        %v4136 = vld [vmem:[%s4133 + $0x8] sm:$0xf]
        %v4137 = vld [vmem:[%s4133 + $0xc] sm:$0xf]
        %v4142 = vunpack.c.l.b16 %v4134
        %v4143 = vunpack.c.l.b16 %v4135
        %v4144 = vunpack.c.l.b16 %v4136
        %v4145 = vunpack.c.l.b16 %v4137
        %v4146 = vpack.c.b16 %v4143, %v4142
        %v4147 = vpack.c.b16 %v4145, %v4144
        %v4151 = vsel %vm3774, %v4132, 0
        %4153 = vmatprep.subr.bf16.mxu0 0
        %4154 = vmatpush1.bf16.msra.mxu0 %v4146
        %4155 = vmatprep.subr.bf16.mxu0 0
        %4156 = vmatpush1.bf16.msra.mxu0 %v4147
        %4157 = vmatprep.subr.bf16.mxu0 0
        %4158 = vmatpush1.bf16.msra.mxu0 0
        %4159 = vmatprep.subr.bf16.mxu0 0
        %4160 = vmatpush1.bf16.msra.mxu0 0
        %4161 = vmatprep.subr.bf16.mxu0 0
        %4162 = vmatpush1.bf16.msra.mxu0 0
        %4163 = vmatprep.subr.bf16.mxu0 0
        %4164 = vmatpush1.bf16.msra.mxu0 0
        %4165 = vmatprep.subr.bf16.mxu0 0
        %4166 = vmatpush1.bf16.msra.mxu0 0
        %4167 = vmatprep.subr.bf16.mxu0 0
        %4168 = vmatpush1.bf16.msra.mxu0 0
        %4169 = vmatprep.subr.bf16.mxu0 0
        %4170 = vmatpush1.bf16.msra.mxu0 0
        %4171 = vmatprep.subr.bf16.mxu0 0
        %4172 = vmatpush1.bf16.msra.mxu0 0
        %4173 = vmatprep.subr.bf16.mxu0 0
        %4174 = vmatpush1.bf16.msra.mxu0 0
        %4175 = vmatprep.subr.bf16.mxu0 0
        %4176 = vmatpush1.bf16.msra.mxu0 0
        %4177 = vmatprep.subr.bf16.mxu0 0
        %4178 = vmatpush1.bf16.msra.mxu0 0
        %4179 = vmatprep.subr.bf16.mxu0 0
        %4180 = vmatpush1.bf16.msra.mxu0 0
        %4181 = vmatprep.subr.bf16.mxu0 0
        %4182 = vmatpush1.bf16.msra.mxu0 0
        %4183 = vmatprep.subr.bf16.mxu0 0
        %4184 = vmatpush1.bf16.msra.mxu0 0
        %4185 = vmatprep.mubr.bf16.mxu0 0
        %4186 = vmatmul.mubr.bf16.gmra.mrb[0].mxu0 %v4151
        %v4187 = vpop.f32.mrb[0].mxu0
        %v4188 = vadd.f32 0.0, %v4187
        %v4189 = vpop.f32.mrb[0].mxu0
        %v4190 = vpop.f32.mrb[0].mxu0
        %v4191 = vpop.f32.mrb[0].mxu0
        %4192 = vdwg.mxu0
        %v4193 = vadd.f32 %v4086, %v4188
        %s4194 = scalar_lea.vmem %s8, 10
        %v4195 = vld [vmem:[%s4194] sm:$0x3]
        %v4197 = vsel %vm2786, %v4195, 0
        %4199 = vmatprep.subr.bf16.mxu0 0
        %4200 = vmatpush1.bf16.msra.mxu0 %v3661
        %4201 = vmatprep.subr.bf16.mxu0 0
        %4202 = vmatpush1.bf16.msra.mxu0 0
        %4203 = vmatprep.subr.bf16.mxu0 0
        %4204 = vmatpush1.bf16.msra.mxu0 0
        %4205 = vmatprep.subr.bf16.mxu0 0
        %4206 = vmatpush1.bf16.msra.mxu0 0
        %4207 = vmatprep.subr.bf16.mxu0 0
        %4208 = vmatpush1.bf16.msra.mxu0 0
        %4209 = vmatprep.subr.bf16.mxu0 0
        %4210 = vmatpush1.bf16.msra.mxu0 0
        %4211 = vmatprep.subr.bf16.mxu0 0
        %4212 = vmatpush1.bf16.msra.mxu0 0
        %4213 = vmatprep.subr.bf16.mxu0 0
        %4214 = vmatpush1.bf16.msra.mxu0 0
        %4215 = vmatprep.subr.bf16.mxu0 0
        %4216 = vmatpush1.bf16.msra.mxu0 0
        %4217 = vmatprep.subr.bf16.mxu0 0
        %4218 = vmatpush1.bf16.msra.mxu0 0
        %4219 = vmatprep.subr.bf16.mxu0 0
        %4220 = vmatpush1.bf16.msra.mxu0 0
        %4221 = vmatprep.subr.bf16.mxu0 0
        %4222 = vmatpush1.bf16.msra.mxu0 0
        %4223 = vmatprep.subr.bf16.mxu0 0
        %4224 = vmatpush1.bf16.msra.mxu0 0
        %4225 = vmatprep.subr.bf16.mxu0 0
        %4226 = vmatpush1.bf16.msra.mxu0 0
        %4227 = vmatprep.subr.bf16.mxu0 0
        %4228 = vmatpush1.bf16.msra.mxu0 0
        %4229 = vmatprep.subr.bf16.mxu0 0
        %4230 = vmatpush1.bf16.msra.mxu0 0
        %4231 = vmatprep.mubr.bf16.mxu0 0
        %4232 = vmatmul.mubr.bf16.gmra.mrb[0].mxu0 %v4197
        %v4233 = vpop.f32.mrb[0].mxu0
        %v4234 = vadd.f32 0.0, %v4233
        %v4235 = vpop.f32.mrb[0].mxu0
        %v4236 = vpop.f32.mrb[0].mxu0
        %v4237 = vpop.f32.mrb[0].mxu0
        %4238 = vdwg.mxu0
        %v4239 = vpack.c.bf16 %v4234, %v4234
        %s4240 = scalar_lea.vmem %s9, 80
        %v4241 = vld [vmem:[%s4240] sm:$0xf]
        %v4242 = vld [vmem:[%s4240 + $0x4] sm:$0xf]
        %v4243 = vld [vmem:[%s4240 + $0x8] sm:$0xf]
        %v4244 = vld [vmem:[%s4240 + $0xc] sm:$0xf]
        %v4249 = vunpack.c.l.b16 %v4241
        %v4250 = vunpack.c.l.b16 %v4242
        %v4251 = vunpack.c.l.b16 %v4243
        %v4252 = vunpack.c.l.b16 %v4244
        %v4253 = vpack.c.b16 %v4250, %v4249
        %v4254 = vpack.c.b16 %v4252, %v4251
        %v4258 = vsel %vm3774, %v4239, 0
        %4260 = vmatprep.subr.bf16.mxu0 0
        %4261 = vmatpush1.bf16.msra.mxu0 %v4253
        %4262 = vmatprep.subr.bf16.mxu0 0
        %4263 = vmatpush1.bf16.msra.mxu0 %v4254
        %4264 = vmatprep.subr.bf16.mxu0 0
        %4265 = vmatpush1.bf16.msra.mxu0 0
        %4266 = vmatprep.subr.bf16.mxu0 0
        %4267 = vmatpush1.bf16.msra.mxu0 0
        %4268 = vmatprep.subr.bf16.mxu0 0
        %4269 = vmatpush1.bf16.msra.mxu0 0
        %4270 = vmatprep.subr.bf16.mxu0 0
        %4271 = vmatpush1.bf16.msra.mxu0 0
        %4272 = vmatprep.subr.bf16.mxu0 0
        %4273 = vmatpush1.bf16.msra.mxu0 0
        %4274 = vmatprep.subr.bf16.mxu0 0
        %4275 = vmatpush1.bf16.msra.mxu0 0
        %4276 = vmatprep.subr.bf16.mxu0 0
        %4277 = vmatpush1.bf16.msra.mxu0 0
        %4278 = vmatprep.subr.bf16.mxu0 0
        %4279 = vmatpush1.bf16.msra.mxu0 0
        %4280 = vmatprep.subr.bf16.mxu0 0
        %4281 = vmatpush1.bf16.msra.mxu0 0
        %4282 = vmatprep.subr.bf16.mxu0 0
        %4283 = vmatpush1.bf16.msra.mxu0 0
        %4284 = vmatprep.subr.bf16.mxu0 0
        %4285 = vmatpush1.bf16.msra.mxu0 0
        %4286 = vmatprep.subr.bf16.mxu0 0
        %4287 = vmatpush1.bf16.msra.mxu0 0
        %4288 = vmatprep.subr.bf16.mxu0 0
        %4289 = vmatpush1.bf16.msra.mxu0 0
        %4290 = vmatprep.subr.bf16.mxu0 0
        %4291 = vmatpush1.bf16.msra.mxu0 0
        %4292 = vmatprep.mubr.bf16.mxu0 0
        %4293 = vmatmul.mubr.bf16.gmra.mrb[0].mxu0 %v4258
        %v4294 = vpop.f32.mrb[0].mxu0
        %v4295 = vadd.f32 0.0, %v4294
        %v4296 = vpop.f32.mrb[0].mxu0
        %v4297 = vpop.f32.mrb[0].mxu0
        %v4298 = vpop.f32.mrb[0].mxu0
        %4299 = vdwg.mxu0
        %v4300 = vadd.f32 %v4193, %v4295
        %s4301 = scalar_lea.vmem %s8, 12
        %v4302 = vld [vmem:[%s4301] sm:$0x3]
        %v4304 = vsel %vm2786, %v4302, 0
        %4306 = vmatprep.subr.bf16.mxu0 0
        %4307 = vmatpush1.bf16.msra.mxu0 %v3661
        %4308 = vmatprep.subr.bf16.mxu0 0
        %4309 = vmatpush1.bf16.msra.mxu0 0
        %4310 = vmatprep.subr.bf16.mxu0 0
        %4311 = vmatpush1.bf16.msra.mxu0 0
        %4312 = vmatprep.subr.bf16.mxu0 0
        %4313 = vmatpush1.bf16.msra.mxu0 0
        %4314 = vmatprep.subr.bf16.mxu0 0
        %4315 = vmatpush1.bf16.msra.mxu0 0
        %4316 = vmatprep.subr.bf16.mxu0 0
        %4317 = vmatpush1.bf16.msra.mxu0 0
        %4318 = vmatprep.subr.bf16.mxu0 0
        %4319 = vmatpush1.bf16.msra.mxu0 0
        %4320 = vmatprep.subr.bf16.mxu0 0
        %4321 = vmatpush1.bf16.msra.mxu0 0
        %4322 = vmatprep.subr.bf16.mxu0 0
        %4323 = vmatpush1.bf16.msra.mxu0 0
        %4324 = vmatprep.subr.bf16.mxu0 0
        %4325 = vmatpush1.bf16.msra.mxu0 0
        %4326 = vmatprep.subr.bf16.mxu0 0
        %4327 = vmatpush1.bf16.msra.mxu0 0
        %4328 = vmatprep.subr.bf16.mxu0 0
        %4329 = vmatpush1.bf16.msra.mxu0 0
        %4330 = vmatprep.subr.bf16.mxu0 0
        %4331 = vmatpush1.bf16.msra.mxu0 0
        %4332 = vmatprep.subr.bf16.mxu0 0
        %4333 = vmatpush1.bf16.msra.mxu0 0
        %4334 = vmatprep.subr.bf16.mxu0 0
        %4335 = vmatpush1.bf16.msra.mxu0 0
        %4336 = vmatprep.subr.bf16.mxu0 0
        %4337 = vmatpush1.bf16.msra.mxu0 0
        %4338 = vmatprep.mubr.bf16.mxu0 0
        %4339 = vmatmul.mubr.bf16.gmra.mrb[0].mxu0 %v4304
        %v4340 = vpop.f32.mrb[0].mxu0
        %v4341 = vadd.f32 0.0, %v4340
        %v4342 = vpop.f32.mrb[0].mxu0
        %v4343 = vpop.f32.mrb[0].mxu0
        %v4344 = vpop.f32.mrb[0].mxu0
        %4345 = vdwg.mxu0
        %v4346 = vpack.c.bf16 %v4341, %v4341
        %s4347 = scalar_lea.vmem %s9, 96
        %v4348 = vld [vmem:[%s4347] sm:$0xf]
        %v4349 = vld [vmem:[%s4347 + $0x4] sm:$0xf]
        %v4350 = vld [vmem:[%s4347 + $0x8] sm:$0xf]
        %v4351 = vld [vmem:[%s4347 + $0xc] sm:$0xf]
        %v4356 = vunpack.c.l.b16 %v4348
        %v4357 = vunpack.c.l.b16 %v4349
        %v4358 = vunpack.c.l.b16 %v4350
        %v4359 = vunpack.c.l.b16 %v4351
        %v4360 = vpack.c.b16 %v4357, %v4356
        %v4361 = vpack.c.b16 %v4359, %v4358
        %v4365 = vsel %vm3774, %v4346, 0
        %4367 = vmatprep.subr.bf16.mxu0 0
        %4368 = vmatpush1.bf16.msra.mxu0 %v4360
        %4369 = vmatprep.subr.bf16.mxu0 0
        %4370 = vmatpush1.bf16.msra.mxu0 %v4361
        %4371 = vmatprep.subr.bf16.mxu0 0
        %4372 = vmatpush1.bf16.msra.mxu0 0
        %4373 = vmatprep.subr.bf16.mxu0 0
        %4374 = vmatpush1.bf16.msra.mxu0 0
        %4375 = vmatprep.subr.bf16.mxu0 0
        %4376 = vmatpush1.bf16.msra.mxu0 0
        %4377 = vmatprep.subr.bf16.mxu0 0
        %4378 = vmatpush1.bf16.msra.mxu0 0
        %4379 = vmatprep.subr.bf16.mxu0 0
        %4380 = vmatpush1.bf16.msra.mxu0 0
        %4381 = vmatprep.subr.bf16.mxu0 0
        %4382 = vmatpush1.bf16.msra.mxu0 0
        %4383 = vmatprep.subr.bf16.mxu0 0
        %4384 = vmatpush1.bf16.msra.mxu0 0
        %4385 = vmatprep.subr.bf16.mxu0 0
        %4386 = vmatpush1.bf16.msra.mxu0 0
        %4387 = vmatprep.subr.bf16.mxu0 0
        %4388 = vmatpush1.bf16.msra.mxu0 0
        %4389 = vmatprep.subr.bf16.mxu0 0
        %4390 = vmatpush1.bf16.msra.mxu0 0
        %4391 = vmatprep.subr.bf16.mxu0 0
        %4392 = vmatpush1.bf16.msra.mxu0 0
        %4393 = vmatprep.subr.bf16.mxu0 0
        %4394 = vmatpush1.bf16.msra.mxu0 0
        %4395 = vmatprep.subr.bf16.mxu0 0
        %4396 = vmatpush1.bf16.msra.mxu0 0
        %4397 = vmatprep.subr.bf16.mxu0 0
        %4398 = vmatpush1.bf16.msra.mxu0 0
        %4399 = vmatprep.mubr.bf16.mxu0 0
        %4400 = vmatmul.mubr.bf16.gmra.mrb[0].mxu0 %v4365
        %v4401 = vpop.f32.mrb[0].mxu0
        %v4402 = vadd.f32 0.0, %v4401
        %v4403 = vpop.f32.mrb[0].mxu0
        %v4404 = vpop.f32.mrb[0].mxu0
        %v4405 = vpop.f32.mrb[0].mxu0
        %4406 = vdwg.mxu0
        %v4407 = vadd.f32 %v4300, %v4402
        %s4408 = scalar_lea.vmem %s8, 14
        %v4409 = vld [vmem:[%s4408] sm:$0x3]
        %v4411 = vsel %vm2786, %v4409, 0
        %4413 = vmatprep.subr.bf16.mxu0 0
        %4414 = vmatpush1.bf16.msra.mxu0 %v3661
        %4415 = vmatprep.subr.bf16.mxu0 0
        %4416 = vmatpush1.bf16.msra.mxu0 0
        %4417 = vmatprep.subr.bf16.mxu0 0
        %4418 = vmatpush1.bf16.msra.mxu0 0
        %4419 = vmatprep.subr.bf16.mxu0 0
        %4420 = vmatpush1.bf16.msra.mxu0 0
        %4421 = vmatprep.subr.bf16.mxu0 0
        %4422 = vmatpush1.bf16.msra.mxu0 0
        %4423 = vmatprep.subr.bf16.mxu0 0
        %4424 = vmatpush1.bf16.msra.mxu0 0
        %4425 = vmatprep.subr.bf16.mxu0 0
        %4426 = vmatpush1.bf16.msra.mxu0 0
        %4427 = vmatprep.subr.bf16.mxu0 0
        %4428 = vmatpush1.bf16.msra.mxu0 0
        %4429 = vmatprep.subr.bf16.mxu0 0
        %4430 = vmatpush1.bf16.msra.mxu0 0
        %4431 = vmatprep.subr.bf16.mxu0 0
        %4432 = vmatpush1.bf16.msra.mxu0 0
        %4433 = vmatprep.subr.bf16.mxu0 0
        %4434 = vmatpush1.bf16.msra.mxu0 0
        %4435 = vmatprep.subr.bf16.mxu0 0
        %4436 = vmatpush1.bf16.msra.mxu0 0
        %4437 = vmatprep.subr.bf16.mxu0 0
        %4438 = vmatpush1.bf16.msra.mxu0 0
        %4439 = vmatprep.subr.bf16.mxu0 0
        %4440 = vmatpush1.bf16.msra.mxu0 0
        %4441 = vmatprep.subr.bf16.mxu0 0
        %4442 = vmatpush1.bf16.msra.mxu0 0
        %4443 = vmatprep.subr.bf16.mxu0 0
        %4444 = vmatpush1.bf16.msra.mxu0 0
        %4445 = vmatprep.mubr.bf16.mxu0 0
        %4446 = vmatmul.mubr.bf16.gmra.mrb[0].mxu0 %v4411
        %v4447 = vpop.f32.mrb[0].mxu0
        %v4448 = vadd.f32 0.0, %v4447
        %v4449 = vpop.f32.mrb[0].mxu0
        %v4450 = vpop.f32.mrb[0].mxu0
        %v4451 = vpop.f32.mrb[0].mxu0
        %4452 = vdwg.mxu0
        %v4453 = vpack.c.bf16 %v4448, %v4448
        %s4454 = scalar_lea.vmem %s9, 112
        %v4455 = vld [vmem:[%s4454] sm:$0xf]
        %v4456 = vld [vmem:[%s4454 + $0x4] sm:$0xf]
        %v4457 = vld [vmem:[%s4454 + $0x8] sm:$0xf]
        %v4458 = vld [vmem:[%s4454 + $0xc] sm:$0xf]
        %v4463 = vunpack.c.l.b16 %v4455
        %v4464 = vunpack.c.l.b16 %v4456
        %v4465 = vunpack.c.l.b16 %v4457
        %v4466 = vunpack.c.l.b16 %v4458
        %v4467 = vpack.c.b16 %v4464, %v4463
        %v4468 = vpack.c.b16 %v4466, %v4465
        %v4472 = vsel %vm3774, %v4453, 0
        %4474 = vmatprep.subr.bf16.mxu0 0
        %4475 = vmatpush1.bf16.msra.mxu0 %v4467
        %4476 = vmatprep.subr.bf16.mxu0 0
        %4477 = vmatpush1.bf16.msra.mxu0 %v4468
        %4478 = vmatprep.subr.bf16.mxu0 0
        %4479 = vmatpush1.bf16.msra.mxu0 0
        %4480 = vmatprep.subr.bf16.mxu0 0
        %4481 = vmatpush1.bf16.msra.mxu0 0
        %4482 = vmatprep.subr.bf16.mxu0 0
        %4483 = vmatpush1.bf16.msra.mxu0 0
        %4484 = vmatprep.subr.bf16.mxu0 0
        %4485 = vmatpush1.bf16.msra.mxu0 0
        %4486 = vmatprep.subr.bf16.mxu0 0
        %4487 = vmatpush1.bf16.msra.mxu0 0
        %4488 = vmatprep.subr.bf16.mxu0 0
        %4489 = vmatpush1.bf16.msra.mxu0 0
        %4490 = vmatprep.subr.bf16.mxu0 0
        %4491 = vmatpush1.bf16.msra.mxu0 0
        %4492 = vmatprep.subr.bf16.mxu0 0
        %4493 = vmatpush1.bf16.msra.mxu0 0
        %4494 = vmatprep.subr.bf16.mxu0 0
        %4495 = vmatpush1.bf16.msra.mxu0 0
        %4496 = vmatprep.subr.bf16.mxu0 0
        %4497 = vmatpush1.bf16.msra.mxu0 0
        %4498 = vmatprep.subr.bf16.mxu0 0
        %4499 = vmatpush1.bf16.msra.mxu0 0
        %4500 = vmatprep.subr.bf16.mxu0 0
        %4501 = vmatpush1.bf16.msra.mxu0 0
        %4502 = vmatprep.subr.bf16.mxu0 0
        %4503 = vmatpush1.bf16.msra.mxu0 0
        %4504 = vmatprep.subr.bf16.mxu0 0
        %4505 = vmatpush1.bf16.msra.mxu0 0
        %4506 = vmatprep.mubr.bf16.mxu0 0
        %4507 = vmatmul.mubr.bf16.gmra.mrb[0].mxu0 %v4472
        %v4508 = vpop.f32.mrb[0].mxu0
        %v4509 = vadd.f32 0.0, %v4508
        %v4510 = vpop.f32.mrb[0].mxu0
        %v4511 = vpop.f32.mrb[0].mxu0
        %v4512 = vpop.f32.mrb[0].mxu0
        %4513 = vdwg.mxu0
        %v4514 = vadd.f32 %v4407, %v4509
        %s4515 = scalar_lea.vmem %s8, 16
        %v4516 = vld [vmem:[%s4515] sm:$0x3]
        %v4518 = vsel %vm2786, %v4516, 0
        %4520 = vmatprep.subr.bf16.mxu0 0
        %4521 = vmatpush1.bf16.msra.mxu0 %v3661
        %4522 = vmatprep.subr.bf16.mxu0 0
        %4523 = vmatpush1.bf16.msra.mxu0 0
        %4524 = vmatprep.subr.bf16.mxu0 0
        %4525 = vmatpush1.bf16.msra.mxu0 0
        %4526 = vmatprep.subr.bf16.mxu0 0
        %4527 = vmatpush1.bf16.msra.mxu0 0
        %4528 = vmatprep.subr.bf16.mxu0 0
        %4529 = vmatpush1.bf16.msra.mxu0 0
        %4530 = vmatprep.subr.bf16.mxu0 0
        %4531 = vmatpush1.bf16.msra.mxu0 0
        %4532 = vmatprep.subr.bf16.mxu0 0
        %4533 = vmatpush1.bf16.msra.mxu0 0
        %4534 = vmatprep.subr.bf16.mxu0 0
        %4535 = vmatpush1.bf16.msra.mxu0 0
        %4536 = vmatprep.subr.bf16.mxu0 0
        %4537 = vmatpush1.bf16.msra.mxu0 0
        %4538 = vmatprep.subr.bf16.mxu0 0
        %4539 = vmatpush1.bf16.msra.mxu0 0
        %4540 = vmatprep.subr.bf16.mxu0 0
        %4541 = vmatpush1.bf16.msra.mxu0 0
        %4542 = vmatprep.subr.bf16.mxu0 0
        %4543 = vmatpush1.bf16.msra.mxu0 0
        %4544 = vmatprep.subr.bf16.mxu0 0
        %4545 = vmatpush1.bf16.msra.mxu0 0
        %4546 = vmatprep.subr.bf16.mxu0 0
        %4547 = vmatpush1.bf16.msra.mxu0 0
        %4548 = vmatprep.subr.bf16.mxu0 0
        %4549 = vmatpush1.bf16.msra.mxu0 0
        %4550 = vmatprep.subr.bf16.mxu0 0
        %4551 = vmatpush1.bf16.msra.mxu0 0
        %4552 = vmatprep.mubr.bf16.mxu0 0
        %4553 = vmatmul.mubr.bf16.gmra.mrb[0].mxu0 %v4518
        %v4554 = vpop.f32.mrb[0].mxu0
        %v4555 = vadd.f32 0.0, %v4554
        %v4556 = vpop.f32.mrb[0].mxu0
        %v4557 = vpop.f32.mrb[0].mxu0
        %v4558 = vpop.f32.mrb[0].mxu0
        %4559 = vdwg.mxu0
        %v4560 = vpack.c.bf16 %v4555, %v4555
        %s4561 = scalar_lea.vmem %s9, 128
        %v4562 = vld [vmem:[%s4561] sm:$0xf]
        %v4563 = vld [vmem:[%s4561 + $0x4] sm:$0xf]
        %v4564 = vld [vmem:[%s4561 + $0x8] sm:$0xf]
        %v4565 = vld [vmem:[%s4561 + $0xc] sm:$0xf]
        %v4570 = vunpack.c.l.b16 %v4562
        %v4571 = vunpack.c.l.b16 %v4563
        %v4572 = vunpack.c.l.b16 %v4564
        %v4573 = vunpack.c.l.b16 %v4565
        %v4574 = vpack.c.b16 %v4571, %v4570
        %v4575 = vpack.c.b16 %v4573, %v4572
        %v4579 = vsel %vm3774, %v4560, 0
        %4581 = vmatprep.subr.bf16.mxu0 0
        %4582 = vmatpush1.bf16.msra.mxu0 %v4574
        %4583 = vmatprep.subr.bf16.mxu0 0
        %4584 = vmatpush1.bf16.msra.mxu0 %v4575
        %4585 = vmatprep.subr.bf16.mxu0 0
        %4586 = vmatpush1.bf16.msra.mxu0 0
        %4587 = vmatprep.subr.bf16.mxu0 0
        %4588 = vmatpush1.bf16.msra.mxu0 0
        %4589 = vmatprep.subr.bf16.mxu0 0
        %4590 = vmatpush1.bf16.msra.mxu0 0
        %4591 = vmatprep.subr.bf16.mxu0 0
        %4592 = vmatpush1.bf16.msra.mxu0 0
        %4593 = vmatprep.subr.bf16.mxu0 0
        %4594 = vmatpush1.bf16.msra.mxu0 0
        %4595 = vmatprep.subr.bf16.mxu0 0
        %4596 = vmatpush1.bf16.msra.mxu0 0
        %4597 = vmatprep.subr.bf16.mxu0 0
        %4598 = vmatpush1.bf16.msra.mxu0 0
        %4599 = vmatprep.subr.bf16.mxu0 0
        %4600 = vmatpush1.bf16.msra.mxu0 0
        %4601 = vmatprep.subr.bf16.mxu0 0
        %4602 = vmatpush1.bf16.msra.mxu0 0
        %4603 = vmatprep.subr.bf16.mxu0 0
        %4604 = vmatpush1.bf16.msra.mxu0 0
        %4605 = vmatprep.subr.bf16.mxu0 0
        %4606 = vmatpush1.bf16.msra.mxu0 0
        %4607 = vmatprep.subr.bf16.mxu0 0
        %4608 = vmatpush1.bf16.msra.mxu0 0
        %4609 = vmatprep.subr.bf16.mxu0 0
        %4610 = vmatpush1.bf16.msra.mxu0 0
        %4611 = vmatprep.subr.bf16.mxu0 0
        %4612 = vmatpush1.bf16.msra.mxu0 0
        %4613 = vmatprep.mubr.bf16.mxu0 0
        %4614 = vmatmul.mubr.bf16.gmra.mrb[0].mxu0 %v4579
        %v4615 = vpop.f32.mrb[0].mxu0
        %v4616 = vadd.f32 0.0, %v4615
        %v4617 = vpop.f32.mrb[0].mxu0
        %v4618 = vpop.f32.mrb[0].mxu0
        %v4619 = vpop.f32.mrb[0].mxu0
        %4620 = vdwg.mxu0
        %v4621 = vadd.f32 %v4514, %v4616
        %v4622 = vld [vmem:[%s10] sm:$0x1]
        %v4624 = vlaneseq
        %v4625 = vshrl.u32 %v4624, 7
        %v4626 = vsub.s32 0, %v4625
        %v4627 = vrot.slane %v4622, %v4626
        %v4629 = vadd.f32 %v4621, %v4627
        %vm4630 = vcmp.gt.f32.partialorder %v4629, 0.0
        %v4631 = vmul.f32 %v4629, 0.2
        %v4632 = vsel %vm4630, %v4629, %v4631
        %v4633 = vld [vmem:[#allocation7] sm:$0x1]
        %v4635 = vlaneseq
        %v4636 = vshrl.u32 %v4635, 7
        %v4637 = vsub.s32 0, %v4636
        %v4638 = vrot.slane %v4633, %v4637
        %v4640 = vadd.f32 %v4632, %v4638
        %v4641 = vpack.c.bf16 %v4640, %v4640
        %v4642 = vld [vmem:[%s12] sm:$0x1]
        %v4644 = vsel %vm1008, %v4642, 0
        %v4647 = vsel %vm1021, %v4641, 0
        %4649 = vmatprep.subr.bf16.mxu0 0
        %4650 = vmatpush1.bf16.msra.mxu0 %v4647
        %4651 = vmatprep.subr.bf16.mxu0 0
        %4652 = vmatpush1.bf16.msra.mxu0 0
        %4653 = vmatprep.subr.bf16.mxu0 0
        %4654 = vmatpush1.bf16.msra.mxu0 0
        %4655 = vmatprep.subr.bf16.mxu0 0
        %4656 = vmatpush1.bf16.msra.mxu0 0
        %4657 = vmatprep.subr.bf16.mxu0 0
        %4658 = vmatpush1.bf16.msra.mxu0 0
        %4659 = vmatprep.subr.bf16.mxu0 0
        %4660 = vmatpush1.bf16.msra.mxu0 0
        %4661 = vmatprep.subr.bf16.mxu0 0
        %4662 = vmatpush1.bf16.msra.mxu0 0
        %4663 = vmatprep.subr.bf16.mxu0 0
        %4664 = vmatpush1.bf16.msra.mxu0 0
        %4665 = vmatprep.subr.bf16.mxu0 0
        %4666 = vmatpush1.bf16.msra.mxu0 0
        %4667 = vmatprep.subr.bf16.mxu0 0
        %4668 = vmatpush1.bf16.msra.mxu0 0
        %4669 = vmatprep.subr.bf16.mxu0 0
        %4670 = vmatpush1.bf16.msra.mxu0 0
        %4671 = vmatprep.subr.bf16.mxu0 0
        %4672 = vmatpush1.bf16.msra.mxu0 0
        %4673 = vmatprep.subr.bf16.mxu0 0
        %4674 = vmatpush1.bf16.msra.mxu0 0
        %4675 = vmatprep.subr.bf16.mxu0 0
        %4676 = vmatpush1.bf16.msra.mxu0 0
        %4677 = vmatprep.subr.bf16.mxu0 0
        %4678 = vmatpush1.bf16.msra.mxu0 0
        %4679 = vmatprep.subr.bf16.mxu0 0
        %4680 = vmatpush1.bf16.msra.mxu0 0
        %4681 = vmatprep.mubr.bf16.mxu0 0
        %4682 = vmatmul.mubr.bf16.gmra.mrb[0].mxu0 %v4644
        %v4683 = vpop.f32.mrb[0].mxu0
        %v4684 = vadd.f32 0.0, %v4683
        %v4685 = vpop.f32.mrb[0].mxu0
        %v4686 = vpop.f32.mrb[0].mxu0
        %v4687 = vpop.f32.mrb[0].mxu0
        %4688 = vdwg.mxu0
        %v4689 = vpack.c.bf16 %v4684, %v4684
        %v4690 = vld [vmem:[%s13] sm:$0xf]
        %v4691 = vld [vmem:[%s13 + $0x4] sm:$0xf]
        %v4692 = vld [vmem:[%s13 + $0x8] sm:$0xf]
        %v4693 = vld [vmem:[%s13 + $0xc] sm:$0xf]
        %v4694 = vld [vmem:[%s13 + $0x10] sm:$0xf]
        %v4695 = vld [vmem:[%s13 + $0x14] sm:$0xf]
        %v4696 = vld [vmem:[%s13 + $0x18] sm:$0xf]
        %v4697 = vld [vmem:[%s13 + $0x1c] sm:$0xf]
        %s4698 = scalar_lea.vmem %s12, 1
        %v4699 = vld [vmem:[%s4698] sm:$0x1]
        %v4701 = vsel %vm1008, %v4699, 0
        %4703 = vmatprep.subr.bf16.mxu0 0
        %4704 = vmatpush1.bf16.msra.mxu0 %v4647
        %4705 = vmatprep.subr.bf16.mxu0 0
        %4706 = vmatpush1.bf16.msra.mxu0 0
        %4707 = vmatprep.subr.bf16.mxu0 0
        %4708 = vmatpush1.bf16.msra.mxu0 0
        %4709 = vmatprep.subr.bf16.mxu0 0
        %4710 = vmatpush1.bf16.msra.mxu0 0
        %4711 = vmatprep.subr.bf16.mxu0 0
        %4712 = vmatpush1.bf16.msra.mxu0 0
        %4713 = vmatprep.subr.bf16.mxu0 0
        %4714 = vmatpush1.bf16.msra.mxu0 0
        %4715 = vmatprep.subr.bf16.mxu0 0
        %4716 = vmatpush1.bf16.msra.mxu0 0
        %4717 = vmatprep.subr.bf16.mxu0 0
        %4718 = vmatpush1.bf16.msra.mxu0 0
        %4719 = vmatprep.subr.bf16.mxu0 0
        %4720 = vmatpush1.bf16.msra.mxu0 0
        %4721 = vmatprep.subr.bf16.mxu0 0
        %4722 = vmatpush1.bf16.msra.mxu0 0
        %4723 = vmatprep.subr.bf16.mxu0 0
        %4724 = vmatpush1.bf16.msra.mxu0 0
        %4725 = vmatprep.subr.bf16.mxu0 0
        %4726 = vmatpush1.bf16.msra.mxu0 0
        %4727 = vmatprep.subr.bf16.mxu0 0
        %4728 = vmatpush1.bf16.msra.mxu0 0
        %4729 = vmatprep.subr.bf16.mxu0 0
        %4730 = vmatpush1.bf16.msra.mxu0 0
        %4731 = vmatprep.subr.bf16.mxu0 0
        %4732 = vmatpush1.bf16.msra.mxu0 0
        %4733 = vmatprep.subr.bf16.mxu0 0
        %4734 = vmatpush1.bf16.msra.mxu0 0
        %4735 = vmatprep.mubr.bf16.mxu0 0
        %4736 = vmatmul.mubr.bf16.gmra.mrb[0].mxu0 %v4701
        %v4737 = vpop.f32.mrb[0].mxu0
        %v4738 = vadd.f32 0.0, %v4737
        %v4739 = vpop.f32.mrb[0].mxu0
        %v4740 = vpop.f32.mrb[0].mxu0
        %v4741 = vpop.f32.mrb[0].mxu0
        %4742 = vdwg.mxu0
        %v4743 = vpack.c.bf16 %v4738, %v4738
        %s4744 = scalar_lea.vmem %s13, 32
        %v4745 = vld [vmem:[%s4744] sm:$0xf]
        %v4746 = vld [vmem:[%s4744 + $0x4] sm:$0xf]
        %v4747 = vld [vmem:[%s4744 + $0x8] sm:$0xf]
        %v4748 = vld [vmem:[%s4744 + $0xc] sm:$0xf]
        %v4749 = vld [vmem:[%s4744 + $0x10] sm:$0xf]
        %v4750 = vld [vmem:[%s4744 + $0x14] sm:$0xf]
        %v4751 = vld [vmem:[%s4744 + $0x18] sm:$0xf]
        %v4752 = vld [vmem:[%s4744 + $0x1c] sm:$0xf]
        %v4761 = vunpack.c.l.b16 %v4745
        %v4762 = vunpack.c.l.b16 %v4746
        %v4763 = vunpack.c.l.b16 %v4747
        %v4764 = vunpack.c.l.b16 %v4748
        %v4765 = vunpack.c.l.b16 %v4749
        %v4766 = vunpack.c.l.b16 %v4750
        %v4767 = vunpack.c.l.b16 %v4751
        %v4768 = vunpack.c.l.b16 %v4752
        %v4769 = vpack.c.b16 %v4762, %v4761
        %v4770 = vpack.c.b16 %v4764, %v4763
        %v4771 = vpack.c.b16 %v4766, %v4765
        %v4772 = vpack.c.b16 %v4768, %v4767
        %v4778 = vsel %vm2676, %v4743, 0
        %4780 = vmatprep.subr.bf16.mxu0 0
        %4781 = vmatpush1.bf16.msra.mxu0 %v4769
        %4782 = vmatprep.subr.bf16.mxu0 0
        %4783 = vmatpush1.bf16.msra.mxu0 %v4770
        %4784 = vmatprep.subr.bf16.mxu0 0
        %4785 = vmatpush1.bf16.msra.mxu0 %v4771
        %4786 = vmatprep.subr.bf16.mxu0 0
        %4787 = vmatpush1.bf16.msra.mxu0 %v4772
        %4788 = vmatprep.subr.bf16.mxu0 0
        %4789 = vmatpush1.bf16.msra.mxu0 0
        %4790 = vmatprep.subr.bf16.mxu0 0
        %4791 = vmatpush1.bf16.msra.mxu0 0
        %4792 = vmatprep.subr.bf16.mxu0 0
        %4793 = vmatpush1.bf16.msra.mxu0 0
        %4794 = vmatprep.subr.bf16.mxu0 0
        %4795 = vmatpush1.bf16.msra.mxu0 0
        %4796 = vmatprep.subr.bf16.mxu0 0
        %4797 = vmatpush1.bf16.msra.mxu0 0
        %4798 = vmatprep.subr.bf16.mxu0 0
        %4799 = vmatpush1.bf16.msra.mxu0 0
        %4800 = vmatprep.subr.bf16.mxu0 0
        %4801 = vmatpush1.bf16.msra.mxu0 0
        %4802 = vmatprep.subr.bf16.mxu0 0
        %4803 = vmatpush1.bf16.msra.mxu0 0
        %4804 = vmatprep.subr.bf16.mxu0 0
        %4805 = vmatpush1.bf16.msra.mxu0 0
        %4806 = vmatprep.subr.bf16.mxu0 0
        %4807 = vmatpush1.bf16.msra.mxu0 0
        %4808 = vmatprep.subr.bf16.mxu0 0
        %4809 = vmatpush1.bf16.msra.mxu0 0
        %4810 = vmatprep.subr.bf16.mxu0 0
        %4811 = vmatpush1.bf16.msra.mxu0 0
        %4812 = vmatprep.mubr.bf16.mxu0 0
        %4813 = vmatmul.mubr.bf16.gmra.mrb[0].mxu0 %v4778
        %v4814 = vpop.f32.mrb[0].mxu0
        %v4815 = vadd.f32 0.0, %v4814
        %v4816 = vpop.f32.mrb[0].mxu0
        %v4817 = vpop.f32.mrb[0].mxu0
        %v4818 = vpop.f32.mrb[0].mxu0
        %4819 = vdwg.mxu0
        %v4828 = vunpack.c.l.b16 %v4690
        %v4829 = vunpack.c.l.b16 %v4691
        %v4830 = vunpack.c.l.b16 %v4692
        %v4831 = vunpack.c.l.b16 %v4693
        %v4832 = vunpack.c.l.b16 %v4694
        %v4833 = vunpack.c.l.b16 %v4695
        %v4834 = vunpack.c.l.b16 %v4696
        %v4835 = vunpack.c.l.b16 %v4697
        %v4836 = vpack.c.b16 %v4829, %v4828
        %v4837 = vpack.c.b16 %v4831, %v4830
        %v4838 = vpack.c.b16 %v4833, %v4832
        %v4839 = vpack.c.b16 %v4835, %v4834
        %v4845 = vsel %vm2676, %v4689, 0
        %4847 = vmatprep.subr.bf16.mxu0 0
        %4848 = vmatpush1.bf16.msra.mxu0 %v4836
        %4849 = vmatprep.subr.bf16.mxu0 0
        %4850 = vmatpush1.bf16.msra.mxu0 %v4837
        %4851 = vmatprep.subr.bf16.mxu0 0
        %4852 = vmatpush1.bf16.msra.mxu0 %v4838
        %4853 = vmatprep.subr.bf16.mxu0 0
        %4854 = vmatpush1.bf16.msra.mxu0 %v4839
        %4855 = vmatprep.subr.bf16.mxu0 0
        %4856 = vmatpush1.bf16.msra.mxu0 0
        %4857 = vmatprep.subr.bf16.mxu0 0
        %4858 = vmatpush1.bf16.msra.mxu0 0
        %4859 = vmatprep.subr.bf16.mxu0 0
        %4860 = vmatpush1.bf16.msra.mxu0 0
        %4861 = vmatprep.subr.bf16.mxu0 0
        %4862 = vmatpush1.bf16.msra.mxu0 0
        %4863 = vmatprep.subr.bf16.mxu0 0
        %4864 = vmatpush1.bf16.msra.mxu0 0
        %4865 = vmatprep.subr.bf16.mxu0 0
        %4866 = vmatpush1.bf16.msra.mxu0 0
        %4867 = vmatprep.subr.bf16.mxu0 0
        %4868 = vmatpush1.bf16.msra.mxu0 0
        %4869 = vmatprep.subr.bf16.mxu0 0
        %4870 = vmatpush1.bf16.msra.mxu0 0
        %4871 = vmatprep.subr.bf16.mxu0 0
        %4872 = vmatpush1.bf16.msra.mxu0 0
        %4873 = vmatprep.subr.bf16.mxu0 0
        %4874 = vmatpush1.bf16.msra.mxu0 0
        %4875 = vmatprep.subr.bf16.mxu0 0
        %4876 = vmatpush1.bf16.msra.mxu0 0
        %4877 = vmatprep.subr.bf16.mxu0 0
        %4878 = vmatpush1.bf16.msra.mxu0 0
        %4879 = vmatprep.mubr.bf16.mxu0 0
        %4880 = vmatmul.mubr.bf16.gmra.mrb[0].mxu0 %v4845
        %v4881 = vpop.f32.mrb[0].mxu0
        %v4882 = vadd.f32 %v4815, %v4881
        %v4883 = vpop.f32.mrb[0].mxu0
        %v4884 = vpop.f32.mrb[0].mxu0
        %v4885 = vpop.f32.mrb[0].mxu0
        %4886 = vdwg.mxu0
        %s4887 = scalar_lea.vmem %s12, 2
        %v4888 = vld [vmem:[%s4887] sm:$0x1]
        %v4890 = vsel %vm1008, %v4888, 0
        %4892 = vmatprep.subr.bf16.mxu0 0
        %4893 = vmatpush1.bf16.msra.mxu0 %v4647
        %4894 = vmatprep.subr.bf16.mxu0 0
        %4895 = vmatpush1.bf16.msra.mxu0 0
        %4896 = vmatprep.subr.bf16.mxu0 0
        %4897 = vmatpush1.bf16.msra.mxu0 0
        %4898 = vmatprep.subr.bf16.mxu0 0
        %4899 = vmatpush1.bf16.msra.mxu0 0
        %4900 = vmatprep.subr.bf16.mxu0 0
        %4901 = vmatpush1.bf16.msra.mxu0 0
        %4902 = vmatprep.subr.bf16.mxu0 0
        %4903 = vmatpush1.bf16.msra.mxu0 0
        %4904 = vmatprep.subr.bf16.mxu0 0
        %4905 = vmatpush1.bf16.msra.mxu0 0
        %4906 = vmatprep.subr.bf16.mxu0 0
        %4907 = vmatpush1.bf16.msra.mxu0 0
        %4908 = vmatprep.subr.bf16.mxu0 0
        %4909 = vmatpush1.bf16.msra.mxu0 0
        %4910 = vmatprep.subr.bf16.mxu0 0
        %4911 = vmatpush1.bf16.msra.mxu0 0
        %4912 = vmatprep.subr.bf16.mxu0 0
        %4913 = vmatpush1.bf16.msra.mxu0 0
        %4914 = vmatprep.subr.bf16.mxu0 0
        %4915 = vmatpush1.bf16.msra.mxu0 0
        %4916 = vmatprep.subr.bf16.mxu0 0
        %4917 = vmatpush1.bf16.msra.mxu0 0
        %4918 = vmatprep.subr.bf16.mxu0 0
        %4919 = vmatpush1.bf16.msra.mxu0 0
        %4920 = vmatprep.subr.bf16.mxu0 0
        %4921 = vmatpush1.bf16.msra.mxu0 0
        %4922 = vmatprep.subr.bf16.mxu0 0
        %4923 = vmatpush1.bf16.msra.mxu0 0
        %4924 = vmatprep.mubr.bf16.mxu0 0
        %4925 = vmatmul.mubr.bf16.gmra.mrb[0].mxu0 %v4890
        %v4926 = vpop.f32.mrb[0].mxu0
        %v4927 = vadd.f32 0.0, %v4926
        %v4928 = vpop.f32.mrb[0].mxu0
        %v4929 = vpop.f32.mrb[0].mxu0
        %v4930 = vpop.f32.mrb[0].mxu0
        %4931 = vdwg.mxu0
        %v4932 = vpack.c.bf16 %v4927, %v4927
        %s4933 = scalar_lea.vmem %s13, 64
        %v4934 = vld [vmem:[%s4933] sm:$0xf]
        %v4935 = vld [vmem:[%s4933 + $0x4] sm:$0xf]
        %v4936 = vld [vmem:[%s4933 + $0x8] sm:$0xf]
        %v4937 = vld [vmem:[%s4933 + $0xc] sm:$0xf]
        %v4938 = vld [vmem:[%s4933 + $0x10] sm:$0xf]
        %v4939 = vld [vmem:[%s4933 + $0x14] sm:$0xf]
        %v4940 = vld [vmem:[%s4933 + $0x18] sm:$0xf]
        %v4941 = vld [vmem:[%s4933 + $0x1c] sm:$0xf]
        %v4950 = vunpack.c.l.b16 %v4934
        %v4951 = vunpack.c.l.b16 %v4935
        %v4952 = vunpack.c.l.b16 %v4936
        %v4953 = vunpack.c.l.b16 %v4937
        %v4954 = vunpack.c.l.b16 %v4938
        %v4955 = vunpack.c.l.b16 %v4939
        %v4956 = vunpack.c.l.b16 %v4940
        %v4957 = vunpack.c.l.b16 %v4941
        %v4958 = vpack.c.b16 %v4951, %v4950
        %v4959 = vpack.c.b16 %v4953, %v4952
        %v4960 = vpack.c.b16 %v4955, %v4954
        %v4961 = vpack.c.b16 %v4957, %v4956
        %v4967 = vsel %vm2676, %v4932, 0
        %4969 = vmatprep.subr.bf16.mxu0 0
        %4970 = vmatpush1.bf16.msra.mxu0 %v4958
        %4971 = vmatprep.subr.bf16.mxu0 0
        %4972 = vmatpush1.bf16.msra.mxu0 %v4959
        %4973 = vmatprep.subr.bf16.mxu0 0
        %4974 = vmatpush1.bf16.msra.mxu0 %v4960
        %4975 = vmatprep.subr.bf16.mxu0 0
        %4976 = vmatpush1.bf16.msra.mxu0 %v4961
        %4977 = vmatprep.subr.bf16.mxu0 0
        %4978 = vmatpush1.bf16.msra.mxu0 0
        %4979 = vmatprep.subr.bf16.mxu0 0
        %4980 = vmatpush1.bf16.msra.mxu0 0
        %4981 = vmatprep.subr.bf16.mxu0 0
        %4982 = vmatpush1.bf16.msra.mxu0 0
        %4983 = vmatprep.subr.bf16.mxu0 0
        %4984 = vmatpush1.bf16.msra.mxu0 0
        %4985 = vmatprep.subr.bf16.mxu0 0
        %4986 = vmatpush1.bf16.msra.mxu0 0
        %4987 = vmatprep.subr.bf16.mxu0 0
        %4988 = vmatpush1.bf16.msra.mxu0 0
        %4989 = vmatprep.subr.bf16.mxu0 0
        %4990 = vmatpush1.bf16.msra.mxu0 0
        %4991 = vmatprep.subr.bf16.mxu0 0
        %4992 = vmatpush1.bf16.msra.mxu0 0
        %4993 = vmatprep.subr.bf16.mxu0 0
        %4994 = vmatpush1.bf16.msra.mxu0 0
        %4995 = vmatprep.subr.bf16.mxu0 0
        %4996 = vmatpush1.bf16.msra.mxu0 0
        %4997 = vmatprep.subr.bf16.mxu0 0
        %4998 = vmatpush1.bf16.msra.mxu0 0
        %4999 = vmatprep.subr.bf16.mxu0 0
        %5000 = vmatpush1.bf16.msra.mxu0 0
        %5001 = vmatprep.mubr.bf16.mxu0 0
        %5002 = vmatmul.mubr.bf16.gmra.mrb[0].mxu0 %v4967
        %v5003 = vpop.f32.mrb[0].mxu0
        %v5004 = vadd.f32 0.0, %v5003
        %v5005 = vpop.f32.mrb[0].mxu0
        %v5006 = vpop.f32.mrb[0].mxu0
        %v5007 = vpop.f32.mrb[0].mxu0
        %5008 = vdwg.mxu0
        %v5009 = vadd.f32 %v4882, %v5004
        %s5010 = scalar_lea.vmem %s12, 3
        %v5011 = vld [vmem:[%s5010] sm:$0x1]
        %v5013 = vsel %vm1008, %v5011, 0
        %5015 = vmatprep.subr.bf16.mxu0 0
        %5016 = vmatpush1.bf16.msra.mxu0 %v4647
        %5017 = vmatprep.subr.bf16.mxu0 0
        %5018 = vmatpush1.bf16.msra.mxu0 0
        %5019 = vmatprep.subr.bf16.mxu0 0
        %5020 = vmatpush1.bf16.msra.mxu0 0
        %5021 = vmatprep.subr.bf16.mxu0 0
        %5022 = vmatpush1.bf16.msra.mxu0 0
        %5023 = vmatprep.subr.bf16.mxu0 0
        %5024 = vmatpush1.bf16.msra.mxu0 0
        %5025 = vmatprep.subr.bf16.mxu0 0
        %5026 = vmatpush1.bf16.msra.mxu0 0
        %5027 = vmatprep.subr.bf16.mxu0 0
        %5028 = vmatpush1.bf16.msra.mxu0 0
        %5029 = vmatprep.subr.bf16.mxu0 0
        %5030 = vmatpush1.bf16.msra.mxu0 0
        %5031 = vmatprep.subr.bf16.mxu0 0
        %5032 = vmatpush1.bf16.msra.mxu0 0
        %5033 = vmatprep.subr.bf16.mxu0 0
        %5034 = vmatpush1.bf16.msra.mxu0 0
        %5035 = vmatprep.subr.bf16.mxu0 0
        %5036 = vmatpush1.bf16.msra.mxu0 0
        %5037 = vmatprep.subr.bf16.mxu0 0
        %5038 = vmatpush1.bf16.msra.mxu0 0
        %5039 = vmatprep.subr.bf16.mxu0 0
        %5040 = vmatpush1.bf16.msra.mxu0 0
        %5041 = vmatprep.subr.bf16.mxu0 0
        %5042 = vmatpush1.bf16.msra.mxu0 0
        %5043 = vmatprep.subr.bf16.mxu0 0
        %5044 = vmatpush1.bf16.msra.mxu0 0
        %5045 = vmatprep.subr.bf16.mxu0 0
        %5046 = vmatpush1.bf16.msra.mxu0 0
        %5047 = vmatprep.mubr.bf16.mxu0 0
        %5048 = vmatmul.mubr.bf16.gmra.mrb[0].mxu0 %v5013
        %v5049 = vpop.f32.mrb[0].mxu0
        %v5050 = vadd.f32 0.0, %v5049
        %v5051 = vpop.f32.mrb[0].mxu0
        %v5052 = vpop.f32.mrb[0].mxu0
        %v5053 = vpop.f32.mrb[0].mxu0
        %5054 = vdwg.mxu0
        %v5055 = vpack.c.bf16 %v5050, %v5050
        %s5056 = scalar_lea.vmem %s13, 96
        %v5057 = vld [vmem:[%s5056] sm:$0xf]
        %v5058 = vld [vmem:[%s5056 + $0x4] sm:$0xf]
        %v5059 = vld [vmem:[%s5056 + $0x8] sm:$0xf]
        %v5060 = vld [vmem:[%s5056 + $0xc] sm:$0xf]
        %v5061 = vld [vmem:[%s5056 + $0x10] sm:$0xf]
        %v5062 = vld [vmem:[%s5056 + $0x14] sm:$0xf]
        %v5063 = vld [vmem:[%s5056 + $0x18] sm:$0xf]
        %v5064 = vld [vmem:[%s5056 + $0x1c] sm:$0xf]
        %v5073 = vunpack.c.l.b16 %v5057
        %v5074 = vunpack.c.l.b16 %v5058
        %v5075 = vunpack.c.l.b16 %v5059
        %v5076 = vunpack.c.l.b16 %v5060
        %v5077 = vunpack.c.l.b16 %v5061
        %v5078 = vunpack.c.l.b16 %v5062
        %v5079 = vunpack.c.l.b16 %v5063
        %v5080 = vunpack.c.l.b16 %v5064
        %v5081 = vpack.c.b16 %v5074, %v5073
        %v5082 = vpack.c.b16 %v5076, %v5075
        %v5083 = vpack.c.b16 %v5078, %v5077
        %v5084 = vpack.c.b16 %v5080, %v5079
        %v5090 = vsel %vm2676, %v5055, 0
        %5092 = vmatprep.subr.bf16.mxu0 0
        %5093 = vmatpush1.bf16.msra.mxu0 %v5081
        %5094 = vmatprep.subr.bf16.mxu0 0
        %5095 = vmatpush1.bf16.msra.mxu0 %v5082
        %5096 = vmatprep.subr.bf16.mxu0 0
        %5097 = vmatpush1.bf16.msra.mxu0 %v5083
        %5098 = vmatprep.subr.bf16.mxu0 0
        %5099 = vmatpush1.bf16.msra.mxu0 %v5084
        %5100 = vmatprep.subr.bf16.mxu0 0
        %5101 = vmatpush1.bf16.msra.mxu0 0
        %5102 = vmatprep.subr.bf16.mxu0 0
        %5103 = vmatpush1.bf16.msra.mxu0 0
        %5104 = vmatprep.subr.bf16.mxu0 0
        %5105 = vmatpush1.bf16.msra.mxu0 0
        %5106 = vmatprep.subr.bf16.mxu0 0
        %5107 = vmatpush1.bf16.msra.mxu0 0
        %5108 = vmatprep.subr.bf16.mxu0 0
        %5109 = vmatpush1.bf16.msra.mxu0 0
        %5110 = vmatprep.subr.bf16.mxu0 0
        %5111 = vmatpush1.bf16.msra.mxu0 0
        %5112 = vmatprep.subr.bf16.mxu0 0
        %5113 = vmatpush1.bf16.msra.mxu0 0
        %5114 = vmatprep.subr.bf16.mxu0 0
        %5115 = vmatpush1.bf16.msra.mxu0 0
        %5116 = vmatprep.subr.bf16.mxu0 0
        %5117 = vmatpush1.bf16.msra.mxu0 0
        %5118 = vmatprep.subr.bf16.mxu0 0
        %5119 = vmatpush1.bf16.msra.mxu0 0
        %5120 = vmatprep.subr.bf16.mxu0 0
        %5121 = vmatpush1.bf16.msra.mxu0 0
        %5122 = vmatprep.subr.bf16.mxu0 0
        %5123 = vmatpush1.bf16.msra.mxu0 0
        %5124 = vmatprep.mubr.bf16.mxu0 0
        %5125 = vmatmul.mubr.bf16.gmra.mrb[0].mxu0 %v5090
        %v5126 = vpop.f32.mrb[0].mxu0
        %v5127 = vadd.f32 0.0, %v5126
        %v5128 = vpop.f32.mrb[0].mxu0
        %v5129 = vpop.f32.mrb[0].mxu0
        %v5130 = vpop.f32.mrb[0].mxu0
        %5131 = vdwg.mxu0
        %v5132 = vadd.f32 %v5009, %v5127
        %s5133 = scalar_lea.vmem %s12, 4
        %v5134 = vld [vmem:[%s5133] sm:$0x1]
        %v5136 = vsel %vm1008, %v5134, 0
        %5138 = vmatprep.subr.bf16.mxu0 0
        %5139 = vmatpush1.bf16.msra.mxu0 %v4647
        %5140 = vmatprep.subr.bf16.mxu0 0
        %5141 = vmatpush1.bf16.msra.mxu0 0
        %5142 = vmatprep.subr.bf16.mxu0 0
        %5143 = vmatpush1.bf16.msra.mxu0 0
        %5144 = vmatprep.subr.bf16.mxu0 0
        %5145 = vmatpush1.bf16.msra.mxu0 0
        %5146 = vmatprep.subr.bf16.mxu0 0
        %5147 = vmatpush1.bf16.msra.mxu0 0
        %5148 = vmatprep.subr.bf16.mxu0 0
        %5149 = vmatpush1.bf16.msra.mxu0 0
        %5150 = vmatprep.subr.bf16.mxu0 0
        %5151 = vmatpush1.bf16.msra.mxu0 0
        %5152 = vmatprep.subr.bf16.mxu0 0
        %5153 = vmatpush1.bf16.msra.mxu0 0
        %5154 = vmatprep.subr.bf16.mxu0 0
        %5155 = vmatpush1.bf16.msra.mxu0 0
        %5156 = vmatprep.subr.bf16.mxu0 0
        %5157 = vmatpush1.bf16.msra.mxu0 0
        %5158 = vmatprep.subr.bf16.mxu0 0
        %5159 = vmatpush1.bf16.msra.mxu0 0
        %5160 = vmatprep.subr.bf16.mxu0 0
        %5161 = vmatpush1.bf16.msra.mxu0 0
        %5162 = vmatprep.subr.bf16.mxu0 0
        %5163 = vmatpush1.bf16.msra.mxu0 0
        %5164 = vmatprep.subr.bf16.mxu0 0
        %5165 = vmatpush1.bf16.msra.mxu0 0
        %5166 = vmatprep.subr.bf16.mxu0 0
        %5167 = vmatpush1.bf16.msra.mxu0 0
        %5168 = vmatprep.subr.bf16.mxu0 0
        %5169 = vmatpush1.bf16.msra.mxu0 0
        %5170 = vmatprep.mubr.bf16.mxu0 0
        %5171 = vmatmul.mubr.bf16.gmra.mrb[0].mxu0 %v5136
        %v5172 = vpop.f32.mrb[0].mxu0
        %v5173 = vadd.f32 0.0, %v5172
        %v5174 = vpop.f32.mrb[0].mxu0
        %v5175 = vpop.f32.mrb[0].mxu0
        %v5176 = vpop.f32.mrb[0].mxu0
        %5177 = vdwg.mxu0
        %v5178 = vpack.c.bf16 %v5173, %v5173
        %s5179 = scalar_lea.vmem %s13, 128
        %v5180 = vld [vmem:[%s5179] sm:$0xf]
        %v5181 = vld [vmem:[%s5179 + $0x4] sm:$0xf]
        %v5182 = vld [vmem:[%s5179 + $0x8] sm:$0xf]
        %v5183 = vld [vmem:[%s5179 + $0xc] sm:$0xf]
        %v5184 = vld [vmem:[%s5179 + $0x10] sm:$0xf]
        %v5185 = vld [vmem:[%s5179 + $0x14] sm:$0xf]
        %v5186 = vld [vmem:[%s5179 + $0x18] sm:$0xf]
        %v5187 = vld [vmem:[%s5179 + $0x1c] sm:$0xf]
        %v5196 = vunpack.c.l.b16 %v5180
        %v5197 = vunpack.c.l.b16 %v5181
        %v5198 = vunpack.c.l.b16 %v5182
        %v5199 = vunpack.c.l.b16 %v5183
        %v5200 = vunpack.c.l.b16 %v5184
        %v5201 = vunpack.c.l.b16 %v5185
        %v5202 = vunpack.c.l.b16 %v5186
        %v5203 = vunpack.c.l.b16 %v5187
        %v5204 = vpack.c.b16 %v5197, %v5196
        %v5205 = vpack.c.b16 %v5199, %v5198
        %v5206 = vpack.c.b16 %v5201, %v5200
        %v5207 = vpack.c.b16 %v5203, %v5202
        %v5213 = vsel %vm2676, %v5178, 0
        %5215 = vmatprep.subr.bf16.mxu0 0
        %5216 = vmatpush1.bf16.msra.mxu0 %v5204
        %5217 = vmatprep.subr.bf16.mxu0 0
        %5218 = vmatpush1.bf16.msra.mxu0 %v5205
        %5219 = vmatprep.subr.bf16.mxu0 0
        %5220 = vmatpush1.bf16.msra.mxu0 %v5206
        %5221 = vmatprep.subr.bf16.mxu0 0
        %5222 = vmatpush1.bf16.msra.mxu0 %v5207
        %5223 = vmatprep.subr.bf16.mxu0 0
        %5224 = vmatpush1.bf16.msra.mxu0 0
        %5225 = vmatprep.subr.bf16.mxu0 0
        %5226 = vmatpush1.bf16.msra.mxu0 0
        %5227 = vmatprep.subr.bf16.mxu0 0
        %5228 = vmatpush1.bf16.msra.mxu0 0
        %5229 = vmatprep.subr.bf16.mxu0 0
        %5230 = vmatpush1.bf16.msra.mxu0 0
        %5231 = vmatprep.subr.bf16.mxu0 0
        %5232 = vmatpush1.bf16.msra.mxu0 0
        %5233 = vmatprep.subr.bf16.mxu0 0
        %5234 = vmatpush1.bf16.msra.mxu0 0
        %5235 = vmatprep.subr.bf16.mxu0 0
        %5236 = vmatpush1.bf16.msra.mxu0 0
        %5237 = vmatprep.subr.bf16.mxu0 0
        %5238 = vmatpush1.bf16.msra.mxu0 0
        %5239 = vmatprep.subr.bf16.mxu0 0
        %5240 = vmatpush1.bf16.msra.mxu0 0
        %5241 = vmatprep.subr.bf16.mxu0 0
        %5242 = vmatpush1.bf16.msra.mxu0 0
        %5243 = vmatprep.subr.bf16.mxu0 0
        %5244 = vmatpush1.bf16.msra.mxu0 0
        %5245 = vmatprep.subr.bf16.mxu0 0
        %5246 = vmatpush1.bf16.msra.mxu0 0
        %5247 = vmatprep.mubr.bf16.mxu0 0
        %5248 = vmatmul.mubr.bf16.gmra.mrb[0].mxu0 %v5213
        %v5249 = vpop.f32.mrb[0].mxu0
        %v5250 = vadd.f32 0.0, %v5249
        %v5251 = vpop.f32.mrb[0].mxu0
        %v5252 = vpop.f32.mrb[0].mxu0
        %v5253 = vpop.f32.mrb[0].mxu0
        %5254 = vdwg.mxu0
        %v5255 = vadd.f32 %v5132, %v5250
        %s5256 = scalar_lea.vmem %s12, 5
        %v5257 = vld [vmem:[%s5256] sm:$0x1]
        %v5259 = vsel %vm1008, %v5257, 0
        %5261 = vmatprep.subr.bf16.mxu0 0
        %5262 = vmatpush1.bf16.msra.mxu0 %v4647
        %5263 = vmatprep.subr.bf16.mxu0 0
        %5264 = vmatpush1.bf16.msra.mxu0 0
        %5265 = vmatprep.subr.bf16.mxu0 0
        %5266 = vmatpush1.bf16.msra.mxu0 0
        %5267 = vmatprep.subr.bf16.mxu0 0
        %5268 = vmatpush1.bf16.msra.mxu0 0
        %5269 = vmatprep.subr.bf16.mxu0 0
        %5270 = vmatpush1.bf16.msra.mxu0 0
        %5271 = vmatprep.subr.bf16.mxu0 0
        %5272 = vmatpush1.bf16.msra.mxu0 0
        %5273 = vmatprep.subr.bf16.mxu0 0
        %5274 = vmatpush1.bf16.msra.mxu0 0
        %5275 = vmatprep.subr.bf16.mxu0 0
        %5276 = vmatpush1.bf16.msra.mxu0 0
        %5277 = vmatprep.subr.bf16.mxu0 0
        %5278 = vmatpush1.bf16.msra.mxu0 0
        %5279 = vmatprep.subr.bf16.mxu0 0
        %5280 = vmatpush1.bf16.msra.mxu0 0
        %5281 = vmatprep.subr.bf16.mxu0 0
        %5282 = vmatpush1.bf16.msra.mxu0 0
        %5283 = vmatprep.subr.bf16.mxu0 0
        %5284 = vmatpush1.bf16.msra.mxu0 0
        %5285 = vmatprep.subr.bf16.mxu0 0
        %5286 = vmatpush1.bf16.msra.mxu0 0
        %5287 = vmatprep.subr.bf16.mxu0 0
        %5288 = vmatpush1.bf16.msra.mxu0 0
        %5289 = vmatprep.subr.bf16.mxu0 0
        %5290 = vmatpush1.bf16.msra.mxu0 0
        %5291 = vmatprep.subr.bf16.mxu0 0
        %5292 = vmatpush1.bf16.msra.mxu0 0
        %5293 = vmatprep.mubr.bf16.mxu0 0
        %5294 = vmatmul.mubr.bf16.gmra.mrb[0].mxu0 %v5259
        %v5295 = vpop.f32.mrb[0].mxu0
        %v5296 = vadd.f32 0.0, %v5295
        %v5297 = vpop.f32.mrb[0].mxu0
        %v5298 = vpop.f32.mrb[0].mxu0
        %v5299 = vpop.f32.mrb[0].mxu0
        %5300 = vdwg.mxu0
        %v5301 = vpack.c.bf16 %v5296, %v5296
        %s5302 = scalar_lea.vmem %s13, 160
        %v5303 = vld [vmem:[%s5302] sm:$0xf]
        %v5304 = vld [vmem:[%s5302 + $0x4] sm:$0xf]
        %v5305 = vld [vmem:[%s5302 + $0x8] sm:$0xf]
        %v5306 = vld [vmem:[%s5302 + $0xc] sm:$0xf]
        %v5307 = vld [vmem:[%s5302 + $0x10] sm:$0xf]
        %v5308 = vld [vmem:[%s5302 + $0x14] sm:$0xf]
        %v5309 = vld [vmem:[%s5302 + $0x18] sm:$0xf]
        %v5310 = vld [vmem:[%s5302 + $0x1c] sm:$0xf]
        %v5319 = vunpack.c.l.b16 %v5303
        %v5320 = vunpack.c.l.b16 %v5304
        %v5321 = vunpack.c.l.b16 %v5305
        %v5322 = vunpack.c.l.b16 %v5306
        %v5323 = vunpack.c.l.b16 %v5307
        %v5324 = vunpack.c.l.b16 %v5308
        %v5325 = vunpack.c.l.b16 %v5309
        %v5326 = vunpack.c.l.b16 %v5310
        %v5327 = vpack.c.b16 %v5320, %v5319
        %v5328 = vpack.c.b16 %v5322, %v5321
        %v5329 = vpack.c.b16 %v5324, %v5323
        %v5330 = vpack.c.b16 %v5326, %v5325
        %v5336 = vsel %vm2676, %v5301, 0
        %5338 = vmatprep.subr.bf16.mxu0 0
        %5339 = vmatpush1.bf16.msra.mxu0 %v5327
        %5340 = vmatprep.subr.bf16.mxu0 0
        %5341 = vmatpush1.bf16.msra.mxu0 %v5328
        %5342 = vmatprep.subr.bf16.mxu0 0
        %5343 = vmatpush1.bf16.msra.mxu0 %v5329
        %5344 = vmatprep.subr.bf16.mxu0 0
        %5345 = vmatpush1.bf16.msra.mxu0 %v5330
        %5346 = vmatprep.subr.bf16.mxu0 0
        %5347 = vmatpush1.bf16.msra.mxu0 0
        %5348 = vmatprep.subr.bf16.mxu0 0
        %5349 = vmatpush1.bf16.msra.mxu0 0
        %5350 = vmatprep.subr.bf16.mxu0 0
        %5351 = vmatpush1.bf16.msra.mxu0 0
        %5352 = vmatprep.subr.bf16.mxu0 0
        %5353 = vmatpush1.bf16.msra.mxu0 0
        %5354 = vmatprep.subr.bf16.mxu0 0
        %5355 = vmatpush1.bf16.msra.mxu0 0
        %5356 = vmatprep.subr.bf16.mxu0 0
        %5357 = vmatpush1.bf16.msra.mxu0 0
        %5358 = vmatprep.subr.bf16.mxu0 0
        %5359 = vmatpush1.bf16.msra.mxu0 0
        %5360 = vmatprep.subr.bf16.mxu0 0
        %5361 = vmatpush1.bf16.msra.mxu0 0
        %5362 = vmatprep.subr.bf16.mxu0 0
        %5363 = vmatpush1.bf16.msra.mxu0 0
        %5364 = vmatprep.subr.bf16.mxu0 0
        %5365 = vmatpush1.bf16.msra.mxu0 0
        %5366 = vmatprep.subr.bf16.mxu0 0
        %5367 = vmatpush1.bf16.msra.mxu0 0
        %5368 = vmatprep.subr.bf16.mxu0 0
        %5369 = vmatpush1.bf16.msra.mxu0 0
        %5370 = vmatprep.mubr.bf16.mxu0 0
        %5371 = vmatmul.mubr.bf16.gmra.mrb[0].mxu0 %v5336
        %v5372 = vpop.f32.mrb[0].mxu0
        %v5373 = vadd.f32 0.0, %v5372
        %v5374 = vpop.f32.mrb[0].mxu0
        %v5375 = vpop.f32.mrb[0].mxu0
        %v5376 = vpop.f32.mrb[0].mxu0
        %5377 = vdwg.mxu0
        %v5378 = vadd.f32 %v5255, %v5373
        %s5379 = scalar_lea.vmem %s12, 6
        %v5380 = vld [vmem:[%s5379] sm:$0x1]
        %v5382 = vsel %vm1008, %v5380, 0
        %5384 = vmatprep.subr.bf16.mxu0 0
        %5385 = vmatpush1.bf16.msra.mxu0 %v4647
        %5386 = vmatprep.subr.bf16.mxu0 0
        %5387 = vmatpush1.bf16.msra.mxu0 0
        %5388 = vmatprep.subr.bf16.mxu0 0
        %5389 = vmatpush1.bf16.msra.mxu0 0
        %5390 = vmatprep.subr.bf16.mxu0 0
        %5391 = vmatpush1.bf16.msra.mxu0 0
        %5392 = vmatprep.subr.bf16.mxu0 0
        %5393 = vmatpush1.bf16.msra.mxu0 0
        %5394 = vmatprep.subr.bf16.mxu0 0
        %5395 = vmatpush1.bf16.msra.mxu0 0
        %5396 = vmatprep.subr.bf16.mxu0 0
        %5397 = vmatpush1.bf16.msra.mxu0 0
        %5398 = vmatprep.subr.bf16.mxu0 0
        %5399 = vmatpush1.bf16.msra.mxu0 0
        %5400 = vmatprep.subr.bf16.mxu0 0
        %5401 = vmatpush1.bf16.msra.mxu0 0
        %5402 = vmatprep.subr.bf16.mxu0 0
        %5403 = vmatpush1.bf16.msra.mxu0 0
        %5404 = vmatprep.subr.bf16.mxu0 0
        %5405 = vmatpush1.bf16.msra.mxu0 0
        %5406 = vmatprep.subr.bf16.mxu0 0
        %5407 = vmatpush1.bf16.msra.mxu0 0
        %5408 = vmatprep.subr.bf16.mxu0 0
        %5409 = vmatpush1.bf16.msra.mxu0 0
        %5410 = vmatprep.subr.bf16.mxu0 0
        %5411 = vmatpush1.bf16.msra.mxu0 0
        %5412 = vmatprep.subr.bf16.mxu0 0
        %5413 = vmatpush1.bf16.msra.mxu0 0
        %5414 = vmatprep.subr.bf16.mxu0 0
        %5415 = vmatpush1.bf16.msra.mxu0 0
        %5416 = vmatprep.mubr.bf16.mxu0 0
        %5417 = vmatmul.mubr.bf16.gmra.mrb[0].mxu0 %v5382
        %v5418 = vpop.f32.mrb[0].mxu0
        %v5419 = vadd.f32 0.0, %v5418
        %v5420 = vpop.f32.mrb[0].mxu0
        %v5421 = vpop.f32.mrb[0].mxu0
        %v5422 = vpop.f32.mrb[0].mxu0
        %5423 = vdwg.mxu0
        %v5424 = vpack.c.bf16 %v5419, %v5419
        %s5425 = scalar_lea.vmem %s13, 192
        %v5426 = vld [vmem:[%s5425] sm:$0xf]
        %v5427 = vld [vmem:[%s5425 + $0x4] sm:$0xf]
        %v5428 = vld [vmem:[%s5425 + $0x8] sm:$0xf]
        %v5429 = vld [vmem:[%s5425 + $0xc] sm:$0xf]
        %v5430 = vld [vmem:[%s5425 + $0x10] sm:$0xf]
        %v5431 = vld [vmem:[%s5425 + $0x14] sm:$0xf]
        %v5432 = vld [vmem:[%s5425 + $0x18] sm:$0xf]
        %v5433 = vld [vmem:[%s5425 + $0x1c] sm:$0xf]
        %v5442 = vunpack.c.l.b16 %v5426
        %v5443 = vunpack.c.l.b16 %v5427
        %v5444 = vunpack.c.l.b16 %v5428
        %v5445 = vunpack.c.l.b16 %v5429
        %v5446 = vunpack.c.l.b16 %v5430
        %v5447 = vunpack.c.l.b16 %v5431
        %v5448 = vunpack.c.l.b16 %v5432
        %v5449 = vunpack.c.l.b16 %v5433
        %v5450 = vpack.c.b16 %v5443, %v5442
        %v5451 = vpack.c.b16 %v5445, %v5444
        %v5452 = vpack.c.b16 %v5447, %v5446
        %v5453 = vpack.c.b16 %v5449, %v5448
        %v5459 = vsel %vm2676, %v5424, 0
        %5461 = vmatprep.subr.bf16.mxu0 0
        %5462 = vmatpush1.bf16.msra.mxu0 %v5450
        %5463 = vmatprep.subr.bf16.mxu0 0
        %5464 = vmatpush1.bf16.msra.mxu0 %v5451
        %5465 = vmatprep.subr.bf16.mxu0 0
        %5466 = vmatpush1.bf16.msra.mxu0 %v5452
        %5467 = vmatprep.subr.bf16.mxu0 0
        %5468 = vmatpush1.bf16.msra.mxu0 %v5453
        %5469 = vmatprep.subr.bf16.mxu0 0
        %5470 = vmatpush1.bf16.msra.mxu0 0
        %5471 = vmatprep.subr.bf16.mxu0 0
        %5472 = vmatpush1.bf16.msra.mxu0 0
        %5473 = vmatprep.subr.bf16.mxu0 0
        %5474 = vmatpush1.bf16.msra.mxu0 0
        %5475 = vmatprep.subr.bf16.mxu0 0
        %5476 = vmatpush1.bf16.msra.mxu0 0
        %5477 = vmatprep.subr.bf16.mxu0 0
        %5478 = vmatpush1.bf16.msra.mxu0 0
        %5479 = vmatprep.subr.bf16.mxu0 0
        %5480 = vmatpush1.bf16.msra.mxu0 0
        %5481 = vmatprep.subr.bf16.mxu0 0
        %5482 = vmatpush1.bf16.msra.mxu0 0
        %5483 = vmatprep.subr.bf16.mxu0 0
        %5484 = vmatpush1.bf16.msra.mxu0 0
        %5485 = vmatprep.subr.bf16.mxu0 0
        %5486 = vmatpush1.bf16.msra.mxu0 0
        %5487 = vmatprep.subr.bf16.mxu0 0
        %5488 = vmatpush1.bf16.msra.mxu0 0
        %5489 = vmatprep.subr.bf16.mxu0 0
        %5490 = vmatpush1.bf16.msra.mxu0 0
        %5491 = vmatprep.subr.bf16.mxu0 0
        %5492 = vmatpush1.bf16.msra.mxu0 0
        %5493 = vmatprep.mubr.bf16.mxu0 0
        %5494 = vmatmul.mubr.bf16.gmra.mrb[0].mxu0 %v5459
        %v5495 = vpop.f32.mrb[0].mxu0
        %v5496 = vadd.f32 0.0, %v5495
        %v5497 = vpop.f32.mrb[0].mxu0
        %v5498 = vpop.f32.mrb[0].mxu0
        %v5499 = vpop.f32.mrb[0].mxu0
        %5500 = vdwg.mxu0
        %v5501 = vadd.f32 %v5378, %v5496
        %s5502 = scalar_lea.vmem %s12, 7
        %v5503 = vld [vmem:[%s5502] sm:$0x1]
        %v5505 = vsel %vm1008, %v5503, 0
        %5507 = vmatprep.subr.bf16.mxu0 0
        %5508 = vmatpush1.bf16.msra.mxu0 %v4647
        %5509 = vmatprep.subr.bf16.mxu0 0
        %5510 = vmatpush1.bf16.msra.mxu0 0
        %5511 = vmatprep.subr.bf16.mxu0 0
        %5512 = vmatpush1.bf16.msra.mxu0 0
        %5513 = vmatprep.subr.bf16.mxu0 0
        %5514 = vmatpush1.bf16.msra.mxu0 0
        %5515 = vmatprep.subr.bf16.mxu0 0
        %5516 = vmatpush1.bf16.msra.mxu0 0
        %5517 = vmatprep.subr.bf16.mxu0 0
        %5518 = vmatpush1.bf16.msra.mxu0 0
        %5519 = vmatprep.subr.bf16.mxu0 0
        %5520 = vmatpush1.bf16.msra.mxu0 0
        %5521 = vmatprep.subr.bf16.mxu0 0
        %5522 = vmatpush1.bf16.msra.mxu0 0
        %5523 = vmatprep.subr.bf16.mxu0 0
        %5524 = vmatpush1.bf16.msra.mxu0 0
        %5525 = vmatprep.subr.bf16.mxu0 0
        %5526 = vmatpush1.bf16.msra.mxu0 0
        %5527 = vmatprep.subr.bf16.mxu0 0
        %5528 = vmatpush1.bf16.msra.mxu0 0
        %5529 = vmatprep.subr.bf16.mxu0 0
        %5530 = vmatpush1.bf16.msra.mxu0 0
        %5531 = vmatprep.subr.bf16.mxu0 0
        %5532 = vmatpush1.bf16.msra.mxu0 0
        %5533 = vmatprep.subr.bf16.mxu0 0
        %5534 = vmatpush1.bf16.msra.mxu0 0
        %5535 = vmatprep.subr.bf16.mxu0 0
        %5536 = vmatpush1.bf16.msra.mxu0 0
        %5537 = vmatprep.subr.bf16.mxu0 0
        %5538 = vmatpush1.bf16.msra.mxu0 0
        %5539 = vmatprep.mubr.bf16.mxu0 0
        %5540 = vmatmul.mubr.bf16.gmra.mrb[0].mxu0 %v5505
        %v5541 = vpop.f32.mrb[0].mxu0
        %v5542 = vadd.f32 0.0, %v5541
        %v5543 = vpop.f32.mrb[0].mxu0
        %v5544 = vpop.f32.mrb[0].mxu0
        %v5545 = vpop.f32.mrb[0].mxu0
        %5546 = vdwg.mxu0
        %v5547 = vpack.c.bf16 %v5542, %v5542
        %s5548 = scalar_lea.vmem %s13, 224
        %v5549 = vld [vmem:[%s5548] sm:$0xf]
        %v5550 = vld [vmem:[%s5548 + $0x4] sm:$0xf]
        %v5551 = vld [vmem:[%s5548 + $0x8] sm:$0xf]
        %v5552 = vld [vmem:[%s5548 + $0xc] sm:$0xf]
        %v5553 = vld [vmem:[%s5548 + $0x10] sm:$0xf]
        %v5554 = vld [vmem:[%s5548 + $0x14] sm:$0xf]
        %v5555 = vld [vmem:[%s5548 + $0x18] sm:$0xf]
        %v5556 = vld [vmem:[%s5548 + $0x1c] sm:$0xf]
        %v5565 = vunpack.c.l.b16 %v5549
        %v5566 = vunpack.c.l.b16 %v5550
        %v5567 = vunpack.c.l.b16 %v5551
        %v5568 = vunpack.c.l.b16 %v5552
        %v5569 = vunpack.c.l.b16 %v5553
        %v5570 = vunpack.c.l.b16 %v5554
        %v5571 = vunpack.c.l.b16 %v5555
        %v5572 = vunpack.c.l.b16 %v5556
        %v5573 = vpack.c.b16 %v5566, %v5565
        %v5574 = vpack.c.b16 %v5568, %v5567
        %v5575 = vpack.c.b16 %v5570, %v5569
        %v5576 = vpack.c.b16 %v5572, %v5571
        %v5582 = vsel %vm2676, %v5547, 0
        %5584 = vmatprep.subr.bf16.mxu0 0
        %5585 = vmatpush1.bf16.msra.mxu0 %v5573
        %5586 = vmatprep.subr.bf16.mxu0 0
        %5587 = vmatpush1.bf16.msra.mxu0 %v5574
        %5588 = vmatprep.subr.bf16.mxu0 0
        %5589 = vmatpush1.bf16.msra.mxu0 %v5575
        %5590 = vmatprep.subr.bf16.mxu0 0
        %5591 = vmatpush1.bf16.msra.mxu0 %v5576
        %5592 = vmatprep.subr.bf16.mxu0 0
        %5593 = vmatpush1.bf16.msra.mxu0 0
        %5594 = vmatprep.subr.bf16.mxu0 0
        %5595 = vmatpush1.bf16.msra.mxu0 0
        %5596 = vmatprep.subr.bf16.mxu0 0
        %5597 = vmatpush1.bf16.msra.mxu0 0
        %5598 = vmatprep.subr.bf16.mxu0 0
        %5599 = vmatpush1.bf16.msra.mxu0 0
        %5600 = vmatprep.subr.bf16.mxu0 0
        %5601 = vmatpush1.bf16.msra.mxu0 0
        %5602 = vmatprep.subr.bf16.mxu0 0
        %5603 = vmatpush1.bf16.msra.mxu0 0
        %5604 = vmatprep.subr.bf16.mxu0 0
        %5605 = vmatpush1.bf16.msra.mxu0 0
        %5606 = vmatprep.subr.bf16.mxu0 0
        %5607 = vmatpush1.bf16.msra.mxu0 0
        %5608 = vmatprep.subr.bf16.mxu0 0
        %5609 = vmatpush1.bf16.msra.mxu0 0
        %5610 = vmatprep.subr.bf16.mxu0 0
        %5611 = vmatpush1.bf16.msra.mxu0 0
        %5612 = vmatprep.subr.bf16.mxu0 0
        %5613 = vmatpush1.bf16.msra.mxu0 0
        %5614 = vmatprep.subr.bf16.mxu0 0
        %5615 = vmatpush1.bf16.msra.mxu0 0
        %5616 = vmatprep.mubr.bf16.mxu0 0
        %5617 = vmatmul.mubr.bf16.gmra.mrb[0].mxu0 %v5582
        %v5618 = vpop.f32.mrb[0].mxu0
        %v5619 = vadd.f32 0.0, %v5618
        %v5620 = vpop.f32.mrb[0].mxu0
        %v5621 = vpop.f32.mrb[0].mxu0
        %v5622 = vpop.f32.mrb[0].mxu0
        %5623 = vdwg.mxu0
        %v5624 = vadd.f32 %v5501, %v5619
        %s5625 = scalar_lea.vmem %s12, 8
        %v5626 = vld [vmem:[%s5625] sm:$0x1]
        %v5628 = vsel %vm1008, %v5626, 0
        %5630 = vmatprep.subr.bf16.mxu0 0
        %5631 = vmatpush1.bf16.msra.mxu0 %v4647
        %5632 = vmatprep.subr.bf16.mxu0 0
        %5633 = vmatpush1.bf16.msra.mxu0 0
        %5634 = vmatprep.subr.bf16.mxu0 0
        %5635 = vmatpush1.bf16.msra.mxu0 0
        %5636 = vmatprep.subr.bf16.mxu0 0
        %5637 = vmatpush1.bf16.msra.mxu0 0
        %5638 = vmatprep.subr.bf16.mxu0 0
        %5639 = vmatpush1.bf16.msra.mxu0 0
        %5640 = vmatprep.subr.bf16.mxu0 0
        %5641 = vmatpush1.bf16.msra.mxu0 0
        %5642 = vmatprep.subr.bf16.mxu0 0
        %5643 = vmatpush1.bf16.msra.mxu0 0
        %5644 = vmatprep.subr.bf16.mxu0 0
        %5645 = vmatpush1.bf16.msra.mxu0 0
        %5646 = vmatprep.subr.bf16.mxu0 0
        %5647 = vmatpush1.bf16.msra.mxu0 0
        %5648 = vmatprep.subr.bf16.mxu0 0
        %5649 = vmatpush1.bf16.msra.mxu0 0
        %5650 = vmatprep.subr.bf16.mxu0 0
        %5651 = vmatpush1.bf16.msra.mxu0 0
        %5652 = vmatprep.subr.bf16.mxu0 0
        %5653 = vmatpush1.bf16.msra.mxu0 0
        %5654 = vmatprep.subr.bf16.mxu0 0
        %5655 = vmatpush1.bf16.msra.mxu0 0
        %5656 = vmatprep.subr.bf16.mxu0 0
        %5657 = vmatpush1.bf16.msra.mxu0 0
        %5658 = vmatprep.subr.bf16.mxu0 0
        %5659 = vmatpush1.bf16.msra.mxu0 0
        %5660 = vmatprep.subr.bf16.mxu0 0
        %5661 = vmatpush1.bf16.msra.mxu0 0
        %5662 = vmatprep.mubr.bf16.mxu0 0
        %5663 = vmatmul.mubr.bf16.gmra.mrb[0].mxu0 %v5628
        %v5664 = vpop.f32.mrb[0].mxu0
        %v5665 = vadd.f32 0.0, %v5664
        %v5666 = vpop.f32.mrb[0].mxu0
        %v5667 = vpop.f32.mrb[0].mxu0
        %v5668 = vpop.f32.mrb[0].mxu0
        %5669 = vdwg.mxu0
        %v5670 = vpack.c.bf16 %v5665, %v5665
        %s5671 = scalar_lea.vmem %s13, 256
        %v5672 = vld [vmem:[%s5671] sm:$0xf]
        %v5673 = vld [vmem:[%s5671 + $0x4] sm:$0xf]
        %v5674 = vld [vmem:[%s5671 + $0x8] sm:$0xf]
        %v5675 = vld [vmem:[%s5671 + $0xc] sm:$0xf]
        %v5676 = vld [vmem:[%s5671 + $0x10] sm:$0xf]
        %v5677 = vld [vmem:[%s5671 + $0x14] sm:$0xf]
        %v5678 = vld [vmem:[%s5671 + $0x18] sm:$0xf]
        %v5679 = vld [vmem:[%s5671 + $0x1c] sm:$0xf]
        %v5688 = vunpack.c.l.b16 %v5672
        %v5689 = vunpack.c.l.b16 %v5673
        %v5690 = vunpack.c.l.b16 %v5674
        %v5691 = vunpack.c.l.b16 %v5675
        %v5692 = vunpack.c.l.b16 %v5676
        %v5693 = vunpack.c.l.b16 %v5677
        %v5694 = vunpack.c.l.b16 %v5678
        %v5695 = vunpack.c.l.b16 %v5679
        %v5696 = vpack.c.b16 %v5689, %v5688
        %v5697 = vpack.c.b16 %v5691, %v5690
        %v5698 = vpack.c.b16 %v5693, %v5692
        %v5699 = vpack.c.b16 %v5695, %v5694
        %v5705 = vsel %vm2676, %v5670, 0
        %5707 = vmatprep.subr.bf16.mxu0 0
        %5708 = vmatpush1.bf16.msra.mxu0 %v5696
        %5709 = vmatprep.subr.bf16.mxu0 0
        %5710 = vmatpush1.bf16.msra.mxu0 %v5697
        %5711 = vmatprep.subr.bf16.mxu0 0
        %5712 = vmatpush1.bf16.msra.mxu0 %v5698
        %5713 = vmatprep.subr.bf16.mxu0 0
        %5714 = vmatpush1.bf16.msra.mxu0 %v5699
        %5715 = vmatprep.subr.bf16.mxu0 0
        %5716 = vmatpush1.bf16.msra.mxu0 0
        %5717 = vmatprep.subr.bf16.mxu0 0
        %5718 = vmatpush1.bf16.msra.mxu0 0
        %5719 = vmatprep.subr.bf16.mxu0 0
        %5720 = vmatpush1.bf16.msra.mxu0 0
        %5721 = vmatprep.subr.bf16.mxu0 0
        %5722 = vmatpush1.bf16.msra.mxu0 0
        %5723 = vmatprep.subr.bf16.mxu0 0
        %5724 = vmatpush1.bf16.msra.mxu0 0
        %5725 = vmatprep.subr.bf16.mxu0 0
        %5726 = vmatpush1.bf16.msra.mxu0 0
        %5727 = vmatprep.subr.bf16.mxu0 0
        %5728 = vmatpush1.bf16.msra.mxu0 0
        %5729 = vmatprep.subr.bf16.mxu0 0
        %5730 = vmatpush1.bf16.msra.mxu0 0
        %5731 = vmatprep.subr.bf16.mxu0 0
        %5732 = vmatpush1.bf16.msra.mxu0 0
        %5733 = vmatprep.subr.bf16.mxu0 0
        %5734 = vmatpush1.bf16.msra.mxu0 0
        %5735 = vmatprep.subr.bf16.mxu0 0
        %5736 = vmatpush1.bf16.msra.mxu0 0
        %5737 = vmatprep.subr.bf16.mxu0 0
        %5738 = vmatpush1.bf16.msra.mxu0 0
        %5739 = vmatprep.mubr.bf16.mxu0 0
        %5740 = vmatmul.mubr.bf16.gmra.mrb[0].mxu0 %v5705
        %v5741 = vpop.f32.mrb[0].mxu0
        %v5742 = vadd.f32 0.0, %v5741
        %v5743 = vpop.f32.mrb[0].mxu0
        %v5744 = vpop.f32.mrb[0].mxu0
        %v5745 = vpop.f32.mrb[0].mxu0
        %5746 = vdwg.mxu0
        %v5747 = vadd.f32 %v5624, %v5742
        %v5748 = vld [vmem:[#allocation8] sm:$0x1]
        %v5749 = vadd.f32 %v5747, %v5748
        %vm5750 = vcmp.gt.f32.partialorder %v5749, 0.0
        %v5751 = vmul.f32 %v5749, 0.2
        %v5752 = vsel %vm5750, %v5749, %v5751
        %v5753 = vld [vmem:[#allocation10] sm:$0x1]
        %v5754 = vadd.f32 %v5752, %v5753
        %v5755 = vpack.c.bf16 %v5754, %v5754
        %v5756 = vunpack.c.l.bf16 %v5755
        %v5757 = vld [vmem:[%s16] sm:$0x1]
        %v5758 = vmul.f32 %v5756, %v5757
        %vm5759 = vcmask 1040384
        %v5760 = vsel %vm5759, %v5758, 0.0
        %5761 = vadd.xlane.f32.xlu0 %v5760
        %v5762 = vpop.xlane.xlu0 %5761
        %v5763 = vadd.f32 %v5762, 0.0
        %v5764 = vld [vmem:[#allocation2] sm:$0x1]
        %v5765 = vadd.f32 %v5763, %v5764
        %v5766 = vmul.f32 %v5765, 0.5
        %v5767 = vtanh.pop %v5766
        %v5768 = vadd.f32 %v5767, 1.0
        %v5769 = vmul.f32 %v5768, 0.5
        %5771 = vset.pattern.permute.xlu0 0
        %5772 = vperm.xlu0 %5771, %v5769
        %v5773 = vpop.permute.xlu0 %5772
        %5775 = vst [vmem:[%s640] sm:$0x1] %v5773
        %p5776 = scmp.lt.s32.totalorder %s34, 1
        %s5777 = scalar_select %p5776, %s34, 1
        %s5778 = scalar_lea.vmem %s18, %s5777
        // Predicated region
        $region113: #{discriminator_forward.1} parent=91 // pred_check
          %p5779 = pneg %p435
        $region114: #{discriminator_forward.1} parent=91 // pred_check_branch
          %5781 = sbr.rel (%p5779) target = $region116
        $region115: #{discriminator_forward.1} parent=91 // pred_region
          _
        $region116: #{discriminator_forward.1} parent=91 // pred_fallthru
          _
      $region92: #{discriminator_forward.1} parent=5 // pred_fallthru
        _
      %p5782 = scmp.le.s32.totalorder 2, %s29
      // Predicated region
      $region117: #{discriminator_forward.1} parent=5 // pred_check
        %p5783 = pneg %p5782
      $region118: #{discriminator_forward.1} parent=5 // pred_check_branch
        %5785 = sbr.rel (%p5783) target = $region120
      $region119: #{discriminator_forward.1} parent=5 // pred_region
        %s5786 = ssub.s32 %s29, 2
        // Predicated region
        $region121: #{discriminator_forward.1} parent=119 // pred_check
          %p5787 = pneg %p441
        $region122: #{discriminator_forward.1} parent=119 // pred_check_branch
          %5789 = sbr.rel (%p5787) target = $region124
        $region123: #{discriminator_forward.1} parent=119 // pred_region
          %p5790 = scmp.lt.s32.totalorder %s35, 1
          %s5791 = scalar_select %p5790, %s35, 1
          %s5792 = scalar_lea.vmem %s18, %s5791
        $region124: #{discriminator_forward.1} parent=119 // pred_fallthru
          _
      $region120: #{discriminator_forward.1} parent=5 // pred_fallthru
        _
    $region6: #{discriminator_forward.1} parent=1 // loop_footer
      %s33 = sadd.s32 1, %s29
    $region7: #{discriminator_forward.1} parent=1 // loop_footer_branch
      %28 = sbr.rel target = $region3
    $region8: #{discriminator_forward.1} parent=1 // loop_exit
      _
    %5793 = vsyncpa [#allocation4], 1
    %s5794 = scalar_lea.sflag [#allocation4], 1
    %5795 = vsyncpa %s5794, 1
    %5796 = vsyncpa [#allocation6], 1
    %5797 = vsyncpa [#allocation9], 1

</llo_original>
